<compile_context>
chip_gen: v6e
topology: v6e:2x2x1
jax: 0.10.0
libtpu: 0.0.40
codegen_flags: <defaults>
</compile_context>

<pallas_src>
import functools

import numpy as np
import jax
import jax.numpy as jnp
from jax import lax
from jax.experimental import pallas as pl
from jax.experimental.pallas import tpu as pltpu


# Convs with contraction depth 9*C <= this bound use the im2col-stacked
# single-matmul path (raises MXU K from C to 9*C for small channel counts).
_STACK_K_BOUND = 256


def _conv3x3_flat(act_bf16, w_ref, pad_ref, stk_ref, mask_l, mask_r, *, H, W):
    """3x3 stride-1 'same' conv on a flattened (H*W, C_in) bf16 activation."""
    HW = H * W
    c = act_bf16.shape[-1]

    # Zero only the 2*W-row halo strips (top/bottom); the interior is fully
    # overwritten below. Done unconditionally (cheap) instead of only at
    # program_id==0 so it stays correct when the grid is split across
    # TensorCores (megacore), where a core may never run iteration 0.
    zstrip = jnp.zeros((2 * W, c), pad_ref.dtype)
    pad_ref[pl.ds(0, 2 * W), :] = zstrip
    pad_ref[pl.ds(2 * W + HW, 2 * W), :] = zstrip
    pad_ref[pl.ds(2 * W, HW), :] = act_bf16

    # Broadcast the two w-validity masks once per conv (JAX does not CSE
    # broadcast_in_dim; doing this inside the tap loop emits 6 chains/conv).
    ml = jnp.broadcast_to(mask_l, (HW, c))
    mr = jnp.broadcast_to(mask_r, (HW, c))

    acc = None
    k = 0
    for dh in (-1, 0, 1):
        for dw in (-1, 0, 1):
            start = (2 + dh) * W + dw                       # static offset
            patch = pad_ref[pl.ds(start, HW), :]
            if dw == -1:
                patch = jnp.where(ml, patch, 0.0)           # kill w wrap-around
            elif dw == 1:
                patch = jnp.where(mr, patch, 0.0)
            if stk_ref is not None:
                stk_ref[:, pl.ds(k * c, c)] = patch         # pack tap along K
            else:
                d = jnp.dot(patch, w_ref[k],
                            preferred_element_type=jnp.float32)
                acc = d if acc is None else acc + d
            k += 1

    if stk_ref is not None:
        # one MXU matmul: (HW, 9C) @ (9C, Cout), f32 accumulation
        return jnp.dot(stk_ref[...], w_ref[...],
                       preferred_element_type=jnp.float32)
    return acc


def _preact_block_kernel(*refs, H, W, has_shortcut, stack1, stack2):
    (x_ref, bn1s_ref, bn1b_ref, w1_ref, bn2s_ref, bn2b_ref, w2_ref) = refs[:7]
    pos = 7
    ws_ref = None
    if has_shortcut:
        ws_ref = refs[pos]; pos += 1
    o_ref = refs[pos]; pos += 1
    pad1_ref = refs[pos]; pos += 1
    pad2_ref = refs[pos]; pos += 1
    stk1_ref = None
    stk2_ref = None
    if stack1:
        stk1_ref = refs[pos]; pos += 1
    if stack2:
        stk2_ref = refs[pos]; pos += 1

    HW = H * W
    # hoisted w-wrap validity masks (only two distinct masks exist: dw = -1/+1)
    wcol = lax.broadcasted_iota(jnp.int32, (HW, 1), 0) % W
    mask_l = wcol >= 1            # reading column w-1 is in-bounds
    mask_r = wcol < (W - 1)       # reading column w+1 is in-bounds

    # bn1 + relu in f32 on the VPU
    a = x_ref[0]                                              # (HW, C_in) f32
    a = jnp.maximum(a * bn1s_ref[...] + bn1b_ref[...], 0.0)
    a_bf = a.astype(jnp.bfloat16)                             # MXU operand

    # shortcut: identity (adds relu(bn1(x)), matching nn.Sequential() applied
    # to `out`) or a 1x1 conv. No eye-matrix matmul on the identity path.
    if has_shortcut:
        shortcut = jnp.dot(a_bf, ws_ref[...],
                           preferred_element_type=jnp.float32)
    else:
        shortcut = a

    # conv1 (3x3, stride 1, pad 1)
    o1 = _conv3x3_flat(a_bf, w1_ref, pad1_ref, stk1_ref, mask_l, mask_r,
                       H=H, W=W)
    # bn2 + relu (f32)
    b = jnp.maximum(o1 * bn2s_ref[...] + bn2b_ref[...], 0.0)
    # conv2 (3x3, stride 1, pad 1)
    o2 = _conv3x3_flat(b.astype(jnp.bfloat16), w2_ref, pad2_ref, stk2_ref,
                       mask_l, mask_r, H=H, W=W)

    o_ref[0] = (o2 + shortcut).astype(o_ref.dtype)


def _prep_conv_w(w_oihw, stacked):
    """(Cout, Cin, 3, 3) -> bf16 (9*Cin, Cout) if stacked else (9, Cin, Cout)."""
    c_out, c_in = w_oihw.shape[0], w_oihw.shape[1]
    w = jnp.transpose(w_oihw, (2, 3, 1, 0)).reshape(9, c_in, c_out)
    if stacked:
        w = w.reshape(9 * c_in, c_out)
    return w.astype(jnp.bfloat16)


def preact_block(x_nchw, p, *, stride=1, eps=1e-5):
    """Pallas implementation of PreActBlock.forward (inference-mode BN)."""
    if stride != 1:
        # TODO(synk): stride > 1 (strided conv1 / 1x1 shortcut) not implemented.
        raise NotImplementedError("stride > 1 not supported in this kernel")

    N, c_in, H, W = x_nchw.shape
    c_out = p["conv1_w"].shape[0]
    HW = H * W
    has_shortcut = "shortcut_w" in p
    stack1 = 9 * c_in <= _STACK_K_BOUND       # conv1 contraction depth
    stack2 = 9 * c_out <= _STACK_K_BOUND      # conv2 contraction depth

    x = jnp.transpose(x_nchw, (0, 2, 3, 1)).reshape(N, HW, c_in)
    x = x.astype(jnp.float32)

    # fold BN (inference form) into per-channel scale / bias, kept in f32
    bn1_s = p["bn1_gamma"] / jnp.sqrt(p["bn1_var"] + eps)
    bn1_b = p["bn1_beta"] - p["bn1_mean"] * bn1_s
    bn2_s = p["bn2_gamma"] / jnp.sqrt(p["bn2_var"] + eps)
    bn2_b = p["bn2_beta"] - p["bn2_mean"] * bn2_s

    w1 = _prep_conv_w(p["conv1_w"], stack1)
    w2 = _prep_conv_w(p["conv2_w"], stack2)

    def _const_spec(shape):
        if len(shape) == 2:
            return pl.BlockSpec(shape, lambda n: (0, 0))
        return pl.BlockSpec(shape, lambda n: (0, 0, 0))

    inputs = [x,
              bn1_s.reshape(1, c_in).astype(jnp.float32),
              bn1_b.reshape(1, c_in).astype(jnp.float32), w1,
              bn2_s.reshape(1, c_out).astype(jnp.float32),
              bn2_b.reshape(1, c_out).astype(jnp.float32), w2]
    in_specs = [
        pl.BlockSpec((1, HW, c_in), lambda n: (n, 0, 0)),     # x
        _const_spec((1, c_in)),                               # bn1 scale
        _const_spec((1, c_in)),                               # bn1 bias
        _const_spec(w1.shape),                                # conv1 weights
        _const_spec((1, c_out)),                              # bn2 scale
        _const_spec((1, c_out)),                              # bn2 bias
        _const_spec(w2.shape),                                # conv2 weights
    ]
    if has_shortcut:
        ws = jnp.transpose(p["shortcut_w"][:, :, 0, 0], (1, 0))
        inputs.append(ws.astype(jnp.bfloat16))                # (Cin, Cout)
        in_specs.append(_const_spec((c_in, c_out)))

    scratch_shapes = [
        pltpu.VMEM(((H + 4) * W, c_in), jnp.bfloat16),   # halo-padded act, conv1
        pltpu.VMEM(((H + 4) * W, c_out), jnp.bfloat16),  # halo-padded act, conv2
    ]
    if stack1:
        scratch_shapes.append(pltpu.VMEM((HW, 9 * c_in), jnp.bfloat16))
    if stack2:
        scratch_shapes.append(pltpu.VMEM((HW, 9 * c_out), jnp.bfloat16))

    kernel = functools.partial(_preact_block_kernel, H=H, W=W,
                               has_shortcut=has_shortcut,
                               stack1=stack1, stack2=stack2)

    # NOTE: for very large channel counts on v7x (64 MiB VMEM) the constant
    # weight/BN specs could additionally be single-buffered
    # (pipeline_mode=pl.Buffered(1)); bf16 weights already halve that footprint.
    out = pl.pallas_call(
        kernel,
        out_shape=jax.ShapeDtypeStruct((N, HW, c_out), jnp.float32),
        grid=(N,),
        in_specs=in_specs,
        out_specs=pl.BlockSpec((1, HW, c_out), lambda n: (n, 0, 0)),
        scratch_shapes=scratch_shapes,
        compiler_params=pltpu.CompilerParams(
            dimension_semantics=("parallel",),
            vmem_limit_bytes=48 * 1024 * 1024),
    )(*inputs)

    return jnp.transpose(out.reshape(N, H, W, c_out), (0, 3, 1, 2))


# ---------------------- deterministic parameter init ------------------------
def make_params(key, c_in, c_out, stride=1):
    ks = jax.random.split(key, 11)
    p = {
        "bn1_gamma": 1.0 + 0.2 * jax.random.normal(ks[0], (c_in,), jnp.float32),
        "bn1_beta": 0.1 * jax.random.normal(ks[1], (c_in,), jnp.float32),
        "bn1_mean": 0.1 * jax.random.normal(ks[2], (c_in,), jnp.float32),
        "bn1_var": 0.5 + jnp.abs(jax.random.normal(ks[3], (c_in,), jnp.float32)),
        "conv1_w": jax.random.normal(ks[4], (c_out, c_in, 3, 3), jnp.float32)
                   * (2.0 / (9 * c_in)) ** 0.5,
        "bn2_gamma": 1.0 + 0.2 * jax.random.normal(ks[5], (c_out,), jnp.float32),
        "bn2_beta": 0.1 * jax.random.normal(ks[6], (c_out,), jnp.float32),
        "bn2_mean": 0.1 * jax.random.normal(ks[7], (c_out,), jnp.float32),
        "bn2_var": 0.5 + jnp.abs(jax.random.normal(ks[8], (c_out,), jnp.float32)),
        "conv2_w": jax.random.normal(ks[9], (c_out, c_out, 3, 3), jnp.float32)
                   * (2.0 / (9 * c_out)) ** 0.5,
    }
    if stride != 1 or c_in != c_out:
        p["shortcut_w"] = (jax.random.normal(ks[10], (c_out, c_in, 1, 1),
                                             jnp.float32)
                           * (2.0 / c_in) ** 0.5)
    return p


# ----------------------------- pure-JAX reference ---------------------------
def _conv_ref(x_nhwc, w_oihw, stride, padding):
    w = jnp.transpose(w_oihw, (2, 3, 1, 0))  # HWIO
    return lax.conv_general_dilated(
        x_nhwc, w, (stride, stride), [(padding, padding)] * 2,
        dimension_numbers=("NHWC", "HWIO", "NHWC"),
        precision=lax.Precision.HIGHEST)


def preact_block_ref(x_nchw, p, eps=1e-5):
    x = jnp.transpose(x_nchw, (0, 2, 3, 1))

    def bn(v, pre):
        s = p[pre + "_gamma"] / jnp.sqrt(p[pre + "_var"] + eps)
        return v * s + (p[pre + "_beta"] - p[pre + "_mean"] * s)

    a = jax.nn.relu(bn(x, "bn1"))
    # shortcut is applied to `out` (= relu(bn1(x))), exactly as in the module
    sc = _conv_ref(a, p["shortcut_w"], 1, 0) if "shortcut_w" in p else a
    o1 = _conv_ref(a, p["conv1_w"], 1, 1)
    b = jax.nn.relu(bn(o1, "bn2"))
    o2 = _conv_ref(b, p["conv2_w"], 1, 1)
    return jnp.transpose(o2 + sc, (0, 3, 1, 2))


if __name__ == "__main__":
    key = jax.random.PRNGKey(0)
    kx1, kp1, kx2, kp2 = jax.random.split(key, 4)

    # case 1: Cin != Cout -> 1x1 conv shortcut; small channels -> stacked taps
    N, C_IN, C_OUT, H, W = 2, 4, 8, 16, 16
    x1 = jax.random.normal(kx1, (N, C_IN, H, W), jnp.float32)
    p1 = make_params(kp1, C_IN, C_OUT, stride=1)
    out1 = jax.block_until_ready(preact_block(x1, p1, stride=1))
    ref1 = preact_block_ref(x1, p1)
    assert out1.shape == (N, C_OUT, H, W)
    np.testing.assert_allclose(np.asarray(out1), np.asarray(ref1),
                               rtol=5e-2, atol=5e-2)

    # case 2: Cin == Cout -> identity shortcut; 9*C > 256 -> 9-tap matmul path
    N2, C2, H2, W2 = 2, 32, 8, 8
    x2 = jax.random.normal(kx2, (N2, C2, H2, W2), jnp.float32)
    p2 = make_params(kp2, C2, C2, stride=1)
    out2 = jax.block_until_ready(preact_block(x2, p2, stride=1))
    ref2 = preact_block_ref(x2, p2)
    assert out2.shape == (N2, C2, H2, W2)
    np.testing.assert_allclose(np.asarray(out2), np.asarray(ref2),
                               rtol=5e-2, atol=5e-2)

    print("KERNEL_OK")
</pallas_src>

<mosaic_0001>
module attributes {stable_mosaic.version = 11 : i64} {
  func.func @_preact_block_kernel(%arg0: i32, %arg1: memref<1x256x4xf32, #tpu.memory_space<vmem>>, %arg2: memref<1x4xf32, #tpu.memory_space<vmem>>, %arg3: memref<1x4xf32, #tpu.memory_space<vmem>>, %arg4: memref<36x8xbf16, #tpu.memory_space<vmem>>, %arg5: memref<1x8xf32, #tpu.memory_space<vmem>>, %arg6: memref<1x8xf32, #tpu.memory_space<vmem>>, %arg7: memref<72x8xbf16, #tpu.memory_space<vmem>>, %arg8: memref<4x8xbf16, #tpu.memory_space<vmem>>, %arg9: memref<1x256x8xf32, #tpu.memory_space<vmem>>, %arg10: memref<320x4xbf16, #tpu.memory_space<vmem>>, %arg11: memref<320x8xbf16, #tpu.memory_space<vmem>>, %arg12: memref<256x36xbf16, #tpu.memory_space<vmem>>, %arg13: memref<256x72xbf16, #tpu.memory_space<vmem>>) attributes {dimension_semantics = [#tpu.dimension_semantics<parallel>], iteration_bounds = array<i64: 2>, scalar_prefetch = 0 : i64, scratch_operands = 4 : i64, tpu.core_type = #tpu.core_type<tc>, window_params = [{transform_indices = @transform_0, window_bounds = array<i64: 1, 256, 4>}, {pipeline_mode = #tpu.pipeline_mode<synchronous>, transform_indices = @transform_1, window_bounds = array<i64: 1, 4>}, {pipeline_mode = #tpu.pipeline_mode<synchronous>, transform_indices = @transform_2, window_bounds = array<i64: 1, 4>}, {pipeline_mode = #tpu.pipeline_mode<synchronous>, transform_indices = @transform_3, window_bounds = array<i64: 36, 8>}, {pipeline_mode = #tpu.pipeline_mode<synchronous>, transform_indices = @transform_4, window_bounds = array<i64: 1, 8>}, {pipeline_mode = #tpu.pipeline_mode<synchronous>, transform_indices = @transform_5, window_bounds = array<i64: 1, 8>}, {pipeline_mode = #tpu.pipeline_mode<synchronous>, transform_indices = @transform_6, window_bounds = array<i64: 72, 8>}, {pipeline_mode = #tpu.pipeline_mode<synchronous>, transform_indices = @transform_7, window_bounds = array<i64: 4, 8>}, {transform_indices = @transform_8, window_bounds = array<i64: 1, 256, 8>}]} {
    %0 = tpu.iota {dimensions = array<i32: 0>} : vector<256x1xi32>
    %c16_i32 = arith.constant 16 : i32
    %c0_i32 = arith.constant 0 : i32
    %1 = arith.cmpi eq, %c16_i32, %c0_i32 : i32
    %c1_i32 = arith.constant 1 : i32
    %2 = arith.select %1, %c1_i32, %c16_i32 : i32
    %3 = vector.broadcast %2 : i32 to vector<256x1xi32>
    %4 = arith.remsi %0, %3 : vector<256x1xi32>
    %c0_i32_0 = arith.constant 0 : i32
    %5 = vector.broadcast %c0_i32_0 : i32 to vector<256x1xi32>
    %6 = arith.cmpi ne, %4, %5 : vector<256x1xi32>
    %c0_i32_1 = arith.constant 0 : i32
    %7 = vector.broadcast %c0_i32_1 : i32 to vector<256x1xi32>
    %8 = arith.cmpi slt, %4, %7 : vector<256x1xi32>
    %c0_i32_2 = arith.constant 0 : i32
    %9 = arith.cmpi slt, %2, %c0_i32_2 : i32
    %10 = vector.broadcast %9 : i1 to vector<256x1xi1>
    %11 = vector.broadcast %10 : vector<256x1xi1> to vector<256x1xi1>
    %12 = arith.xori %8, %11 : vector<256x1xi1>
    %13 = arith.andi %12, %6 : vector<256x1xi1>
    %14 = vector.broadcast %2 : i32 to vector<256x1xi32>
    %15 = arith.addi %4, %14 : vector<256x1xi32>
    %16 = arith.select %13, %15, %4 : vector<256x1xi1>, vector<256x1xi32>
    %c1_i32_3 = arith.constant 1 : i32
    %17 = vector.broadcast %c1_i32_3 : i32 to vector<256x1xi32>
    %18 = arith.cmpi sge, %16, %17 : vector<256x1xi32>
    %c15_i32 = arith.constant 15 : i32
    %19 = vector.broadcast %c15_i32 : i32 to vector<256x1xi32>
    %20 = arith.cmpi slt, %16, %19 : vector<256x1xi32>
    %c0 = arith.constant 0 : index
    %c0_4 = arith.constant 0 : index
    %c0_5 = arith.constant 0 : index
    %21 = vector.load %arg1[%c0, %c0_4, %c0_5] : memref<1x256x4xf32, #tpu.memory_space<vmem>>, vector<1x256x4xf32>
    %22 = vector.shape_cast %21 : vector<1x256x4xf32> to vector<256x4xf32>
    %c0_6 = arith.constant 0 : index
    %c0_7 = arith.constant 0 : index
    %23 = vector.load %arg2[%c0_6, %c0_7] : memref<1x4xf32, #tpu.memory_space<vmem>>, vector<1x4xf32>
    %24 = vector.broadcast %23 : vector<1x4xf32> to vector<256x4xf32>
    %25 = arith.mulf %22, %24 : vector<256x4xf32>
    %c0_8 = arith.constant 0 : index
    %c0_9 = arith.constant 0 : index
    %26 = vector.load %arg3[%c0_8, %c0_9] : memref<1x4xf32, #tpu.memory_space<vmem>>, vector<1x4xf32>
    %27 = vector.broadcast %26 : vector<1x4xf32> to vector<256x4xf32>
    %28 = arith.addf %25, %27 : vector<256x4xf32>
    %cst = arith.constant 0.000000e+00 : f32
    %29 = vector.broadcast %cst : f32 to vector<256x4xf32>
    %30 = arith.maximumf %28, %29 : vector<256x4xf32>
    %31 = arith.truncf %30 : vector<256x4xf32> to vector<256x4xbf16>
    %c0_10 = arith.constant 0 : index
    %c0_11 = arith.constant 0 : index
    %32 = vector.load %arg8[%c0_10, %c0_11] : memref<4x8xbf16, #tpu.memory_space<vmem>>, vector<4x8xbf16>
    %cst_12 = arith.constant dense<0.000000e+00> : vector<256x8xf32>
    %33 = tpu.matmul %31, %32, %cst_12 {dimension_numbers = #tpu.dot_dimension_numbers<[1], [0], [0], [1], [0, 0, 1, 1], [], []>} : vector<256x4xbf16>, vector<4x8xbf16>, vector<256x8xf32> -> vector<256x8xf32>
    %cst_13 = arith.constant 0.000000e+00 : bf16
    %34 = vector.broadcast %cst_13 : bf16 to vector<32x4xbf16>
    %c0_14 = arith.constant 0 : index
    %c0_15 = arith.constant 0 : index
    %35 = vector.load %arg10[%c0_14, %c0_15] : memref<320x4xbf16, #tpu.memory_space<vmem>>, vector<32x4xbf16>
    tpu.vector_store %arg10[%c0_14, %c0_15], %34 {strides = array<i32>} : memref<320x4xbf16, #tpu.memory_space<vmem>>, vector<32x4xbf16>,
    %c288 = arith.constant 288 : index
    %c0_16 = arith.constant 0 : index
    %36 = vector.load %arg10[%c288, %c0_16] : memref<320x4xbf16, #tpu.memory_space<vmem>>, vector<32x4xbf16>
    tpu.vector_store %arg10[%c288, %c0_16], %34 {strides = array<i32>} : memref<320x4xbf16, #tpu.memory_space<vmem>>, vector<32x4xbf16>,
    %c32 = arith.constant 32 : index
    %c0_17 = arith.constant 0 : index
    %37 = vector.load %arg10[%c32, %c0_17] : memref<320x4xbf16, #tpu.memory_space<vmem>>, vector<256x4xbf16>
    tpu.vector_store %arg10[%c32, %c0_17], %31 {strides = array<i32>} : memref<320x4xbf16, #tpu.memory_space<vmem>>, vector<256x4xbf16>,
    %38 = vector.shape_cast %18 : vector<256x1xi1> to vector<256x1xi1>
    %39 = vector.broadcast %38 : vector<256x1xi1> to vector<256x4xi1>
    %40 = vector.shape_cast %20 : vector<256x1xi1> to vector<256x1xi1>
    %41 = vector.broadcast %40 : vector<256x1xi1> to vector<256x4xi1>
    %c15 = arith.constant 15 : index
    %c0_18 = arith.constant 0 : index
    %42 = vector.load %arg10[%c15, %c0_18] : memref<320x4xbf16, #tpu.memory_space<vmem>>, vector<256x4xbf16>
    %cst_19 = arith.constant 0.000000e+00 : f32
    %43 = arith.truncf %cst_19 : f32 to bf16
    %44 = vector.broadcast %43 : bf16 to vector<256x4xbf16>
    %45 = arith.select %39, %42, %44 : vector<256x4xi1>, vector<256x4xbf16>
    %c0_20 = arith.constant 0 : index
    %c0_21 = arith.constant 0 : index
    %46 = vector.load %arg12[%c0_20, %c0_21] : memref<256x36xbf16, #tpu.memory_space<vmem>>, vector<256x4xbf16>
    tpu.vector_store %arg12[%c0_20, %c0_21], %45 {strides = array<i32>} : memref<256x36xbf16, #tpu.memory_space<vmem>>, vector<256x4xbf16>,
    %c16 = arith.constant 16 : index
    %c0_22 = arith.constant 0 : index
    %47 = vector.load %arg10[%c16, %c0_22] : memref<320x4xbf16, #tpu.memory_space<vmem>>, vector<256x4xbf16>
    %c0_23 = arith.constant 0 : index
    %c4 = arith.constant 4 : index
    %48 = vector.load %arg12[%c0_23, %c4] : memref<256x36xbf16, #tpu.memory_space<vmem>>, vector<256x4xbf16>
    tpu.vector_store %arg12[%c0_23, %c4], %47 {strides = array<i32>} : memref<256x36xbf16, #tpu.memory_space<vmem>>, vector<256x4xbf16>,
    %c17 = arith.constant 17 : index
    %c0_24 = arith.constant 0 : index
    %49 = vector.load %arg10[%c17, %c0_24] : memref<320x4xbf16, #tpu.memory_space<vmem>>, vector<256x4xbf16>
    %cst_25 = arith.constant 0.000000e+00 : f32
    %50 = arith.truncf %cst_25 : f32 to bf16
    %51 = vector.broadcast %50 : bf16 to vector<256x4xbf16>
    %52 = arith.select %41, %49, %51 : vector<256x4xi1>, vector<256x4xbf16>
    %c0_26 = arith.constant 0 : index
    %c8 = arith.constant 8 : index
    %53 = vector.load %arg12[%c0_26, %c8] : memref<256x36xbf16, #tpu.memory_space<vmem>>, vector<256x4xbf16>
    tpu.vector_store %arg12[%c0_26, %c8], %52 {strides = array<i32>} : memref<256x36xbf16, #tpu.memory_space<vmem>>, vector<256x4xbf16>,
    %c31 = arith.constant 31 : index
    %c0_27 = arith.constant 0 : index
    %54 = vector.load %arg10[%c31, %c0_27] : memref<320x4xbf16, #tpu.memory_space<vmem>>, vector<256x4xbf16>
    %cst_28 = arith.constant 0.000000e+00 : f32
    %55 = arith.truncf %cst_28 : f32 to bf16
    %56 = vector.broadcast %55 : bf16 to vector<256x4xbf16>
    %57 = arith.select %39, %54, %56 : vector<256x4xi1>, vector<256x4xbf16>
    %c0_29 = arith.constant 0 : index
    %c12 = arith.constant 12 : index
    %58 = vector.load %arg12[%c0_29, %c12] : memref<256x36xbf16, #tpu.memory_space<vmem>>, vector<256x4xbf16>
    tpu.vector_store %arg12[%c0_29, %c12], %57 {strides = array<i32>} : memref<256x36xbf16, #tpu.memory_space<vmem>>, vector<256x4xbf16>,
    %c32_30 = arith.constant 32 : index
    %c0_31 = arith.constant 0 : index
    %59 = vector.load %arg10[%c32_30, %c0_31] : memref<320x4xbf16, #tpu.memory_space<vmem>>, vector<256x4xbf16>
    %c0_32 = arith.constant 0 : index
    %c16_33 = arith.constant 16 : index
    %60 = vector.load %arg12[%c0_32, %c16_33] : memref<256x36xbf16, #tpu.memory_space<vmem>>, vector<256x4xbf16>
    tpu.vector_store %arg12[%c0_32, %c16_33], %59 {strides = array<i32>} : memref<256x36xbf16, #tpu.memory_space<vmem>>, vector<256x4xbf16>,
    %c33 = arith.constant 33 : index
    %c0_34 = arith.constant 0 : index
    %61 = vector.load %arg10[%c33, %c0_34] : memref<320x4xbf16, #tpu.memory_space<vmem>>, vector<256x4xbf16>
    %cst_35 = arith.constant 0.000000e+00 : f32
    %62 = arith.truncf %cst_35 : f32 to bf16
    %63 = vector.broadcast %62 : bf16 to vector<256x4xbf16>
    %64 = arith.select %41, %61, %63 : vector<256x4xi1>, vector<256x4xbf16>
    %c0_36 = arith.constant 0 : index
    %c20 = arith.constant 20 : index
    %65 = vector.load %arg12[%c0_36, %c20] : memref<256x36xbf16, #tpu.memory_space<vmem>>, vector<256x4xbf16>
    tpu.vector_store %arg12[%c0_36, %c20], %64 {strides = array<i32>} : memref<256x36xbf16, #tpu.memory_space<vmem>>, vector<256x4xbf16>,
    %c47 = arith.constant 47 : index
    %c0_37 = arith.constant 0 : index
    %66 = vector.load %arg10[%c47, %c0_37] : memref<320x4xbf16, #tpu.memory_space<vmem>>, vector<256x4xbf16>
    %cst_38 = arith.constant 0.000000e+00 : f32
    %67 = arith.truncf %cst_38 : f32 to bf16
    %68 = vector.broadcast %67 : bf16 to vector<256x4xbf16>
    %69 = arith.select %39, %66, %68 : vector<256x4xi1>, vector<256x4xbf16>
    %c0_39 = arith.constant 0 : index
    %c24 = arith.constant 24 : index
    %70 = vector.load %arg12[%c0_39, %c24] : memref<256x36xbf16, #tpu.memory_space<vmem>>, vector<256x4xbf16>
    tpu.vector_store %arg12[%c0_39, %c24], %69 {strides = array<i32>} : memref<256x36xbf16, #tpu.memory_space<vmem>>, vector<256x4xbf16>,
    %c48 = arith.constant 48 : index
    %c0_40 = arith.constant 0 : index
    %71 = vector.load %arg10[%c48, %c0_40] : memref<320x4xbf16, #tpu.memory_space<vmem>>, vector<256x4xbf16>
    %c0_41 = arith.constant 0 : index
    %c28 = arith.constant 28 : index
    %72 = vector.load %arg12[%c0_41, %c28] : memref<256x36xbf16, #tpu.memory_space<vmem>>, vector<256x4xbf16>
    tpu.vector_store %arg12[%c0_41, %c28], %71 {strides = array<i32>} : memref<256x36xbf16, #tpu.memory_space<vmem>>, vector<256x4xbf16>,
    %c49 = arith.constant 49 : index
    %c0_42 = arith.constant 0 : index
    %73 = vector.load %arg10[%c49, %c0_42] : memref<320x4xbf16, #tpu.memory_space<vmem>>, vector<256x4xbf16>
    %cst_43 = arith.constant 0.000000e+00 : f32
    %74 = arith.truncf %cst_43 : f32 to bf16
    %75 = vector.broadcast %74 : bf16 to vector<256x4xbf16>
    %76 = arith.select %41, %73, %75 : vector<256x4xi1>, vector<256x4xbf16>
    %c0_44 = arith.constant 0 : index
    %c32_45 = arith.constant 32 : index
    %77 = vector.load %arg12[%c0_44, %c32_45] : memref<256x36xbf16, #tpu.memory_space<vmem>>, vector<256x4xbf16>
    tpu.vector_store %arg12[%c0_44, %c32_45], %76 {strides = array<i32>} : memref<256x36xbf16, #tpu.memory_space<vmem>>, vector<256x4xbf16>,
    %c0_46 = arith.constant 0 : index
    %c0_47 = arith.constant 0 : index
    %78 = vector.load %arg12[%c0_46, %c0_47] : memref<256x36xbf16, #tpu.memory_space<vmem>>, vector<256x36xbf16>
    %c0_48 = arith.constant 0 : index
    %c0_49 = arith.constant 0 : index
    %79 = vector.load %arg4[%c0_48, %c0_49] : memref<36x8xbf16, #tpu.memory_space<vmem>>, vector<36x8xbf16>
    %cst_50 = arith.constant dense<0.000000e+00> : vector<256x8xf32>
    %80 = tpu.matmul %78, %79, %cst_50 {dimension_numbers = #tpu.dot_dimension_numbers<[1], [0], [0], [1], [0, 0, 1, 1], [], []>} : vector<256x36xbf16>, vector<36x8xbf16>, vector<256x8xf32> -> vector<256x8xf32>
    %c0_51 = arith.constant 0 : index
    %c0_52 = arith.constant 0 : index
    %81 = vector.load %arg5[%c0_51, %c0_52] : memref<1x8xf32, #tpu.memory_space<vmem>>, vector<1x8xf32>
    %82 = vector.broadcast %81 : vector<1x8xf32> to vector<256x8xf32>
    %83 = arith.mulf %80, %82 : vector<256x8xf32>
    %c0_53 = arith.constant 0 : index
    %c0_54 = arith.constant 0 : index
    %84 = vector.load %arg6[%c0_53, %c0_54] : memref<1x8xf32, #tpu.memory_space<vmem>>, vector<1x8xf32>
    %85 = vector.broadcast %84 : vector<1x8xf32> to vector<256x8xf32>
    %86 = arith.addf %83, %85 : vector<256x8xf32>
    %cst_55 = arith.constant 0.000000e+00 : f32
    %87 = vector.broadcast %cst_55 : f32 to vector<256x8xf32>
    %88 = arith.maximumf %86, %87 : vector<256x8xf32>
    %89 = arith.truncf %88 : vector<256x8xf32> to vector<256x8xbf16>
    %cst_56 = arith.constant 0.000000e+00 : bf16
    %90 = vector.broadcast %cst_56 : bf16 to vector<32x8xbf16>
    %c0_57 = arith.constant 0 : index
    %c0_58 = arith.constant 0 : index
    %91 = vector.load %arg11[%c0_57, %c0_58] : memref<320x8xbf16, #tpu.memory_space<vmem>>, vector<32x8xbf16>
    tpu.vector_store %arg11[%c0_57, %c0_58], %90 {strides = array<i32>} : memref<320x8xbf16, #tpu.memory_space<vmem>>, vector<32x8xbf16>,
    %c288_59 = arith.constant 288 : index
    %c0_60 = arith.constant 0 : index
    %92 = vector.load %arg11[%c288_59, %c0_60] : memref<320x8xbf16, #tpu.memory_space<vmem>>, vector<32x8xbf16>
    tpu.vector_store %arg11[%c288_59, %c0_60], %90 {strides = array<i32>} : memref<320x8xbf16, #tpu.memory_space<vmem>>, vector<32x8xbf16>,
    %c32_61 = arith.constant 32 : index
    %c0_62 = arith.constant 0 : index
    %93 = vector.load %arg11[%c32_61, %c0_62] : memref<320x8xbf16, #tpu.memory_space<vmem>>, vector<256x8xbf16>
    tpu.vector_store %arg11[%c32_61, %c0_62], %89 {strides = array<i32>} : memref<320x8xbf16, #tpu.memory_space<vmem>>, vector<256x8xbf16>,
    %94 = vector.shape_cast %18 : vector<256x1xi1> to vector<256x1xi1>
    %95 = vector.broadcast %94 : vector<256x1xi1> to vector<256x8xi1>
    %96 = vector.shape_cast %20 : vector<256x1xi1> to vector<256x1xi1>
    %97 = vector.broadcast %96 : vector<256x1xi1> to vector<256x8xi1>
    %c15_63 = arith.constant 15 : index
    %c0_64 = arith.constant 0 : index
    %98 = vector.load %arg11[%c15_63, %c0_64] : memref<320x8xbf16, #tpu.memory_space<vmem>>, vector<256x8xbf16>
    %cst_65 = arith.constant 0.000000e+00 : f32
    %99 = arith.truncf %cst_65 : f32 to bf16
    %100 = vector.broadcast %99 : bf16 to vector<256x8xbf16>
    %101 = arith.select %95, %98, %100 : vector<256x8xi1>, vector<256x8xbf16>
    %c0_66 = arith.constant 0 : index
    %c0_67 = arith.constant 0 : index
    %102 = vector.load %arg13[%c0_66, %c0_67] : memref<256x72xbf16, #tpu.memory_space<vmem>>, vector<256x8xbf16>
    tpu.vector_store %arg13[%c0_66, %c0_67], %101 {strides = array<i32>} : memref<256x72xbf16, #tpu.memory_space<vmem>>, vector<256x8xbf16>,
    %c16_68 = arith.constant 16 : index
    %c0_69 = arith.constant 0 : index
    %103 = vector.load %arg11[%c16_68, %c0_69] : memref<320x8xbf16, #tpu.memory_space<vmem>>, vector<256x8xbf16>
    %c0_70 = arith.constant 0 : index
    %c8_71 = arith.constant 8 : index
    %104 = vector.load %arg13[%c0_70, %c8_71] : memref<256x72xbf16, #tpu.memory_space<vmem>>, vector<256x8xbf16>
    tpu.vector_store %arg13[%c0_70, %c8_71], %103 {strides = array<i32>} : memref<256x72xbf16, #tpu.memory_space<vmem>>, vector<256x8xbf16>,
    %c17_72 = arith.constant 17 : index
    %c0_73 = arith.constant 0 : index
    %105 = vector.load %arg11[%c17_72, %c0_73] : memref<320x8xbf16, #tpu.memory_space<vmem>>, vector<256x8xbf16>
    %cst_74 = arith.constant 0.000000e+00 : f32
    %106 = arith.truncf %cst_74 : f32 to bf16
    %107 = vector.broadcast %106 : bf16 to vector<256x8xbf16>
    %108 = arith.select %97, %105, %107 : vector<256x8xi1>, vector<256x8xbf16>
    %c0_75 = arith.constant 0 : index
    %c16_76 = arith.constant 16 : index
    %109 = vector.load %arg13[%c0_75, %c16_76] : memref<256x72xbf16, #tpu.memory_space<vmem>>, vector<256x8xbf16>
    tpu.vector_store %arg13[%c0_75, %c16_76], %108 {strides = array<i32>} : memref<256x72xbf16, #tpu.memory_space<vmem>>, vector<256x8xbf16>,
    %c31_77 = arith.constant 31 : index
    %c0_78 = arith.constant 0 : index
    %110 = vector.load %arg11[%c31_77, %c0_78] : memref<320x8xbf16, #tpu.memory_space<vmem>>, vector<256x8xbf16>
    %cst_79 = arith.constant 0.000000e+00 : f32
    %111 = arith.truncf %cst_79 : f32 to bf16
    %112 = vector.broadcast %111 : bf16 to vector<256x8xbf16>
    %113 = arith.select %95, %110, %112 : vector<256x8xi1>, vector<256x8xbf16>
    %c0_80 = arith.constant 0 : index
    %c24_81 = arith.constant 24 : index
    %114 = vector.load %arg13[%c0_80, %c24_81] : memref<256x72xbf16, #tpu.memory_space<vmem>>, vector<256x8xbf16>
    tpu.vector_store %arg13[%c0_80, %c24_81], %113 {strides = array<i32>} : memref<256x72xbf16, #tpu.memory_space<vmem>>, vector<256x8xbf16>,
    %c32_82 = arith.constant 32 : index
    %c0_83 = arith.constant 0 : index
    %115 = vector.load %arg11[%c32_82, %c0_83] : memref<320x8xbf16, #tpu.memory_space<vmem>>, vector<256x8xbf16>
    %c0_84 = arith.constant 0 : index
    %c32_85 = arith.constant 32 : index
    %116 = vector.load %arg13[%c0_84, %c32_85] : memref<256x72xbf16, #tpu.memory_space<vmem>>, vector<256x8xbf16>
    tpu.vector_store %arg13[%c0_84, %c32_85], %115 {strides = array<i32>} : memref<256x72xbf16, #tpu.memory_space<vmem>>, vector<256x8xbf16>,
    %c33_86 = arith.constant 33 : index
    %c0_87 = arith.constant 0 : index
    %117 = vector.load %arg11[%c33_86, %c0_87] : memref<320x8xbf16, #tpu.memory_space<vmem>>, vector<256x8xbf16>
    %cst_88 = arith.constant 0.000000e+00 : f32
    %118 = arith.truncf %cst_88 : f32 to bf16
    %119 = vector.broadcast %118 : bf16 to vector<256x8xbf16>
    %120 = arith.select %97, %117, %119 : vector<256x8xi1>, vector<256x8xbf16>
    %c0_89 = arith.constant 0 : index
    %c40 = arith.constant 40 : index
    %121 = vector.load %arg13[%c0_89, %c40] : memref<256x72xbf16, #tpu.memory_space<vmem>>, vector<256x8xbf16>
    tpu.vector_store %arg13[%c0_89, %c40], %120 {strides = array<i32>} : memref<256x72xbf16, #tpu.memory_space<vmem>>, vector<256x8xbf16>,
    %c47_90 = arith.constant 47 : index
    %c0_91 = arith.constant 0 : index
    %122 = vector.load %arg11[%c47_90, %c0_91] : memref<320x8xbf16, #tpu.memory_space<vmem>>, vector<256x8xbf16>
    %cst_92 = arith.constant 0.000000e+00 : f32
    %123 = arith.truncf %cst_92 : f32 to bf16
    %124 = vector.broadcast %123 : bf16 to vector<256x8xbf16>
    %125 = arith.select %95, %122, %124 : vector<256x8xi1>, vector<256x8xbf16>
    %c0_93 = arith.constant 0 : index
    %c48_94 = arith.constant 48 : index
    %126 = vector.load %arg13[%c0_93, %c48_94] : memref<256x72xbf16, #tpu.memory_space<vmem>>, vector<256x8xbf16>
    tpu.vector_store %arg13[%c0_93, %c48_94], %125 {strides = array<i32>} : memref<256x72xbf16, #tpu.memory_space<vmem>>, vector<256x8xbf16>,
    %c48_95 = arith.constant 48 : index
    %c0_96 = arith.constant 0 : index
    %127 = vector.load %arg11[%c48_95, %c0_96] : memref<320x8xbf16, #tpu.memory_space<vmem>>, vector<256x8xbf16>
    %c0_97 = arith.constant 0 : index
    %c56 = arith.constant 56 : index
    %128 = vector.load %arg13[%c0_97, %c56] : memref<256x72xbf16, #tpu.memory_space<vmem>>, vector<256x8xbf16>
    tpu.vector_store %arg13[%c0_97, %c56], %127 {strides = array<i32>} : memref<256x72xbf16, #tpu.memory_space<vmem>>, vector<256x8xbf16>,
    %c49_98 = arith.constant 49 : index
    %c0_99 = arith.constant 0 : index
    %129 = vector.load %arg11[%c49_98, %c0_99] : memref<320x8xbf16, #tpu.memory_space<vmem>>, vector<256x8xbf16>
    %cst_100 = arith.constant 0.000000e+00 : f32
    %130 = arith.truncf %cst_100 : f32 to bf16
    %131 = vector.broadcast %130 : bf16 to vector<256x8xbf16>
    %132 = arith.select %97, %129, %131 : vector<256x8xi1>, vector<256x8xbf16>
    %c0_101 = arith.constant 0 : index
    %c64 = arith.constant 64 : index
    %133 = vector.load %arg13[%c0_101, %c64] : memref<256x72xbf16, #tpu.memory_space<vmem>>, vector<256x8xbf16>
    tpu.vector_store %arg13[%c0_101, %c64], %132 {strides = array<i32>} : memref<256x72xbf16, #tpu.memory_space<vmem>>, vector<256x8xbf16>,
    %c0_102 = arith.constant 0 : index
    %c0_103 = arith.constant 0 : index
    %134 = vector.load %arg13[%c0_102, %c0_103] : memref<256x72xbf16, #tpu.memory_space<vmem>>, vector<256x72xbf16>
    %c0_104 = arith.constant 0 : index
    %c0_105 = arith.constant 0 : index
    %135 = vector.load %arg7[%c0_104, %c0_105] : memref<72x8xbf16, #tpu.memory_space<vmem>>, vector<72x8xbf16>
    %cst_106 = arith.constant dense<0.000000e+00> : vector<256x8xf32>
    %136 = tpu.matmul %134, %135, %cst_106 {dimension_numbers = #tpu.dot_dimension_numbers<[1], [0], [0], [1], [0, 0, 1, 1], [], []>} : vector<256x72xbf16>, vector<72x8xbf16>, vector<256x8xf32> -> vector<256x8xf32>
    %137 = arith.addf %136, %33 : vector<256x8xf32>
    %c0_107 = arith.constant 0 : index
    %c0_108 = arith.constant 0 : index
    %c0_109 = arith.constant 0 : index
    %138 = vector.load %arg9[%c0_107, %c0_108, %c0_109] : memref<1x256x8xf32, #tpu.memory_space<vmem>>, vector<1x256x8xf32>
    %139 = vector.shape_cast %138 : vector<1x256x8xf32> to vector<256x8xf32>
    %140 = vector.shape_cast %137 : vector<256x8xf32> to vector<1x256x8xf32>
    tpu.vector_store %arg9[%c0_107, %c0_108, %c0_109], %140 {strides = array<i32>} : memref<1x256x8xf32, #tpu.memory_space<vmem>>, vector<1x256x8xf32>,
    return
  }
  func.func @transform_0(%arg0: i32) -> (i32, i32, i32) {
    %c0_i32 = arith.constant 0 : i32
    %c0_i32_0 = arith.constant 0 : i32
    %c0_i32_1 = arith.constant 0 : i32
    return %arg0, %c0_i32, %c0_i32_0 : i32, i32, i32
  }
  func.func @transform_1(%arg0: i32) -> (i32, i32) {
    %c0_i32 = arith.constant 0 : i32
    %c0_i32_0 = arith.constant 0 : i32
    %c0_i32_1 = arith.constant 0 : i32
    return %c0_i32, %c0_i32_0 : i32, i32
  }
  func.func @transform_2(%arg0: i32) -> (i32, i32) {
    %c0_i32 = arith.constant 0 : i32
    %c0_i32_0 = arith.constant 0 : i32
    %c0_i32_1 = arith.constant 0 : i32
    return %c0_i32, %c0_i32_0 : i32, i32
  }
  func.func @transform_3(%arg0: i32) -> (i32, i32) {
    %c0_i32 = arith.constant 0 : i32
    %c0_i32_0 = arith.constant 0 : i32
    %c0_i32_1 = arith.constant 0 : i32
    return %c0_i32, %c0_i32_0 : i32, i32
  }
  func.func @transform_4(%arg0: i32) -> (i32, i32) {
    %c0_i32 = arith.constant 0 : i32
    %c0_i32_0 = arith.constant 0 : i32
    %c0_i32_1 = arith.constant 0 : i32
    return %c0_i32, %c0_i32_0 : i32, i32
  }
  func.func @transform_5(%arg0: i32) -> (i32, i32) {
    %c0_i32 = arith.constant 0 : i32
    %c0_i32_0 = arith.constant 0 : i32
    %c0_i32_1 = arith.constant 0 : i32
    return %c0_i32, %c0_i32_0 : i32, i32
  }
  func.func @transform_6(%arg0: i32) -> (i32, i32) {
    %c0_i32 = arith.constant 0 : i32
    %c0_i32_0 = arith.constant 0 : i32
    %c0_i32_1 = arith.constant 0 : i32
    return %c0_i32, %c0_i32_0 : i32, i32
  }
  func.func @transform_7(%arg0: i32) -> (i32, i32) {
    %c0_i32 = arith.constant 0 : i32
    %c0_i32_0 = arith.constant 0 : i32
    %c0_i32_1 = arith.constant 0 : i32
    return %c0_i32, %c0_i32_0 : i32, i32
  }
  func.func @transform_8(%arg0: i32) -> (i32, i32, i32) {
    %c0_i32 = arith.constant 0 : i32
    %c0_i32_0 = arith.constant 0 : i32
    %c0_i32_1 = arith.constant 0 : i32
    return %arg0, %c0_i32, %c0_i32_0 : i32, i32, i32
  }
}

</mosaic_0001>

<llo_original>
// kernel: tpu_custom_call.1
$region0: #{tpu_custom_call.1}
  #allocation0 [shape = 'u32[]', space=smem, size = 0x4, offset = 0x4, fixed_abs, tag = 'smem constant byte address 0x4 - core index']
  #allocation1 [shape = 'u32[144,128]{1,0:T(1,128)}', space=vmem, size = 0x12000, scoped, tag = 'internal scratch']
  #allocation2 [shape = 'bf16[320,4]{1,0:T(8,128)(2,1)}', space=vmem, size = 0x14000, scoped, tag = 'scratch operand']
  #allocation3 [shape = 'bf16[320,8]{1,0:T(8,128)(2,1)}', space=vmem, size = 0x14000, scoped, tag = 'scratch operand']
  #allocation4 [shape = 'bf16[256,36]{1,0:T(8,128)(2,1)}', space=vmem, size = 0x10000, scoped, tag = 'scratch operand']
  #allocation5 [shape = 'bf16[256,72]{1,0:T(8,128)(2,1)}', space=vmem, size = 0x10000, scoped, tag = 'scratch operand']
  %s0 = inlined_call_operand.vmem [shape: f32[2,256,4], index: 0, kind: input, shape index: {}]
  %s1 = inlined_call_operand.vmem [shape: f32[1,4], index: 1, kind: input, shape index: {}]
  %s2 = inlined_call_operand.vmem [shape: f32[1,4], index: 2, kind: input, shape index: {}]
  %s3 = inlined_call_operand.vmem [shape: bf16[36,8], index: 3, kind: input, shape index: {}]
  %s4 = inlined_call_operand.vmem [shape: f32[1,8], index: 4, kind: input, shape index: {}]
  %s5 = inlined_call_operand.vmem [shape: f32[1,8], index: 5, kind: input, shape index: {}]
  %s6 = inlined_call_operand.vmem [shape: bf16[72,8], index: 6, kind: input, shape index: {}]
  %s7 = inlined_call_operand.vmem [shape: bf16[4,8], index: 7, kind: input, shape index: {}]
  %s8 = inlined_call_operand.vmem [shape: f32[2,256,8], index: 8, kind: output, shape index: {}]
  %s9 = sld [smem:[#allocation0]]
  $region65: #{tpu_custom_call.1} parent=0
    _
  %s11 = ssub.s32 1, %s9
  %s12 = scalar_select 0, %s11, %s9
  loop: start=0, step=1, limit=4
  $region2: #{tpu_custom_call.1} parent=0 // loop_pre_header
    _
  $region3: #{tpu_custom_call.1} parent=0 // loop_header
    %s14 = sphi 0, %s18
    %p15 = scmp.ge.s32.totalorder %s14, 4
    %s24 = sphi 0, %s26
    %s27 = sphi 0, %s24
    %s28 = sphi 0, %s27
    %s44 = sphi 0, %s28
    %s48 = sphi 0, %s48
    %s50 = sphi 0, %s48
    %s51 = sphi 0, %s50
    %s65 = sphi 0, %s51
    %s69 = sphi 0, %s69
    %s71 = sphi 0, %s69
    %s72 = sphi 0, %s71
    %s86 = sphi 0, %s72
    %s90 = sphi 0, %s90
    %s92 = sphi 0, %s90
    %s93 = sphi 0, %s92
    %s107 = sphi 0, %s93
    %s111 = sphi 0, %s111
    %s113 = sphi 0, %s111
    %s114 = sphi 0, %s113
    %s128 = sphi 0, %s114
    %s132 = sphi 0, %s132
    %s134 = sphi 0, %s132
    %s135 = sphi 0, %s134
    %s149 = sphi 0, %s135
    %s153 = sphi 0, %s153
    %s155 = sphi 0, %s153
    %s156 = sphi 0, %s155
    %s170 = sphi 0, %s156
    %s174 = sphi 0, %s174
    %s176 = sphi 0, %s174
    %s177 = sphi 0, %s176
    %s191 = sphi 0, %s177
    %s197 = sphi 0, %s199
    %s200 = sphi 0, %s197
    %s201 = sphi 0, %s200
    %s217 = sphi 0, %s201
  $region4: #{tpu_custom_call.1} parent=0 // loop_header_branch
    %17 = sbr.rel (%p15) target = $region8
  $region5: #{tpu_custom_call.1} parent=0 // loop_body
    %s19 = ssub.s32 %s14, 1
    %s20 = ssub.s32 %s14, 2
    %s21 = sadd.s32 %s14, 1
    %s22 = ssub.s32 %s14, %s21
    %p23 = scmp.eq.s32.totalorder %s22, 0
    %s25 = sadd.s32 %s24, 1
    %s26 = scalar_select %p23, %s24, %s25
    %p29 = pneg %p23
    %p30 = scmp.eq.s32.totalorder %s14, 1
    %p31 = por %p29, %p30
    %p32 = scmp.ne.s32.totalorder %s24, %s27
    %p33 = scmp.eq.s32.totalorder %s14, 0
    %p34 = por %p32, %p33
    %p35 = scmp.ne.s32.totalorder %s24, %s27
    %p36 = scmp.eq.s32.totalorder %s19, 1
    %p37 = por %p35, %p36
    %p38 = scmp.ne.s32.totalorder %s27, %s28
    %p39 = scmp.eq.s32.totalorder %s19, 0
    %p40 = por %p38, %p39
    %p41 = scmp.ne.s32.totalorder %s27, %s28
    %p42 = scmp.eq.s32.totalorder %s20, 1
    %p43 = por %p41, %p42
    %p45 = scmp.ne.s32.totalorder %s28, %s44
    %p46 = scmp.eq.s32.totalorder %s20, 0
    %p47 = por %p45, %p46
    %s49 = sadd.s32 %s48, 1
    %p52 = scmp.eq.s32.totalorder %s14, 1
    %p53 = scmp.ne.s32.totalorder %s48, %s50
    %p54 = scmp.eq.s32.totalorder %s14, 0
    %p55 = por %p53, %p54
    %p56 = scmp.ne.s32.totalorder %s48, %s50
    %p57 = scmp.eq.s32.totalorder %s19, 1
    %p58 = por %p56, %p57
    %p59 = scmp.ne.s32.totalorder %s50, %s51
    %p60 = scmp.eq.s32.totalorder %s19, 0
    %p61 = por %p59, %p60
    %p62 = scmp.ne.s32.totalorder %s50, %s51
    %p63 = scmp.eq.s32.totalorder %s20, 1
    %p64 = por %p62, %p63
    %p66 = scmp.ne.s32.totalorder %s51, %s65
    %p67 = scmp.eq.s32.totalorder %s20, 0
    %p68 = por %p66, %p67
    %s70 = sadd.s32 %s69, 1
    %p73 = scmp.eq.s32.totalorder %s14, 1
    %p74 = scmp.ne.s32.totalorder %s69, %s71
    %p75 = scmp.eq.s32.totalorder %s14, 0
    %p76 = por %p74, %p75
    %p77 = scmp.ne.s32.totalorder %s69, %s71
    %p78 = scmp.eq.s32.totalorder %s19, 1
    %p79 = por %p77, %p78
    %p80 = scmp.ne.s32.totalorder %s71, %s72
    %p81 = scmp.eq.s32.totalorder %s19, 0
    %p82 = por %p80, %p81
    %p83 = scmp.ne.s32.totalorder %s71, %s72
    %p84 = scmp.eq.s32.totalorder %s20, 1
    %p85 = por %p83, %p84
    %p87 = scmp.ne.s32.totalorder %s72, %s86
    %p88 = scmp.eq.s32.totalorder %s20, 0
    %p89 = por %p87, %p88
    %s91 = sadd.s32 %s90, 1
    %p94 = scmp.eq.s32.totalorder %s14, 1
    %p95 = scmp.ne.s32.totalorder %s90, %s92
    %p96 = scmp.eq.s32.totalorder %s14, 0
    %p97 = por %p95, %p96
    %p98 = scmp.ne.s32.totalorder %s90, %s92
    %p99 = scmp.eq.s32.totalorder %s19, 1
    %p100 = por %p98, %p99
    %p101 = scmp.ne.s32.totalorder %s92, %s93
    %p102 = scmp.eq.s32.totalorder %s19, 0
    %p103 = por %p101, %p102
    %p104 = scmp.ne.s32.totalorder %s92, %s93
    %p105 = scmp.eq.s32.totalorder %s20, 1
    %p106 = por %p104, %p105
    %p108 = scmp.ne.s32.totalorder %s93, %s107
    %p109 = scmp.eq.s32.totalorder %s20, 0
    %p110 = por %p108, %p109
    %s112 = sadd.s32 %s111, 1
    %p115 = scmp.eq.s32.totalorder %s14, 1
    %p116 = scmp.ne.s32.totalorder %s111, %s113
    %p117 = scmp.eq.s32.totalorder %s14, 0
    %p118 = por %p116, %p117
    %p119 = scmp.ne.s32.totalorder %s111, %s113
    %p120 = scmp.eq.s32.totalorder %s19, 1
    %p121 = por %p119, %p120
    %p122 = scmp.ne.s32.totalorder %s113, %s114
    %p123 = scmp.eq.s32.totalorder %s19, 0
    %p124 = por %p122, %p123
    %p125 = scmp.ne.s32.totalorder %s113, %s114
    %p126 = scmp.eq.s32.totalorder %s20, 1
    %p127 = por %p125, %p126
    %p129 = scmp.ne.s32.totalorder %s114, %s128
    %p130 = scmp.eq.s32.totalorder %s20, 0
    %p131 = por %p129, %p130
    %s133 = sadd.s32 %s132, 1
    %p136 = scmp.eq.s32.totalorder %s14, 1
    %p137 = scmp.ne.s32.totalorder %s132, %s134
    %p138 = scmp.eq.s32.totalorder %s14, 0
    %p139 = por %p137, %p138
    %p140 = scmp.ne.s32.totalorder %s132, %s134
    %p141 = scmp.eq.s32.totalorder %s19, 1
    %p142 = por %p140, %p141
    %p143 = scmp.ne.s32.totalorder %s134, %s135
    %p144 = scmp.eq.s32.totalorder %s19, 0
    %p145 = por %p143, %p144
    %p146 = scmp.ne.s32.totalorder %s134, %s135
    %p147 = scmp.eq.s32.totalorder %s20, 1
    %p148 = por %p146, %p147
    %p150 = scmp.ne.s32.totalorder %s135, %s149
    %p151 = scmp.eq.s32.totalorder %s20, 0
    %p152 = por %p150, %p151
    %s154 = sadd.s32 %s153, 1
    %p157 = scmp.eq.s32.totalorder %s14, 1
    %p158 = scmp.ne.s32.totalorder %s153, %s155
    %p159 = scmp.eq.s32.totalorder %s14, 0
    %p160 = por %p158, %p159
    %p161 = scmp.ne.s32.totalorder %s153, %s155
    %p162 = scmp.eq.s32.totalorder %s19, 1
    %p163 = por %p161, %p162
    %p164 = scmp.ne.s32.totalorder %s155, %s156
    %p165 = scmp.eq.s32.totalorder %s19, 0
    %p166 = por %p164, %p165
    %p167 = scmp.ne.s32.totalorder %s155, %s156
    %p168 = scmp.eq.s32.totalorder %s20, 1
    %p169 = por %p167, %p168
    %p171 = scmp.ne.s32.totalorder %s156, %s170
    %p172 = scmp.eq.s32.totalorder %s20, 0
    %p173 = por %p171, %p172
    %s175 = sadd.s32 %s174, 1
    %p178 = scmp.eq.s32.totalorder %s14, 1
    %p179 = scmp.ne.s32.totalorder %s174, %s176
    %p180 = scmp.eq.s32.totalorder %s14, 0
    %p181 = por %p179, %p180
    %p182 = scmp.ne.s32.totalorder %s174, %s176
    %p183 = scmp.eq.s32.totalorder %s19, 1
    %p184 = por %p182, %p183
    %p185 = scmp.ne.s32.totalorder %s176, %s177
    %p186 = scmp.eq.s32.totalorder %s19, 0
    %p187 = por %p185, %p186
    %p188 = scmp.ne.s32.totalorder %s176, %s177
    %p189 = scmp.eq.s32.totalorder %s20, 1
    %p190 = por %p188, %p189
    %p192 = scmp.ne.s32.totalorder %s177, %s191
    %p193 = scmp.eq.s32.totalorder %s20, 0
    %p194 = por %p192, %p193
    %s195 = ssub.s32 %s14, %s21
    %p196 = scmp.eq.s32.totalorder %s195, 0
    %s198 = sadd.s32 %s197, 1
    %s199 = scalar_select %p196, %s197, %s198
    %p202 = pneg %p196
    %p203 = scmp.eq.s32.totalorder %s14, 1
    %p204 = por %p202, %p203
    %p205 = scmp.ne.s32.totalorder %s197, %s200
    %p206 = scmp.eq.s32.totalorder %s14, 0
    %p207 = por %p205, %p206
    %p208 = scmp.ne.s32.totalorder %s197, %s200
    %p209 = scmp.eq.s32.totalorder %s19, 1
    %p210 = por %p208, %p209
    %p211 = scmp.ne.s32.totalorder %s200, %s201
    %p212 = scmp.eq.s32.totalorder %s19, 0
    %p213 = por %p211, %p212
    %p214 = scmp.ne.s32.totalorder %s200, %s201
    %p215 = scmp.eq.s32.totalorder %s20, 1
    %p216 = por %p214, %p215
    %p218 = scmp.ne.s32.totalorder %s201, %s217
    %p219 = scmp.eq.s32.totalorder %s20, 0
    %p220 = por %p218, %p219
    %p221 = scmp.le.s32.totalorder 1, %s14
    %p222 = scmp.lt.s32.totalorder %s14, 3
    %p223 = pnand %p221, %p222
    %p224 = pneg %p223
    // Predicated region
    $region9: #{tpu_custom_call.1} parent=5 // pred_check
      _
    $region10: #{tpu_custom_call.1} parent=5 // pred_check_branch
      %226 = sbr.rel (%p223) target = $region12
    $region11: #{tpu_custom_call.1} parent=5 // pred_region
      %s227 = ssub.s32 %s14, 1
      // Predicated region
      $region13: #{tpu_custom_call.1} parent=11 // pred_check
        %p228 = pneg %p61
      $region14: #{tpu_custom_call.1} parent=11 // pred_check_branch
        %230 = sbr.rel (%p228) target = $region16
      $region15: #{tpu_custom_call.1} parent=11 // pred_region
        _
      $region16: #{tpu_custom_call.1} parent=11 // pred_fallthru
        _
      // Predicated region
      $region17: #{tpu_custom_call.1} parent=11 // pred_check
        %p231 = pneg %p82
      $region18: #{tpu_custom_call.1} parent=11 // pred_check_branch
        %233 = sbr.rel (%p231) target = $region20
      $region19: #{tpu_custom_call.1} parent=11 // pred_region
        _
      $region20: #{tpu_custom_call.1} parent=11 // pred_fallthru
        _
      // Predicated region
      $region21: #{tpu_custom_call.1} parent=11 // pred_check
        %p234 = pneg %p103
      $region22: #{tpu_custom_call.1} parent=11 // pred_check_branch
        %236 = sbr.rel (%p234) target = $region24
      $region23: #{tpu_custom_call.1} parent=11 // pred_region
        _
      $region24: #{tpu_custom_call.1} parent=11 // pred_fallthru
        _
      // Predicated region
      $region25: #{tpu_custom_call.1} parent=11 // pred_check
        %p237 = pneg %p124
      $region26: #{tpu_custom_call.1} parent=11 // pred_check_branch
        %239 = sbr.rel (%p237) target = $region28
      $region27: #{tpu_custom_call.1} parent=11 // pred_region
        _
      $region28: #{tpu_custom_call.1} parent=11 // pred_fallthru
        _
      // Predicated region
      $region29: #{tpu_custom_call.1} parent=11 // pred_check
        %p240 = pneg %p145
      $region30: #{tpu_custom_call.1} parent=11 // pred_check_branch
        %242 = sbr.rel (%p240) target = $region32
      $region31: #{tpu_custom_call.1} parent=11 // pred_region
        _
      $region32: #{tpu_custom_call.1} parent=11 // pred_fallthru
        _
      // Predicated region
      $region33: #{tpu_custom_call.1} parent=11 // pred_check
        %p243 = pneg %p166
      $region34: #{tpu_custom_call.1} parent=11 // pred_check_branch
        %245 = sbr.rel (%p243) target = $region36
      $region35: #{tpu_custom_call.1} parent=11 // pred_region
        _
      $region36: #{tpu_custom_call.1} parent=11 // pred_fallthru
        _
      // Predicated region
      $region37: #{tpu_custom_call.1} parent=11 // pred_check
        %p246 = pneg %p187
      $region38: #{tpu_custom_call.1} parent=11 // pred_check_branch
        %248 = sbr.rel (%p246) target = $region40
      $region39: #{tpu_custom_call.1} parent=11 // pred_region
        _
      $region40: #{tpu_custom_call.1} parent=11 // pred_fallthru
        _
    $region12: #{tpu_custom_call.1} parent=5 // pred_fallthru
      _
    %p249 = scmp.lt.s32.totalorder %s14, 2
    // Predicated region
    $region41: #{tpu_custom_call.1} parent=5 // pred_check
      %p250 = pneg %p249
    $region42: #{tpu_custom_call.1} parent=5 // pred_check_branch
      %252 = sbr.rel (%p250) target = $region44
    $region43: #{tpu_custom_call.1} parent=5 // pred_region
      // Predicated region
      $region45: #{tpu_custom_call.1} parent=43 // pred_check
        %p253 = pneg %p34
      $region46: #{tpu_custom_call.1} parent=43 // pred_check_branch
        %255 = sbr.rel (%p253) target = $region48
      $region47: #{tpu_custom_call.1} parent=43 // pred_region
        %p256 = scmp.lt.s32.totalorder %s14, 1
        %s257 = scalar_select %p256, %s14, 1
        %s258 = smul.addr %s257, 32
        %s259 = smul.addr %s258, 8
        %s260 = scalar_lea.vmem %s0, %s259
      $region48: #{tpu_custom_call.1} parent=43 // pred_fallthru
        _
    $region44: #{tpu_custom_call.1} parent=5 // pred_fallthru
      _
    %p261 = scmp.le.s32.totalorder 1, %s14
    %p262 = scmp.lt.s32.totalorder %s14, 3
    %p263 = pnand %p261, %p262
    %p264 = pneg %p263
    // Predicated region
    $region49: #{tpu_custom_call.1} parent=5 // pred_check
      _
    $region50: #{tpu_custom_call.1} parent=5 // pred_check_branch
      %266 = sbr.rel (%p263) target = $region52
    $region51: #{tpu_custom_call.1} parent=5 // pred_region
      %s267 = ssub.s32 %s14, 1
      %p268 = scmp.lt.s32.totalorder %s19, 1
      %s269 = scalar_select %p268, %s19, 1
      %s270 = smul.addr %s269, 32
      %s271 = smul.addr %s270, 8
      %s272 = scalar_lea.vmem %s0, %s271
      %p273 = pneg %p40
      %p274 = pneg %p37
      %p275 = pneg %p61
      %p276 = pneg %p58
      %p277 = pneg %p82
      %p278 = pneg %p79
      %p279 = pneg %p103
      %p280 = pneg %p100
      %p281 = pneg %p124
      %p282 = pneg %p121
      %p283 = pneg %p145
      %p284 = pneg %p142
      %p285 = pneg %p166
      %p286 = pneg %p163
      %p287 = pneg %p187
      %p288 = pneg %p184
      %p289 = pneg %p213
      %p290 = pneg %p210
      %p291 = scmp.lt.s32.totalorder %s19, 1
      %s292 = scalar_select %p291, %s19, 1
      %s293 = smul.addr %s292, 32
      %s294 = smul.addr %s293, 8
      %s295 = scalar_lea.vmem %s8, %s294
      %p296 = scmp.lt.s32.totalorder %s19, 1
      %s297 = scalar_select %p296, %s19, 1
      %s298 = smul.addr %s297, 32
      %s299 = smul.addr %s298, 8
      %s300 = scalar_lea.vmem %s0, %s299
      %p301 = scmp.lt.s32.totalorder %s19, 1
      %s302 = scalar_select %p301, %s19, 1
      %s303 = smul.addr %s302, 32
      %s304 = smul.addr %s303, 8
      %s305 = scalar_lea.vmem %s8, %s304
      %v309 = vlaneseq
      %v310 = vshrl.u32 %v309, 7
      %v311 = vadd.s32 %v310, 8
      %v312 = vadd.s32 %v310, 16
      %v313 = vadd.s32 %v310, 24
      %v314 = vadd.s32 %v310, 32
      %v315 = vadd.s32 %v310, 40
      %v316 = vadd.s32 %v310, 48
      %v317 = vadd.s32 %v310, 56
      %v318 = vadd.s32 %v310, 64
      %v319 = vadd.s32 %v310, 72
      %v320 = vadd.s32 %v310, 80
      %v321 = vadd.s32 %v310, 88
      %v322 = vadd.s32 %v310, 96
      %v323 = vadd.s32 %v310, 104
      %v324 = vadd.s32 %v310, 112
      %v325 = vadd.s32 %v310, 120
      %v326 = vadd.s32 %v310, 128
      %v327 = vadd.s32 %v310, 136
      %v328 = vadd.s32 %v310, 144
      %v329 = vadd.s32 %v310, 152
      %v330 = vadd.s32 %v310, 160
      %v331 = vadd.s32 %v310, 168
      %v332 = vadd.s32 %v310, 176
      %v333 = vadd.s32 %v310, 184
      %v334 = vadd.s32 %v310, 192
      %v335 = vadd.s32 %v310, 200
      %v336 = vadd.s32 %v310, 208
      %v337 = vadd.s32 %v310, 216
      %v338 = vadd.s32 %v310, 224
      %v339 = vadd.s32 %v310, 232
      %v340 = vadd.s32 %v310, 240
      %v341 = vadd.s32 %v310, 248
      %vm342 = vcmp.lt.s32.totalorder %v310, 0
      %v343 = vsub.s32 0, %v310
      %v344 = vsel %vm342, %v343, %v310
      %v345 = vshrl.u32 %v344, 4
      %v346 = vand.u32 %v344, 15
      %v347 = vsub.s32 0, %v346
      %v348 = vsel %vm342, %v347, %v346
      %vm349 = vcmp.lt.s32.totalorder %v311, 0
      %v350 = vsub.s32 0, %v311
      %v351 = vsel %vm349, %v350, %v311
      %v352 = vshrl.u32 %v351, 4
      %v353 = vand.u32 %v351, 15
      %v354 = vsub.s32 0, %v353
      %v355 = vsel %vm349, %v354, %v353
      %vm356 = vcmp.lt.s32.totalorder %v312, 0
      %v357 = vsub.s32 0, %v312
      %v358 = vsel %vm356, %v357, %v312
      %v359 = vshrl.u32 %v358, 4
      %v360 = vand.u32 %v358, 15
      %v361 = vsub.s32 0, %v360
      %v362 = vsel %vm356, %v361, %v360
      %vm363 = vcmp.lt.s32.totalorder %v313, 0
      %v364 = vsub.s32 0, %v313
      %v365 = vsel %vm363, %v364, %v313
      %v366 = vshrl.u32 %v365, 4
      %v367 = vand.u32 %v365, 15
      %v368 = vsub.s32 0, %v367
      %v369 = vsel %vm363, %v368, %v367
      %vm370 = vcmp.lt.s32.totalorder %v314, 0
      %v371 = vsub.s32 0, %v314
      %v372 = vsel %vm370, %v371, %v314
      %v373 = vshrl.u32 %v372, 4
      %v374 = vand.u32 %v372, 15
      %v375 = vsub.s32 0, %v374
      %v376 = vsel %vm370, %v375, %v374
      %vm377 = vcmp.lt.s32.totalorder %v315, 0
      %v378 = vsub.s32 0, %v315
      %v379 = vsel %vm377, %v378, %v315
      %v380 = vshrl.u32 %v379, 4
      %v381 = vand.u32 %v379, 15
      %v382 = vsub.s32 0, %v381
      %v383 = vsel %vm377, %v382, %v381
      %vm384 = vcmp.lt.s32.totalorder %v316, 0
      %v385 = vsub.s32 0, %v316
      %v386 = vsel %vm384, %v385, %v316
      %v387 = vshrl.u32 %v386, 4
      %v388 = vand.u32 %v386, 15
      %v389 = vsub.s32 0, %v388
      %v390 = vsel %vm384, %v389, %v388
      %vm391 = vcmp.lt.s32.totalorder %v317, 0
      %v392 = vsub.s32 0, %v317
      %v393 = vsel %vm391, %v392, %v317
      %v394 = vshrl.u32 %v393, 4
      %v395 = vand.u32 %v393, 15
      %v396 = vsub.s32 0, %v395
      %v397 = vsel %vm391, %v396, %v395
      %vm398 = vcmp.lt.s32.totalorder %v318, 0
      %v399 = vsub.s32 0, %v318
      %v400 = vsel %vm398, %v399, %v318
      %v401 = vshrl.u32 %v400, 4
      %v402 = vand.u32 %v400, 15
      %v403 = vsub.s32 0, %v402
      %v404 = vsel %vm398, %v403, %v402
      %vm405 = vcmp.lt.s32.totalorder %v319, 0
      %v406 = vsub.s32 0, %v319
      %v407 = vsel %vm405, %v406, %v319
      %v408 = vshrl.u32 %v407, 4
      %v409 = vand.u32 %v407, 15
      %v410 = vsub.s32 0, %v409
      %v411 = vsel %vm405, %v410, %v409
      %vm412 = vcmp.lt.s32.totalorder %v320, 0
      %v413 = vsub.s32 0, %v320
      %v414 = vsel %vm412, %v413, %v320
      %v415 = vshrl.u32 %v414, 4
      %v416 = vand.u32 %v414, 15
      %v417 = vsub.s32 0, %v416
      %v418 = vsel %vm412, %v417, %v416
      %vm419 = vcmp.lt.s32.totalorder %v321, 0
      %v420 = vsub.s32 0, %v321
      %v421 = vsel %vm419, %v420, %v321
      %v422 = vshrl.u32 %v421, 4
      %v423 = vand.u32 %v421, 15
      %v424 = vsub.s32 0, %v423
      %v425 = vsel %vm419, %v424, %v423
      %vm426 = vcmp.lt.s32.totalorder %v322, 0
      %v427 = vsub.s32 0, %v322
      %v428 = vsel %vm426, %v427, %v322
      %v429 = vshrl.u32 %v428, 4
      %v430 = vand.u32 %v428, 15
      %v431 = vsub.s32 0, %v430
      %v432 = vsel %vm426, %v431, %v430
      %vm433 = vcmp.lt.s32.totalorder %v323, 0
      %v434 = vsub.s32 0, %v323
      %v435 = vsel %vm433, %v434, %v323
      %v436 = vshrl.u32 %v435, 4
      %v437 = vand.u32 %v435, 15
      %v438 = vsub.s32 0, %v437
      %v439 = vsel %vm433, %v438, %v437
      %vm440 = vcmp.lt.s32.totalorder %v324, 0
      %v441 = vsub.s32 0, %v324
      %v442 = vsel %vm440, %v441, %v324
      %v443 = vshrl.u32 %v442, 4
      %v444 = vand.u32 %v442, 15
      %v445 = vsub.s32 0, %v444
      %v446 = vsel %vm440, %v445, %v444
      %vm447 = vcmp.lt.s32.totalorder %v325, 0
      %v448 = vsub.s32 0, %v325
      %v449 = vsel %vm447, %v448, %v325
      %v450 = vshrl.u32 %v449, 4
      %v451 = vand.u32 %v449, 15
      %v452 = vsub.s32 0, %v451
      %v453 = vsel %vm447, %v452, %v451
      %vm454 = vcmp.lt.s32.totalorder %v326, 0
      %v455 = vsub.s32 0, %v326
      %v456 = vsel %vm454, %v455, %v326
      %v457 = vshrl.u32 %v456, 4
      %v458 = vand.u32 %v456, 15
      %v459 = vsub.s32 0, %v458
      %v460 = vsel %vm454, %v459, %v458
      %vm461 = vcmp.lt.s32.totalorder %v327, 0
      %v462 = vsub.s32 0, %v327
      %v463 = vsel %vm461, %v462, %v327
      %v464 = vshrl.u32 %v463, 4
      %v465 = vand.u32 %v463, 15
      %v466 = vsub.s32 0, %v465
      %v467 = vsel %vm461, %v466, %v465
      %vm468 = vcmp.lt.s32.totalorder %v328, 0
      %v469 = vsub.s32 0, %v328
      %v470 = vsel %vm468, %v469, %v328
      %v471 = vshrl.u32 %v470, 4
      %v472 = vand.u32 %v470, 15
      %v473 = vsub.s32 0, %v472
      %v474 = vsel %vm468, %v473, %v472
      %vm475 = vcmp.lt.s32.totalorder %v329, 0
      %v476 = vsub.s32 0, %v329
      %v477 = vsel %vm475, %v476, %v329
      %v478 = vshrl.u32 %v477, 4
      %v479 = vand.u32 %v477, 15
      %v480 = vsub.s32 0, %v479
      %v481 = vsel %vm475, %v480, %v479
      %vm482 = vcmp.lt.s32.totalorder %v330, 0
      %v483 = vsub.s32 0, %v330
      %v484 = vsel %vm482, %v483, %v330
      %v485 = vshrl.u32 %v484, 4
      %v486 = vand.u32 %v484, 15
      %v487 = vsub.s32 0, %v486
      %v488 = vsel %vm482, %v487, %v486
      %vm489 = vcmp.lt.s32.totalorder %v331, 0
      %v490 = vsub.s32 0, %v331
      %v491 = vsel %vm489, %v490, %v331
      %v492 = vshrl.u32 %v491, 4
      %v493 = vand.u32 %v491, 15
      %v494 = vsub.s32 0, %v493
      %v495 = vsel %vm489, %v494, %v493
      %vm496 = vcmp.lt.s32.totalorder %v332, 0
      %v497 = vsub.s32 0, %v332
      %v498 = vsel %vm496, %v497, %v332
      %v499 = vshrl.u32 %v498, 4
      %v500 = vand.u32 %v498, 15
      %v501 = vsub.s32 0, %v500
      %v502 = vsel %vm496, %v501, %v500
      %vm503 = vcmp.lt.s32.totalorder %v333, 0
      %v504 = vsub.s32 0, %v333
      %v505 = vsel %vm503, %v504, %v333
      %v506 = vshrl.u32 %v505, 4
      %v507 = vand.u32 %v505, 15
      %v508 = vsub.s32 0, %v507
      %v509 = vsel %vm503, %v508, %v507
      %vm510 = vcmp.lt.s32.totalorder %v334, 0
      %v511 = vsub.s32 0, %v334
      %v512 = vsel %vm510, %v511, %v334
      %v513 = vshrl.u32 %v512, 4
      %v514 = vand.u32 %v512, 15
      %v515 = vsub.s32 0, %v514
      %v516 = vsel %vm510, %v515, %v514
      %vm517 = vcmp.lt.s32.totalorder %v335, 0
      %v518 = vsub.s32 0, %v335
      %v519 = vsel %vm517, %v518, %v335
      %v520 = vshrl.u32 %v519, 4
      %v521 = vand.u32 %v519, 15
      %v522 = vsub.s32 0, %v521
      %v523 = vsel %vm517, %v522, %v521
      %vm524 = vcmp.lt.s32.totalorder %v336, 0
      %v525 = vsub.s32 0, %v336
      %v526 = vsel %vm524, %v525, %v336
      %v527 = vshrl.u32 %v526, 4
      %v528 = vand.u32 %v526, 15
      %v529 = vsub.s32 0, %v528
      %v530 = vsel %vm524, %v529, %v528
      %vm531 = vcmp.lt.s32.totalorder %v337, 0
      %v532 = vsub.s32 0, %v337
      %v533 = vsel %vm531, %v532, %v337
      %v534 = vshrl.u32 %v533, 4
      %v535 = vand.u32 %v533, 15
      %v536 = vsub.s32 0, %v535
      %v537 = vsel %vm531, %v536, %v535
      %vm538 = vcmp.lt.s32.totalorder %v338, 0
      %v539 = vsub.s32 0, %v338
      %v540 = vsel %vm538, %v539, %v338
      %v541 = vshrl.u32 %v540, 4
      %v542 = vand.u32 %v540, 15
      %v543 = vsub.s32 0, %v542
      %v544 = vsel %vm538, %v543, %v542
      %vm545 = vcmp.lt.s32.totalorder %v339, 0
      %v546 = vsub.s32 0, %v339
      %v547 = vsel %vm545, %v546, %v339
      %v548 = vshrl.u32 %v547, 4
      %v549 = vand.u32 %v547, 15
      %v550 = vsub.s32 0, %v549
      %v551 = vsel %vm545, %v550, %v549
      %vm552 = vcmp.lt.s32.totalorder %v340, 0
      %v553 = vsub.s32 0, %v340
      %v554 = vsel %vm552, %v553, %v340
      %v555 = vshrl.u32 %v554, 4
      %v556 = vand.u32 %v554, 15
      %v557 = vsub.s32 0, %v556
      %v558 = vsel %vm552, %v557, %v556
      %vm559 = vcmp.lt.s32.totalorder %v341, 0
      %v560 = vsub.s32 0, %v341
      %v561 = vsel %vm559, %v560, %v341
      %v562 = vshrl.u32 %v561, 4
      %v563 = vand.u32 %v561, 15
      %v564 = vsub.s32 0, %v563
      %v565 = vsel %vm559, %v564, %v563
      %vm566 = vcmp.ne.s32.totalorder %v348, 0
      %vm567 = vcmp.ne.s32.totalorder %v355, 0
      %vm568 = vcmp.ne.s32.totalorder %v362, 0
      %vm569 = vcmp.ne.s32.totalorder %v369, 0
      %vm570 = vcmp.ne.s32.totalorder %v376, 0
      %vm571 = vcmp.ne.s32.totalorder %v383, 0
      %vm572 = vcmp.ne.s32.totalorder %v390, 0
      %vm573 = vcmp.ne.s32.totalorder %v397, 0
      %vm574 = vcmp.ne.s32.totalorder %v404, 0
      %vm575 = vcmp.ne.s32.totalorder %v411, 0
      %vm576 = vcmp.ne.s32.totalorder %v418, 0
      %vm577 = vcmp.ne.s32.totalorder %v425, 0
      %vm578 = vcmp.ne.s32.totalorder %v432, 0
      %vm579 = vcmp.ne.s32.totalorder %v439, 0
      %vm580 = vcmp.ne.s32.totalorder %v446, 0
      %vm581 = vcmp.ne.s32.totalorder %v453, 0
      %vm582 = vcmp.ne.s32.totalorder %v460, 0
      %vm583 = vcmp.ne.s32.totalorder %v467, 0
      %vm584 = vcmp.ne.s32.totalorder %v474, 0
      %vm585 = vcmp.ne.s32.totalorder %v481, 0
      %vm586 = vcmp.ne.s32.totalorder %v488, 0
      %vm587 = vcmp.ne.s32.totalorder %v495, 0
      %vm588 = vcmp.ne.s32.totalorder %v502, 0
      %vm589 = vcmp.ne.s32.totalorder %v509, 0
      %vm590 = vcmp.ne.s32.totalorder %v516, 0
      %vm591 = vcmp.ne.s32.totalorder %v523, 0
      %vm592 = vcmp.ne.s32.totalorder %v530, 0
      %vm593 = vcmp.ne.s32.totalorder %v537, 0
      %vm594 = vcmp.ne.s32.totalorder %v544, 0
      %vm595 = vcmp.ne.s32.totalorder %v551, 0
      %vm596 = vcmp.ne.s32.totalorder %v558, 0
      %vm597 = vcmp.ne.s32.totalorder %v565, 0
      %vm598 = vcmp.lt.s32.totalorder %v348, 0
      %vm599 = vcmp.lt.s32.totalorder %v355, 0
      %vm600 = vcmp.lt.s32.totalorder %v362, 0
      %vm601 = vcmp.lt.s32.totalorder %v369, 0
      %vm602 = vcmp.lt.s32.totalorder %v376, 0
      %vm603 = vcmp.lt.s32.totalorder %v383, 0
      %vm604 = vcmp.lt.s32.totalorder %v390, 0
      %vm605 = vcmp.lt.s32.totalorder %v397, 0
      %vm606 = vcmp.lt.s32.totalorder %v404, 0
      %vm607 = vcmp.lt.s32.totalorder %v411, 0
      %vm608 = vcmp.lt.s32.totalorder %v418, 0
      %vm609 = vcmp.lt.s32.totalorder %v425, 0
      %vm610 = vcmp.lt.s32.totalorder %v432, 0
      %vm611 = vcmp.lt.s32.totalorder %v439, 0
      %vm612 = vcmp.lt.s32.totalorder %v446, 0
      %vm613 = vcmp.lt.s32.totalorder %v453, 0
      %vm614 = vcmp.lt.s32.totalorder %v460, 0
      %vm615 = vcmp.lt.s32.totalorder %v467, 0
      %vm616 = vcmp.lt.s32.totalorder %v474, 0
      %vm617 = vcmp.lt.s32.totalorder %v481, 0
      %vm618 = vcmp.lt.s32.totalorder %v488, 0
      %vm619 = vcmp.lt.s32.totalorder %v495, 0
      %vm620 = vcmp.lt.s32.totalorder %v502, 0
      %vm621 = vcmp.lt.s32.totalorder %v509, 0
      %vm622 = vcmp.lt.s32.totalorder %v516, 0
      %vm623 = vcmp.lt.s32.totalorder %v523, 0
      %vm624 = vcmp.lt.s32.totalorder %v530, 0
      %vm625 = vcmp.lt.s32.totalorder %v537, 0
      %vm626 = vcmp.lt.s32.totalorder %v544, 0
      %vm627 = vcmp.lt.s32.totalorder %v551, 0
      %vm628 = vcmp.lt.s32.totalorder %v558, 0
      %vm629 = vcmp.lt.s32.totalorder %v565, 0
      %vm630 = vmand %vm598, %vm566
      %vm631 = vmand %vm599, %vm567
      %vm632 = vmand %vm600, %vm568
      %vm633 = vmand %vm601, %vm569
      %vm634 = vmand %vm602, %vm570
      %vm635 = vmand %vm603, %vm571
      %vm636 = vmand %vm604, %vm572
      %vm637 = vmand %vm605, %vm573
      %vm638 = vmand %vm606, %vm574
      %vm639 = vmand %vm607, %vm575
      %vm640 = vmand %vm608, %vm576
      %vm641 = vmand %vm609, %vm577
      %vm642 = vmand %vm610, %vm578
      %vm643 = vmand %vm611, %vm579
      %vm644 = vmand %vm612, %vm580
      %vm645 = vmand %vm613, %vm581
      %vm646 = vmand %vm614, %vm582
      %vm647 = vmand %vm615, %vm583
      %vm648 = vmand %vm616, %vm584
      %vm649 = vmand %vm617, %vm585
      %vm650 = vmand %vm618, %vm586
      %vm651 = vmand %vm619, %vm587
      %vm652 = vmand %vm620, %vm588
      %vm653 = vmand %vm621, %vm589
      %vm654 = vmand %vm622, %vm590
      %vm655 = vmand %vm623, %vm591
      %vm656 = vmand %vm624, %vm592
      %vm657 = vmand %vm625, %vm593
      %vm658 = vmand %vm626, %vm594
      %vm659 = vmand %vm627, %vm595
      %vm660 = vmand %vm628, %vm596
      %vm661 = vmand %vm629, %vm597
      %v662 = vadd.s32 %v348, 16
      %v663 = vadd.s32 %v355, 16
      %v664 = vadd.s32 %v362, 16
      %v665 = vadd.s32 %v369, 16
      %v666 = vadd.s32 %v376, 16
      %v667 = vadd.s32 %v383, 16
      %v668 = vadd.s32 %v390, 16
      %v669 = vadd.s32 %v397, 16
      %v670 = vadd.s32 %v404, 16
      %v671 = vadd.s32 %v411, 16
      %v672 = vadd.s32 %v418, 16
      %v673 = vadd.s32 %v425, 16
      %v674 = vadd.s32 %v432, 16
      %v675 = vadd.s32 %v439, 16
      %v676 = vadd.s32 %v446, 16
      %v677 = vadd.s32 %v453, 16
      %v678 = vadd.s32 %v460, 16
      %v679 = vadd.s32 %v467, 16
      %v680 = vadd.s32 %v474, 16
      %v681 = vadd.s32 %v481, 16
      %v682 = vadd.s32 %v488, 16
      %v683 = vadd.s32 %v495, 16
      %v684 = vadd.s32 %v502, 16
      %v685 = vadd.s32 %v509, 16
      %v686 = vadd.s32 %v516, 16
      %v687 = vadd.s32 %v523, 16
      %v688 = vadd.s32 %v530, 16
      %v689 = vadd.s32 %v537, 16
      %v690 = vadd.s32 %v544, 16
      %v691 = vadd.s32 %v551, 16
      %v692 = vadd.s32 %v558, 16
      %v693 = vadd.s32 %v565, 16
      %v694 = vsel %vm630, %v662, %v348
      %v695 = vsel %vm631, %v663, %v355
      %v696 = vsel %vm632, %v664, %v362
      %v697 = vsel %vm633, %v665, %v369
      %v698 = vsel %vm634, %v666, %v376
      %v699 = vsel %vm635, %v667, %v383
      %v700 = vsel %vm636, %v668, %v390
      %v701 = vsel %vm637, %v669, %v397
      %v702 = vsel %vm638, %v670, %v404
      %v703 = vsel %vm639, %v671, %v411
      %v704 = vsel %vm640, %v672, %v418
      %v705 = vsel %vm641, %v673, %v425
      %v706 = vsel %vm642, %v674, %v432
      %v707 = vsel %vm643, %v675, %v439
      %v708 = vsel %vm644, %v676, %v446
      %v709 = vsel %vm645, %v677, %v453
      %v710 = vsel %vm646, %v678, %v460
      %v711 = vsel %vm647, %v679, %v467
      %v712 = vsel %vm648, %v680, %v474
      %v713 = vsel %vm649, %v681, %v481
      %v714 = vsel %vm650, %v682, %v488
      %v715 = vsel %vm651, %v683, %v495
      %v716 = vsel %vm652, %v684, %v502
      %v717 = vsel %vm653, %v685, %v509
      %v718 = vsel %vm654, %v686, %v516
      %v719 = vsel %vm655, %v687, %v523
      %v720 = vsel %vm656, %v688, %v530
      %v721 = vsel %vm657, %v689, %v537
      %v722 = vsel %vm658, %v690, %v544
      %v723 = vsel %vm659, %v691, %v551
      %v724 = vsel %vm660, %v692, %v558
      %v725 = vsel %vm661, %v693, %v565
      %vm726 = vcmp.ge.s32.totalorder %v694, 1
      %vm727 = vcmp.ge.s32.totalorder %v695, 1
      %vm728 = vcmp.ge.s32.totalorder %v696, 1
      %vm729 = vcmp.ge.s32.totalorder %v697, 1
      %vm730 = vcmp.ge.s32.totalorder %v698, 1
      %vm731 = vcmp.ge.s32.totalorder %v699, 1
      %vm732 = vcmp.ge.s32.totalorder %v700, 1
      %vm733 = vcmp.ge.s32.totalorder %v701, 1
      %vm734 = vcmp.ge.s32.totalorder %v702, 1
      %vm735 = vcmp.ge.s32.totalorder %v703, 1
      %vm736 = vcmp.ge.s32.totalorder %v704, 1
      %vm737 = vcmp.ge.s32.totalorder %v705, 1
      %vm738 = vcmp.ge.s32.totalorder %v706, 1
      %vm739 = vcmp.ge.s32.totalorder %v707, 1
      %vm740 = vcmp.ge.s32.totalorder %v708, 1
      %vm741 = vcmp.ge.s32.totalorder %v709, 1
      %vm742 = vcmp.ge.s32.totalorder %v710, 1
      %vm743 = vcmp.ge.s32.totalorder %v711, 1
      %vm744 = vcmp.ge.s32.totalorder %v712, 1
      %vm745 = vcmp.ge.s32.totalorder %v713, 1
      %vm746 = vcmp.ge.s32.totalorder %v714, 1
      %vm747 = vcmp.ge.s32.totalorder %v715, 1
      %vm748 = vcmp.ge.s32.totalorder %v716, 1
      %vm749 = vcmp.ge.s32.totalorder %v717, 1
      %vm750 = vcmp.ge.s32.totalorder %v718, 1
      %vm751 = vcmp.ge.s32.totalorder %v719, 1
      %vm752 = vcmp.ge.s32.totalorder %v720, 1
      %vm753 = vcmp.ge.s32.totalorder %v721, 1
      %vm754 = vcmp.ge.s32.totalorder %v722, 1
      %vm755 = vcmp.ge.s32.totalorder %v723, 1
      %vm756 = vcmp.ge.s32.totalorder %v724, 1
      %vm757 = vcmp.ge.s32.totalorder %v725, 1
      %vm758 = vcmp.lt.s32.totalorder %v694, 15
      %vm759 = vcmp.lt.s32.totalorder %v695, 15
      %vm760 = vcmp.lt.s32.totalorder %v696, 15
      %vm761 = vcmp.lt.s32.totalorder %v697, 15
      %vm762 = vcmp.lt.s32.totalorder %v698, 15
      %vm763 = vcmp.lt.s32.totalorder %v699, 15
      %vm764 = vcmp.lt.s32.totalorder %v700, 15
      %vm765 = vcmp.lt.s32.totalorder %v701, 15
      %vm766 = vcmp.lt.s32.totalorder %v702, 15
      %vm767 = vcmp.lt.s32.totalorder %v703, 15
      %vm768 = vcmp.lt.s32.totalorder %v704, 15
      %vm769 = vcmp.lt.s32.totalorder %v705, 15
      %vm770 = vcmp.lt.s32.totalorder %v706, 15
      %vm771 = vcmp.lt.s32.totalorder %v707, 15
      %vm772 = vcmp.lt.s32.totalorder %v708, 15
      %vm773 = vcmp.lt.s32.totalorder %v709, 15
      %vm774 = vcmp.lt.s32.totalorder %v710, 15
      %vm775 = vcmp.lt.s32.totalorder %v711, 15
      %vm776 = vcmp.lt.s32.totalorder %v712, 15
      %vm777 = vcmp.lt.s32.totalorder %v713, 15
      %vm778 = vcmp.lt.s32.totalorder %v714, 15
      %vm779 = vcmp.lt.s32.totalorder %v715, 15
      %vm780 = vcmp.lt.s32.totalorder %v716, 15
      %vm781 = vcmp.lt.s32.totalorder %v717, 15
      %vm782 = vcmp.lt.s32.totalorder %v718, 15
      %vm783 = vcmp.lt.s32.totalorder %v719, 15
      %vm784 = vcmp.lt.s32.totalorder %v720, 15
      %vm785 = vcmp.lt.s32.totalorder %v721, 15
      %vm786 = vcmp.lt.s32.totalorder %v722, 15
      %vm787 = vcmp.lt.s32.totalorder %v723, 15
      %vm788 = vcmp.lt.s32.totalorder %v724, 15
      %vm789 = vcmp.lt.s32.totalorder %v725, 15
      %v790 = vld [vmem:[%s300] sm:$0xff]
      %v791 = vld [vmem:[%s300 + $0x8] sm:$0xff]
      %v792 = vld [vmem:[%s300 + $0x10] sm:$0xff]
      %v793 = vld [vmem:[%s300 + $0x18] sm:$0xff]
      %v794 = vld [vmem:[%s300 + $0x20] sm:$0xff]
      %v795 = vld [vmem:[%s300 + $0x28] sm:$0xff]
      %v796 = vld [vmem:[%s300 + $0x30] sm:$0xff]
      %v797 = vld [vmem:[%s300 + $0x38] sm:$0xff]
      %v798 = vld [vmem:[%s300 + $0x40] sm:$0xff]
      %v799 = vld [vmem:[%s300 + $0x48] sm:$0xff]
      %v800 = vld [vmem:[%s300 + $0x50] sm:$0xff]
      %v801 = vld [vmem:[%s300 + $0x58] sm:$0xff]
      %v802 = vld [vmem:[%s300 + $0x60] sm:$0xff]
      %v803 = vld [vmem:[%s300 + $0x68] sm:$0xff]
      %v804 = vld [vmem:[%s300 + $0x70] sm:$0xff]
      %v805 = vld [vmem:[%s300 + $0x78] sm:$0xff]
      %v806 = vld [vmem:[%s300 + $0x80] sm:$0xff]
      %v807 = vld [vmem:[%s300 + $0x88] sm:$0xff]
      %v808 = vld [vmem:[%s300 + $0x90] sm:$0xff]
      %v809 = vld [vmem:[%s300 + $0x98] sm:$0xff]
      %v810 = vld [vmem:[%s300 + $0xa0] sm:$0xff]
      %v811 = vld [vmem:[%s300 + $0xa8] sm:$0xff]
      %v812 = vld [vmem:[%s300 + $0xb0] sm:$0xff]
      %v813 = vld [vmem:[%s300 + $0xb8] sm:$0xff]
      %v814 = vld [vmem:[%s300 + $0xc0] sm:$0xff]
      %v815 = vld [vmem:[%s300 + $0xc8] sm:$0xff]
      %v816 = vld [vmem:[%s300 + $0xd0] sm:$0xff]
      %v817 = vld [vmem:[%s300 + $0xd8] sm:$0xff]
      %v818 = vld [vmem:[%s300 + $0xe0] sm:$0xff]
      %v819 = vld [vmem:[%s300 + $0xe8] sm:$0xff]
      %v820 = vld [vmem:[%s300 + $0xf0] sm:$0xff]
      %v821 = vld [vmem:[%s300 + $0xf8] sm:$0xff]
      %v822 = vld [vmem:[%s1] sm:$0x1]
      %v824 = vlaneseq
      %v825 = vshrl.u32 %v824, 7
      %v826 = vsub.s32 0, %v825
      %v827 = vrot.slane %v822, %v826
      %v829 = vmul.f32 %v790, %v827
      %v830 = vmul.f32 %v791, %v827
      %v831 = vmul.f32 %v792, %v827
      %v832 = vmul.f32 %v793, %v827
      %v833 = vmul.f32 %v794, %v827
      %v834 = vmul.f32 %v795, %v827
      %v835 = vmul.f32 %v796, %v827
      %v836 = vmul.f32 %v797, %v827
      %v837 = vmul.f32 %v798, %v827
      %v838 = vmul.f32 %v799, %v827
      %v839 = vmul.f32 %v800, %v827
      %v840 = vmul.f32 %v801, %v827
      %v841 = vmul.f32 %v802, %v827
      %v842 = vmul.f32 %v803, %v827
      %v843 = vmul.f32 %v804, %v827
      %v844 = vmul.f32 %v805, %v827
      %v845 = vmul.f32 %v806, %v827
      %v846 = vmul.f32 %v807, %v827
      %v847 = vmul.f32 %v808, %v827
      %v848 = vmul.f32 %v809, %v827
      %v849 = vmul.f32 %v810, %v827
      %v850 = vmul.f32 %v811, %v827
      %v851 = vmul.f32 %v812, %v827
      %v852 = vmul.f32 %v813, %v827
      %v853 = vmul.f32 %v814, %v827
      %v854 = vmul.f32 %v815, %v827
      %v855 = vmul.f32 %v816, %v827
      %v856 = vmul.f32 %v817, %v827
      %v857 = vmul.f32 %v818, %v827
      %v858 = vmul.f32 %v819, %v827
      %v859 = vmul.f32 %v820, %v827
      %v860 = vmul.f32 %v821, %v827
      %v861 = vld [vmem:[%s2] sm:$0x1]
      %v863 = vlaneseq
      %v864 = vshrl.u32 %v863, 7
      %v865 = vsub.s32 0, %v864
      %v866 = vrot.slane %v861, %v865
      %v868 = vadd.f32 %v829, %v866
      %v869 = vadd.f32 %v830, %v866
      %v870 = vadd.f32 %v831, %v866
      %v871 = vadd.f32 %v832, %v866
      %v872 = vadd.f32 %v833, %v866
      %v873 = vadd.f32 %v834, %v866
      %v874 = vadd.f32 %v835, %v866
      %v875 = vadd.f32 %v836, %v866
      %v876 = vadd.f32 %v837, %v866
      %v877 = vadd.f32 %v838, %v866
      %v878 = vadd.f32 %v839, %v866
      %v879 = vadd.f32 %v840, %v866
      %v880 = vadd.f32 %v841, %v866
      %v881 = vadd.f32 %v842, %v866
      %v882 = vadd.f32 %v843, %v866
      %v883 = vadd.f32 %v844, %v866
      %v884 = vadd.f32 %v845, %v866
      %v885 = vadd.f32 %v846, %v866
      %v886 = vadd.f32 %v847, %v866
      %v887 = vadd.f32 %v848, %v866
      %v888 = vadd.f32 %v849, %v866
      %v889 = vadd.f32 %v850, %v866
      %v890 = vadd.f32 %v851, %v866
      %v891 = vadd.f32 %v852, %v866
      %v892 = vadd.f32 %v853, %v866
      %v893 = vadd.f32 %v854, %v866
      %v894 = vadd.f32 %v855, %v866
      %v895 = vadd.f32 %v856, %v866
      %v896 = vadd.f32 %v857, %v866
      %v897 = vadd.f32 %v858, %v866
      %v898 = vadd.f32 %v859, %v866
      %v899 = vadd.f32 %v860, %v866
      %v900 = vmax.f32 %v868, 0.0
      %v901 = vmax.f32 %v869, 0.0
      %v902 = vmax.f32 %v870, 0.0
      %v903 = vmax.f32 %v871, 0.0
      %v904 = vmax.f32 %v872, 0.0
      %v905 = vmax.f32 %v873, 0.0
      %v906 = vmax.f32 %v874, 0.0
      %v907 = vmax.f32 %v875, 0.0
      %v908 = vmax.f32 %v876, 0.0
      %v909 = vmax.f32 %v877, 0.0
      %v910 = vmax.f32 %v878, 0.0
      %v911 = vmax.f32 %v879, 0.0
      %v912 = vmax.f32 %v880, 0.0
      %v913 = vmax.f32 %v881, 0.0
      %v914 = vmax.f32 %v882, 0.0
      %v915 = vmax.f32 %v883, 0.0
      %v916 = vmax.f32 %v884, 0.0
      %v917 = vmax.f32 %v885, 0.0
      %v918 = vmax.f32 %v886, 0.0
      %v919 = vmax.f32 %v887, 0.0
      %v920 = vmax.f32 %v888, 0.0
      %v921 = vmax.f32 %v889, 0.0
      %v922 = vmax.f32 %v890, 0.0
      %v923 = vmax.f32 %v891, 0.0
      %v924 = vmax.f32 %v892, 0.0
      %v925 = vmax.f32 %v893, 0.0
      %v926 = vmax.f32 %v894, 0.0
      %v927 = vmax.f32 %v895, 0.0
      %v928 = vmax.f32 %v896, 0.0
      %v929 = vmax.f32 %v897, 0.0
      %v930 = vmax.f32 %v898, 0.0
      %v931 = vmax.f32 %v899, 0.0
      %v932 = vpack.c.bf16 %v901, %v900
      %v933 = vpack.c.bf16 %v903, %v902
      %v934 = vpack.c.bf16 %v905, %v904
      %v935 = vpack.c.bf16 %v907, %v906
      %v936 = vpack.c.bf16 %v909, %v908
      %v937 = vpack.c.bf16 %v911, %v910
      %v938 = vpack.c.bf16 %v913, %v912
      %v939 = vpack.c.bf16 %v915, %v914
      %v940 = vpack.c.bf16 %v917, %v916
      %v941 = vpack.c.bf16 %v919, %v918
      %v942 = vpack.c.bf16 %v921, %v920
      %v943 = vpack.c.bf16 %v923, %v922
      %v944 = vpack.c.bf16 %v925, %v924
      %v945 = vpack.c.bf16 %v927, %v926
      %v946 = vpack.c.bf16 %v929, %v928
      %v947 = vpack.c.bf16 %v931, %v930
      %v948 = vld [vmem:[%s7] sm:$0x3]
      %vm949 = vcmask 31744
      %v951 = vsel %vm949, %v932, 0
      %v954 = vsel %vm949, %v933, 0
      %v957 = vsel %vm949, %v934, 0
      %v960 = vsel %vm949, %v935, 0
      %v963 = vsel %vm949, %v936, 0
      %v966 = vsel %vm949, %v937, 0
      %v969 = vsel %vm949, %v938, 0
      %v972 = vsel %vm949, %v939, 0
      %v975 = vsel %vm949, %v940, 0
      %v978 = vsel %vm949, %v941, 0
      %v981 = vsel %vm949, %v942, 0
      %v984 = vsel %vm949, %v943, 0
      %v987 = vsel %vm949, %v944, 0
      %v990 = vsel %vm949, %v945, 0
      %v993 = vsel %vm949, %v946, 0
      %v996 = vsel %vm949, %v947, 0
      %vm998 = vcmask 1041408
      %v1000 = vsel %vm998, %v948, 0
      %1002 = vmatprep.subr.bf16.mxu0 0
      %1003 = vmatpush1.bf16.msra.mxu0 0
      %1004 = vmatprep.subr.bf16.mxu0 0
      %1005 = vmatpush1.bf16.msra.mxu0 0
      %1006 = vmatprep.subr.bf16.mxu0 0
      %1007 = vmatpush1.bf16.msra.mxu0 0
      %1008 = vmatprep.subr.bf16.mxu0 0
      %1009 = vmatpush1.bf16.msra.mxu0 0
      %1010 = vmatprep.subr.bf16.mxu0 0
      %1011 = vmatpush1.bf16.msra.mxu0 0
      %1012 = vmatprep.subr.bf16.mxu0 0
      %1013 = vmatpush1.bf16.msra.mxu0 0
      %1014 = vmatprep.subr.bf16.mxu0 0
      %1015 = vmatpush1.bf16.msra.mxu0 0
      %1016 = vmatprep.subr.bf16.mxu0 0
      %1017 = vmatpush1.bf16.msra.mxu0 %v1000
      %1018 = vmatprep.subr.bf16.mxu0 0
      %1019 = vmatpush2.bf16.msra.mxu0 0
      %1020 = vmatprep.subr.bf16.mxu0 0
      %1021 = vmatpush2.bf16.msra.mxu0 0
      %1022 = vmatprep.subr.bf16.mxu0 0
      %1023 = vmatpush2.bf16.msra.mxu0 0
      %1024 = vmatprep.subr.bf16.mxu0 0
      %1025 = vmatpush2.bf16.msra.mxu0 0
      %1026 = vmatprep.subr.bf16.mxu0 0
      %1027 = vmatpush2.bf16.msra.mxu0 0
      %1028 = vmatprep.subr.bf16.mxu0 0
      %1029 = vmatpush2.bf16.msra.mxu0 0
      %1030 = vmatprep.subr.bf16.mxu0 0
      %1031 = vmatpush2.bf16.msra.mxu0 0
      %1032 = vmatprep.subr.bf16.mxu0 0
      %1033 = vmatpush2.bf16.msra.mxu0 0
      %1034 = vmatprep.mubr.bf16.mxu0 0
      %1035 = vmatmul.mubr.bf16.gmra.mxu0 %v951
      %v1036 = vpop.f32.mrf.mxu0
      %v1037 = vadd.f32 0.0, %v1036
      %v1038 = vpop.f32.mrf.mxu0
      %v1039 = vpop.f32.mrf.mxu0
      %v1040 = vadd.f32 0.0, %v1039
      %v1041 = vpop.f32.mrf.mxu0
      %1042 = vmatprep.mubr.bf16.mxu0 0
      %1043 = vmatmul.mubr.bf16.gmra.mxu0 %v954
      %v1044 = vpop.f32.mrf.mxu0
      %v1045 = vadd.f32 0.0, %v1044
      %v1046 = vpop.f32.mrf.mxu0
      %v1047 = vpop.f32.mrf.mxu0
      %v1048 = vadd.f32 0.0, %v1047
      %v1049 = vpop.f32.mrf.mxu0
      %1050 = vmatprep.mubr.bf16.mxu0 0
      %1051 = vmatmul.mubr.bf16.gmra.mxu0 %v957
      %v1052 = vpop.f32.mrf.mxu0
      %v1053 = vadd.f32 0.0, %v1052
      %v1054 = vpop.f32.mrf.mxu0
      %v1055 = vpop.f32.mrf.mxu0
      %v1056 = vadd.f32 0.0, %v1055
      %v1057 = vpop.f32.mrf.mxu0
      %1058 = vmatprep.mubr.bf16.mxu0 0
      %1059 = vmatmul.mubr.bf16.gmra.mxu0 %v960
      %v1060 = vpop.f32.mrf.mxu0
      %v1061 = vadd.f32 0.0, %v1060
      %v1062 = vpop.f32.mrf.mxu0
      %v1063 = vpop.f32.mrf.mxu0
      %v1064 = vadd.f32 0.0, %v1063
      %v1065 = vpop.f32.mrf.mxu0
      %1066 = vmatprep.mubr.bf16.mxu0 0
      %1067 = vmatmul.mubr.bf16.gmra.mxu0 %v963
      %v1068 = vpop.f32.mrf.mxu0
      %v1069 = vadd.f32 0.0, %v1068
      %v1070 = vpop.f32.mrf.mxu0
      %v1071 = vpop.f32.mrf.mxu0
      %v1072 = vadd.f32 0.0, %v1071
      %v1073 = vpop.f32.mrf.mxu0
      %1074 = vmatprep.mubr.bf16.mxu0 0
      %1075 = vmatmul.mubr.bf16.gmra.mxu0 %v966
      %v1076 = vpop.f32.mrf.mxu0
      %v1077 = vadd.f32 0.0, %v1076
      %v1078 = vpop.f32.mrf.mxu0
      %v1079 = vpop.f32.mrf.mxu0
      %v1080 = vadd.f32 0.0, %v1079
      %v1081 = vpop.f32.mrf.mxu0
      %1082 = vmatprep.mubr.bf16.mxu0 0
      %1083 = vmatmul.mubr.bf16.gmra.mxu0 %v969
      %v1084 = vpop.f32.mrf.mxu0
      %v1085 = vadd.f32 0.0, %v1084
      %v1086 = vpop.f32.mrf.mxu0
      %v1087 = vpop.f32.mrf.mxu0
      %v1088 = vadd.f32 0.0, %v1087
      %v1089 = vpop.f32.mrf.mxu0
      %1090 = vmatprep.mubr.bf16.mxu0 0
      %1091 = vmatmul.mubr.bf16.gmra.mxu0 %v972
      %v1092 = vpop.f32.mrf.mxu0
      %v1093 = vadd.f32 0.0, %v1092
      %v1094 = vpop.f32.mrf.mxu0
      %v1095 = vpop.f32.mrf.mxu0
      %v1096 = vadd.f32 0.0, %v1095
      %v1097 = vpop.f32.mrf.mxu0
      %1098 = vmatprep.mubr.bf16.mxu0 0
      %1099 = vmatmul.mubr.bf16.gmra.mxu0 %v975
      %v1100 = vpop.f32.mrf.mxu0
      %v1101 = vadd.f32 0.0, %v1100
      %v1102 = vpop.f32.mrf.mxu0
      %v1103 = vpop.f32.mrf.mxu0
      %v1104 = vadd.f32 0.0, %v1103
      %v1105 = vpop.f32.mrf.mxu0
      %1106 = vmatprep.mubr.bf16.mxu0 0
      %1107 = vmatmul.mubr.bf16.gmra.mxu0 %v978
      %v1108 = vpop.f32.mrf.mxu0
      %v1109 = vadd.f32 0.0, %v1108
      %v1110 = vpop.f32.mrf.mxu0
      %v1111 = vpop.f32.mrf.mxu0
      %v1112 = vadd.f32 0.0, %v1111
      %v1113 = vpop.f32.mrf.mxu0
      %1114 = vmatprep.mubr.bf16.mxu0 0
      %1115 = vmatmul.mubr.bf16.gmra.mxu0 %v981
      %v1116 = vpop.f32.mrf.mxu0
      %v1117 = vadd.f32 0.0, %v1116
      %v1118 = vpop.f32.mrf.mxu0
      %v1119 = vpop.f32.mrf.mxu0
      %v1120 = vadd.f32 0.0, %v1119
      %v1121 = vpop.f32.mrf.mxu0
      %1122 = vmatprep.mubr.bf16.mxu0 0
      %1123 = vmatmul.mubr.bf16.gmra.mxu0 %v984
      %v1124 = vpop.f32.mrf.mxu0
      %v1125 = vadd.f32 0.0, %v1124
      %v1126 = vpop.f32.mrf.mxu0
      %v1127 = vpop.f32.mrf.mxu0
      %v1128 = vadd.f32 0.0, %v1127
      %v1129 = vpop.f32.mrf.mxu0
      %1130 = vmatprep.mubr.bf16.mxu0 0
      %1131 = vmatmul.mubr.bf16.gmra.mxu0 %v987
      %v1132 = vpop.f32.mrf.mxu0
      %v1133 = vadd.f32 0.0, %v1132
      %v1134 = vpop.f32.mrf.mxu0
      %v1135 = vpop.f32.mrf.mxu0
      %v1136 = vadd.f32 0.0, %v1135
      %v1137 = vpop.f32.mrf.mxu0
      %1138 = vmatprep.mubr.bf16.mxu0 0
      %1139 = vmatmul.mubr.bf16.gmra.mxu0 %v990
      %v1140 = vpop.f32.mrf.mxu0
      %v1141 = vadd.f32 0.0, %v1140
      %v1142 = vpop.f32.mrf.mxu0
      %v1143 = vpop.f32.mrf.mxu0
      %v1144 = vadd.f32 0.0, %v1143
      %v1145 = vpop.f32.mrf.mxu0
      %1146 = vmatprep.mubr.bf16.mxu0 0
      %1147 = vmatmul.mubr.bf16.gmra.mxu0 %v993
      %v1148 = vpop.f32.mrf.mxu0
      %v1149 = vadd.f32 0.0, %v1148
      %v1150 = vpop.f32.mrf.mxu0
      %v1151 = vpop.f32.mrf.mxu0
      %v1152 = vadd.f32 0.0, %v1151
      %v1153 = vpop.f32.mrf.mxu0
      %1154 = vmatprep.mubr.bf16.mxu0 0
      %1155 = vmatmul.mubr.bf16.gmra.mxu0 %v996
      %v1156 = vpop.f32.mrf.mxu0
      %v1157 = vadd.f32 0.0, %v1156
      %v1158 = vpop.f32.mrf.mxu0
      %v1159 = vpop.f32.mrf.mxu0
      %v1160 = vadd.f32 0.0, %v1159
      %v1161 = vpop.f32.mrf.mxu0
      %1162 = vdwg.mxu0
      %vm1163 = vcmask 27648
      %1164 = vst.msk [vmem:[#allocation2] sm:$0xf] %vm1163, 0
      %1165 = vst.msk [vmem:[#allocation2 + $0x4] sm:$0xf] %vm1163, 0
      %1166 = vst.msk [vmem:[#allocation2 + $0x8] sm:$0xf] %vm1163, 0
      %1167 = vst.msk [vmem:[#allocation2 + $0xc] sm:$0xf] %vm1163, 0
      %1168 = vst.msk [vmem:[#allocation2 + $0x90] sm:$0xf] %vm1163, 0
      %1169 = vst.msk [vmem:[#allocation2 + $0x94] sm:$0xf] %vm1163, 0
      %1170 = vst.msk [vmem:[#allocation2 + $0x98] sm:$0xf] %vm1163, 0
      %1171 = vst.msk [vmem:[#allocation2 + $0x9c] sm:$0xf] %vm1163, 0
      %v1188 = vunpack.c.l.b16 %v932
      %v1189 = vunpack.c.h.b16 %v932
      %v1190 = vunpack.c.l.b16 %v933
      %v1191 = vunpack.c.h.b16 %v933
      %v1192 = vunpack.c.l.b16 %v934
      %v1193 = vunpack.c.h.b16 %v934
      %v1194 = vunpack.c.l.b16 %v935
      %v1195 = vunpack.c.h.b16 %v935
      %v1196 = vunpack.c.l.b16 %v936
      %v1197 = vunpack.c.h.b16 %v936
      %v1198 = vunpack.c.l.b16 %v937
      %v1199 = vunpack.c.h.b16 %v937
      %v1200 = vunpack.c.l.b16 %v938
      %v1201 = vunpack.c.h.b16 %v938
      %v1202 = vunpack.c.l.b16 %v939
      %v1203 = vunpack.c.h.b16 %v939
      %v1204 = vunpack.c.l.b16 %v940
      %v1205 = vunpack.c.h.b16 %v940
      %v1206 = vunpack.c.l.b16 %v941
      %v1207 = vunpack.c.h.b16 %v941
      %v1208 = vunpack.c.l.b16 %v942
      %v1209 = vunpack.c.h.b16 %v942
      %v1210 = vunpack.c.l.b16 %v943
      %v1211 = vunpack.c.h.b16 %v943
      %v1212 = vunpack.c.l.b16 %v944
      %v1213 = vunpack.c.h.b16 %v944
      %v1214 = vunpack.c.l.b16 %v945
      %v1215 = vunpack.c.h.b16 %v945
      %v1216 = vunpack.c.l.b16 %v946
      %v1217 = vunpack.c.h.b16 %v946
      %v1218 = vunpack.c.l.b16 %v947
      %v1219 = vunpack.c.h.b16 %v947
      %v1220 = vpack.c.b16 %v1188, %v1188
      %v1221 = vpack.c.b16 %v1189, %v1189
      %v1222 = vpack.c.b16 %v1190, %v1190
      %v1223 = vpack.c.b16 %v1191, %v1191
      %v1224 = vpack.c.b16 %v1192, %v1192
      %v1225 = vpack.c.b16 %v1193, %v1193
      %v1226 = vpack.c.b16 %v1194, %v1194
      %v1227 = vpack.c.b16 %v1195, %v1195
      %v1228 = vpack.c.b16 %v1196, %v1196
      %v1229 = vpack.c.b16 %v1197, %v1197
      %v1230 = vpack.c.b16 %v1198, %v1198
      %v1231 = vpack.c.b16 %v1199, %v1199
      %v1232 = vpack.c.b16 %v1200, %v1200
      %v1233 = vpack.c.b16 %v1201, %v1201
      %v1234 = vpack.c.b16 %v1202, %v1202
      %v1235 = vpack.c.b16 %v1203, %v1203
      %v1236 = vpack.c.b16 %v1204, %v1204
      %v1237 = vpack.c.b16 %v1205, %v1205
      %v1238 = vpack.c.b16 %v1206, %v1206
      %v1239 = vpack.c.b16 %v1207, %v1207
      %v1240 = vpack.c.b16 %v1208, %v1208
      %v1241 = vpack.c.b16 %v1209, %v1209
      %v1242 = vpack.c.b16 %v1210, %v1210
      %v1243 = vpack.c.b16 %v1211, %v1211
      %v1244 = vpack.c.b16 %v1212, %v1212
      %v1245 = vpack.c.b16 %v1213, %v1213
      %v1246 = vpack.c.b16 %v1214, %v1214
      %v1247 = vpack.c.b16 %v1215, %v1215
      %v1248 = vpack.c.b16 %v1216, %v1216
      %v1249 = vpack.c.b16 %v1217, %v1217
      %v1250 = vpack.c.b16 %v1218, %v1218
      %v1251 = vpack.c.b16 %v1219, %v1219
      %1284 = vst.msk [vmem:[#allocation2 + $0x10] sm:$0xf] %vm1163, %v1220
      %1285 = vst.msk [vmem:[#allocation2 + $0x14] sm:$0xf] %vm1163, %v1221
      %1286 = vst.msk [vmem:[#allocation2 + $0x18] sm:$0xf] %vm1163, %v1222
      %1287 = vst.msk [vmem:[#allocation2 + $0x1c] sm:$0xf] %vm1163, %v1223
      %1288 = vst.msk [vmem:[#allocation2 + $0x20] sm:$0xf] %vm1163, %v1224
      %1289 = vst.msk [vmem:[#allocation2 + $0x24] sm:$0xf] %vm1163, %v1225
      %1290 = vst.msk [vmem:[#allocation2 + $0x28] sm:$0xf] %vm1163, %v1226
      %1291 = vst.msk [vmem:[#allocation2 + $0x2c] sm:$0xf] %vm1163, %v1227
      %1292 = vst.msk [vmem:[#allocation2 + $0x30] sm:$0xf] %vm1163, %v1228
      %1293 = vst.msk [vmem:[#allocation2 + $0x34] sm:$0xf] %vm1163, %v1229
      %1294 = vst.msk [vmem:[#allocation2 + $0x38] sm:$0xf] %vm1163, %v1230
      %1295 = vst.msk [vmem:[#allocation2 + $0x3c] sm:$0xf] %vm1163, %v1231
      %1296 = vst.msk [vmem:[#allocation2 + $0x40] sm:$0xf] %vm1163, %v1232
      %1297 = vst.msk [vmem:[#allocation2 + $0x44] sm:$0xf] %vm1163, %v1233
      %1298 = vst.msk [vmem:[#allocation2 + $0x48] sm:$0xf] %vm1163, %v1234
      %1299 = vst.msk [vmem:[#allocation2 + $0x4c] sm:$0xf] %vm1163, %v1235
      %1300 = vst.msk [vmem:[#allocation2 + $0x50] sm:$0xf] %vm1163, %v1236
      %1301 = vst.msk [vmem:[#allocation2 + $0x54] sm:$0xf] %vm1163, %v1237
      %1302 = vst.msk [vmem:[#allocation2 + $0x58] sm:$0xf] %vm1163, %v1238
      %1303 = vst.msk [vmem:[#allocation2 + $0x5c] sm:$0xf] %vm1163, %v1239
      %1304 = vst.msk [vmem:[#allocation2 + $0x60] sm:$0xf] %vm1163, %v1240
      %1305 = vst.msk [vmem:[#allocation2 + $0x64] sm:$0xf] %vm1163, %v1241
      %1306 = vst.msk [vmem:[#allocation2 + $0x68] sm:$0xf] %vm1163, %v1242
      %1307 = vst.msk [vmem:[#allocation2 + $0x6c] sm:$0xf] %vm1163, %v1243
      %1308 = vst.msk [vmem:[#allocation2 + $0x70] sm:$0xf] %vm1163, %v1244
      %1309 = vst.msk [vmem:[#allocation2 + $0x74] sm:$0xf] %vm1163, %v1245
      %1310 = vst.msk [vmem:[#allocation2 + $0x78] sm:$0xf] %vm1163, %v1246
      %1311 = vst.msk [vmem:[#allocation2 + $0x7c] sm:$0xf] %vm1163, %v1247
      %1312 = vst.msk [vmem:[#allocation2 + $0x80] sm:$0xf] %vm1163, %v1248
      %1313 = vst.msk [vmem:[#allocation2 + $0x84] sm:$0xf] %vm1163, %v1249
      %1314 = vst.msk [vmem:[#allocation2 + $0x88] sm:$0xf] %vm1163, %v1250
      %1315 = vst.msk [vmem:[#allocation2 + $0x8c] sm:$0xf] %vm1163, %v1251
      %v1316 = vsel %vm726, 1, 0
      %v1317 = vsel %vm727, 1, 0
      %v1318 = vsel %vm728, 1, 0
      %v1319 = vsel %vm729, 1, 0
      %v1320 = vsel %vm730, 1, 0
      %v1321 = vsel %vm731, 1, 0
      %v1322 = vsel %vm732, 1, 0
      %v1323 = vsel %vm733, 1, 0
      %v1324 = vsel %vm734, 1, 0
      %v1325 = vsel %vm735, 1, 0
      %v1326 = vsel %vm736, 1, 0
      %v1327 = vsel %vm737, 1, 0
      %v1328 = vsel %vm738, 1, 0
      %v1329 = vsel %vm739, 1, 0
      %v1330 = vsel %vm740, 1, 0
      %v1331 = vsel %vm741, 1, 0
      %v1332 = vsel %vm742, 1, 0
      %v1333 = vsel %vm743, 1, 0
      %v1334 = vsel %vm744, 1, 0
      %v1335 = vsel %vm745, 1, 0
      %v1336 = vsel %vm746, 1, 0
      %v1337 = vsel %vm747, 1, 0
      %v1338 = vsel %vm748, 1, 0
      %v1339 = vsel %vm749, 1, 0
      %v1340 = vsel %vm750, 1, 0
      %v1341 = vsel %vm751, 1, 0
      %v1342 = vsel %vm752, 1, 0
      %v1343 = vsel %vm753, 1, 0
      %v1344 = vsel %vm754, 1, 0
      %v1345 = vsel %vm755, 1, 0
      %v1346 = vsel %vm756, 1, 0
      %v1347 = vsel %vm757, 1, 0
      %vm1348 = vcmp.eq.s32.totalorder %v1316, 1
      %vm1349 = vcmp.eq.s32.totalorder %v1317, 1
      %vm1350 = vcmp.eq.s32.totalorder %v1318, 1
      %vm1351 = vcmp.eq.s32.totalorder %v1319, 1
      %vm1352 = vcmp.eq.s32.totalorder %v1320, 1
      %vm1353 = vcmp.eq.s32.totalorder %v1321, 1
      %vm1354 = vcmp.eq.s32.totalorder %v1322, 1
      %vm1355 = vcmp.eq.s32.totalorder %v1323, 1
      %vm1356 = vcmp.eq.s32.totalorder %v1324, 1
      %vm1357 = vcmp.eq.s32.totalorder %v1325, 1
      %vm1358 = vcmp.eq.s32.totalorder %v1326, 1
      %vm1359 = vcmp.eq.s32.totalorder %v1327, 1
      %vm1360 = vcmp.eq.s32.totalorder %v1328, 1
      %vm1361 = vcmp.eq.s32.totalorder %v1329, 1
      %vm1362 = vcmp.eq.s32.totalorder %v1330, 1
      %vm1363 = vcmp.eq.s32.totalorder %v1331, 1
      %vm1364 = vcmp.eq.s32.totalorder %v1332, 1
      %vm1365 = vcmp.eq.s32.totalorder %v1333, 1
      %vm1366 = vcmp.eq.s32.totalorder %v1334, 1
      %vm1367 = vcmp.eq.s32.totalorder %v1335, 1
      %vm1368 = vcmp.eq.s32.totalorder %v1336, 1
      %vm1369 = vcmp.eq.s32.totalorder %v1337, 1
      %vm1370 = vcmp.eq.s32.totalorder %v1338, 1
      %vm1371 = vcmp.eq.s32.totalorder %v1339, 1
      %vm1372 = vcmp.eq.s32.totalorder %v1340, 1
      %vm1373 = vcmp.eq.s32.totalorder %v1341, 1
      %vm1374 = vcmp.eq.s32.totalorder %v1342, 1
      %vm1375 = vcmp.eq.s32.totalorder %v1343, 1
      %vm1376 = vcmp.eq.s32.totalorder %v1344, 1
      %vm1377 = vcmp.eq.s32.totalorder %v1345, 1
      %vm1378 = vcmp.eq.s32.totalorder %v1346, 1
      %vm1379 = vcmp.eq.s32.totalorder %v1347, 1
      %v1380 = vsel %vm758, 1, 0
      %v1381 = vsel %vm759, 1, 0
      %v1382 = vsel %vm760, 1, 0
      %v1383 = vsel %vm761, 1, 0
      %v1384 = vsel %vm762, 1, 0
      %v1385 = vsel %vm763, 1, 0
      %v1386 = vsel %vm764, 1, 0
      %v1387 = vsel %vm765, 1, 0
      %v1388 = vsel %vm766, 1, 0
      %v1389 = vsel %vm767, 1, 0
      %v1390 = vsel %vm768, 1, 0
      %v1391 = vsel %vm769, 1, 0
      %v1392 = vsel %vm770, 1, 0
      %v1393 = vsel %vm771, 1, 0
      %v1394 = vsel %vm772, 1, 0
      %v1395 = vsel %vm773, 1, 0
      %v1396 = vsel %vm774, 1, 0
      %v1397 = vsel %vm775, 1, 0
      %v1398 = vsel %vm776, 1, 0
      %v1399 = vsel %vm777, 1, 0
      %v1400 = vsel %vm778, 1, 0
      %v1401 = vsel %vm779, 1, 0
      %v1402 = vsel %vm780, 1, 0
      %v1403 = vsel %vm781, 1, 0
      %v1404 = vsel %vm782, 1, 0
      %v1405 = vsel %vm783, 1, 0
      %v1406 = vsel %vm784, 1, 0
      %v1407 = vsel %vm785, 1, 0
      %v1408 = vsel %vm786, 1, 0
      %v1409 = vsel %vm787, 1, 0
      %v1410 = vsel %vm788, 1, 0
      %v1411 = vsel %vm789, 1, 0
      %vm1412 = vcmp.eq.s32.totalorder %v1380, 1
      %vm1413 = vcmp.eq.s32.totalorder %v1381, 1
      %vm1414 = vcmp.eq.s32.totalorder %v1382, 1
      %vm1415 = vcmp.eq.s32.totalorder %v1383, 1
      %vm1416 = vcmp.eq.s32.totalorder %v1384, 1
      %vm1417 = vcmp.eq.s32.totalorder %v1385, 1
      %vm1418 = vcmp.eq.s32.totalorder %v1386, 1
      %vm1419 = vcmp.eq.s32.totalorder %v1387, 1
      %vm1420 = vcmp.eq.s32.totalorder %v1388, 1
      %vm1421 = vcmp.eq.s32.totalorder %v1389, 1
      %vm1422 = vcmp.eq.s32.totalorder %v1390, 1
      %vm1423 = vcmp.eq.s32.totalorder %v1391, 1
      %vm1424 = vcmp.eq.s32.totalorder %v1392, 1
      %vm1425 = vcmp.eq.s32.totalorder %v1393, 1
      %vm1426 = vcmp.eq.s32.totalorder %v1394, 1
      %vm1427 = vcmp.eq.s32.totalorder %v1395, 1
      %vm1428 = vcmp.eq.s32.totalorder %v1396, 1
      %vm1429 = vcmp.eq.s32.totalorder %v1397, 1
      %vm1430 = vcmp.eq.s32.totalorder %v1398, 1
      %vm1431 = vcmp.eq.s32.totalorder %v1399, 1
      %vm1432 = vcmp.eq.s32.totalorder %v1400, 1
      %vm1433 = vcmp.eq.s32.totalorder %v1401, 1
      %vm1434 = vcmp.eq.s32.totalorder %v1402, 1
      %vm1435 = vcmp.eq.s32.totalorder %v1403, 1
      %vm1436 = vcmp.eq.s32.totalorder %v1404, 1
      %vm1437 = vcmp.eq.s32.totalorder %v1405, 1
      %vm1438 = vcmp.eq.s32.totalorder %v1406, 1
      %vm1439 = vcmp.eq.s32.totalorder %v1407, 1
      %vm1440 = vcmp.eq.s32.totalorder %v1408, 1
      %vm1441 = vcmp.eq.s32.totalorder %v1409, 1
      %vm1442 = vcmp.eq.s32.totalorder %v1410, 1
      %vm1443 = vcmp.eq.s32.totalorder %v1411, 1
      %v1444 = vld [vmem:[#allocation2 + $0x4] sm:$0x8]
      %v1445 = vld [vmem:[#allocation2 + $0x8] sm:$0xf]
      %v1446 = vld [vmem:[#allocation2 + $0xc] sm:$0xf]
      %v1447 = vld [vmem:[#allocation2 + $0x10] sm:$0xf]
      %v1448 = vld [vmem:[#allocation2 + $0x14] sm:$0xf]
      %v1449 = vld [vmem:[#allocation2 + $0x18] sm:$0xf]
      %v1450 = vld [vmem:[#allocation2 + $0x1c] sm:$0xf]
      %v1451 = vld [vmem:[#allocation2 + $0x20] sm:$0xf]
      %v1452 = vld [vmem:[#allocation2 + $0x24] sm:$0xf]
      %v1453 = vld [vmem:[#allocation2 + $0x28] sm:$0xf]
      %v1454 = vld [vmem:[#allocation2 + $0x2c] sm:$0xf]
      %v1455 = vld [vmem:[#allocation2 + $0x30] sm:$0xf]
      %v1456 = vld [vmem:[#allocation2 + $0x34] sm:$0xf]
      %v1457 = vld [vmem:[#allocation2 + $0x38] sm:$0xf]
      %v1458 = vld [vmem:[#allocation2 + $0x3c] sm:$0xf]
      %v1459 = vld [vmem:[#allocation2 + $0x40] sm:$0xf]
      %v1460 = vld [vmem:[#allocation2 + $0x44] sm:$0xf]
      %v1461 = vld [vmem:[#allocation2 + $0x48] sm:$0xf]
      %v1462 = vld [vmem:[#allocation2 + $0x4c] sm:$0xf]
      %v1463 = vld [vmem:[#allocation2 + $0x50] sm:$0xf]
      %v1464 = vld [vmem:[#allocation2 + $0x54] sm:$0xf]
      %v1465 = vld [vmem:[#allocation2 + $0x58] sm:$0xf]
      %v1466 = vld [vmem:[#allocation2 + $0x5c] sm:$0xf]
      %v1467 = vld [vmem:[#allocation2 + $0x60] sm:$0xf]
      %v1468 = vld [vmem:[#allocation2 + $0x64] sm:$0xf]
      %v1469 = vld [vmem:[#allocation2 + $0x68] sm:$0xf]
      %v1470 = vld [vmem:[#allocation2 + $0x6c] sm:$0xf]
      %v1471 = vld [vmem:[#allocation2 + $0x70] sm:$0xf]
      %v1472 = vld [vmem:[#allocation2 + $0x74] sm:$0xf]
      %v1473 = vld [vmem:[#allocation2 + $0x78] sm:$0xf]
      %v1474 = vld [vmem:[#allocation2 + $0x7c] sm:$0xf]
      %v1475 = vld [vmem:[#allocation2 + $0x80] sm:$0xf]
      %v1476 = vld [vmem:[#allocation2 + $0x84] sm:$0xf]
      %vm1477 = vmpackc.low %vm1348, %vm1348
      %vm1478 = vmpackc.low %vm1349, %vm1349
      %vm1479 = vmpackc.low %vm1350, %vm1350
      %vm1480 = vmpackc.low %vm1351, %vm1351
      %vm1481 = vmpackc.low %vm1352, %vm1352
      %vm1482 = vmpackc.low %vm1353, %vm1353
      %vm1483 = vmpackc.low %vm1354, %vm1354
      %vm1484 = vmpackc.low %vm1355, %vm1355
      %vm1485 = vmpackc.low %vm1356, %vm1356
      %vm1486 = vmpackc.low %vm1357, %vm1357
      %vm1487 = vmpackc.low %vm1358, %vm1358
      %vm1488 = vmpackc.low %vm1359, %vm1359
      %vm1489 = vmpackc.low %vm1360, %vm1360
      %vm1490 = vmpackc.low %vm1361, %vm1361
      %vm1491 = vmpackc.low %vm1362, %vm1362
      %vm1492 = vmpackc.low %vm1363, %vm1363
      %vm1493 = vmpackc.low %vm1364, %vm1364
      %vm1494 = vmpackc.low %vm1365, %vm1365
      %vm1495 = vmpackc.low %vm1366, %vm1366
      %vm1496 = vmpackc.low %vm1367, %vm1367
      %vm1497 = vmpackc.low %vm1368, %vm1368
      %vm1498 = vmpackc.low %vm1369, %vm1369
      %vm1499 = vmpackc.low %vm1370, %vm1370
      %vm1500 = vmpackc.low %vm1371, %vm1371
      %vm1501 = vmpackc.low %vm1372, %vm1372
      %vm1502 = vmpackc.low %vm1373, %vm1373
      %vm1503 = vmpackc.low %vm1374, %vm1374
      %vm1504 = vmpackc.low %vm1375, %vm1375
      %vm1505 = vmpackc.low %vm1376, %vm1376
      %vm1506 = vmpackc.low %vm1377, %vm1377
      %vm1507 = vmpackc.low %vm1378, %vm1378
      %vm1508 = vmpackc.low %vm1379, %vm1379
      %v1509 = vsel %vm1477, 65537, 0
      %v1510 = vsel %vm1478, 65537, 0
      %v1511 = vsel %vm1479, 65537, 0
      %v1512 = vsel %vm1480, 65537, 0
      %v1513 = vsel %vm1481, 65537, 0
      %v1514 = vsel %vm1482, 65537, 0
      %v1515 = vsel %vm1483, 65537, 0
      %v1516 = vsel %vm1484, 65537, 0
      %v1517 = vsel %vm1485, 65537, 0
      %v1518 = vsel %vm1486, 65537, 0
      %v1519 = vsel %vm1487, 65537, 0
      %v1520 = vsel %vm1488, 65537, 0
      %v1521 = vsel %vm1489, 65537, 0
      %v1522 = vsel %vm1490, 65537, 0
      %v1523 = vsel %vm1491, 65537, 0
      %v1524 = vsel %vm1492, 65537, 0
      %v1525 = vsel %vm1493, 65537, 0
      %v1526 = vsel %vm1494, 65537, 0
      %v1527 = vsel %vm1495, 65537, 0
      %v1528 = vsel %vm1496, 65537, 0
      %v1529 = vsel %vm1497, 65537, 0
      %v1530 = vsel %vm1498, 65537, 0
      %v1531 = vsel %vm1499, 65537, 0
      %v1532 = vsel %vm1500, 65537, 0
      %v1533 = vsel %vm1501, 65537, 0
      %v1534 = vsel %vm1502, 65537, 0
      %v1535 = vsel %vm1503, 65537, 0
      %v1536 = vsel %vm1504, 65537, 0
      %v1537 = vsel %vm1505, 65537, 0
      %v1538 = vsel %vm1506, 65537, 0
      %v1539 = vsel %vm1507, 65537, 0
      %v1540 = vsel %vm1508, 65537, 0
      %vm1541 = vsmask.f32 3328
      %vm1542 = vsmask.f32 7440
      %vm1543 = vmor %vm1541, %vm1542
      %v1545 = vshll.u32 %v1509, 16
      %v1547 = vrot.slane %v1545, 5
      %v1548 = vshrl.u32 %v1509, 16
      %v1550 = vrot.slane %v1548, 4
      %v1551 = vor.u32 %v1550, %v1547
      %v1552 = vrot.slane %v1551, 4
      %v1554 = vshll.u32 %v1510, 16
      %v1556 = vrot.slane %v1554, 5
      %v1557 = vsel %vm1543, %v1552, %v1556
      %v1558 = vshrl.u32 %v1510, 16
      %v1560 = vrot.slane %v1558, 4
      %v1561 = vor.u32 %v1560, %v1556
      %v1562 = vrot.slane %v1561, 4
      %v1564 = vshll.u32 %v1511, 16
      %v1566 = vrot.slane %v1564, 5
      %v1567 = vsel %vm1543, %v1562, %v1566
      %v1568 = vshrl.u32 %v1511, 16
      %v1570 = vrot.slane %v1568, 4
      %v1571 = vor.u32 %v1570, %v1566
      %v1572 = vrot.slane %v1571, 4
      %v1574 = vshll.u32 %v1512, 16
      %v1576 = vrot.slane %v1574, 5
      %v1577 = vsel %vm1543, %v1572, %v1576
      %v1578 = vshrl.u32 %v1512, 16
      %v1580 = vrot.slane %v1578, 4
      %v1581 = vor.u32 %v1580, %v1576
      %v1582 = vrot.slane %v1581, 4
      %v1584 = vshll.u32 %v1513, 16
      %v1586 = vrot.slane %v1584, 5
      %v1587 = vsel %vm1543, %v1582, %v1586
      %v1588 = vshrl.u32 %v1513, 16
      %v1590 = vrot.slane %v1588, 4
      %v1591 = vor.u32 %v1590, %v1586
      %v1592 = vrot.slane %v1591, 4
      %v1594 = vshll.u32 %v1514, 16
      %v1596 = vrot.slane %v1594, 5
      %v1597 = vsel %vm1543, %v1592, %v1596
      %v1598 = vshrl.u32 %v1514, 16
      %v1600 = vrot.slane %v1598, 4
      %v1601 = vor.u32 %v1600, %v1596
      %v1602 = vrot.slane %v1601, 4
      %v1604 = vshll.u32 %v1515, 16
      %v1606 = vrot.slane %v1604, 5
      %v1607 = vsel %vm1543, %v1602, %v1606
      %v1608 = vshrl.u32 %v1515, 16
      %v1610 = vrot.slane %v1608, 4
      %v1611 = vor.u32 %v1610, %v1606
      %v1612 = vrot.slane %v1611, 4
      %v1614 = vshll.u32 %v1516, 16
      %v1616 = vrot.slane %v1614, 5
      %v1617 = vsel %vm1543, %v1612, %v1616
      %v1618 = vshrl.u32 %v1516, 16
      %v1620 = vrot.slane %v1618, 4
      %v1621 = vor.u32 %v1620, %v1616
      %v1622 = vrot.slane %v1621, 4
      %v1624 = vshll.u32 %v1517, 16
      %v1626 = vrot.slane %v1624, 5
      %v1627 = vsel %vm1543, %v1622, %v1626
      %v1628 = vshrl.u32 %v1517, 16
      %v1630 = vrot.slane %v1628, 4
      %v1631 = vor.u32 %v1630, %v1626
      %v1632 = vrot.slane %v1631, 4
      %v1634 = vshll.u32 %v1518, 16
      %v1636 = vrot.slane %v1634, 5
      %v1637 = vsel %vm1543, %v1632, %v1636
      %v1638 = vshrl.u32 %v1518, 16
      %v1640 = vrot.slane %v1638, 4
      %v1641 = vor.u32 %v1640, %v1636
      %v1642 = vrot.slane %v1641, 4
      %v1644 = vshll.u32 %v1519, 16
      %v1646 = vrot.slane %v1644, 5
      %v1647 = vsel %vm1543, %v1642, %v1646
      %v1648 = vshrl.u32 %v1519, 16
      %v1650 = vrot.slane %v1648, 4
      %v1651 = vor.u32 %v1650, %v1646
      %v1652 = vrot.slane %v1651, 4
      %v1654 = vshll.u32 %v1520, 16
      %v1656 = vrot.slane %v1654, 5
      %v1657 = vsel %vm1543, %v1652, %v1656
      %v1658 = vshrl.u32 %v1520, 16
      %v1660 = vrot.slane %v1658, 4
      %v1661 = vor.u32 %v1660, %v1656
      %v1662 = vrot.slane %v1661, 4
      %v1664 = vshll.u32 %v1521, 16
      %v1666 = vrot.slane %v1664, 5
      %v1667 = vsel %vm1543, %v1662, %v1666
      %v1668 = vshrl.u32 %v1521, 16
      %v1670 = vrot.slane %v1668, 4
      %v1671 = vor.u32 %v1670, %v1666
      %v1672 = vrot.slane %v1671, 4
      %v1674 = vshll.u32 %v1522, 16
      %v1676 = vrot.slane %v1674, 5
      %v1677 = vsel %vm1543, %v1672, %v1676
      %v1678 = vshrl.u32 %v1522, 16
      %v1680 = vrot.slane %v1678, 4
      %v1681 = vor.u32 %v1680, %v1676
      %v1682 = vrot.slane %v1681, 4
      %v1684 = vshll.u32 %v1523, 16
      %v1686 = vrot.slane %v1684, 5
      %v1687 = vsel %vm1543, %v1682, %v1686
      %v1688 = vshrl.u32 %v1523, 16
      %v1690 = vrot.slane %v1688, 4
      %v1691 = vor.u32 %v1690, %v1686
      %v1692 = vrot.slane %v1691, 4
      %v1694 = vshll.u32 %v1524, 16
      %v1696 = vrot.slane %v1694, 5
      %v1697 = vsel %vm1543, %v1692, %v1696
      %v1698 = vshrl.u32 %v1524, 16
      %v1700 = vrot.slane %v1698, 4
      %v1701 = vor.u32 %v1700, %v1696
      %v1702 = vrot.slane %v1701, 4
      %v1704 = vshll.u32 %v1525, 16
      %v1706 = vrot.slane %v1704, 5
      %v1707 = vsel %vm1543, %v1702, %v1706
      %v1708 = vshrl.u32 %v1525, 16
      %v1710 = vrot.slane %v1708, 4
      %v1711 = vor.u32 %v1710, %v1706
      %v1712 = vrot.slane %v1711, 4
      %v1714 = vshll.u32 %v1526, 16
      %v1716 = vrot.slane %v1714, 5
      %v1717 = vsel %vm1543, %v1712, %v1716
      %v1718 = vshrl.u32 %v1526, 16
      %v1720 = vrot.slane %v1718, 4
      %v1721 = vor.u32 %v1720, %v1716
      %v1722 = vrot.slane %v1721, 4
      %v1724 = vshll.u32 %v1527, 16
      %v1726 = vrot.slane %v1724, 5
      %v1727 = vsel %vm1543, %v1722, %v1726
      %v1728 = vshrl.u32 %v1527, 16
      %v1730 = vrot.slane %v1728, 4
      %v1731 = vor.u32 %v1730, %v1726
      %v1732 = vrot.slane %v1731, 4
      %v1734 = vshll.u32 %v1528, 16
      %v1736 = vrot.slane %v1734, 5
      %v1737 = vsel %vm1543, %v1732, %v1736
      %v1738 = vshrl.u32 %v1528, 16
      %v1740 = vrot.slane %v1738, 4
      %v1741 = vor.u32 %v1740, %v1736
      %v1742 = vrot.slane %v1741, 4
      %v1744 = vshll.u32 %v1529, 16
      %v1746 = vrot.slane %v1744, 5
      %v1747 = vsel %vm1543, %v1742, %v1746
      %v1748 = vshrl.u32 %v1529, 16
      %v1750 = vrot.slane %v1748, 4
      %v1751 = vor.u32 %v1750, %v1746
      %v1752 = vrot.slane %v1751, 4
      %v1754 = vshll.u32 %v1530, 16
      %v1756 = vrot.slane %v1754, 5
      %v1757 = vsel %vm1543, %v1752, %v1756
      %v1758 = vshrl.u32 %v1530, 16
      %v1760 = vrot.slane %v1758, 4
      %v1761 = vor.u32 %v1760, %v1756
      %v1762 = vrot.slane %v1761, 4
      %v1764 = vshll.u32 %v1531, 16
      %v1766 = vrot.slane %v1764, 5
      %v1767 = vsel %vm1543, %v1762, %v1766
      %v1768 = vshrl.u32 %v1531, 16
      %v1770 = vrot.slane %v1768, 4
      %v1771 = vor.u32 %v1770, %v1766
      %v1772 = vrot.slane %v1771, 4
      %v1774 = vshll.u32 %v1532, 16
      %v1776 = vrot.slane %v1774, 5
      %v1777 = vsel %vm1543, %v1772, %v1776
      %v1778 = vshrl.u32 %v1532, 16
      %v1780 = vrot.slane %v1778, 4
      %v1781 = vor.u32 %v1780, %v1776
      %v1782 = vrot.slane %v1781, 4
      %v1784 = vshll.u32 %v1533, 16
      %v1786 = vrot.slane %v1784, 5
      %v1787 = vsel %vm1543, %v1782, %v1786
      %v1788 = vshrl.u32 %v1533, 16
      %v1790 = vrot.slane %v1788, 4
      %v1791 = vor.u32 %v1790, %v1786
      %v1792 = vrot.slane %v1791, 4
      %v1794 = vshll.u32 %v1534, 16
      %v1796 = vrot.slane %v1794, 5
      %v1797 = vsel %vm1543, %v1792, %v1796
      %v1798 = vshrl.u32 %v1534, 16
      %v1800 = vrot.slane %v1798, 4
      %v1801 = vor.u32 %v1800, %v1796
      %v1802 = vrot.slane %v1801, 4
      %v1804 = vshll.u32 %v1535, 16
      %v1806 = vrot.slane %v1804, 5
      %v1807 = vsel %vm1543, %v1802, %v1806
      %v1808 = vshrl.u32 %v1535, 16
      %v1810 = vrot.slane %v1808, 4
      %v1811 = vor.u32 %v1810, %v1806
      %v1812 = vrot.slane %v1811, 4
      %v1814 = vshll.u32 %v1536, 16
      %v1816 = vrot.slane %v1814, 5
      %v1817 = vsel %vm1543, %v1812, %v1816
      %v1818 = vshrl.u32 %v1536, 16
      %v1820 = vrot.slane %v1818, 4
      %v1821 = vor.u32 %v1820, %v1816
      %v1822 = vrot.slane %v1821, 4
      %v1824 = vshll.u32 %v1537, 16
      %v1826 = vrot.slane %v1824, 5
      %v1827 = vsel %vm1543, %v1822, %v1826
      %v1828 = vshrl.u32 %v1537, 16
      %v1830 = vrot.slane %v1828, 4
      %v1831 = vor.u32 %v1830, %v1826
      %v1832 = vrot.slane %v1831, 4
      %v1834 = vshll.u32 %v1538, 16
      %v1836 = vrot.slane %v1834, 5
      %v1837 = vsel %vm1543, %v1832, %v1836
      %v1838 = vshrl.u32 %v1538, 16
      %v1840 = vrot.slane %v1838, 4
      %v1841 = vor.u32 %v1840, %v1836
      %v1842 = vrot.slane %v1841, 4
      %v1844 = vshll.u32 %v1539, 16
      %v1846 = vrot.slane %v1844, 5
      %v1847 = vsel %vm1543, %v1842, %v1846
      %v1848 = vshrl.u32 %v1539, 16
      %v1850 = vrot.slane %v1848, 4
      %v1851 = vor.u32 %v1850, %v1846
      %v1852 = vrot.slane %v1851, 4
      %v1854 = vshll.u32 %v1540, 16
      %v1856 = vrot.slane %v1854, 5
      %v1857 = vsel %vm1543, %v1852, %v1856
      %v1858 = vshrl.u32 %v1540, 16
      %v1860 = vrot.slane %v1858, 4
      %v1861 = vor.u32 %v1860, %v1856
      %v1862 = vrot.slane %v1861, 4
      %vm1863 = vcmp.ne.s16.totalorder %v1547, 0
      %vm1864 = vcmp.ne.s16.totalorder %v1557, 0
      %vm1865 = vcmp.ne.s16.totalorder %v1567, 0
      %vm1866 = vcmp.ne.s16.totalorder %v1577, 0
      %vm1867 = vcmp.ne.s16.totalorder %v1587, 0
      %vm1868 = vcmp.ne.s16.totalorder %v1597, 0
      %vm1869 = vcmp.ne.s16.totalorder %v1607, 0
      %vm1870 = vcmp.ne.s16.totalorder %v1617, 0
      %vm1871 = vcmp.ne.s16.totalorder %v1627, 0
      %vm1872 = vcmp.ne.s16.totalorder %v1637, 0
      %vm1873 = vcmp.ne.s16.totalorder %v1647, 0
      %vm1874 = vcmp.ne.s16.totalorder %v1657, 0
      %vm1875 = vcmp.ne.s16.totalorder %v1667, 0
      %vm1876 = vcmp.ne.s16.totalorder %v1677, 0
      %vm1877 = vcmp.ne.s16.totalorder %v1687, 0
      %vm1878 = vcmp.ne.s16.totalorder %v1697, 0
      %vm1879 = vcmp.ne.s16.totalorder %v1707, 0
      %vm1880 = vcmp.ne.s16.totalorder %v1717, 0
      %vm1881 = vcmp.ne.s16.totalorder %v1727, 0
      %vm1882 = vcmp.ne.s16.totalorder %v1737, 0
      %vm1883 = vcmp.ne.s16.totalorder %v1747, 0
      %vm1884 = vcmp.ne.s16.totalorder %v1757, 0
      %vm1885 = vcmp.ne.s16.totalorder %v1767, 0
      %vm1886 = vcmp.ne.s16.totalorder %v1777, 0
      %vm1887 = vcmp.ne.s16.totalorder %v1787, 0
      %vm1888 = vcmp.ne.s16.totalorder %v1797, 0
      %vm1889 = vcmp.ne.s16.totalorder %v1807, 0
      %vm1890 = vcmp.ne.s16.totalorder %v1817, 0
      %vm1891 = vcmp.ne.s16.totalorder %v1827, 0
      %vm1892 = vcmp.ne.s16.totalorder %v1837, 0
      %vm1893 = vcmp.ne.s16.totalorder %v1847, 0
      %vm1894 = vcmp.ne.s16.totalorder %v1857, 0
      %vm1895 = vcmp.ne.s16.totalorder %v1862, 0
      %v1896 = vsel %vm1863, %v1444, 0
      %v1897 = vsel %vm1864, %v1445, 0
      %v1898 = vsel %vm1865, %v1446, 0
      %v1899 = vsel %vm1866, %v1447, 0
      %v1900 = vsel %vm1867, %v1448, 0
      %v1901 = vsel %vm1868, %v1449, 0
      %v1902 = vsel %vm1869, %v1450, 0
      %v1903 = vsel %vm1870, %v1451, 0
      %v1904 = vsel %vm1871, %v1452, 0
      %v1905 = vsel %vm1872, %v1453, 0
      %v1906 = vsel %vm1873, %v1454, 0
      %v1907 = vsel %vm1874, %v1455, 0
      %v1908 = vsel %vm1875, %v1456, 0
      %v1909 = vsel %vm1876, %v1457, 0
      %v1910 = vsel %vm1877, %v1458, 0
      %v1911 = vsel %vm1878, %v1459, 0
      %v1912 = vsel %vm1879, %v1460, 0
      %v1913 = vsel %vm1880, %v1461, 0
      %v1914 = vsel %vm1881, %v1462, 0
      %v1915 = vsel %vm1882, %v1463, 0
      %v1916 = vsel %vm1883, %v1464, 0
      %v1917 = vsel %vm1884, %v1465, 0
      %v1918 = vsel %vm1885, %v1466, 0
      %v1919 = vsel %vm1886, %v1467, 0
      %v1920 = vsel %vm1887, %v1468, 0
      %v1921 = vsel %vm1888, %v1469, 0
      %v1922 = vsel %vm1889, %v1470, 0
      %v1923 = vsel %vm1890, %v1471, 0
      %v1924 = vsel %vm1891, %v1472, 0
      %v1925 = vsel %vm1892, %v1473, 0
      %v1926 = vsel %vm1893, %v1474, 0
      %v1927 = vsel %vm1894, %v1475, 0
      %v1928 = vsel %vm1895, %v1476, 0
      %vm1929 = vsmask.f32 256
      %vm1930 = vsmask.f32 4368
      %vm1931 = vmor %vm1929, %vm1930
      %v1933 = vshrl.u32 %v1896, 16
      %v1935 = vrot.slane %v1933, 7
      %v1936 = vrot.slane %v1935, 4
      %v1938 = vshrl.u32 %v1897, 16
      %v1940 = vrot.slane %v1938, 7
      %v1941 = vshll.u32 %v1897, 16
      %v1943 = vor.u32 %v1940, %v1941
      %v1944 = vsel %vm1931, %v1936, %v1943
      %v1945 = vrot.slane %v1940, 4
      %v1947 = vshrl.u32 %v1898, 16
      %v1949 = vrot.slane %v1947, 7
      %v1950 = vshll.u32 %v1898, 16
      %v1952 = vor.u32 %v1949, %v1950
      %v1953 = vsel %vm1931, %v1945, %v1952
      %v1954 = vrot.slane %v1949, 4
      %v1956 = vshrl.u32 %v1899, 16
      %v1958 = vrot.slane %v1956, 7
      %v1959 = vshll.u32 %v1899, 16
      %v1961 = vor.u32 %v1958, %v1959
      %v1962 = vsel %vm1931, %v1954, %v1961
      %v1963 = vrot.slane %v1958, 4
      %v1965 = vshrl.u32 %v1900, 16
      %v1967 = vrot.slane %v1965, 7
      %v1968 = vshll.u32 %v1900, 16
      %v1970 = vor.u32 %v1967, %v1968
      %v1971 = vsel %vm1931, %v1963, %v1970
      %v1972 = vrot.slane %v1967, 4
      %v1974 = vshrl.u32 %v1901, 16
      %v1976 = vrot.slane %v1974, 7
      %v1977 = vshll.u32 %v1901, 16
      %v1979 = vor.u32 %v1976, %v1977
      %v1980 = vsel %vm1931, %v1972, %v1979
      %v1981 = vrot.slane %v1976, 4
      %v1983 = vshrl.u32 %v1902, 16
      %v1985 = vrot.slane %v1983, 7
      %v1986 = vshll.u32 %v1902, 16
      %v1988 = vor.u32 %v1985, %v1986
      %v1989 = vsel %vm1931, %v1981, %v1988
      %v1990 = vrot.slane %v1985, 4
      %v1992 = vshrl.u32 %v1903, 16
      %v1994 = vrot.slane %v1992, 7
      %v1995 = vshll.u32 %v1903, 16
      %v1997 = vor.u32 %v1994, %v1995
      %v1998 = vsel %vm1931, %v1990, %v1997
      %v1999 = vrot.slane %v1994, 4
      %v2001 = vshrl.u32 %v1904, 16
      %v2003 = vrot.slane %v2001, 7
      %v2004 = vshll.u32 %v1904, 16
      %v2006 = vor.u32 %v2003, %v2004
      %v2007 = vsel %vm1931, %v1999, %v2006
      %v2008 = vrot.slane %v2003, 4
      %v2010 = vshrl.u32 %v1905, 16
      %v2012 = vrot.slane %v2010, 7
      %v2013 = vshll.u32 %v1905, 16
      %v2015 = vor.u32 %v2012, %v2013
      %v2016 = vsel %vm1931, %v2008, %v2015
      %v2017 = vrot.slane %v2012, 4
      %v2019 = vshrl.u32 %v1906, 16
      %v2021 = vrot.slane %v2019, 7
      %v2022 = vshll.u32 %v1906, 16
      %v2024 = vor.u32 %v2021, %v2022
      %v2025 = vsel %vm1931, %v2017, %v2024
      %v2026 = vrot.slane %v2021, 4
      %v2028 = vshrl.u32 %v1907, 16
      %v2030 = vrot.slane %v2028, 7
      %v2031 = vshll.u32 %v1907, 16
      %v2033 = vor.u32 %v2030, %v2031
      %v2034 = vsel %vm1931, %v2026, %v2033
      %v2035 = vrot.slane %v2030, 4
      %v2037 = vshrl.u32 %v1908, 16
      %v2039 = vrot.slane %v2037, 7
      %v2040 = vshll.u32 %v1908, 16
      %v2042 = vor.u32 %v2039, %v2040
      %v2043 = vsel %vm1931, %v2035, %v2042
      %v2044 = vrot.slane %v2039, 4
      %v2046 = vshrl.u32 %v1909, 16
      %v2048 = vrot.slane %v2046, 7
      %v2049 = vshll.u32 %v1909, 16
      %v2051 = vor.u32 %v2048, %v2049
      %v2052 = vsel %vm1931, %v2044, %v2051
      %v2053 = vrot.slane %v2048, 4
      %v2055 = vshrl.u32 %v1910, 16
      %v2057 = vrot.slane %v2055, 7
      %v2058 = vshll.u32 %v1910, 16
      %v2060 = vor.u32 %v2057, %v2058
      %v2061 = vsel %vm1931, %v2053, %v2060
      %v2062 = vrot.slane %v2057, 4
      %v2064 = vshrl.u32 %v1911, 16
      %v2066 = vrot.slane %v2064, 7
      %v2067 = vshll.u32 %v1911, 16
      %v2069 = vor.u32 %v2066, %v2067
      %v2070 = vsel %vm1931, %v2062, %v2069
      %v2071 = vrot.slane %v2066, 4
      %v2073 = vshrl.u32 %v1912, 16
      %v2075 = vrot.slane %v2073, 7
      %v2076 = vshll.u32 %v1912, 16
      %v2078 = vor.u32 %v2075, %v2076
      %v2079 = vsel %vm1931, %v2071, %v2078
      %v2080 = vrot.slane %v2075, 4
      %v2082 = vshrl.u32 %v1913, 16
      %v2084 = vrot.slane %v2082, 7
      %v2085 = vshll.u32 %v1913, 16
      %v2087 = vor.u32 %v2084, %v2085
      %v2088 = vsel %vm1931, %v2080, %v2087
      %v2089 = vrot.slane %v2084, 4
      %v2091 = vshrl.u32 %v1914, 16
      %v2093 = vrot.slane %v2091, 7
      %v2094 = vshll.u32 %v1914, 16
      %v2096 = vor.u32 %v2093, %v2094
      %v2097 = vsel %vm1931, %v2089, %v2096
      %v2098 = vrot.slane %v2093, 4
      %v2100 = vshrl.u32 %v1915, 16
      %v2102 = vrot.slane %v2100, 7
      %v2103 = vshll.u32 %v1915, 16
      %v2105 = vor.u32 %v2102, %v2103
      %v2106 = vsel %vm1931, %v2098, %v2105
      %v2107 = vrot.slane %v2102, 4
      %v2109 = vshrl.u32 %v1916, 16
      %v2111 = vrot.slane %v2109, 7
      %v2112 = vshll.u32 %v1916, 16
      %v2114 = vor.u32 %v2111, %v2112
      %v2115 = vsel %vm1931, %v2107, %v2114
      %v2116 = vrot.slane %v2111, 4
      %v2118 = vshrl.u32 %v1917, 16
      %v2120 = vrot.slane %v2118, 7
      %v2121 = vshll.u32 %v1917, 16
      %v2123 = vor.u32 %v2120, %v2121
      %v2124 = vsel %vm1931, %v2116, %v2123
      %v2125 = vrot.slane %v2120, 4
      %v2127 = vshrl.u32 %v1918, 16
      %v2129 = vrot.slane %v2127, 7
      %v2130 = vshll.u32 %v1918, 16
      %v2132 = vor.u32 %v2129, %v2130
      %v2133 = vsel %vm1931, %v2125, %v2132
      %v2134 = vrot.slane %v2129, 4
      %v2136 = vshrl.u32 %v1919, 16
      %v2138 = vrot.slane %v2136, 7
      %v2139 = vshll.u32 %v1919, 16
      %v2141 = vor.u32 %v2138, %v2139
      %v2142 = vsel %vm1931, %v2134, %v2141
      %v2143 = vrot.slane %v2138, 4
      %v2145 = vshrl.u32 %v1920, 16
      %v2147 = vrot.slane %v2145, 7
      %v2148 = vshll.u32 %v1920, 16
      %v2150 = vor.u32 %v2147, %v2148
      %v2151 = vsel %vm1931, %v2143, %v2150
      %v2152 = vrot.slane %v2147, 4
      %v2154 = vshrl.u32 %v1921, 16
      %v2156 = vrot.slane %v2154, 7
      %v2157 = vshll.u32 %v1921, 16
      %v2159 = vor.u32 %v2156, %v2157
      %v2160 = vsel %vm1931, %v2152, %v2159
      %v2161 = vrot.slane %v2156, 4
      %v2163 = vshrl.u32 %v1922, 16
      %v2165 = vrot.slane %v2163, 7
      %v2166 = vshll.u32 %v1922, 16
      %v2168 = vor.u32 %v2165, %v2166
      %v2169 = vsel %vm1931, %v2161, %v2168
      %v2170 = vrot.slane %v2165, 4
      %v2172 = vshrl.u32 %v1923, 16
      %v2174 = vrot.slane %v2172, 7
      %v2175 = vshll.u32 %v1923, 16
      %v2177 = vor.u32 %v2174, %v2175
      %v2178 = vsel %vm1931, %v2170, %v2177
      %v2179 = vrot.slane %v2174, 4
      %v2181 = vshrl.u32 %v1924, 16
      %v2183 = vrot.slane %v2181, 7
      %v2184 = vshll.u32 %v1924, 16
      %v2186 = vor.u32 %v2183, %v2184
      %v2187 = vsel %vm1931, %v2179, %v2186
      %v2188 = vrot.slane %v2183, 4
      %v2190 = vshrl.u32 %v1925, 16
      %v2192 = vrot.slane %v2190, 7
      %v2193 = vshll.u32 %v1925, 16
      %v2195 = vor.u32 %v2192, %v2193
      %v2196 = vsel %vm1931, %v2188, %v2195
      %v2197 = vrot.slane %v2192, 4
      %v2199 = vshrl.u32 %v1926, 16
      %v2201 = vrot.slane %v2199, 7
      %v2202 = vshll.u32 %v1926, 16
      %v2204 = vor.u32 %v2201, %v2202
      %v2205 = vsel %vm1931, %v2197, %v2204
      %v2206 = vrot.slane %v2201, 4
      %v2208 = vshrl.u32 %v1927, 16
      %v2210 = vrot.slane %v2208, 7
      %v2211 = vshll.u32 %v1927, 16
      %v2213 = vor.u32 %v2210, %v2211
      %v2214 = vsel %vm1931, %v2206, %v2213
      %v2215 = vrot.slane %v2210, 4
      %v2217 = vshrl.u32 %v1928, 16
      %v2219 = vrot.slane %v2217, 7
      %v2220 = vshll.u32 %v1928, 16
      %v2222 = vor.u32 %v2219, %v2220
      %v2223 = vsel %vm1931, %v2215, %v2222
      %2256 = vst.msk [vmem:[#allocation4] sm:$0xf] %vm1163, %v1944
      %2257 = vst.msk [vmem:[#allocation4 + $0x4] sm:$0xf] %vm1163, %v1953
      %2258 = vst.msk [vmem:[#allocation4 + $0x8] sm:$0xf] %vm1163, %v1962
      %2259 = vst.msk [vmem:[#allocation4 + $0xc] sm:$0xf] %vm1163, %v1971
      %2260 = vst.msk [vmem:[#allocation4 + $0x10] sm:$0xf] %vm1163, %v1980
      %2261 = vst.msk [vmem:[#allocation4 + $0x14] sm:$0xf] %vm1163, %v1989
      %2262 = vst.msk [vmem:[#allocation4 + $0x18] sm:$0xf] %vm1163, %v1998
      %2263 = vst.msk [vmem:[#allocation4 + $0x1c] sm:$0xf] %vm1163, %v2007
      %2264 = vst.msk [vmem:[#allocation4 + $0x20] sm:$0xf] %vm1163, %v2016
      %2265 = vst.msk [vmem:[#allocation4 + $0x24] sm:$0xf] %vm1163, %v2025
      %2266 = vst.msk [vmem:[#allocation4 + $0x28] sm:$0xf] %vm1163, %v2034
      %2267 = vst.msk [vmem:[#allocation4 + $0x2c] sm:$0xf] %vm1163, %v2043
      %2268 = vst.msk [vmem:[#allocation4 + $0x30] sm:$0xf] %vm1163, %v2052
      %2269 = vst.msk [vmem:[#allocation4 + $0x34] sm:$0xf] %vm1163, %v2061
      %2270 = vst.msk [vmem:[#allocation4 + $0x38] sm:$0xf] %vm1163, %v2070
      %2271 = vst.msk [vmem:[#allocation4 + $0x3c] sm:$0xf] %vm1163, %v2079
      %2272 = vst.msk [vmem:[#allocation4 + $0x40] sm:$0xf] %vm1163, %v2088
      %2273 = vst.msk [vmem:[#allocation4 + $0x44] sm:$0xf] %vm1163, %v2097
      %2274 = vst.msk [vmem:[#allocation4 + $0x48] sm:$0xf] %vm1163, %v2106
      %2275 = vst.msk [vmem:[#allocation4 + $0x4c] sm:$0xf] %vm1163, %v2115
      %2276 = vst.msk [vmem:[#allocation4 + $0x50] sm:$0xf] %vm1163, %v2124
      %2277 = vst.msk [vmem:[#allocation4 + $0x54] sm:$0xf] %vm1163, %v2133
      %2278 = vst.msk [vmem:[#allocation4 + $0x58] sm:$0xf] %vm1163, %v2142
      %2279 = vst.msk [vmem:[#allocation4 + $0x5c] sm:$0xf] %vm1163, %v2151
      %2280 = vst.msk [vmem:[#allocation4 + $0x60] sm:$0xf] %vm1163, %v2160
      %2281 = vst.msk [vmem:[#allocation4 + $0x64] sm:$0xf] %vm1163, %v2169
      %2282 = vst.msk [vmem:[#allocation4 + $0x68] sm:$0xf] %vm1163, %v2178
      %2283 = vst.msk [vmem:[#allocation4 + $0x6c] sm:$0xf] %vm1163, %v2187
      %2284 = vst.msk [vmem:[#allocation4 + $0x70] sm:$0xf] %vm1163, %v2196
      %2285 = vst.msk [vmem:[#allocation4 + $0x74] sm:$0xf] %vm1163, %v2205
      %2286 = vst.msk [vmem:[#allocation4 + $0x78] sm:$0xf] %vm1163, %v2214
      %2287 = vst.msk [vmem:[#allocation4 + $0x7c] sm:$0xf] %vm1163, %v2223
      %v2288 = vld [vmem:[#allocation2 + $0x8] sm:$0xf]
      %v2289 = vld [vmem:[#allocation2 + $0xc] sm:$0xf]
      %v2290 = vld [vmem:[#allocation2 + $0x10] sm:$0xf]
      %v2291 = vld [vmem:[#allocation2 + $0x14] sm:$0xf]
      %v2292 = vld [vmem:[#allocation2 + $0x18] sm:$0xf]
      %v2293 = vld [vmem:[#allocation2 + $0x1c] sm:$0xf]
      %v2294 = vld [vmem:[#allocation2 + $0x20] sm:$0xf]
      %v2295 = vld [vmem:[#allocation2 + $0x24] sm:$0xf]
      %v2296 = vld [vmem:[#allocation2 + $0x28] sm:$0xf]
      %v2297 = vld [vmem:[#allocation2 + $0x2c] sm:$0xf]
      %v2298 = vld [vmem:[#allocation2 + $0x30] sm:$0xf]
      %v2299 = vld [vmem:[#allocation2 + $0x34] sm:$0xf]
      %v2300 = vld [vmem:[#allocation2 + $0x38] sm:$0xf]
      %v2301 = vld [vmem:[#allocation2 + $0x3c] sm:$0xf]
      %v2302 = vld [vmem:[#allocation2 + $0x40] sm:$0xf]
      %v2303 = vld [vmem:[#allocation2 + $0x44] sm:$0xf]
      %v2304 = vld [vmem:[#allocation2 + $0x48] sm:$0xf]
      %v2305 = vld [vmem:[#allocation2 + $0x4c] sm:$0xf]
      %v2306 = vld [vmem:[#allocation2 + $0x50] sm:$0xf]
      %v2307 = vld [vmem:[#allocation2 + $0x54] sm:$0xf]
      %v2308 = vld [vmem:[#allocation2 + $0x58] sm:$0xf]
      %v2309 = vld [vmem:[#allocation2 + $0x5c] sm:$0xf]
      %v2310 = vld [vmem:[#allocation2 + $0x60] sm:$0xf]
      %v2311 = vld [vmem:[#allocation2 + $0x64] sm:$0xf]
      %v2312 = vld [vmem:[#allocation2 + $0x68] sm:$0xf]
      %v2313 = vld [vmem:[#allocation2 + $0x6c] sm:$0xf]
      %v2314 = vld [vmem:[#allocation2 + $0x70] sm:$0xf]
      %v2315 = vld [vmem:[#allocation2 + $0x74] sm:$0xf]
      %v2316 = vld [vmem:[#allocation2 + $0x78] sm:$0xf]
      %v2317 = vld [vmem:[#allocation2 + $0x7c] sm:$0xf]
      %v2318 = vld [vmem:[#allocation2 + $0x80] sm:$0xf]
      %v2319 = vld [vmem:[#allocation2 + $0x84] sm:$0xf]
      %2352 = vrot.lane.b32.xlu0 %v2288, 4
      %v2353 = vpop.permute.xlu0 %2352
      %2354 = vrot.lane.b32.xlu0 %v2289, 4
      %v2355 = vpop.permute.xlu0 %2354
      %2356 = vrot.lane.b32.xlu0 %v2290, 4
      %v2357 = vpop.permute.xlu0 %2356
      %2358 = vrot.lane.b32.xlu0 %v2291, 4
      %v2359 = vpop.permute.xlu0 %2358
      %2360 = vrot.lane.b32.xlu0 %v2292, 4
      %v2361 = vpop.permute.xlu0 %2360
      %2362 = vrot.lane.b32.xlu0 %v2293, 4
      %v2363 = vpop.permute.xlu0 %2362
      %2364 = vrot.lane.b32.xlu0 %v2294, 4
      %v2365 = vpop.permute.xlu0 %2364
      %2366 = vrot.lane.b32.xlu0 %v2295, 4
      %v2367 = vpop.permute.xlu0 %2366
      %2368 = vrot.lane.b32.xlu0 %v2296, 4
      %v2369 = vpop.permute.xlu0 %2368
      %2370 = vrot.lane.b32.xlu0 %v2297, 4
      %v2371 = vpop.permute.xlu0 %2370
      %2372 = vrot.lane.b32.xlu0 %v2298, 4
      %v2373 = vpop.permute.xlu0 %2372
      %2374 = vrot.lane.b32.xlu0 %v2299, 4
      %v2375 = vpop.permute.xlu0 %2374
      %2376 = vrot.lane.b32.xlu0 %v2300, 4
      %v2377 = vpop.permute.xlu0 %2376
      %2378 = vrot.lane.b32.xlu0 %v2301, 4
      %v2379 = vpop.permute.xlu0 %2378
      %2380 = vrot.lane.b32.xlu0 %v2302, 4
      %v2381 = vpop.permute.xlu0 %2380
      %2382 = vrot.lane.b32.xlu0 %v2303, 4
      %v2383 = vpop.permute.xlu0 %2382
      %2384 = vrot.lane.b32.xlu0 %v2304, 4
      %v2385 = vpop.permute.xlu0 %2384
      %2386 = vrot.lane.b32.xlu0 %v2305, 4
      %v2387 = vpop.permute.xlu0 %2386
      %2388 = vrot.lane.b32.xlu0 %v2306, 4
      %v2389 = vpop.permute.xlu0 %2388
      %2390 = vrot.lane.b32.xlu0 %v2307, 4
      %v2391 = vpop.permute.xlu0 %2390
      %2392 = vrot.lane.b32.xlu0 %v2308, 4
      %v2393 = vpop.permute.xlu0 %2392
      %2394 = vrot.lane.b32.xlu0 %v2309, 4
      %v2395 = vpop.permute.xlu0 %2394
      %2396 = vrot.lane.b32.xlu0 %v2310, 4
      %v2397 = vpop.permute.xlu0 %2396
      %2398 = vrot.lane.b32.xlu0 %v2311, 4
      %v2399 = vpop.permute.xlu0 %2398
      %2400 = vrot.lane.b32.xlu0 %v2312, 4
      %v2401 = vpop.permute.xlu0 %2400
      %2402 = vrot.lane.b32.xlu0 %v2313, 4
      %v2403 = vpop.permute.xlu0 %2402
      %2404 = vrot.lane.b32.xlu0 %v2314, 4
      %v2405 = vpop.permute.xlu0 %2404
      %2406 = vrot.lane.b32.xlu0 %v2315, 4
      %v2407 = vpop.permute.xlu0 %2406
      %2408 = vrot.lane.b32.xlu0 %v2316, 4
      %v2409 = vpop.permute.xlu0 %2408
      %2410 = vrot.lane.b32.xlu0 %v2317, 4
      %v2411 = vpop.permute.xlu0 %2410
      %2412 = vrot.lane.b32.xlu0 %v2318, 4
      %v2413 = vpop.permute.xlu0 %2412
      %2414 = vrot.lane.b32.xlu0 %v2319, 4
      %v2415 = vpop.permute.xlu0 %2414
      %vm2448 = vcmask 60448
      %2449 = vst.msk [vmem:[#allocation4] sm:$0xf] %vm2448, %v2353
      %2450 = vst.msk [vmem:[#allocation4 + $0x4] sm:$0xf] %vm2448, %v2355
      %2451 = vst.msk [vmem:[#allocation4 + $0x8] sm:$0xf] %vm2448, %v2357
      %2452 = vst.msk [vmem:[#allocation4 + $0xc] sm:$0xf] %vm2448, %v2359
      %2453 = vst.msk [vmem:[#allocation4 + $0x10] sm:$0xf] %vm2448, %v2361
      %2454 = vst.msk [vmem:[#allocation4 + $0x14] sm:$0xf] %vm2448, %v2363
      %2455 = vst.msk [vmem:[#allocation4 + $0x18] sm:$0xf] %vm2448, %v2365
      %2456 = vst.msk [vmem:[#allocation4 + $0x1c] sm:$0xf] %vm2448, %v2367
      %2457 = vst.msk [vmem:[#allocation4 + $0x20] sm:$0xf] %vm2448, %v2369
      %2458 = vst.msk [vmem:[#allocation4 + $0x24] sm:$0xf] %vm2448, %v2371
      %2459 = vst.msk [vmem:[#allocation4 + $0x28] sm:$0xf] %vm2448, %v2373
      %2460 = vst.msk [vmem:[#allocation4 + $0x2c] sm:$0xf] %vm2448, %v2375
      %2461 = vst.msk [vmem:[#allocation4 + $0x30] sm:$0xf] %vm2448, %v2377
      %2462 = vst.msk [vmem:[#allocation4 + $0x34] sm:$0xf] %vm2448, %v2379
      %2463 = vst.msk [vmem:[#allocation4 + $0x38] sm:$0xf] %vm2448, %v2381
      %2464 = vst.msk [vmem:[#allocation4 + $0x3c] sm:$0xf] %vm2448, %v2383
      %2465 = vst.msk [vmem:[#allocation4 + $0x40] sm:$0xf] %vm2448, %v2385
      %2466 = vst.msk [vmem:[#allocation4 + $0x44] sm:$0xf] %vm2448, %v2387
      %2467 = vst.msk [vmem:[#allocation4 + $0x48] sm:$0xf] %vm2448, %v2389
      %2468 = vst.msk [vmem:[#allocation4 + $0x4c] sm:$0xf] %vm2448, %v2391
      %2469 = vst.msk [vmem:[#allocation4 + $0x50] sm:$0xf] %vm2448, %v2393
      %2470 = vst.msk [vmem:[#allocation4 + $0x54] sm:$0xf] %vm2448, %v2395
      %2471 = vst.msk [vmem:[#allocation4 + $0x58] sm:$0xf] %vm2448, %v2397
      %2472 = vst.msk [vmem:[#allocation4 + $0x5c] sm:$0xf] %vm2448, %v2399
      %2473 = vst.msk [vmem:[#allocation4 + $0x60] sm:$0xf] %vm2448, %v2401
      %2474 = vst.msk [vmem:[#allocation4 + $0x64] sm:$0xf] %vm2448, %v2403
      %2475 = vst.msk [vmem:[#allocation4 + $0x68] sm:$0xf] %vm2448, %v2405
      %2476 = vst.msk [vmem:[#allocation4 + $0x6c] sm:$0xf] %vm2448, %v2407
      %2477 = vst.msk [vmem:[#allocation4 + $0x70] sm:$0xf] %vm2448, %v2409
      %2478 = vst.msk [vmem:[#allocation4 + $0x74] sm:$0xf] %vm2448, %v2411
      %2479 = vst.msk [vmem:[#allocation4 + $0x78] sm:$0xf] %vm2448, %v2413
      %2480 = vst.msk [vmem:[#allocation4 + $0x7c] sm:$0xf] %vm2448, %v2415
      %v2481 = vld [vmem:[#allocation2 + $0x8] sm:$0xf]
      %v2482 = vld [vmem:[#allocation2 + $0xc] sm:$0xf]
      %v2483 = vld [vmem:[#allocation2 + $0x10] sm:$0xf]
      %v2484 = vld [vmem:[#allocation2 + $0x14] sm:$0xf]
      %v2485 = vld [vmem:[#allocation2 + $0x18] sm:$0xf]
      %v2486 = vld [vmem:[#allocation2 + $0x1c] sm:$0xf]
      %v2487 = vld [vmem:[#allocation2 + $0x20] sm:$0xf]
      %v2488 = vld [vmem:[#allocation2 + $0x24] sm:$0xf]
      %v2489 = vld [vmem:[#allocation2 + $0x28] sm:$0xf]
      %v2490 = vld [vmem:[#allocation2 + $0x2c] sm:$0xf]
      %v2491 = vld [vmem:[#allocation2 + $0x30] sm:$0xf]
      %v2492 = vld [vmem:[#allocation2 + $0x34] sm:$0xf]
      %v2493 = vld [vmem:[#allocation2 + $0x38] sm:$0xf]
      %v2494 = vld [vmem:[#allocation2 + $0x3c] sm:$0xf]
      %v2495 = vld [vmem:[#allocation2 + $0x40] sm:$0xf]
      %v2496 = vld [vmem:[#allocation2 + $0x44] sm:$0xf]
      %v2497 = vld [vmem:[#allocation2 + $0x48] sm:$0xf]
      %v2498 = vld [vmem:[#allocation2 + $0x4c] sm:$0xf]
      %v2499 = vld [vmem:[#allocation2 + $0x50] sm:$0xf]
      %v2500 = vld [vmem:[#allocation2 + $0x54] sm:$0xf]
      %v2501 = vld [vmem:[#allocation2 + $0x58] sm:$0xf]
      %v2502 = vld [vmem:[#allocation2 + $0x5c] sm:$0xf]
      %v2503 = vld [vmem:[#allocation2 + $0x60] sm:$0xf]
      %v2504 = vld [vmem:[#allocation2 + $0x64] sm:$0xf]
      %v2505 = vld [vmem:[#allocation2 + $0x68] sm:$0xf]
      %v2506 = vld [vmem:[#allocation2 + $0x6c] sm:$0xf]
      %v2507 = vld [vmem:[#allocation2 + $0x70] sm:$0xf]
      %v2508 = vld [vmem:[#allocation2 + $0x74] sm:$0xf]
      %v2509 = vld [vmem:[#allocation2 + $0x78] sm:$0xf]
      %v2510 = vld [vmem:[#allocation2 + $0x7c] sm:$0xf]
      %v2511 = vld [vmem:[#allocation2 + $0x80] sm:$0xf]
      %v2512 = vld [vmem:[#allocation2 + $0x84] sm:$0xf]
      %v2513 = vld [vmem:[#allocation2 + $0x88] sm:$0x1]
      %vm2514 = vmpackc.low %vm1412, %vm1412
      %vm2515 = vmpackc.low %vm1413, %vm1413
      %vm2516 = vmpackc.low %vm1414, %vm1414
      %vm2517 = vmpackc.low %vm1415, %vm1415
      %vm2518 = vmpackc.low %vm1416, %vm1416
      %vm2519 = vmpackc.low %vm1417, %vm1417
      %vm2520 = vmpackc.low %vm1418, %vm1418
      %vm2521 = vmpackc.low %vm1419, %vm1419
      %vm2522 = vmpackc.low %vm1420, %vm1420
      %vm2523 = vmpackc.low %vm1421, %vm1421
      %vm2524 = vmpackc.low %vm1422, %vm1422
      %vm2525 = vmpackc.low %vm1423, %vm1423
      %vm2526 = vmpackc.low %vm1424, %vm1424
      %vm2527 = vmpackc.low %vm1425, %vm1425
      %vm2528 = vmpackc.low %vm1426, %vm1426
      %vm2529 = vmpackc.low %vm1427, %vm1427
      %vm2530 = vmpackc.low %vm1428, %vm1428
      %vm2531 = vmpackc.low %vm1429, %vm1429
      %vm2532 = vmpackc.low %vm1430, %vm1430
      %vm2533 = vmpackc.low %vm1431, %vm1431
      %vm2534 = vmpackc.low %vm1432, %vm1432
      %vm2535 = vmpackc.low %vm1433, %vm1433
      %vm2536 = vmpackc.low %vm1434, %vm1434
      %vm2537 = vmpackc.low %vm1435, %vm1435
      %vm2538 = vmpackc.low %vm1436, %vm1436
      %vm2539 = vmpackc.low %vm1437, %vm1437
      %vm2540 = vmpackc.low %vm1438, %vm1438
      %vm2541 = vmpackc.low %vm1439, %vm1439
      %vm2542 = vmpackc.low %vm1440, %vm1440
      %vm2543 = vmpackc.low %vm1441, %vm1441
      %vm2544 = vmpackc.low %vm1442, %vm1442
      %vm2545 = vmpackc.low %vm1443, %vm1443
      %v2546 = vsel %vm2514, 65537, 0
      %v2547 = vsel %vm2515, 65537, 0
      %v2548 = vsel %vm2516, 65537, 0
      %v2549 = vsel %vm2517, 65537, 0
      %v2550 = vsel %vm2518, 65537, 0
      %v2551 = vsel %vm2519, 65537, 0
      %v2552 = vsel %vm2520, 65537, 0
      %v2553 = vsel %vm2521, 65537, 0
      %v2554 = vsel %vm2522, 65537, 0
      %v2555 = vsel %vm2523, 65537, 0
      %v2556 = vsel %vm2524, 65537, 0
      %v2557 = vsel %vm2525, 65537, 0
      %v2558 = vsel %vm2526, 65537, 0
      %v2559 = vsel %vm2527, 65537, 0
      %v2560 = vsel %vm2528, 65537, 0
      %v2561 = vsel %vm2529, 65537, 0
      %v2562 = vsel %vm2530, 65537, 0
      %v2563 = vsel %vm2531, 65537, 0
      %v2564 = vsel %vm2532, 65537, 0
      %v2565 = vsel %vm2533, 65537, 0
      %v2566 = vsel %vm2534, 65537, 0
      %v2567 = vsel %vm2535, 65537, 0
      %v2568 = vsel %vm2536, 65537, 0
      %v2569 = vsel %vm2537, 65537, 0
      %v2570 = vsel %vm2538, 65537, 0
      %v2571 = vsel %vm2539, 65537, 0
      %v2572 = vsel %vm2540, 65537, 0
      %v2573 = vsel %vm2541, 65537, 0
      %v2574 = vsel %vm2542, 65537, 0
      %v2575 = vsel %vm2543, 65537, 0
      %v2576 = vsel %vm2544, 65537, 0
      %v2577 = vsel %vm2545, 65537, 0
      %v2579 = vshrl.u32 %v2546, 16
      %v2581 = vrot.slane %v2579, 7
      %v2582 = vshll.u32 %v2546, 16
      %v2584 = vor.u32 %v2581, %v2582
      %v2585 = vrot.slane %v2581, 4
      %v2587 = vshrl.u32 %v2547, 16
      %v2589 = vrot.slane %v2587, 7
      %v2590 = vshll.u32 %v2547, 16
      %v2592 = vor.u32 %v2589, %v2590
      %v2593 = vsel %vm1931, %v2585, %v2592
      %v2594 = vrot.slane %v2589, 4
      %v2596 = vshrl.u32 %v2548, 16
      %v2598 = vrot.slane %v2596, 7
      %v2599 = vshll.u32 %v2548, 16
      %v2601 = vor.u32 %v2598, %v2599
      %v2602 = vsel %vm1931, %v2594, %v2601
      %v2603 = vrot.slane %v2598, 4
      %v2605 = vshrl.u32 %v2549, 16
      %v2607 = vrot.slane %v2605, 7
      %v2608 = vshll.u32 %v2549, 16
      %v2610 = vor.u32 %v2607, %v2608
      %v2611 = vsel %vm1931, %v2603, %v2610
      %v2612 = vrot.slane %v2607, 4
      %v2614 = vshrl.u32 %v2550, 16
      %v2616 = vrot.slane %v2614, 7
      %v2617 = vshll.u32 %v2550, 16
      %v2619 = vor.u32 %v2616, %v2617
      %v2620 = vsel %vm1931, %v2612, %v2619
      %v2621 = vrot.slane %v2616, 4
      %v2623 = vshrl.u32 %v2551, 16
      %v2625 = vrot.slane %v2623, 7
      %v2626 = vshll.u32 %v2551, 16
      %v2628 = vor.u32 %v2625, %v2626
      %v2629 = vsel %vm1931, %v2621, %v2628
      %v2630 = vrot.slane %v2625, 4
      %v2632 = vshrl.u32 %v2552, 16
      %v2634 = vrot.slane %v2632, 7
      %v2635 = vshll.u32 %v2552, 16
      %v2637 = vor.u32 %v2634, %v2635
      %v2638 = vsel %vm1931, %v2630, %v2637
      %v2639 = vrot.slane %v2634, 4
      %v2641 = vshrl.u32 %v2553, 16
      %v2643 = vrot.slane %v2641, 7
      %v2644 = vshll.u32 %v2553, 16
      %v2646 = vor.u32 %v2643, %v2644
      %v2647 = vsel %vm1931, %v2639, %v2646
      %v2648 = vrot.slane %v2643, 4
      %v2650 = vshrl.u32 %v2554, 16
      %v2652 = vrot.slane %v2650, 7
      %v2653 = vshll.u32 %v2554, 16
      %v2655 = vor.u32 %v2652, %v2653
      %v2656 = vsel %vm1931, %v2648, %v2655
      %v2657 = vrot.slane %v2652, 4
      %v2659 = vshrl.u32 %v2555, 16
      %v2661 = vrot.slane %v2659, 7
      %v2662 = vshll.u32 %v2555, 16
      %v2664 = vor.u32 %v2661, %v2662
      %v2665 = vsel %vm1931, %v2657, %v2664
      %v2666 = vrot.slane %v2661, 4
      %v2668 = vshrl.u32 %v2556, 16
      %v2670 = vrot.slane %v2668, 7
      %v2671 = vshll.u32 %v2556, 16
      %v2673 = vor.u32 %v2670, %v2671
      %v2674 = vsel %vm1931, %v2666, %v2673
      %v2675 = vrot.slane %v2670, 4
      %v2677 = vshrl.u32 %v2557, 16
      %v2679 = vrot.slane %v2677, 7
      %v2680 = vshll.u32 %v2557, 16
      %v2682 = vor.u32 %v2679, %v2680
      %v2683 = vsel %vm1931, %v2675, %v2682
      %v2684 = vrot.slane %v2679, 4
      %v2686 = vshrl.u32 %v2558, 16
      %v2688 = vrot.slane %v2686, 7
      %v2689 = vshll.u32 %v2558, 16
      %v2691 = vor.u32 %v2688, %v2689
      %v2692 = vsel %vm1931, %v2684, %v2691
      %v2693 = vrot.slane %v2688, 4
      %v2695 = vshrl.u32 %v2559, 16
      %v2697 = vrot.slane %v2695, 7
      %v2698 = vshll.u32 %v2559, 16
      %v2700 = vor.u32 %v2697, %v2698
      %v2701 = vsel %vm1931, %v2693, %v2700
      %v2702 = vrot.slane %v2697, 4
      %v2704 = vshrl.u32 %v2560, 16
      %v2706 = vrot.slane %v2704, 7
      %v2707 = vshll.u32 %v2560, 16
      %v2709 = vor.u32 %v2706, %v2707
      %v2710 = vsel %vm1931, %v2702, %v2709
      %v2711 = vrot.slane %v2706, 4
      %v2713 = vshrl.u32 %v2561, 16
      %v2715 = vrot.slane %v2713, 7
      %v2716 = vshll.u32 %v2561, 16
      %v2718 = vor.u32 %v2715, %v2716
      %v2719 = vsel %vm1931, %v2711, %v2718
      %v2720 = vrot.slane %v2715, 4
      %v2722 = vshrl.u32 %v2562, 16
      %v2724 = vrot.slane %v2722, 7
      %v2725 = vshll.u32 %v2562, 16
      %v2727 = vor.u32 %v2724, %v2725
      %v2728 = vsel %vm1931, %v2720, %v2727
      %v2729 = vrot.slane %v2724, 4
      %v2731 = vshrl.u32 %v2563, 16
      %v2733 = vrot.slane %v2731, 7
      %v2734 = vshll.u32 %v2563, 16
      %v2736 = vor.u32 %v2733, %v2734
      %v2737 = vsel %vm1931, %v2729, %v2736
      %v2738 = vrot.slane %v2733, 4
      %v2740 = vshrl.u32 %v2564, 16
      %v2742 = vrot.slane %v2740, 7
      %v2743 = vshll.u32 %v2564, 16
      %v2745 = vor.u32 %v2742, %v2743
      %v2746 = vsel %vm1931, %v2738, %v2745
      %v2747 = vrot.slane %v2742, 4
      %v2749 = vshrl.u32 %v2565, 16
      %v2751 = vrot.slane %v2749, 7
      %v2752 = vshll.u32 %v2565, 16
      %v2754 = vor.u32 %v2751, %v2752
      %v2755 = vsel %vm1931, %v2747, %v2754
      %v2756 = vrot.slane %v2751, 4
      %v2758 = vshrl.u32 %v2566, 16
      %v2760 = vrot.slane %v2758, 7
      %v2761 = vshll.u32 %v2566, 16
      %v2763 = vor.u32 %v2760, %v2761
      %v2764 = vsel %vm1931, %v2756, %v2763
      %v2765 = vrot.slane %v2760, 4
      %v2767 = vshrl.u32 %v2567, 16
      %v2769 = vrot.slane %v2767, 7
      %v2770 = vshll.u32 %v2567, 16
      %v2772 = vor.u32 %v2769, %v2770
      %v2773 = vsel %vm1931, %v2765, %v2772
      %v2774 = vrot.slane %v2769, 4
      %v2776 = vshrl.u32 %v2568, 16
      %v2778 = vrot.slane %v2776, 7
      %v2779 = vshll.u32 %v2568, 16
      %v2781 = vor.u32 %v2778, %v2779
      %v2782 = vsel %vm1931, %v2774, %v2781
      %v2783 = vrot.slane %v2778, 4
      %v2785 = vshrl.u32 %v2569, 16
      %v2787 = vrot.slane %v2785, 7
      %v2788 = vshll.u32 %v2569, 16
      %v2790 = vor.u32 %v2787, %v2788
      %v2791 = vsel %vm1931, %v2783, %v2790
      %v2792 = vrot.slane %v2787, 4
      %v2794 = vshrl.u32 %v2570, 16
      %v2796 = vrot.slane %v2794, 7
      %v2797 = vshll.u32 %v2570, 16
      %v2799 = vor.u32 %v2796, %v2797
      %v2800 = vsel %vm1931, %v2792, %v2799
      %v2801 = vrot.slane %v2796, 4
      %v2803 = vshrl.u32 %v2571, 16
      %v2805 = vrot.slane %v2803, 7
      %v2806 = vshll.u32 %v2571, 16
      %v2808 = vor.u32 %v2805, %v2806
      %v2809 = vsel %vm1931, %v2801, %v2808
      %v2810 = vrot.slane %v2805, 4
      %v2812 = vshrl.u32 %v2572, 16
      %v2814 = vrot.slane %v2812, 7
      %v2815 = vshll.u32 %v2572, 16
      %v2817 = vor.u32 %v2814, %v2815
      %v2818 = vsel %vm1931, %v2810, %v2817
      %v2819 = vrot.slane %v2814, 4
      %v2821 = vshrl.u32 %v2573, 16
      %v2823 = vrot.slane %v2821, 7
      %v2824 = vshll.u32 %v2573, 16
      %v2826 = vor.u32 %v2823, %v2824
      %v2827 = vsel %vm1931, %v2819, %v2826
      %v2828 = vrot.slane %v2823, 4
      %v2830 = vshrl.u32 %v2574, 16
      %v2832 = vrot.slane %v2830, 7
      %v2833 = vshll.u32 %v2574, 16
      %v2835 = vor.u32 %v2832, %v2833
      %v2836 = vsel %vm1931, %v2828, %v2835
      %v2837 = vrot.slane %v2832, 4
      %v2839 = vshrl.u32 %v2575, 16
      %v2841 = vrot.slane %v2839, 7
      %v2842 = vshll.u32 %v2575, 16
      %v2844 = vor.u32 %v2841, %v2842
      %v2845 = vsel %vm1931, %v2837, %v2844
      %v2846 = vrot.slane %v2841, 4
      %v2848 = vshrl.u32 %v2576, 16
      %v2850 = vrot.slane %v2848, 7
      %v2851 = vshll.u32 %v2576, 16
      %v2853 = vor.u32 %v2850, %v2851
      %v2854 = vsel %vm1931, %v2846, %v2853
      %v2855 = vrot.slane %v2850, 4
      %v2857 = vshrl.u32 %v2577, 16
      %v2859 = vrot.slane %v2857, 7
      %v2860 = vshll.u32 %v2577, 16
      %v2862 = vor.u32 %v2859, %v2860
      %v2863 = vsel %vm1931, %v2855, %v2862
      %v2864 = vrot.slane %v2859, 4
      %vm2865 = vcmp.ne.s16.totalorder %v2584, 0
      %vm2866 = vcmp.ne.s16.totalorder %v2593, 0
      %vm2867 = vcmp.ne.s16.totalorder %v2602, 0
      %vm2868 = vcmp.ne.s16.totalorder %v2611, 0
      %vm2869 = vcmp.ne.s16.totalorder %v2620, 0
      %vm2870 = vcmp.ne.s16.totalorder %v2629, 0
      %vm2871 = vcmp.ne.s16.totalorder %v2638, 0
      %vm2872 = vcmp.ne.s16.totalorder %v2647, 0
      %vm2873 = vcmp.ne.s16.totalorder %v2656, 0
      %vm2874 = vcmp.ne.s16.totalorder %v2665, 0
      %vm2875 = vcmp.ne.s16.totalorder %v2674, 0
      %vm2876 = vcmp.ne.s16.totalorder %v2683, 0
      %vm2877 = vcmp.ne.s16.totalorder %v2692, 0
      %vm2878 = vcmp.ne.s16.totalorder %v2701, 0
      %vm2879 = vcmp.ne.s16.totalorder %v2710, 0
      %vm2880 = vcmp.ne.s16.totalorder %v2719, 0
      %vm2881 = vcmp.ne.s16.totalorder %v2728, 0
      %vm2882 = vcmp.ne.s16.totalorder %v2737, 0
      %vm2883 = vcmp.ne.s16.totalorder %v2746, 0
      %vm2884 = vcmp.ne.s16.totalorder %v2755, 0
      %vm2885 = vcmp.ne.s16.totalorder %v2764, 0
      %vm2886 = vcmp.ne.s16.totalorder %v2773, 0
      %vm2887 = vcmp.ne.s16.totalorder %v2782, 0
      %vm2888 = vcmp.ne.s16.totalorder %v2791, 0
      %vm2889 = vcmp.ne.s16.totalorder %v2800, 0
      %vm2890 = vcmp.ne.s16.totalorder %v2809, 0
      %vm2891 = vcmp.ne.s16.totalorder %v2818, 0
      %vm2892 = vcmp.ne.s16.totalorder %v2827, 0
      %vm2893 = vcmp.ne.s16.totalorder %v2836, 0
      %vm2894 = vcmp.ne.s16.totalorder %v2845, 0
      %vm2895 = vcmp.ne.s16.totalorder %v2854, 0
      %vm2896 = vcmp.ne.s16.totalorder %v2863, 0
      %vm2897 = vcmp.ne.s16.totalorder %v2864, 0
      %v2898 = vsel %vm2865, %v2481, 0
      %v2899 = vsel %vm2866, %v2482, 0
      %v2900 = vsel %vm2867, %v2483, 0
      %v2901 = vsel %vm2868, %v2484, 0
      %v2902 = vsel %vm2869, %v2485, 0
      %v2903 = vsel %vm2870, %v2486, 0
      %v2904 = vsel %vm2871, %v2487, 0
      %v2905 = vsel %vm2872, %v2488, 0
      %v2906 = vsel %vm2873, %v2489, 0
      %v2907 = vsel %vm2874, %v2490, 0
      %v2908 = vsel %vm2875, %v2491, 0
      %v2909 = vsel %vm2876, %v2492, 0
      %v2910 = vsel %vm2877, %v2493, 0
      %v2911 = vsel %vm2878, %v2494, 0
      %v2912 = vsel %vm2879, %v2495, 0
      %v2913 = vsel %vm2880, %v2496, 0
      %v2914 = vsel %vm2881, %v2497, 0
      %v2915 = vsel %vm2882, %v2498, 0
      %v2916 = vsel %vm2883, %v2499, 0
      %v2917 = vsel %vm2884, %v2500, 0
      %v2918 = vsel %vm2885, %v2501, 0
      %v2919 = vsel %vm2886, %v2502, 0
      %v2920 = vsel %vm2887, %v2503, 0
      %v2921 = vsel %vm2888, %v2504, 0
      %v2922 = vsel %vm2889, %v2505, 0
      %v2923 = vsel %vm2890, %v2506, 0
      %v2924 = vsel %vm2891, %v2507, 0
      %v2925 = vsel %vm2892, %v2508, 0
      %v2926 = vsel %vm2893, %v2509, 0
      %v2927 = vsel %vm2894, %v2510, 0
      %v2928 = vsel %vm2895, %v2511, 0
      %v2929 = vsel %vm2896, %v2512, 0
      %v2930 = vsel %vm2897, %v2513, 0
      %v2932 = vshrl.u32 %v2898, 16
      %v2934 = vrot.slane %v2932, 4
      %v2935 = vshll.u32 %v2898, 16
      %v2937 = vrot.slane %v2935, 5
      %v2938 = vor.u32 %v2934, %v2937
      %v2939 = vrot.slane %v2938, 4
      %v2941 = vshll.u32 %v2899, 16
      %v2943 = vrot.slane %v2941, 5
      %v2944 = vsel %vm1543, %v2939, %v2943
      %v2945 = vshrl.u32 %v2899, 16
      %v2947 = vrot.slane %v2945, 4
      %v2948 = vor.u32 %v2947, %v2943
      %v2949 = vrot.slane %v2948, 4
      %v2951 = vshll.u32 %v2900, 16
      %v2953 = vrot.slane %v2951, 5
      %v2954 = vsel %vm1543, %v2949, %v2953
      %v2955 = vshrl.u32 %v2900, 16
      %v2957 = vrot.slane %v2955, 4
      %v2958 = vor.u32 %v2957, %v2953
      %v2959 = vrot.slane %v2958, 4
      %v2961 = vshll.u32 %v2901, 16
      %v2963 = vrot.slane %v2961, 5
      %v2964 = vsel %vm1543, %v2959, %v2963
      %v2965 = vshrl.u32 %v2901, 16
      %v2967 = vrot.slane %v2965, 4
      %v2968 = vor.u32 %v2967, %v2963
      %v2969 = vrot.slane %v2968, 4
      %v2971 = vshll.u32 %v2902, 16
      %v2973 = vrot.slane %v2971, 5
      %v2974 = vsel %vm1543, %v2969, %v2973
      %v2975 = vshrl.u32 %v2902, 16
      %v2977 = vrot.slane %v2975, 4
      %v2978 = vor.u32 %v2977, %v2973
      %v2979 = vrot.slane %v2978, 4
      %v2981 = vshll.u32 %v2903, 16
      %v2983 = vrot.slane %v2981, 5
      %v2984 = vsel %vm1543, %v2979, %v2983
      %v2985 = vshrl.u32 %v2903, 16
      %v2987 = vrot.slane %v2985, 4
      %v2988 = vor.u32 %v2987, %v2983
      %v2989 = vrot.slane %v2988, 4
      %v2991 = vshll.u32 %v2904, 16
      %v2993 = vrot.slane %v2991, 5
      %v2994 = vsel %vm1543, %v2989, %v2993
      %v2995 = vshrl.u32 %v2904, 16
      %v2997 = vrot.slane %v2995, 4
      %v2998 = vor.u32 %v2997, %v2993
      %v2999 = vrot.slane %v2998, 4
      %v3001 = vshll.u32 %v2905, 16
      %v3003 = vrot.slane %v3001, 5
      %v3004 = vsel %vm1543, %v2999, %v3003
      %v3005 = vshrl.u32 %v2905, 16
      %v3007 = vrot.slane %v3005, 4
      %v3008 = vor.u32 %v3007, %v3003
      %v3009 = vrot.slane %v3008, 4
      %v3011 = vshll.u32 %v2906, 16
      %v3013 = vrot.slane %v3011, 5
      %v3014 = vsel %vm1543, %v3009, %v3013
      %v3015 = vshrl.u32 %v2906, 16
      %v3017 = vrot.slane %v3015, 4
      %v3018 = vor.u32 %v3017, %v3013
      %v3019 = vrot.slane %v3018, 4
      %v3021 = vshll.u32 %v2907, 16
      %v3023 = vrot.slane %v3021, 5
      %v3024 = vsel %vm1543, %v3019, %v3023
      %v3025 = vshrl.u32 %v2907, 16
      %v3027 = vrot.slane %v3025, 4
      %v3028 = vor.u32 %v3027, %v3023
      %v3029 = vrot.slane %v3028, 4
      %v3031 = vshll.u32 %v2908, 16
      %v3033 = vrot.slane %v3031, 5
      %v3034 = vsel %vm1543, %v3029, %v3033
      %v3035 = vshrl.u32 %v2908, 16
      %v3037 = vrot.slane %v3035, 4
      %v3038 = vor.u32 %v3037, %v3033
      %v3039 = vrot.slane %v3038, 4
      %v3041 = vshll.u32 %v2909, 16
      %v3043 = vrot.slane %v3041, 5
      %v3044 = vsel %vm1543, %v3039, %v3043
      %v3045 = vshrl.u32 %v2909, 16
      %v3047 = vrot.slane %v3045, 4
      %v3048 = vor.u32 %v3047, %v3043
      %v3049 = vrot.slane %v3048, 4
      %v3051 = vshll.u32 %v2910, 16
      %v3053 = vrot.slane %v3051, 5
      %v3054 = vsel %vm1543, %v3049, %v3053
      %v3055 = vshrl.u32 %v2910, 16
      %v3057 = vrot.slane %v3055, 4
      %v3058 = vor.u32 %v3057, %v3053
      %v3059 = vrot.slane %v3058, 4
      %v3061 = vshll.u32 %v2911, 16
      %v3063 = vrot.slane %v3061, 5
      %v3064 = vsel %vm1543, %v3059, %v3063
      %v3065 = vshrl.u32 %v2911, 16
      %v3067 = vrot.slane %v3065, 4
      %v3068 = vor.u32 %v3067, %v3063
      %v3069 = vrot.slane %v3068, 4
      %v3071 = vshll.u32 %v2912, 16
      %v3073 = vrot.slane %v3071, 5
      %v3074 = vsel %vm1543, %v3069, %v3073
      %v3075 = vshrl.u32 %v2912, 16
      %v3077 = vrot.slane %v3075, 4
      %v3078 = vor.u32 %v3077, %v3073
      %v3079 = vrot.slane %v3078, 4
      %v3081 = vshll.u32 %v2913, 16
      %v3083 = vrot.slane %v3081, 5
      %v3084 = vsel %vm1543, %v3079, %v3083
      %v3085 = vshrl.u32 %v2913, 16
      %v3087 = vrot.slane %v3085, 4
      %v3088 = vor.u32 %v3087, %v3083
      %v3089 = vrot.slane %v3088, 4
      %v3091 = vshll.u32 %v2914, 16
      %v3093 = vrot.slane %v3091, 5
      %v3094 = vsel %vm1543, %v3089, %v3093
      %v3095 = vshrl.u32 %v2914, 16
      %v3097 = vrot.slane %v3095, 4
      %v3098 = vor.u32 %v3097, %v3093
      %v3099 = vrot.slane %v3098, 4
      %v3101 = vshll.u32 %v2915, 16
      %v3103 = vrot.slane %v3101, 5
      %v3104 = vsel %vm1543, %v3099, %v3103
      %v3105 = vshrl.u32 %v2915, 16
      %v3107 = vrot.slane %v3105, 4
      %v3108 = vor.u32 %v3107, %v3103
      %v3109 = vrot.slane %v3108, 4
      %v3111 = vshll.u32 %v2916, 16
      %v3113 = vrot.slane %v3111, 5
      %v3114 = vsel %vm1543, %v3109, %v3113
      %v3115 = vshrl.u32 %v2916, 16
      %v3117 = vrot.slane %v3115, 4
      %v3118 = vor.u32 %v3117, %v3113
      %v3119 = vrot.slane %v3118, 4
      %v3121 = vshll.u32 %v2917, 16
      %v3123 = vrot.slane %v3121, 5
      %v3124 = vsel %vm1543, %v3119, %v3123
      %v3125 = vshrl.u32 %v2917, 16
      %v3127 = vrot.slane %v3125, 4
      %v3128 = vor.u32 %v3127, %v3123
      %v3129 = vrot.slane %v3128, 4
      %v3131 = vshll.u32 %v2918, 16
      %v3133 = vrot.slane %v3131, 5
      %v3134 = vsel %vm1543, %v3129, %v3133
      %v3135 = vshrl.u32 %v2918, 16
      %v3137 = vrot.slane %v3135, 4
      %v3138 = vor.u32 %v3137, %v3133
      %v3139 = vrot.slane %v3138, 4
      %v3141 = vshll.u32 %v2919, 16
      %v3143 = vrot.slane %v3141, 5
      %v3144 = vsel %vm1543, %v3139, %v3143
      %v3145 = vshrl.u32 %v2919, 16
      %v3147 = vrot.slane %v3145, 4
      %v3148 = vor.u32 %v3147, %v3143
      %v3149 = vrot.slane %v3148, 4
      %v3151 = vshll.u32 %v2920, 16
      %v3153 = vrot.slane %v3151, 5
      %v3154 = vsel %vm1543, %v3149, %v3153
      %v3155 = vshrl.u32 %v2920, 16
      %v3157 = vrot.slane %v3155, 4
      %v3158 = vor.u32 %v3157, %v3153
      %v3159 = vrot.slane %v3158, 4
      %v3161 = vshll.u32 %v2921, 16
      %v3163 = vrot.slane %v3161, 5
      %v3164 = vsel %vm1543, %v3159, %v3163
      %v3165 = vshrl.u32 %v2921, 16
      %v3167 = vrot.slane %v3165, 4
      %v3168 = vor.u32 %v3167, %v3163
      %v3169 = vrot.slane %v3168, 4
      %v3171 = vshll.u32 %v2922, 16
      %v3173 = vrot.slane %v3171, 5
      %v3174 = vsel %vm1543, %v3169, %v3173
      %v3175 = vshrl.u32 %v2922, 16
      %v3177 = vrot.slane %v3175, 4
      %v3178 = vor.u32 %v3177, %v3173
      %v3179 = vrot.slane %v3178, 4
      %v3181 = vshll.u32 %v2923, 16
      %v3183 = vrot.slane %v3181, 5
      %v3184 = vsel %vm1543, %v3179, %v3183
      %v3185 = vshrl.u32 %v2923, 16
      %v3187 = vrot.slane %v3185, 4
      %v3188 = vor.u32 %v3187, %v3183
      %v3189 = vrot.slane %v3188, 4
      %v3191 = vshll.u32 %v2924, 16
      %v3193 = vrot.slane %v3191, 5
      %v3194 = vsel %vm1543, %v3189, %v3193
      %v3195 = vshrl.u32 %v2924, 16
      %v3197 = vrot.slane %v3195, 4
      %v3198 = vor.u32 %v3197, %v3193
      %v3199 = vrot.slane %v3198, 4
      %v3201 = vshll.u32 %v2925, 16
      %v3203 = vrot.slane %v3201, 5
      %v3204 = vsel %vm1543, %v3199, %v3203
      %v3205 = vshrl.u32 %v2925, 16
      %v3207 = vrot.slane %v3205, 4
      %v3208 = vor.u32 %v3207, %v3203
      %v3209 = vrot.slane %v3208, 4
      %v3211 = vshll.u32 %v2926, 16
      %v3213 = vrot.slane %v3211, 5
      %v3214 = vsel %vm1543, %v3209, %v3213
      %v3215 = vshrl.u32 %v2926, 16
      %v3217 = vrot.slane %v3215, 4
      %v3218 = vor.u32 %v3217, %v3213
      %v3219 = vrot.slane %v3218, 4
      %v3221 = vshll.u32 %v2927, 16
      %v3223 = vrot.slane %v3221, 5
      %v3224 = vsel %vm1543, %v3219, %v3223
      %v3225 = vshrl.u32 %v2927, 16
      %v3227 = vrot.slane %v3225, 4
      %v3228 = vor.u32 %v3227, %v3223
      %v3229 = vrot.slane %v3228, 4
      %v3231 = vshll.u32 %v2928, 16
      %v3233 = vrot.slane %v3231, 5
      %v3234 = vsel %vm1543, %v3229, %v3233
      %v3235 = vshrl.u32 %v2928, 16
      %v3237 = vrot.slane %v3235, 4
      %v3238 = vor.u32 %v3237, %v3233
      %v3239 = vrot.slane %v3238, 4
      %v3241 = vshll.u32 %v2929, 16
      %v3243 = vrot.slane %v3241, 5
      %v3244 = vsel %vm1543, %v3239, %v3243
      %v3245 = vshrl.u32 %v2929, 16
      %v3247 = vrot.slane %v3245, 4
      %v3248 = vor.u32 %v3247, %v3243
      %v3249 = vrot.slane %v3248, 4
      %v3251 = vshll.u32 %v2930, 16
      %v3253 = vrot.slane %v3251, 5
      %v3254 = vsel %vm1543, %v3249, %v3253
      %3255 = vrot.lane.b32.xlu0 %v2944, 8
      %v3256 = vpop.permute.xlu0 %3255
      %3257 = vrot.lane.b32.xlu0 %v2954, 8
      %v3258 = vpop.permute.xlu0 %3257
      %3259 = vrot.lane.b32.xlu0 %v2964, 8
      %v3260 = vpop.permute.xlu0 %3259
      %3261 = vrot.lane.b32.xlu0 %v2974, 8
      %v3262 = vpop.permute.xlu0 %3261
      %3263 = vrot.lane.b32.xlu0 %v2984, 8
      %v3264 = vpop.permute.xlu0 %3263
      %3265 = vrot.lane.b32.xlu0 %v2994, 8
      %v3266 = vpop.permute.xlu0 %3265
      %3267 = vrot.lane.b32.xlu0 %v3004, 8
      %v3268 = vpop.permute.xlu0 %3267
      %3269 = vrot.lane.b32.xlu0 %v3014, 8
      %v3270 = vpop.permute.xlu0 %3269
      %3271 = vrot.lane.b32.xlu0 %v3024, 8
      %v3272 = vpop.permute.xlu0 %3271
      %3273 = vrot.lane.b32.xlu0 %v3034, 8
      %v3274 = vpop.permute.xlu0 %3273
      %3275 = vrot.lane.b32.xlu0 %v3044, 8
      %v3276 = vpop.permute.xlu0 %3275
      %3277 = vrot.lane.b32.xlu0 %v3054, 8
      %v3278 = vpop.permute.xlu0 %3277
      %3279 = vrot.lane.b32.xlu0 %v3064, 8
      %v3280 = vpop.permute.xlu0 %3279
      %3281 = vrot.lane.b32.xlu0 %v3074, 8
      %v3282 = vpop.permute.xlu0 %3281
      %3283 = vrot.lane.b32.xlu0 %v3084, 8
      %v3284 = vpop.permute.xlu0 %3283
      %3285 = vrot.lane.b32.xlu0 %v3094, 8
      %v3286 = vpop.permute.xlu0 %3285
      %3287 = vrot.lane.b32.xlu0 %v3104, 8
      %v3288 = vpop.permute.xlu0 %3287
      %3289 = vrot.lane.b32.xlu0 %v3114, 8
      %v3290 = vpop.permute.xlu0 %3289
      %3291 = vrot.lane.b32.xlu0 %v3124, 8
      %v3292 = vpop.permute.xlu0 %3291
      %3293 = vrot.lane.b32.xlu0 %v3134, 8
      %v3294 = vpop.permute.xlu0 %3293
      %3295 = vrot.lane.b32.xlu0 %v3144, 8
      %v3296 = vpop.permute.xlu0 %3295
      %3297 = vrot.lane.b32.xlu0 %v3154, 8
      %v3298 = vpop.permute.xlu0 %3297
      %3299 = vrot.lane.b32.xlu0 %v3164, 8
      %v3300 = vpop.permute.xlu0 %3299
      %3301 = vrot.lane.b32.xlu0 %v3174, 8
      %v3302 = vpop.permute.xlu0 %3301
      %3303 = vrot.lane.b32.xlu0 %v3184, 8
      %v3304 = vpop.permute.xlu0 %3303
      %3305 = vrot.lane.b32.xlu0 %v3194, 8
      %v3306 = vpop.permute.xlu0 %3305
      %3307 = vrot.lane.b32.xlu0 %v3204, 8
      %v3308 = vpop.permute.xlu0 %3307
      %3309 = vrot.lane.b32.xlu0 %v3214, 8
      %v3310 = vpop.permute.xlu0 %3309
      %3311 = vrot.lane.b32.xlu0 %v3224, 8
      %v3312 = vpop.permute.xlu0 %3311
      %3313 = vrot.lane.b32.xlu0 %v3234, 8
      %v3314 = vpop.permute.xlu0 %3313
      %3315 = vrot.lane.b32.xlu0 %v3244, 8
      %v3316 = vpop.permute.xlu0 %3315
      %3317 = vrot.lane.b32.xlu0 %v3254, 8
      %v3318 = vpop.permute.xlu0 %3317
      %vm3351 = vcmask 93248
      %3352 = vst.msk [vmem:[#allocation4] sm:$0xf] %vm3351, %v3256
      %3353 = vst.msk [vmem:[#allocation4 + $0x4] sm:$0xf] %vm3351, %v3258
      %3354 = vst.msk [vmem:[#allocation4 + $0x8] sm:$0xf] %vm3351, %v3260
      %3355 = vst.msk [vmem:[#allocation4 + $0xc] sm:$0xf] %vm3351, %v3262
      %3356 = vst.msk [vmem:[#allocation4 + $0x10] sm:$0xf] %vm3351, %v3264
      %3357 = vst.msk [vmem:[#allocation4 + $0x14] sm:$0xf] %vm3351, %v3266
      %3358 = vst.msk [vmem:[#allocation4 + $0x18] sm:$0xf] %vm3351, %v3268
      %3359 = vst.msk [vmem:[#allocation4 + $0x1c] sm:$0xf] %vm3351, %v3270
      %3360 = vst.msk [vmem:[#allocation4 + $0x20] sm:$0xf] %vm3351, %v3272
      %3361 = vst.msk [vmem:[#allocation4 + $0x24] sm:$0xf] %vm3351, %v3274
      %3362 = vst.msk [vmem:[#allocation4 + $0x28] sm:$0xf] %vm3351, %v3276
      %3363 = vst.msk [vmem:[#allocation4 + $0x2c] sm:$0xf] %vm3351, %v3278
      %3364 = vst.msk [vmem:[#allocation4 + $0x30] sm:$0xf] %vm3351, %v3280
      %3365 = vst.msk [vmem:[#allocation4 + $0x34] sm:$0xf] %vm3351, %v3282
      %3366 = vst.msk [vmem:[#allocation4 + $0x38] sm:$0xf] %vm3351, %v3284
      %3367 = vst.msk [vmem:[#allocation4 + $0x3c] sm:$0xf] %vm3351, %v3286
      %3368 = vst.msk [vmem:[#allocation4 + $0x40] sm:$0xf] %vm3351, %v3288
      %3369 = vst.msk [vmem:[#allocation4 + $0x44] sm:$0xf] %vm3351, %v3290
      %3370 = vst.msk [vmem:[#allocation4 + $0x48] sm:$0xf] %vm3351, %v3292
      %3371 = vst.msk [vmem:[#allocation4 + $0x4c] sm:$0xf] %vm3351, %v3294
      %3372 = vst.msk [vmem:[#allocation4 + $0x50] sm:$0xf] %vm3351, %v3296
      %3373 = vst.msk [vmem:[#allocation4 + $0x54] sm:$0xf] %vm3351, %v3298
      %3374 = vst.msk [vmem:[#allocation4 + $0x58] sm:$0xf] %vm3351, %v3300
      %3375 = vst.msk [vmem:[#allocation4 + $0x5c] sm:$0xf] %vm3351, %v3302
      %3376 = vst.msk [vmem:[#allocation4 + $0x60] sm:$0xf] %vm3351, %v3304
      %3377 = vst.msk [vmem:[#allocation4 + $0x64] sm:$0xf] %vm3351, %v3306
      %3378 = vst.msk [vmem:[#allocation4 + $0x68] sm:$0xf] %vm3351, %v3308
      %3379 = vst.msk [vmem:[#allocation4 + $0x6c] sm:$0xf] %vm3351, %v3310
      %3380 = vst.msk [vmem:[#allocation4 + $0x70] sm:$0xf] %vm3351, %v3312
      %3381 = vst.msk [vmem:[#allocation4 + $0x74] sm:$0xf] %vm3351, %v3314
      %3382 = vst.msk [vmem:[#allocation4 + $0x78] sm:$0xf] %vm3351, %v3316
      %3383 = vst.msk [vmem:[#allocation4 + $0x7c] sm:$0xf] %vm3351, %v3318
      %v3384 = vld [vmem:[#allocation2 + $0xc] sm:$0x8]
      %v3385 = vld [vmem:[#allocation2 + $0x10] sm:$0xf]
      %v3386 = vld [vmem:[#allocation2 + $0x14] sm:$0xf]
      %v3387 = vld [vmem:[#allocation2 + $0x18] sm:$0xf]
      %v3388 = vld [vmem:[#allocation2 + $0x1c] sm:$0xf]
      %v3389 = vld [vmem:[#allocation2 + $0x20] sm:$0xf]
      %v3390 = vld [vmem:[#allocation2 + $0x24] sm:$0xf]
      %v3391 = vld [vmem:[#allocation2 + $0x28] sm:$0xf]
      %v3392 = vld [vmem:[#allocation2 + $0x2c] sm:$0xf]
      %v3393 = vld [vmem:[#allocation2 + $0x30] sm:$0xf]
      %v3394 = vld [vmem:[#allocation2 + $0x34] sm:$0xf]
      %v3395 = vld [vmem:[#allocation2 + $0x38] sm:$0xf]
      %v3396 = vld [vmem:[#allocation2 + $0x3c] sm:$0xf]
      %v3397 = vld [vmem:[#allocation2 + $0x40] sm:$0xf]
      %v3398 = vld [vmem:[#allocation2 + $0x44] sm:$0xf]
      %v3399 = vld [vmem:[#allocation2 + $0x48] sm:$0xf]
      %v3400 = vld [vmem:[#allocation2 + $0x4c] sm:$0xf]
      %v3401 = vld [vmem:[#allocation2 + $0x50] sm:$0xf]
      %v3402 = vld [vmem:[#allocation2 + $0x54] sm:$0xf]
      %v3403 = vld [vmem:[#allocation2 + $0x58] sm:$0xf]
      %v3404 = vld [vmem:[#allocation2 + $0x5c] sm:$0xf]
      %v3405 = vld [vmem:[#allocation2 + $0x60] sm:$0xf]
      %v3406 = vld [vmem:[#allocation2 + $0x64] sm:$0xf]
      %v3407 = vld [vmem:[#allocation2 + $0x68] sm:$0xf]
      %v3408 = vld [vmem:[#allocation2 + $0x6c] sm:$0xf]
      %v3409 = vld [vmem:[#allocation2 + $0x70] sm:$0xf]
      %v3410 = vld [vmem:[#allocation2 + $0x74] sm:$0xf]
      %v3411 = vld [vmem:[#allocation2 + $0x78] sm:$0xf]
      %v3412 = vld [vmem:[#allocation2 + $0x7c] sm:$0xf]
      %v3413 = vld [vmem:[#allocation2 + $0x80] sm:$0xf]
      %v3414 = vld [vmem:[#allocation2 + $0x84] sm:$0xf]
      %v3415 = vld [vmem:[#allocation2 + $0x88] sm:$0xf]
      %v3416 = vld [vmem:[#allocation2 + $0x8c] sm:$0xf]
      %v3417 = vsel %vm1863, %v3384, 0
      %v3418 = vsel %vm1864, %v3385, 0
      %v3419 = vsel %vm1865, %v3386, 0
      %v3420 = vsel %vm1866, %v3387, 0
      %v3421 = vsel %vm1867, %v3388, 0
      %v3422 = vsel %vm1868, %v3389, 0
      %v3423 = vsel %vm1869, %v3390, 0
      %v3424 = vsel %vm1870, %v3391, 0
      %v3425 = vsel %vm1871, %v3392, 0
      %v3426 = vsel %vm1872, %v3393, 0
      %v3427 = vsel %vm1873, %v3394, 0
      %v3428 = vsel %vm1874, %v3395, 0
      %v3429 = vsel %vm1875, %v3396, 0
      %v3430 = vsel %vm1876, %v3397, 0
      %v3431 = vsel %vm1877, %v3398, 0
      %v3432 = vsel %vm1878, %v3399, 0
      %v3433 = vsel %vm1879, %v3400, 0
      %v3434 = vsel %vm1880, %v3401, 0
      %v3435 = vsel %vm1881, %v3402, 0
      %v3436 = vsel %vm1882, %v3403, 0
      %v3437 = vsel %vm1883, %v3404, 0
      %v3438 = vsel %vm1884, %v3405, 0
      %v3439 = vsel %vm1885, %v3406, 0
      %v3440 = vsel %vm1886, %v3407, 0
      %v3441 = vsel %vm1887, %v3408, 0
      %v3442 = vsel %vm1888, %v3409, 0
      %v3443 = vsel %vm1889, %v3410, 0
      %v3444 = vsel %vm1890, %v3411, 0
      %v3445 = vsel %vm1891, %v3412, 0
      %v3446 = vsel %vm1892, %v3413, 0
      %v3447 = vsel %vm1893, %v3414, 0
      %v3448 = vsel %vm1894, %v3415, 0
      %v3449 = vsel %vm1895, %v3416, 0
      %v3451 = vshrl.u32 %v3417, 16
      %v3453 = vrot.slane %v3451, 7
      %v3454 = vrot.slane %v3453, 4
      %v3456 = vshrl.u32 %v3418, 16
      %v3458 = vrot.slane %v3456, 7
      %v3459 = vshll.u32 %v3418, 16
      %v3461 = vor.u32 %v3458, %v3459
      %v3462 = vsel %vm1931, %v3454, %v3461
      %v3463 = vrot.slane %v3458, 4
      %v3465 = vshrl.u32 %v3419, 16
      %v3467 = vrot.slane %v3465, 7
      %v3468 = vshll.u32 %v3419, 16
      %v3470 = vor.u32 %v3467, %v3468
      %v3471 = vsel %vm1931, %v3463, %v3470
      %v3472 = vrot.slane %v3467, 4
      %v3474 = vshrl.u32 %v3420, 16
      %v3476 = vrot.slane %v3474, 7
      %v3477 = vshll.u32 %v3420, 16
      %v3479 = vor.u32 %v3476, %v3477
      %v3480 = vsel %vm1931, %v3472, %v3479
      %v3481 = vrot.slane %v3476, 4
      %v3483 = vshrl.u32 %v3421, 16
      %v3485 = vrot.slane %v3483, 7
      %v3486 = vshll.u32 %v3421, 16
      %v3488 = vor.u32 %v3485, %v3486
      %v3489 = vsel %vm1931, %v3481, %v3488
      %v3490 = vrot.slane %v3485, 4
      %v3492 = vshrl.u32 %v3422, 16
      %v3494 = vrot.slane %v3492, 7
      %v3495 = vshll.u32 %v3422, 16
      %v3497 = vor.u32 %v3494, %v3495
      %v3498 = vsel %vm1931, %v3490, %v3497
      %v3499 = vrot.slane %v3494, 4
      %v3501 = vshrl.u32 %v3423, 16
      %v3503 = vrot.slane %v3501, 7
      %v3504 = vshll.u32 %v3423, 16
      %v3506 = vor.u32 %v3503, %v3504
      %v3507 = vsel %vm1931, %v3499, %v3506
      %v3508 = vrot.slane %v3503, 4
      %v3510 = vshrl.u32 %v3424, 16
      %v3512 = vrot.slane %v3510, 7
      %v3513 = vshll.u32 %v3424, 16
      %v3515 = vor.u32 %v3512, %v3513
      %v3516 = vsel %vm1931, %v3508, %v3515
      %v3517 = vrot.slane %v3512, 4
      %v3519 = vshrl.u32 %v3425, 16
      %v3521 = vrot.slane %v3519, 7
      %v3522 = vshll.u32 %v3425, 16
      %v3524 = vor.u32 %v3521, %v3522
      %v3525 = vsel %vm1931, %v3517, %v3524
      %v3526 = vrot.slane %v3521, 4
      %v3528 = vshrl.u32 %v3426, 16
      %v3530 = vrot.slane %v3528, 7
      %v3531 = vshll.u32 %v3426, 16
      %v3533 = vor.u32 %v3530, %v3531
      %v3534 = vsel %vm1931, %v3526, %v3533
      %v3535 = vrot.slane %v3530, 4
      %v3537 = vshrl.u32 %v3427, 16
      %v3539 = vrot.slane %v3537, 7
      %v3540 = vshll.u32 %v3427, 16
      %v3542 = vor.u32 %v3539, %v3540
      %v3543 = vsel %vm1931, %v3535, %v3542
      %v3544 = vrot.slane %v3539, 4
      %v3546 = vshrl.u32 %v3428, 16
      %v3548 = vrot.slane %v3546, 7
      %v3549 = vshll.u32 %v3428, 16
      %v3551 = vor.u32 %v3548, %v3549
      %v3552 = vsel %vm1931, %v3544, %v3551
      %v3553 = vrot.slane %v3548, 4
      %v3555 = vshrl.u32 %v3429, 16
      %v3557 = vrot.slane %v3555, 7
      %v3558 = vshll.u32 %v3429, 16
      %v3560 = vor.u32 %v3557, %v3558
      %v3561 = vsel %vm1931, %v3553, %v3560
      %v3562 = vrot.slane %v3557, 4
      %v3564 = vshrl.u32 %v3430, 16
      %v3566 = vrot.slane %v3564, 7
      %v3567 = vshll.u32 %v3430, 16
      %v3569 = vor.u32 %v3566, %v3567
      %v3570 = vsel %vm1931, %v3562, %v3569
      %v3571 = vrot.slane %v3566, 4
      %v3573 = vshrl.u32 %v3431, 16
      %v3575 = vrot.slane %v3573, 7
      %v3576 = vshll.u32 %v3431, 16
      %v3578 = vor.u32 %v3575, %v3576
      %v3579 = vsel %vm1931, %v3571, %v3578
      %v3580 = vrot.slane %v3575, 4
      %v3582 = vshrl.u32 %v3432, 16
      %v3584 = vrot.slane %v3582, 7
      %v3585 = vshll.u32 %v3432, 16
      %v3587 = vor.u32 %v3584, %v3585
      %v3588 = vsel %vm1931, %v3580, %v3587
      %v3589 = vrot.slane %v3584, 4
      %v3591 = vshrl.u32 %v3433, 16
      %v3593 = vrot.slane %v3591, 7
      %v3594 = vshll.u32 %v3433, 16
      %v3596 = vor.u32 %v3593, %v3594
      %v3597 = vsel %vm1931, %v3589, %v3596
      %v3598 = vrot.slane %v3593, 4
      %v3600 = vshrl.u32 %v3434, 16
      %v3602 = vrot.slane %v3600, 7
      %v3603 = vshll.u32 %v3434, 16
      %v3605 = vor.u32 %v3602, %v3603
      %v3606 = vsel %vm1931, %v3598, %v3605
      %v3607 = vrot.slane %v3602, 4
      %v3609 = vshrl.u32 %v3435, 16
      %v3611 = vrot.slane %v3609, 7
      %v3612 = vshll.u32 %v3435, 16
      %v3614 = vor.u32 %v3611, %v3612
      %v3615 = vsel %vm1931, %v3607, %v3614
      %v3616 = vrot.slane %v3611, 4
      %v3618 = vshrl.u32 %v3436, 16
      %v3620 = vrot.slane %v3618, 7
      %v3621 = vshll.u32 %v3436, 16
      %v3623 = vor.u32 %v3620, %v3621
      %v3624 = vsel %vm1931, %v3616, %v3623
      %v3625 = vrot.slane %v3620, 4
      %v3627 = vshrl.u32 %v3437, 16
      %v3629 = vrot.slane %v3627, 7
      %v3630 = vshll.u32 %v3437, 16
      %v3632 = vor.u32 %v3629, %v3630
      %v3633 = vsel %vm1931, %v3625, %v3632
      %v3634 = vrot.slane %v3629, 4
      %v3636 = vshrl.u32 %v3438, 16
      %v3638 = vrot.slane %v3636, 7
      %v3639 = vshll.u32 %v3438, 16
      %v3641 = vor.u32 %v3638, %v3639
      %v3642 = vsel %vm1931, %v3634, %v3641
      %v3643 = vrot.slane %v3638, 4
      %v3645 = vshrl.u32 %v3439, 16
      %v3647 = vrot.slane %v3645, 7
      %v3648 = vshll.u32 %v3439, 16
      %v3650 = vor.u32 %v3647, %v3648
      %v3651 = vsel %vm1931, %v3643, %v3650
      %v3652 = vrot.slane %v3647, 4
      %v3654 = vshrl.u32 %v3440, 16
      %v3656 = vrot.slane %v3654, 7
      %v3657 = vshll.u32 %v3440, 16
      %v3659 = vor.u32 %v3656, %v3657
      %v3660 = vsel %vm1931, %v3652, %v3659
      %v3661 = vrot.slane %v3656, 4
      %v3663 = vshrl.u32 %v3441, 16
      %v3665 = vrot.slane %v3663, 7
      %v3666 = vshll.u32 %v3441, 16
      %v3668 = vor.u32 %v3665, %v3666
      %v3669 = vsel %vm1931, %v3661, %v3668
      %v3670 = vrot.slane %v3665, 4
      %v3672 = vshrl.u32 %v3442, 16
      %v3674 = vrot.slane %v3672, 7
      %v3675 = vshll.u32 %v3442, 16
      %v3677 = vor.u32 %v3674, %v3675
      %v3678 = vsel %vm1931, %v3670, %v3677
      %v3679 = vrot.slane %v3674, 4
      %v3681 = vshrl.u32 %v3443, 16
      %v3683 = vrot.slane %v3681, 7
      %v3684 = vshll.u32 %v3443, 16
      %v3686 = vor.u32 %v3683, %v3684
      %v3687 = vsel %vm1931, %v3679, %v3686
      %v3688 = vrot.slane %v3683, 4
      %v3690 = vshrl.u32 %v3444, 16
      %v3692 = vrot.slane %v3690, 7
      %v3693 = vshll.u32 %v3444, 16
      %v3695 = vor.u32 %v3692, %v3693
      %v3696 = vsel %vm1931, %v3688, %v3695
      %v3697 = vrot.slane %v3692, 4
      %v3699 = vshrl.u32 %v3445, 16
      %v3701 = vrot.slane %v3699, 7
      %v3702 = vshll.u32 %v3445, 16
      %v3704 = vor.u32 %v3701, %v3702
      %v3705 = vsel %vm1931, %v3697, %v3704
      %v3706 = vrot.slane %v3701, 4
      %v3708 = vshrl.u32 %v3446, 16
      %v3710 = vrot.slane %v3708, 7
      %v3711 = vshll.u32 %v3446, 16
      %v3713 = vor.u32 %v3710, %v3711
      %v3714 = vsel %vm1931, %v3706, %v3713
      %v3715 = vrot.slane %v3710, 4
      %v3717 = vshrl.u32 %v3447, 16
      %v3719 = vrot.slane %v3717, 7
      %v3720 = vshll.u32 %v3447, 16
      %v3722 = vor.u32 %v3719, %v3720
      %v3723 = vsel %vm1931, %v3715, %v3722
      %v3724 = vrot.slane %v3719, 4
      %v3726 = vshrl.u32 %v3448, 16
      %v3728 = vrot.slane %v3726, 7
      %v3729 = vshll.u32 %v3448, 16
      %v3731 = vor.u32 %v3728, %v3729
      %v3732 = vsel %vm1931, %v3724, %v3731
      %v3733 = vrot.slane %v3728, 4
      %v3735 = vshrl.u32 %v3449, 16
      %v3737 = vrot.slane %v3735, 7
      %v3738 = vshll.u32 %v3449, 16
      %v3740 = vor.u32 %v3737, %v3738
      %v3741 = vsel %vm1931, %v3733, %v3740
      %3742 = vrot.lane.b32.xlu0 %v3462, 12
      %v3743 = vpop.permute.xlu0 %3742
      %3744 = vrot.lane.b32.xlu0 %v3471, 12
      %v3745 = vpop.permute.xlu0 %3744
      %3746 = vrot.lane.b32.xlu0 %v3480, 12
      %v3747 = vpop.permute.xlu0 %3746
      %3748 = vrot.lane.b32.xlu0 %v3489, 12
      %v3749 = vpop.permute.xlu0 %3748
      %3750 = vrot.lane.b32.xlu0 %v3498, 12
      %v3751 = vpop.permute.xlu0 %3750
      %3752 = vrot.lane.b32.xlu0 %v3507, 12
      %v3753 = vpop.permute.xlu0 %3752
      %3754 = vrot.lane.b32.xlu0 %v3516, 12
      %v3755 = vpop.permute.xlu0 %3754
      %3756 = vrot.lane.b32.xlu0 %v3525, 12
      %v3757 = vpop.permute.xlu0 %3756
      %3758 = vrot.lane.b32.xlu0 %v3534, 12
      %v3759 = vpop.permute.xlu0 %3758
      %3760 = vrot.lane.b32.xlu0 %v3543, 12
      %v3761 = vpop.permute.xlu0 %3760
      %3762 = vrot.lane.b32.xlu0 %v3552, 12
      %v3763 = vpop.permute.xlu0 %3762
      %3764 = vrot.lane.b32.xlu0 %v3561, 12
      %v3765 = vpop.permute.xlu0 %3764
      %3766 = vrot.lane.b32.xlu0 %v3570, 12
      %v3767 = vpop.permute.xlu0 %3766
      %3768 = vrot.lane.b32.xlu0 %v3579, 12
      %v3769 = vpop.permute.xlu0 %3768
      %3770 = vrot.lane.b32.xlu0 %v3588, 12
      %v3771 = vpop.permute.xlu0 %3770
      %3772 = vrot.lane.b32.xlu0 %v3597, 12
      %v3773 = vpop.permute.xlu0 %3772
      %3774 = vrot.lane.b32.xlu0 %v3606, 12
      %v3775 = vpop.permute.xlu0 %3774
      %3776 = vrot.lane.b32.xlu0 %v3615, 12
      %v3777 = vpop.permute.xlu0 %3776
      %3778 = vrot.lane.b32.xlu0 %v3624, 12
      %v3779 = vpop.permute.xlu0 %3778
      %3780 = vrot.lane.b32.xlu0 %v3633, 12
      %v3781 = vpop.permute.xlu0 %3780
      %3782 = vrot.lane.b32.xlu0 %v3642, 12
      %v3783 = vpop.permute.xlu0 %3782
      %3784 = vrot.lane.b32.xlu0 %v3651, 12
      %v3785 = vpop.permute.xlu0 %3784
      %3786 = vrot.lane.b32.xlu0 %v3660, 12
      %v3787 = vpop.permute.xlu0 %3786
      %3788 = vrot.lane.b32.xlu0 %v3669, 12
      %v3789 = vpop.permute.xlu0 %3788
      %3790 = vrot.lane.b32.xlu0 %v3678, 12
      %v3791 = vpop.permute.xlu0 %3790
      %3792 = vrot.lane.b32.xlu0 %v3687, 12
      %v3793 = vpop.permute.xlu0 %3792
      %3794 = vrot.lane.b32.xlu0 %v3696, 12
      %v3795 = vpop.permute.xlu0 %3794
      %3796 = vrot.lane.b32.xlu0 %v3705, 12
      %v3797 = vpop.permute.xlu0 %3796
      %3798 = vrot.lane.b32.xlu0 %v3714, 12
      %v3799 = vpop.permute.xlu0 %3798
      %3800 = vrot.lane.b32.xlu0 %v3723, 12
      %v3801 = vpop.permute.xlu0 %3800
      %3802 = vrot.lane.b32.xlu0 %v3732, 12
      %v3803 = vpop.permute.xlu0 %3802
      %3804 = vrot.lane.b32.xlu0 %v3741, 12
      %v3805 = vpop.permute.xlu0 %3804
      %vm3838 = vcmask 126048
      %3839 = vst.msk [vmem:[#allocation4] sm:$0xf] %vm3838, %v3743
      %3840 = vst.msk [vmem:[#allocation4 + $0x4] sm:$0xf] %vm3838, %v3745
      %3841 = vst.msk [vmem:[#allocation4 + $0x8] sm:$0xf] %vm3838, %v3747
      %3842 = vst.msk [vmem:[#allocation4 + $0xc] sm:$0xf] %vm3838, %v3749
      %3843 = vst.msk [vmem:[#allocation4 + $0x10] sm:$0xf] %vm3838, %v3751
      %3844 = vst.msk [vmem:[#allocation4 + $0x14] sm:$0xf] %vm3838, %v3753
      %3845 = vst.msk [vmem:[#allocation4 + $0x18] sm:$0xf] %vm3838, %v3755
      %3846 = vst.msk [vmem:[#allocation4 + $0x1c] sm:$0xf] %vm3838, %v3757
      %3847 = vst.msk [vmem:[#allocation4 + $0x20] sm:$0xf] %vm3838, %v3759
      %3848 = vst.msk [vmem:[#allocation4 + $0x24] sm:$0xf] %vm3838, %v3761
      %3849 = vst.msk [vmem:[#allocation4 + $0x28] sm:$0xf] %vm3838, %v3763
      %3850 = vst.msk [vmem:[#allocation4 + $0x2c] sm:$0xf] %vm3838, %v3765
      %3851 = vst.msk [vmem:[#allocation4 + $0x30] sm:$0xf] %vm3838, %v3767
      %3852 = vst.msk [vmem:[#allocation4 + $0x34] sm:$0xf] %vm3838, %v3769
      %3853 = vst.msk [vmem:[#allocation4 + $0x38] sm:$0xf] %vm3838, %v3771
      %3854 = vst.msk [vmem:[#allocation4 + $0x3c] sm:$0xf] %vm3838, %v3773
      %3855 = vst.msk [vmem:[#allocation4 + $0x40] sm:$0xf] %vm3838, %v3775
      %3856 = vst.msk [vmem:[#allocation4 + $0x44] sm:$0xf] %vm3838, %v3777
      %3857 = vst.msk [vmem:[#allocation4 + $0x48] sm:$0xf] %vm3838, %v3779
      %3858 = vst.msk [vmem:[#allocation4 + $0x4c] sm:$0xf] %vm3838, %v3781
      %3859 = vst.msk [vmem:[#allocation4 + $0x50] sm:$0xf] %vm3838, %v3783
      %3860 = vst.msk [vmem:[#allocation4 + $0x54] sm:$0xf] %vm3838, %v3785
      %3861 = vst.msk [vmem:[#allocation4 + $0x58] sm:$0xf] %vm3838, %v3787
      %3862 = vst.msk [vmem:[#allocation4 + $0x5c] sm:$0xf] %vm3838, %v3789
      %3863 = vst.msk [vmem:[#allocation4 + $0x60] sm:$0xf] %vm3838, %v3791
      %3864 = vst.msk [vmem:[#allocation4 + $0x64] sm:$0xf] %vm3838, %v3793
      %3865 = vst.msk [vmem:[#allocation4 + $0x68] sm:$0xf] %vm3838, %v3795
      %3866 = vst.msk [vmem:[#allocation4 + $0x6c] sm:$0xf] %vm3838, %v3797
      %3867 = vst.msk [vmem:[#allocation4 + $0x70] sm:$0xf] %vm3838, %v3799
      %3868 = vst.msk [vmem:[#allocation4 + $0x74] sm:$0xf] %vm3838, %v3801
      %3869 = vst.msk [vmem:[#allocation4 + $0x78] sm:$0xf] %vm3838, %v3803
      %3870 = vst.msk [vmem:[#allocation4 + $0x7c] sm:$0xf] %vm3838, %v3805
      %v3871 = vld [vmem:[#allocation2 + $0x10] sm:$0xf]
      %v3872 = vld [vmem:[#allocation2 + $0x14] sm:$0xf]
      %v3873 = vld [vmem:[#allocation2 + $0x18] sm:$0xf]
      %v3874 = vld [vmem:[#allocation2 + $0x1c] sm:$0xf]
      %v3875 = vld [vmem:[#allocation2 + $0x20] sm:$0xf]
      %v3876 = vld [vmem:[#allocation2 + $0x24] sm:$0xf]
      %v3877 = vld [vmem:[#allocation2 + $0x28] sm:$0xf]
      %v3878 = vld [vmem:[#allocation2 + $0x2c] sm:$0xf]
      %v3879 = vld [vmem:[#allocation2 + $0x30] sm:$0xf]
      %v3880 = vld [vmem:[#allocation2 + $0x34] sm:$0xf]
      %v3881 = vld [vmem:[#allocation2 + $0x38] sm:$0xf]
      %v3882 = vld [vmem:[#allocation2 + $0x3c] sm:$0xf]
      %v3883 = vld [vmem:[#allocation2 + $0x40] sm:$0xf]
      %v3884 = vld [vmem:[#allocation2 + $0x44] sm:$0xf]
      %v3885 = vld [vmem:[#allocation2 + $0x48] sm:$0xf]
      %v3886 = vld [vmem:[#allocation2 + $0x4c] sm:$0xf]
      %v3887 = vld [vmem:[#allocation2 + $0x50] sm:$0xf]
      %v3888 = vld [vmem:[#allocation2 + $0x54] sm:$0xf]
      %v3889 = vld [vmem:[#allocation2 + $0x58] sm:$0xf]
      %v3890 = vld [vmem:[#allocation2 + $0x5c] sm:$0xf]
      %v3891 = vld [vmem:[#allocation2 + $0x60] sm:$0xf]
      %v3892 = vld [vmem:[#allocation2 + $0x64] sm:$0xf]
      %v3893 = vld [vmem:[#allocation2 + $0x68] sm:$0xf]
      %v3894 = vld [vmem:[#allocation2 + $0x6c] sm:$0xf]
      %v3895 = vld [vmem:[#allocation2 + $0x70] sm:$0xf]
      %v3896 = vld [vmem:[#allocation2 + $0x74] sm:$0xf]
      %v3897 = vld [vmem:[#allocation2 + $0x78] sm:$0xf]
      %v3898 = vld [vmem:[#allocation2 + $0x7c] sm:$0xf]
      %v3899 = vld [vmem:[#allocation2 + $0x80] sm:$0xf]
      %v3900 = vld [vmem:[#allocation2 + $0x84] sm:$0xf]
      %v3901 = vld [vmem:[#allocation2 + $0x88] sm:$0xf]
      %v3902 = vld [vmem:[#allocation2 + $0x8c] sm:$0xf]
      %3935 = vrot.lane.b32.xlu0 %v3871, 16
      %v3936 = vpop.permute.xlu0 %3935
      %3937 = vrot.lane.b32.xlu0 %v3872, 16
      %v3938 = vpop.permute.xlu0 %3937
      %3939 = vrot.lane.b32.xlu0 %v3873, 16
      %v3940 = vpop.permute.xlu0 %3939
      %3941 = vrot.lane.b32.xlu0 %v3874, 16
      %v3942 = vpop.permute.xlu0 %3941
      %3943 = vrot.lane.b32.xlu0 %v3875, 16
      %v3944 = vpop.permute.xlu0 %3943
      %3945 = vrot.lane.b32.xlu0 %v3876, 16
      %v3946 = vpop.permute.xlu0 %3945
      %3947 = vrot.lane.b32.xlu0 %v3877, 16
      %v3948 = vpop.permute.xlu0 %3947
      %3949 = vrot.lane.b32.xlu0 %v3878, 16
      %v3950 = vpop.permute.xlu0 %3949
      %3951 = vrot.lane.b32.xlu0 %v3879, 16
      %v3952 = vpop.permute.xlu0 %3951
      %3953 = vrot.lane.b32.xlu0 %v3880, 16
      %v3954 = vpop.permute.xlu0 %3953
      %3955 = vrot.lane.b32.xlu0 %v3881, 16
      %v3956 = vpop.permute.xlu0 %3955
      %3957 = vrot.lane.b32.xlu0 %v3882, 16
      %v3958 = vpop.permute.xlu0 %3957
      %3959 = vrot.lane.b32.xlu0 %v3883, 16
      %v3960 = vpop.permute.xlu0 %3959
      %3961 = vrot.lane.b32.xlu0 %v3884, 16
      %v3962 = vpop.permute.xlu0 %3961
      %3963 = vrot.lane.b32.xlu0 %v3885, 16
      %v3964 = vpop.permute.xlu0 %3963
      %3965 = vrot.lane.b32.xlu0 %v3886, 16
      %v3966 = vpop.permute.xlu0 %3965
      %3967 = vrot.lane.b32.xlu0 %v3887, 16
      %v3968 = vpop.permute.xlu0 %3967
      %3969 = vrot.lane.b32.xlu0 %v3888, 16
      %v3970 = vpop.permute.xlu0 %3969
      %3971 = vrot.lane.b32.xlu0 %v3889, 16
      %v3972 = vpop.permute.xlu0 %3971
      %3973 = vrot.lane.b32.xlu0 %v3890, 16
      %v3974 = vpop.permute.xlu0 %3973
      %3975 = vrot.lane.b32.xlu0 %v3891, 16
      %v3976 = vpop.permute.xlu0 %3975
      %3977 = vrot.lane.b32.xlu0 %v3892, 16
      %v3978 = vpop.permute.xlu0 %3977
      %3979 = vrot.lane.b32.xlu0 %v3893, 16
      %v3980 = vpop.permute.xlu0 %3979
      %3981 = vrot.lane.b32.xlu0 %v3894, 16
      %v3982 = vpop.permute.xlu0 %3981
      %3983 = vrot.lane.b32.xlu0 %v3895, 16
      %v3984 = vpop.permute.xlu0 %3983
      %3985 = vrot.lane.b32.xlu0 %v3896, 16
      %v3986 = vpop.permute.xlu0 %3985
      %3987 = vrot.lane.b32.xlu0 %v3897, 16
      %v3988 = vpop.permute.xlu0 %3987
      %3989 = vrot.lane.b32.xlu0 %v3898, 16
      %v3990 = vpop.permute.xlu0 %3989
      %3991 = vrot.lane.b32.xlu0 %v3899, 16
      %v3992 = vpop.permute.xlu0 %3991
      %3993 = vrot.lane.b32.xlu0 %v3900, 16
      %v3994 = vpop.permute.xlu0 %3993
      %3995 = vrot.lane.b32.xlu0 %v3901, 16
      %v3996 = vpop.permute.xlu0 %3995
      %3997 = vrot.lane.b32.xlu0 %v3902, 16
      %v3998 = vpop.permute.xlu0 %3997
      %vm4031 = vcmask 158848
      %4032 = vst.msk [vmem:[#allocation4] sm:$0xf] %vm4031, %v3936
      %4033 = vst.msk [vmem:[#allocation4 + $0x4] sm:$0xf] %vm4031, %v3938
      %4034 = vst.msk [vmem:[#allocation4 + $0x8] sm:$0xf] %vm4031, %v3940
      %4035 = vst.msk [vmem:[#allocation4 + $0xc] sm:$0xf] %vm4031, %v3942
      %4036 = vst.msk [vmem:[#allocation4 + $0x10] sm:$0xf] %vm4031, %v3944
      %4037 = vst.msk [vmem:[#allocation4 + $0x14] sm:$0xf] %vm4031, %v3946
      %4038 = vst.msk [vmem:[#allocation4 + $0x18] sm:$0xf] %vm4031, %v3948
      %4039 = vst.msk [vmem:[#allocation4 + $0x1c] sm:$0xf] %vm4031, %v3950
      %4040 = vst.msk [vmem:[#allocation4 + $0x20] sm:$0xf] %vm4031, %v3952
      %4041 = vst.msk [vmem:[#allocation4 + $0x24] sm:$0xf] %vm4031, %v3954
      %4042 = vst.msk [vmem:[#allocation4 + $0x28] sm:$0xf] %vm4031, %v3956
      %4043 = vst.msk [vmem:[#allocation4 + $0x2c] sm:$0xf] %vm4031, %v3958
      %4044 = vst.msk [vmem:[#allocation4 + $0x30] sm:$0xf] %vm4031, %v3960
      %4045 = vst.msk [vmem:[#allocation4 + $0x34] sm:$0xf] %vm4031, %v3962
      %4046 = vst.msk [vmem:[#allocation4 + $0x38] sm:$0xf] %vm4031, %v3964
      %4047 = vst.msk [vmem:[#allocation4 + $0x3c] sm:$0xf] %vm4031, %v3966
      %4048 = vst.msk [vmem:[#allocation4 + $0x40] sm:$0xf] %vm4031, %v3968
      %4049 = vst.msk [vmem:[#allocation4 + $0x44] sm:$0xf] %vm4031, %v3970
      %4050 = vst.msk [vmem:[#allocation4 + $0x48] sm:$0xf] %vm4031, %v3972
      %4051 = vst.msk [vmem:[#allocation4 + $0x4c] sm:$0xf] %vm4031, %v3974
      %4052 = vst.msk [vmem:[#allocation4 + $0x50] sm:$0xf] %vm4031, %v3976
      %4053 = vst.msk [vmem:[#allocation4 + $0x54] sm:$0xf] %vm4031, %v3978
      %4054 = vst.msk [vmem:[#allocation4 + $0x58] sm:$0xf] %vm4031, %v3980
      %4055 = vst.msk [vmem:[#allocation4 + $0x5c] sm:$0xf] %vm4031, %v3982
      %4056 = vst.msk [vmem:[#allocation4 + $0x60] sm:$0xf] %vm4031, %v3984
      %4057 = vst.msk [vmem:[#allocation4 + $0x64] sm:$0xf] %vm4031, %v3986
      %4058 = vst.msk [vmem:[#allocation4 + $0x68] sm:$0xf] %vm4031, %v3988
      %4059 = vst.msk [vmem:[#allocation4 + $0x6c] sm:$0xf] %vm4031, %v3990
      %4060 = vst.msk [vmem:[#allocation4 + $0x70] sm:$0xf] %vm4031, %v3992
      %4061 = vst.msk [vmem:[#allocation4 + $0x74] sm:$0xf] %vm4031, %v3994
      %4062 = vst.msk [vmem:[#allocation4 + $0x78] sm:$0xf] %vm4031, %v3996
      %4063 = vst.msk [vmem:[#allocation4 + $0x7c] sm:$0xf] %vm4031, %v3998
      %v4064 = vld [vmem:[#allocation2 + $0x10] sm:$0xf]
      %v4065 = vld [vmem:[#allocation2 + $0x14] sm:$0xf]
      %v4066 = vld [vmem:[#allocation2 + $0x18] sm:$0xf]
      %v4067 = vld [vmem:[#allocation2 + $0x1c] sm:$0xf]
      %v4068 = vld [vmem:[#allocation2 + $0x20] sm:$0xf]
      %v4069 = vld [vmem:[#allocation2 + $0x24] sm:$0xf]
      %v4070 = vld [vmem:[#allocation2 + $0x28] sm:$0xf]
      %v4071 = vld [vmem:[#allocation2 + $0x2c] sm:$0xf]
      %v4072 = vld [vmem:[#allocation2 + $0x30] sm:$0xf]
      %v4073 = vld [vmem:[#allocation2 + $0x34] sm:$0xf]
      %v4074 = vld [vmem:[#allocation2 + $0x38] sm:$0xf]
      %v4075 = vld [vmem:[#allocation2 + $0x3c] sm:$0xf]
      %v4076 = vld [vmem:[#allocation2 + $0x40] sm:$0xf]
      %v4077 = vld [vmem:[#allocation2 + $0x44] sm:$0xf]
      %v4078 = vld [vmem:[#allocation2 + $0x48] sm:$0xf]
      %v4079 = vld [vmem:[#allocation2 + $0x4c] sm:$0xf]
      %v4080 = vld [vmem:[#allocation2 + $0x50] sm:$0xf]
      %v4081 = vld [vmem:[#allocation2 + $0x54] sm:$0xf]
      %v4082 = vld [vmem:[#allocation2 + $0x58] sm:$0xf]
      %v4083 = vld [vmem:[#allocation2 + $0x5c] sm:$0xf]
      %v4084 = vld [vmem:[#allocation2 + $0x60] sm:$0xf]
      %v4085 = vld [vmem:[#allocation2 + $0x64] sm:$0xf]
      %v4086 = vld [vmem:[#allocation2 + $0x68] sm:$0xf]
      %v4087 = vld [vmem:[#allocation2 + $0x6c] sm:$0xf]
      %v4088 = vld [vmem:[#allocation2 + $0x70] sm:$0xf]
      %v4089 = vld [vmem:[#allocation2 + $0x74] sm:$0xf]
      %v4090 = vld [vmem:[#allocation2 + $0x78] sm:$0xf]
      %v4091 = vld [vmem:[#allocation2 + $0x7c] sm:$0xf]
      %v4092 = vld [vmem:[#allocation2 + $0x80] sm:$0xf]
      %v4093 = vld [vmem:[#allocation2 + $0x84] sm:$0xf]
      %v4094 = vld [vmem:[#allocation2 + $0x88] sm:$0xf]
      %v4095 = vld [vmem:[#allocation2 + $0x8c] sm:$0xf]
      %v4096 = vld [vmem:[#allocation2 + $0x90] sm:$0x1]
      %v4097 = vsel %vm2865, %v4064, 0
      %v4098 = vsel %vm2866, %v4065, 0
      %v4099 = vsel %vm2867, %v4066, 0
      %v4100 = vsel %vm2868, %v4067, 0
      %v4101 = vsel %vm2869, %v4068, 0
      %v4102 = vsel %vm2870, %v4069, 0
      %v4103 = vsel %vm2871, %v4070, 0
      %v4104 = vsel %vm2872, %v4071, 0
      %v4105 = vsel %vm2873, %v4072, 0
      %v4106 = vsel %vm2874, %v4073, 0
      %v4107 = vsel %vm2875, %v4074, 0
      %v4108 = vsel %vm2876, %v4075, 0
      %v4109 = vsel %vm2877, %v4076, 0
      %v4110 = vsel %vm2878, %v4077, 0
      %v4111 = vsel %vm2879, %v4078, 0
      %v4112 = vsel %vm2880, %v4079, 0
      %v4113 = vsel %vm2881, %v4080, 0
      %v4114 = vsel %vm2882, %v4081, 0
      %v4115 = vsel %vm2883, %v4082, 0
      %v4116 = vsel %vm2884, %v4083, 0
      %v4117 = vsel %vm2885, %v4084, 0
      %v4118 = vsel %vm2886, %v4085, 0
      %v4119 = vsel %vm2887, %v4086, 0
      %v4120 = vsel %vm2888, %v4087, 0
      %v4121 = vsel %vm2889, %v4088, 0
      %v4122 = vsel %vm2890, %v4089, 0
      %v4123 = vsel %vm2891, %v4090, 0
      %v4124 = vsel %vm2892, %v4091, 0
      %v4125 = vsel %vm2893, %v4092, 0
      %v4126 = vsel %vm2894, %v4093, 0
      %v4127 = vsel %vm2895, %v4094, 0
      %v4128 = vsel %vm2896, %v4095, 0
      %v4129 = vsel %vm2897, %v4096, 0
      %v4131 = vshrl.u32 %v4097, 16
      %v4133 = vrot.slane %v4131, 4
      %v4134 = vshll.u32 %v4097, 16
      %v4136 = vrot.slane %v4134, 5
      %v4137 = vor.u32 %v4133, %v4136
      %v4138 = vrot.slane %v4137, 4
      %v4140 = vshll.u32 %v4098, 16
      %v4142 = vrot.slane %v4140, 5
      %v4143 = vsel %vm1543, %v4138, %v4142
      %v4144 = vshrl.u32 %v4098, 16
      %v4146 = vrot.slane %v4144, 4
      %v4147 = vor.u32 %v4146, %v4142
      %v4148 = vrot.slane %v4147, 4
      %v4150 = vshll.u32 %v4099, 16
      %v4152 = vrot.slane %v4150, 5
      %v4153 = vsel %vm1543, %v4148, %v4152
      %v4154 = vshrl.u32 %v4099, 16
      %v4156 = vrot.slane %v4154, 4
      %v4157 = vor.u32 %v4156, %v4152
      %v4158 = vrot.slane %v4157, 4
      %v4160 = vshll.u32 %v4100, 16
      %v4162 = vrot.slane %v4160, 5
      %v4163 = vsel %vm1543, %v4158, %v4162
      %v4164 = vshrl.u32 %v4100, 16
      %v4166 = vrot.slane %v4164, 4
      %v4167 = vor.u32 %v4166, %v4162
      %v4168 = vrot.slane %v4167, 4
      %v4170 = vshll.u32 %v4101, 16
      %v4172 = vrot.slane %v4170, 5
      %v4173 = vsel %vm1543, %v4168, %v4172
      %v4174 = vshrl.u32 %v4101, 16
      %v4176 = vrot.slane %v4174, 4
      %v4177 = vor.u32 %v4176, %v4172
      %v4178 = vrot.slane %v4177, 4
      %v4180 = vshll.u32 %v4102, 16
      %v4182 = vrot.slane %v4180, 5
      %v4183 = vsel %vm1543, %v4178, %v4182
      %v4184 = vshrl.u32 %v4102, 16
      %v4186 = vrot.slane %v4184, 4
      %v4187 = vor.u32 %v4186, %v4182
      %v4188 = vrot.slane %v4187, 4
      %v4190 = vshll.u32 %v4103, 16
      %v4192 = vrot.slane %v4190, 5
      %v4193 = vsel %vm1543, %v4188, %v4192
      %v4194 = vshrl.u32 %v4103, 16
      %v4196 = vrot.slane %v4194, 4
      %v4197 = vor.u32 %v4196, %v4192
      %v4198 = vrot.slane %v4197, 4
      %v4200 = vshll.u32 %v4104, 16
      %v4202 = vrot.slane %v4200, 5
      %v4203 = vsel %vm1543, %v4198, %v4202
      %v4204 = vshrl.u32 %v4104, 16
      %v4206 = vrot.slane %v4204, 4
      %v4207 = vor.u32 %v4206, %v4202
      %v4208 = vrot.slane %v4207, 4
      %v4210 = vshll.u32 %v4105, 16
      %v4212 = vrot.slane %v4210, 5
      %v4213 = vsel %vm1543, %v4208, %v4212
      %v4214 = vshrl.u32 %v4105, 16
      %v4216 = vrot.slane %v4214, 4
      %v4217 = vor.u32 %v4216, %v4212
      %v4218 = vrot.slane %v4217, 4
      %v4220 = vshll.u32 %v4106, 16
      %v4222 = vrot.slane %v4220, 5
      %v4223 = vsel %vm1543, %v4218, %v4222
      %v4224 = vshrl.u32 %v4106, 16
      %v4226 = vrot.slane %v4224, 4
      %v4227 = vor.u32 %v4226, %v4222
      %v4228 = vrot.slane %v4227, 4
      %v4230 = vshll.u32 %v4107, 16
      %v4232 = vrot.slane %v4230, 5
      %v4233 = vsel %vm1543, %v4228, %v4232
      %v4234 = vshrl.u32 %v4107, 16
      %v4236 = vrot.slane %v4234, 4
      %v4237 = vor.u32 %v4236, %v4232
      %v4238 = vrot.slane %v4237, 4
      %v4240 = vshll.u32 %v4108, 16
      %v4242 = vrot.slane %v4240, 5
      %v4243 = vsel %vm1543, %v4238, %v4242
      %v4244 = vshrl.u32 %v4108, 16
      %v4246 = vrot.slane %v4244, 4
      %v4247 = vor.u32 %v4246, %v4242
      %v4248 = vrot.slane %v4247, 4
      %v4250 = vshll.u32 %v4109, 16
      %v4252 = vrot.slane %v4250, 5
      %v4253 = vsel %vm1543, %v4248, %v4252
      %v4254 = vshrl.u32 %v4109, 16
      %v4256 = vrot.slane %v4254, 4
      %v4257 = vor.u32 %v4256, %v4252
      %v4258 = vrot.slane %v4257, 4
      %v4260 = vshll.u32 %v4110, 16
      %v4262 = vrot.slane %v4260, 5
      %v4263 = vsel %vm1543, %v4258, %v4262
      %v4264 = vshrl.u32 %v4110, 16
      %v4266 = vrot.slane %v4264, 4
      %v4267 = vor.u32 %v4266, %v4262
      %v4268 = vrot.slane %v4267, 4
      %v4270 = vshll.u32 %v4111, 16
      %v4272 = vrot.slane %v4270, 5
      %v4273 = vsel %vm1543, %v4268, %v4272
      %v4274 = vshrl.u32 %v4111, 16
      %v4276 = vrot.slane %v4274, 4
      %v4277 = vor.u32 %v4276, %v4272
      %v4278 = vrot.slane %v4277, 4
      %v4280 = vshll.u32 %v4112, 16
      %v4282 = vrot.slane %v4280, 5
      %v4283 = vsel %vm1543, %v4278, %v4282
      %v4284 = vshrl.u32 %v4112, 16
      %v4286 = vrot.slane %v4284, 4
      %v4287 = vor.u32 %v4286, %v4282
      %v4288 = vrot.slane %v4287, 4
      %v4290 = vshll.u32 %v4113, 16
      %v4292 = vrot.slane %v4290, 5
      %v4293 = vsel %vm1543, %v4288, %v4292
      %v4294 = vshrl.u32 %v4113, 16
      %v4296 = vrot.slane %v4294, 4
      %v4297 = vor.u32 %v4296, %v4292
      %v4298 = vrot.slane %v4297, 4
      %v4300 = vshll.u32 %v4114, 16
      %v4302 = vrot.slane %v4300, 5
      %v4303 = vsel %vm1543, %v4298, %v4302
      %v4304 = vshrl.u32 %v4114, 16
      %v4306 = vrot.slane %v4304, 4
      %v4307 = vor.u32 %v4306, %v4302
      %v4308 = vrot.slane %v4307, 4
      %v4310 = vshll.u32 %v4115, 16
      %v4312 = vrot.slane %v4310, 5
      %v4313 = vsel %vm1543, %v4308, %v4312
      %v4314 = vshrl.u32 %v4115, 16
      %v4316 = vrot.slane %v4314, 4
      %v4317 = vor.u32 %v4316, %v4312
      %v4318 = vrot.slane %v4317, 4
      %v4320 = vshll.u32 %v4116, 16
      %v4322 = vrot.slane %v4320, 5
      %v4323 = vsel %vm1543, %v4318, %v4322
      %v4324 = vshrl.u32 %v4116, 16
      %v4326 = vrot.slane %v4324, 4
      %v4327 = vor.u32 %v4326, %v4322
      %v4328 = vrot.slane %v4327, 4
      %v4330 = vshll.u32 %v4117, 16
      %v4332 = vrot.slane %v4330, 5
      %v4333 = vsel %vm1543, %v4328, %v4332
      %v4334 = vshrl.u32 %v4117, 16
      %v4336 = vrot.slane %v4334, 4
      %v4337 = vor.u32 %v4336, %v4332
      %v4338 = vrot.slane %v4337, 4
      %v4340 = vshll.u32 %v4118, 16
      %v4342 = vrot.slane %v4340, 5
      %v4343 = vsel %vm1543, %v4338, %v4342
      %v4344 = vshrl.u32 %v4118, 16
      %v4346 = vrot.slane %v4344, 4
      %v4347 = vor.u32 %v4346, %v4342
      %v4348 = vrot.slane %v4347, 4
      %v4350 = vshll.u32 %v4119, 16
      %v4352 = vrot.slane %v4350, 5
      %v4353 = vsel %vm1543, %v4348, %v4352
      %v4354 = vshrl.u32 %v4119, 16
      %v4356 = vrot.slane %v4354, 4
      %v4357 = vor.u32 %v4356, %v4352
      %v4358 = vrot.slane %v4357, 4
      %v4360 = vshll.u32 %v4120, 16
      %v4362 = vrot.slane %v4360, 5
      %v4363 = vsel %vm1543, %v4358, %v4362
      %v4364 = vshrl.u32 %v4120, 16
      %v4366 = vrot.slane %v4364, 4
      %v4367 = vor.u32 %v4366, %v4362
      %v4368 = vrot.slane %v4367, 4
      %v4370 = vshll.u32 %v4121, 16
      %v4372 = vrot.slane %v4370, 5
      %v4373 = vsel %vm1543, %v4368, %v4372
      %v4374 = vshrl.u32 %v4121, 16
      %v4376 = vrot.slane %v4374, 4
      %v4377 = vor.u32 %v4376, %v4372
      %v4378 = vrot.slane %v4377, 4
      %v4380 = vshll.u32 %v4122, 16
      %v4382 = vrot.slane %v4380, 5
      %v4383 = vsel %vm1543, %v4378, %v4382
      %v4384 = vshrl.u32 %v4122, 16
      %v4386 = vrot.slane %v4384, 4
      %v4387 = vor.u32 %v4386, %v4382
      %v4388 = vrot.slane %v4387, 4
      %v4390 = vshll.u32 %v4123, 16
      %v4392 = vrot.slane %v4390, 5
      %v4393 = vsel %vm1543, %v4388, %v4392
      %v4394 = vshrl.u32 %v4123, 16
      %v4396 = vrot.slane %v4394, 4
      %v4397 = vor.u32 %v4396, %v4392
      %v4398 = vrot.slane %v4397, 4
      %v4400 = vshll.u32 %v4124, 16
      %v4402 = vrot.slane %v4400, 5
      %v4403 = vsel %vm1543, %v4398, %v4402
      %v4404 = vshrl.u32 %v4124, 16
      %v4406 = vrot.slane %v4404, 4
      %v4407 = vor.u32 %v4406, %v4402
      %v4408 = vrot.slane %v4407, 4
      %v4410 = vshll.u32 %v4125, 16
      %v4412 = vrot.slane %v4410, 5
      %v4413 = vsel %vm1543, %v4408, %v4412
      %v4414 = vshrl.u32 %v4125, 16
      %v4416 = vrot.slane %v4414, 4
      %v4417 = vor.u32 %v4416, %v4412
      %v4418 = vrot.slane %v4417, 4
      %v4420 = vshll.u32 %v4126, 16
      %v4422 = vrot.slane %v4420, 5
      %v4423 = vsel %vm1543, %v4418, %v4422
      %v4424 = vshrl.u32 %v4126, 16
      %v4426 = vrot.slane %v4424, 4
      %v4427 = vor.u32 %v4426, %v4422
      %v4428 = vrot.slane %v4427, 4
      %v4430 = vshll.u32 %v4127, 16
      %v4432 = vrot.slane %v4430, 5
      %v4433 = vsel %vm1543, %v4428, %v4432
      %v4434 = vshrl.u32 %v4127, 16
      %v4436 = vrot.slane %v4434, 4
      %v4437 = vor.u32 %v4436, %v4432
      %v4438 = vrot.slane %v4437, 4
      %v4440 = vshll.u32 %v4128, 16
      %v4442 = vrot.slane %v4440, 5
      %v4443 = vsel %vm1543, %v4438, %v4442
      %v4444 = vshrl.u32 %v4128, 16
      %v4446 = vrot.slane %v4444, 4
      %v4447 = vor.u32 %v4446, %v4442
      %v4448 = vrot.slane %v4447, 4
      %v4450 = vshll.u32 %v4129, 16
      %v4452 = vrot.slane %v4450, 5
      %v4453 = vsel %vm1543, %v4448, %v4452
      %4454 = vrot.lane.b32.xlu0 %v4143, 20
      %v4455 = vpop.permute.xlu0 %4454
      %4456 = vrot.lane.b32.xlu0 %v4153, 20
      %v4457 = vpop.permute.xlu0 %4456
      %4458 = vrot.lane.b32.xlu0 %v4163, 20
      %v4459 = vpop.permute.xlu0 %4458
      %4460 = vrot.lane.b32.xlu0 %v4173, 20
      %v4461 = vpop.permute.xlu0 %4460
      %4462 = vrot.lane.b32.xlu0 %v4183, 20
      %v4463 = vpop.permute.xlu0 %4462
      %4464 = vrot.lane.b32.xlu0 %v4193, 20
      %v4465 = vpop.permute.xlu0 %4464
      %4466 = vrot.lane.b32.xlu0 %v4203, 20
      %v4467 = vpop.permute.xlu0 %4466
      %4468 = vrot.lane.b32.xlu0 %v4213, 20
      %v4469 = vpop.permute.xlu0 %4468
      %4470 = vrot.lane.b32.xlu0 %v4223, 20
      %v4471 = vpop.permute.xlu0 %4470
      %4472 = vrot.lane.b32.xlu0 %v4233, 20
      %v4473 = vpop.permute.xlu0 %4472
      %4474 = vrot.lane.b32.xlu0 %v4243, 20
      %v4475 = vpop.permute.xlu0 %4474
      %4476 = vrot.lane.b32.xlu0 %v4253, 20
      %v4477 = vpop.permute.xlu0 %4476
      %4478 = vrot.lane.b32.xlu0 %v4263, 20
      %v4479 = vpop.permute.xlu0 %4478
      %4480 = vrot.lane.b32.xlu0 %v4273, 20
      %v4481 = vpop.permute.xlu0 %4480
      %4482 = vrot.lane.b32.xlu0 %v4283, 20
      %v4483 = vpop.permute.xlu0 %4482
      %4484 = vrot.lane.b32.xlu0 %v4293, 20
      %v4485 = vpop.permute.xlu0 %4484
      %4486 = vrot.lane.b32.xlu0 %v4303, 20
      %v4487 = vpop.permute.xlu0 %4486
      %4488 = vrot.lane.b32.xlu0 %v4313, 20
      %v4489 = vpop.permute.xlu0 %4488
      %4490 = vrot.lane.b32.xlu0 %v4323, 20
      %v4491 = vpop.permute.xlu0 %4490
      %4492 = vrot.lane.b32.xlu0 %v4333, 20
      %v4493 = vpop.permute.xlu0 %4492
      %4494 = vrot.lane.b32.xlu0 %v4343, 20
      %v4495 = vpop.permute.xlu0 %4494
      %4496 = vrot.lane.b32.xlu0 %v4353, 20
      %v4497 = vpop.permute.xlu0 %4496
      %4498 = vrot.lane.b32.xlu0 %v4363, 20
      %v4499 = vpop.permute.xlu0 %4498
      %4500 = vrot.lane.b32.xlu0 %v4373, 20
      %v4501 = vpop.permute.xlu0 %4500
      %4502 = vrot.lane.b32.xlu0 %v4383, 20
      %v4503 = vpop.permute.xlu0 %4502
      %4504 = vrot.lane.b32.xlu0 %v4393, 20
      %v4505 = vpop.permute.xlu0 %4504
      %4506 = vrot.lane.b32.xlu0 %v4403, 20
      %v4507 = vpop.permute.xlu0 %4506
      %4508 = vrot.lane.b32.xlu0 %v4413, 20
      %v4509 = vpop.permute.xlu0 %4508
      %4510 = vrot.lane.b32.xlu0 %v4423, 20
      %v4511 = vpop.permute.xlu0 %4510
      %4512 = vrot.lane.b32.xlu0 %v4433, 20
      %v4513 = vpop.permute.xlu0 %4512
      %4514 = vrot.lane.b32.xlu0 %v4443, 20
      %v4515 = vpop.permute.xlu0 %4514
      %4516 = vrot.lane.b32.xlu0 %v4453, 20
      %v4517 = vpop.permute.xlu0 %4516
      %vm4550 = vcmask 191648
      %4551 = vst.msk [vmem:[#allocation4] sm:$0xf] %vm4550, %v4455
      %4552 = vst.msk [vmem:[#allocation4 + $0x4] sm:$0xf] %vm4550, %v4457
      %4553 = vst.msk [vmem:[#allocation4 + $0x8] sm:$0xf] %vm4550, %v4459
      %4554 = vst.msk [vmem:[#allocation4 + $0xc] sm:$0xf] %vm4550, %v4461
      %4555 = vst.msk [vmem:[#allocation4 + $0x10] sm:$0xf] %vm4550, %v4463
      %4556 = vst.msk [vmem:[#allocation4 + $0x14] sm:$0xf] %vm4550, %v4465
      %4557 = vst.msk [vmem:[#allocation4 + $0x18] sm:$0xf] %vm4550, %v4467
      %4558 = vst.msk [vmem:[#allocation4 + $0x1c] sm:$0xf] %vm4550, %v4469
      %4559 = vst.msk [vmem:[#allocation4 + $0x20] sm:$0xf] %vm4550, %v4471
      %4560 = vst.msk [vmem:[#allocation4 + $0x24] sm:$0xf] %vm4550, %v4473
      %4561 = vst.msk [vmem:[#allocation4 + $0x28] sm:$0xf] %vm4550, %v4475
      %4562 = vst.msk [vmem:[#allocation4 + $0x2c] sm:$0xf] %vm4550, %v4477
      %4563 = vst.msk [vmem:[#allocation4 + $0x30] sm:$0xf] %vm4550, %v4479
      %4564 = vst.msk [vmem:[#allocation4 + $0x34] sm:$0xf] %vm4550, %v4481
      %4565 = vst.msk [vmem:[#allocation4 + $0x38] sm:$0xf] %vm4550, %v4483
      %4566 = vst.msk [vmem:[#allocation4 + $0x3c] sm:$0xf] %vm4550, %v4485
      %4567 = vst.msk [vmem:[#allocation4 + $0x40] sm:$0xf] %vm4550, %v4487
      %4568 = vst.msk [vmem:[#allocation4 + $0x44] sm:$0xf] %vm4550, %v4489
      %4569 = vst.msk [vmem:[#allocation4 + $0x48] sm:$0xf] %vm4550, %v4491
      %4570 = vst.msk [vmem:[#allocation4 + $0x4c] sm:$0xf] %vm4550, %v4493
      %4571 = vst.msk [vmem:[#allocation4 + $0x50] sm:$0xf] %vm4550, %v4495
      %4572 = vst.msk [vmem:[#allocation4 + $0x54] sm:$0xf] %vm4550, %v4497
      %4573 = vst.msk [vmem:[#allocation4 + $0x58] sm:$0xf] %vm4550, %v4499
      %4574 = vst.msk [vmem:[#allocation4 + $0x5c] sm:$0xf] %vm4550, %v4501
      %4575 = vst.msk [vmem:[#allocation4 + $0x60] sm:$0xf] %vm4550, %v4503
      %4576 = vst.msk [vmem:[#allocation4 + $0x64] sm:$0xf] %vm4550, %v4505
      %4577 = vst.msk [vmem:[#allocation4 + $0x68] sm:$0xf] %vm4550, %v4507
      %4578 = vst.msk [vmem:[#allocation4 + $0x6c] sm:$0xf] %vm4550, %v4509
      %4579 = vst.msk [vmem:[#allocation4 + $0x70] sm:$0xf] %vm4550, %v4511
      %4580 = vst.msk [vmem:[#allocation4 + $0x74] sm:$0xf] %vm4550, %v4513
      %4581 = vst.msk [vmem:[#allocation4 + $0x78] sm:$0xf] %vm4550, %v4515
      %4582 = vst.msk [vmem:[#allocation4 + $0x7c] sm:$0xf] %vm4550, %v4517
      %v4583 = vld [vmem:[#allocation2 + $0x14] sm:$0x8]
      %v4584 = vld [vmem:[#allocation2 + $0x18] sm:$0xf]
      %v4585 = vld [vmem:[#allocation2 + $0x1c] sm:$0xf]
      %v4586 = vld [vmem:[#allocation2 + $0x20] sm:$0xf]
      %v4587 = vld [vmem:[#allocation2 + $0x24] sm:$0xf]
      %v4588 = vld [vmem:[#allocation2 + $0x28] sm:$0xf]
      %v4589 = vld [vmem:[#allocation2 + $0x2c] sm:$0xf]
      %v4590 = vld [vmem:[#allocation2 + $0x30] sm:$0xf]
      %v4591 = vld [vmem:[#allocation2 + $0x34] sm:$0xf]
      %v4592 = vld [vmem:[#allocation2 + $0x38] sm:$0xf]
      %v4593 = vld [vmem:[#allocation2 + $0x3c] sm:$0xf]
      %v4594 = vld [vmem:[#allocation2 + $0x40] sm:$0xf]
      %v4595 = vld [vmem:[#allocation2 + $0x44] sm:$0xf]
      %v4596 = vld [vmem:[#allocation2 + $0x48] sm:$0xf]
      %v4597 = vld [vmem:[#allocation2 + $0x4c] sm:$0xf]
      %v4598 = vld [vmem:[#allocation2 + $0x50] sm:$0xf]
      %v4599 = vld [vmem:[#allocation2 + $0x54] sm:$0xf]
      %v4600 = vld [vmem:[#allocation2 + $0x58] sm:$0xf]
      %v4601 = vld [vmem:[#allocation2 + $0x5c] sm:$0xf]
      %v4602 = vld [vmem:[#allocation2 + $0x60] sm:$0xf]
      %v4603 = vld [vmem:[#allocation2 + $0x64] sm:$0xf]
      %v4604 = vld [vmem:[#allocation2 + $0x68] sm:$0xf]
      %v4605 = vld [vmem:[#allocation2 + $0x6c] sm:$0xf]
      %v4606 = vld [vmem:[#allocation2 + $0x70] sm:$0xf]
      %v4607 = vld [vmem:[#allocation2 + $0x74] sm:$0xf]
      %v4608 = vld [vmem:[#allocation2 + $0x78] sm:$0xf]
      %v4609 = vld [vmem:[#allocation2 + $0x7c] sm:$0xf]
      %v4610 = vld [vmem:[#allocation2 + $0x80] sm:$0xf]
      %v4611 = vld [vmem:[#allocation2 + $0x84] sm:$0xf]
      %v4612 = vld [vmem:[#allocation2 + $0x88] sm:$0xf]
      %v4613 = vld [vmem:[#allocation2 + $0x8c] sm:$0xf]
      %v4614 = vld [vmem:[#allocation2 + $0x90] sm:$0xf]
      %v4615 = vld [vmem:[#allocation2 + $0x94] sm:$0xf]
      %v4616 = vsel %vm1863, %v4583, 0
      %v4617 = vsel %vm1864, %v4584, 0
      %v4618 = vsel %vm1865, %v4585, 0
      %v4619 = vsel %vm1866, %v4586, 0
      %v4620 = vsel %vm1867, %v4587, 0
      %v4621 = vsel %vm1868, %v4588, 0
      %v4622 = vsel %vm1869, %v4589, 0
      %v4623 = vsel %vm1870, %v4590, 0
      %v4624 = vsel %vm1871, %v4591, 0
      %v4625 = vsel %vm1872, %v4592, 0
      %v4626 = vsel %vm1873, %v4593, 0
      %v4627 = vsel %vm1874, %v4594, 0
      %v4628 = vsel %vm1875, %v4595, 0
      %v4629 = vsel %vm1876, %v4596, 0
      %v4630 = vsel %vm1877, %v4597, 0
      %v4631 = vsel %vm1878, %v4598, 0
      %v4632 = vsel %vm1879, %v4599, 0
      %v4633 = vsel %vm1880, %v4600, 0
      %v4634 = vsel %vm1881, %v4601, 0
      %v4635 = vsel %vm1882, %v4602, 0
      %v4636 = vsel %vm1883, %v4603, 0
      %v4637 = vsel %vm1884, %v4604, 0
      %v4638 = vsel %vm1885, %v4605, 0
      %v4639 = vsel %vm1886, %v4606, 0
      %v4640 = vsel %vm1887, %v4607, 0
      %v4641 = vsel %vm1888, %v4608, 0
      %v4642 = vsel %vm1889, %v4609, 0
      %v4643 = vsel %vm1890, %v4610, 0
      %v4644 = vsel %vm1891, %v4611, 0
      %v4645 = vsel %vm1892, %v4612, 0
      %v4646 = vsel %vm1893, %v4613, 0
      %v4647 = vsel %vm1894, %v4614, 0
      %v4648 = vsel %vm1895, %v4615, 0
      %v4650 = vshrl.u32 %v4616, 16
      %v4652 = vrot.slane %v4650, 7
      %v4653 = vrot.slane %v4652, 4
      %v4655 = vshrl.u32 %v4617, 16
      %v4657 = vrot.slane %v4655, 7
      %v4658 = vshll.u32 %v4617, 16
      %v4660 = vor.u32 %v4657, %v4658
      %v4661 = vsel %vm1931, %v4653, %v4660
      %v4662 = vrot.slane %v4657, 4
      %v4664 = vshrl.u32 %v4618, 16
      %v4666 = vrot.slane %v4664, 7
      %v4667 = vshll.u32 %v4618, 16
      %v4669 = vor.u32 %v4666, %v4667
      %v4670 = vsel %vm1931, %v4662, %v4669
      %v4671 = vrot.slane %v4666, 4
      %v4673 = vshrl.u32 %v4619, 16
      %v4675 = vrot.slane %v4673, 7
      %v4676 = vshll.u32 %v4619, 16
      %v4678 = vor.u32 %v4675, %v4676
      %v4679 = vsel %vm1931, %v4671, %v4678
      %v4680 = vrot.slane %v4675, 4
      %v4682 = vshrl.u32 %v4620, 16
      %v4684 = vrot.slane %v4682, 7
      %v4685 = vshll.u32 %v4620, 16
      %v4687 = vor.u32 %v4684, %v4685
      %v4688 = vsel %vm1931, %v4680, %v4687
      %v4689 = vrot.slane %v4684, 4
      %v4691 = vshrl.u32 %v4621, 16
      %v4693 = vrot.slane %v4691, 7
      %v4694 = vshll.u32 %v4621, 16
      %v4696 = vor.u32 %v4693, %v4694
      %v4697 = vsel %vm1931, %v4689, %v4696
      %v4698 = vrot.slane %v4693, 4
      %v4700 = vshrl.u32 %v4622, 16
      %v4702 = vrot.slane %v4700, 7
      %v4703 = vshll.u32 %v4622, 16
      %v4705 = vor.u32 %v4702, %v4703
      %v4706 = vsel %vm1931, %v4698, %v4705
      %v4707 = vrot.slane %v4702, 4
      %v4709 = vshrl.u32 %v4623, 16
      %v4711 = vrot.slane %v4709, 7
      %v4712 = vshll.u32 %v4623, 16
      %v4714 = vor.u32 %v4711, %v4712
      %v4715 = vsel %vm1931, %v4707, %v4714
      %v4716 = vrot.slane %v4711, 4
      %v4718 = vshrl.u32 %v4624, 16
      %v4720 = vrot.slane %v4718, 7
      %v4721 = vshll.u32 %v4624, 16
      %v4723 = vor.u32 %v4720, %v4721
      %v4724 = vsel %vm1931, %v4716, %v4723
      %v4725 = vrot.slane %v4720, 4
      %v4727 = vshrl.u32 %v4625, 16
      %v4729 = vrot.slane %v4727, 7
      %v4730 = vshll.u32 %v4625, 16
      %v4732 = vor.u32 %v4729, %v4730
      %v4733 = vsel %vm1931, %v4725, %v4732
      %v4734 = vrot.slane %v4729, 4
      %v4736 = vshrl.u32 %v4626, 16
      %v4738 = vrot.slane %v4736, 7
      %v4739 = vshll.u32 %v4626, 16
      %v4741 = vor.u32 %v4738, %v4739
      %v4742 = vsel %vm1931, %v4734, %v4741
      %v4743 = vrot.slane %v4738, 4
      %v4745 = vshrl.u32 %v4627, 16
      %v4747 = vrot.slane %v4745, 7
      %v4748 = vshll.u32 %v4627, 16
      %v4750 = vor.u32 %v4747, %v4748
      %v4751 = vsel %vm1931, %v4743, %v4750
      %v4752 = vrot.slane %v4747, 4
      %v4754 = vshrl.u32 %v4628, 16
      %v4756 = vrot.slane %v4754, 7
      %v4757 = vshll.u32 %v4628, 16
      %v4759 = vor.u32 %v4756, %v4757
      %v4760 = vsel %vm1931, %v4752, %v4759
      %v4761 = vrot.slane %v4756, 4
      %v4763 = vshrl.u32 %v4629, 16
      %v4765 = vrot.slane %v4763, 7
      %v4766 = vshll.u32 %v4629, 16
      %v4768 = vor.u32 %v4765, %v4766
      %v4769 = vsel %vm1931, %v4761, %v4768
      %v4770 = vrot.slane %v4765, 4
      %v4772 = vshrl.u32 %v4630, 16
      %v4774 = vrot.slane %v4772, 7
      %v4775 = vshll.u32 %v4630, 16
      %v4777 = vor.u32 %v4774, %v4775
      %v4778 = vsel %vm1931, %v4770, %v4777
      %v4779 = vrot.slane %v4774, 4
      %v4781 = vshrl.u32 %v4631, 16
      %v4783 = vrot.slane %v4781, 7
      %v4784 = vshll.u32 %v4631, 16
      %v4786 = vor.u32 %v4783, %v4784
      %v4787 = vsel %vm1931, %v4779, %v4786
      %v4788 = vrot.slane %v4783, 4
      %v4790 = vshrl.u32 %v4632, 16
      %v4792 = vrot.slane %v4790, 7
      %v4793 = vshll.u32 %v4632, 16
      %v4795 = vor.u32 %v4792, %v4793
      %v4796 = vsel %vm1931, %v4788, %v4795
      %v4797 = vrot.slane %v4792, 4
      %v4799 = vshrl.u32 %v4633, 16
      %v4801 = vrot.slane %v4799, 7
      %v4802 = vshll.u32 %v4633, 16
      %v4804 = vor.u32 %v4801, %v4802
      %v4805 = vsel %vm1931, %v4797, %v4804
      %v4806 = vrot.slane %v4801, 4
      %v4808 = vshrl.u32 %v4634, 16
      %v4810 = vrot.slane %v4808, 7
      %v4811 = vshll.u32 %v4634, 16
      %v4813 = vor.u32 %v4810, %v4811
      %v4814 = vsel %vm1931, %v4806, %v4813
      %v4815 = vrot.slane %v4810, 4
      %v4817 = vshrl.u32 %v4635, 16
      %v4819 = vrot.slane %v4817, 7
      %v4820 = vshll.u32 %v4635, 16
      %v4822 = vor.u32 %v4819, %v4820
      %v4823 = vsel %vm1931, %v4815, %v4822
      %v4824 = vrot.slane %v4819, 4
      %v4826 = vshrl.u32 %v4636, 16
      %v4828 = vrot.slane %v4826, 7
      %v4829 = vshll.u32 %v4636, 16
      %v4831 = vor.u32 %v4828, %v4829
      %v4832 = vsel %vm1931, %v4824, %v4831
      %v4833 = vrot.slane %v4828, 4
      %v4835 = vshrl.u32 %v4637, 16
      %v4837 = vrot.slane %v4835, 7
      %v4838 = vshll.u32 %v4637, 16
      %v4840 = vor.u32 %v4837, %v4838
      %v4841 = vsel %vm1931, %v4833, %v4840
      %v4842 = vrot.slane %v4837, 4
      %v4844 = vshrl.u32 %v4638, 16
      %v4846 = vrot.slane %v4844, 7
      %v4847 = vshll.u32 %v4638, 16
      %v4849 = vor.u32 %v4846, %v4847
      %v4850 = vsel %vm1931, %v4842, %v4849
      %v4851 = vrot.slane %v4846, 4
      %v4853 = vshrl.u32 %v4639, 16
      %v4855 = vrot.slane %v4853, 7
      %v4856 = vshll.u32 %v4639, 16
      %v4858 = vor.u32 %v4855, %v4856
      %v4859 = vsel %vm1931, %v4851, %v4858
      %v4860 = vrot.slane %v4855, 4
      %v4862 = vshrl.u32 %v4640, 16
      %v4864 = vrot.slane %v4862, 7
      %v4865 = vshll.u32 %v4640, 16
      %v4867 = vor.u32 %v4864, %v4865
      %v4868 = vsel %vm1931, %v4860, %v4867
      %v4869 = vrot.slane %v4864, 4
      %v4871 = vshrl.u32 %v4641, 16
      %v4873 = vrot.slane %v4871, 7
      %v4874 = vshll.u32 %v4641, 16
      %v4876 = vor.u32 %v4873, %v4874
      %v4877 = vsel %vm1931, %v4869, %v4876
      %v4878 = vrot.slane %v4873, 4
      %v4880 = vshrl.u32 %v4642, 16
      %v4882 = vrot.slane %v4880, 7
      %v4883 = vshll.u32 %v4642, 16
      %v4885 = vor.u32 %v4882, %v4883
      %v4886 = vsel %vm1931, %v4878, %v4885
      %v4887 = vrot.slane %v4882, 4
      %v4889 = vshrl.u32 %v4643, 16
      %v4891 = vrot.slane %v4889, 7
      %v4892 = vshll.u32 %v4643, 16
      %v4894 = vor.u32 %v4891, %v4892
      %v4895 = vsel %vm1931, %v4887, %v4894
      %v4896 = vrot.slane %v4891, 4
      %v4898 = vshrl.u32 %v4644, 16
      %v4900 = vrot.slane %v4898, 7
      %v4901 = vshll.u32 %v4644, 16
      %v4903 = vor.u32 %v4900, %v4901
      %v4904 = vsel %vm1931, %v4896, %v4903
      %v4905 = vrot.slane %v4900, 4
      %v4907 = vshrl.u32 %v4645, 16
      %v4909 = vrot.slane %v4907, 7
      %v4910 = vshll.u32 %v4645, 16
      %v4912 = vor.u32 %v4909, %v4910
      %v4913 = vsel %vm1931, %v4905, %v4912
      %v4914 = vrot.slane %v4909, 4
      %v4916 = vshrl.u32 %v4646, 16
      %v4918 = vrot.slane %v4916, 7
      %v4919 = vshll.u32 %v4646, 16
      %v4921 = vor.u32 %v4918, %v4919
      %v4922 = vsel %vm1931, %v4914, %v4921
      %v4923 = vrot.slane %v4918, 4
      %v4925 = vshrl.u32 %v4647, 16
      %v4927 = vrot.slane %v4925, 7
      %v4928 = vshll.u32 %v4647, 16
      %v4930 = vor.u32 %v4927, %v4928
      %v4931 = vsel %vm1931, %v4923, %v4930
      %v4932 = vrot.slane %v4927, 4
      %v4934 = vshrl.u32 %v4648, 16
      %v4936 = vrot.slane %v4934, 7
      %v4937 = vshll.u32 %v4648, 16
      %v4939 = vor.u32 %v4936, %v4937
      %v4940 = vsel %vm1931, %v4932, %v4939
      %4941 = vrot.lane.b32.xlu0 %v4661, 24
      %v4942 = vpop.permute.xlu0 %4941
      %4943 = vrot.lane.b32.xlu0 %v4670, 24
      %v4944 = vpop.permute.xlu0 %4943
      %4945 = vrot.lane.b32.xlu0 %v4679, 24
      %v4946 = vpop.permute.xlu0 %4945
      %4947 = vrot.lane.b32.xlu0 %v4688, 24
      %v4948 = vpop.permute.xlu0 %4947
      %4949 = vrot.lane.b32.xlu0 %v4697, 24
      %v4950 = vpop.permute.xlu0 %4949
      %4951 = vrot.lane.b32.xlu0 %v4706, 24
      %v4952 = vpop.permute.xlu0 %4951
      %4953 = vrot.lane.b32.xlu0 %v4715, 24
      %v4954 = vpop.permute.xlu0 %4953
      %4955 = vrot.lane.b32.xlu0 %v4724, 24
      %v4956 = vpop.permute.xlu0 %4955
      %4957 = vrot.lane.b32.xlu0 %v4733, 24
      %v4958 = vpop.permute.xlu0 %4957
      %4959 = vrot.lane.b32.xlu0 %v4742, 24
      %v4960 = vpop.permute.xlu0 %4959
      %4961 = vrot.lane.b32.xlu0 %v4751, 24
      %v4962 = vpop.permute.xlu0 %4961
      %4963 = vrot.lane.b32.xlu0 %v4760, 24
      %v4964 = vpop.permute.xlu0 %4963
      %4965 = vrot.lane.b32.xlu0 %v4769, 24
      %v4966 = vpop.permute.xlu0 %4965
      %4967 = vrot.lane.b32.xlu0 %v4778, 24
      %v4968 = vpop.permute.xlu0 %4967
      %4969 = vrot.lane.b32.xlu0 %v4787, 24
      %v4970 = vpop.permute.xlu0 %4969
      %4971 = vrot.lane.b32.xlu0 %v4796, 24
      %v4972 = vpop.permute.xlu0 %4971
      %4973 = vrot.lane.b32.xlu0 %v4805, 24
      %v4974 = vpop.permute.xlu0 %4973
      %4975 = vrot.lane.b32.xlu0 %v4814, 24
      %v4976 = vpop.permute.xlu0 %4975
      %4977 = vrot.lane.b32.xlu0 %v4823, 24
      %v4978 = vpop.permute.xlu0 %4977
      %4979 = vrot.lane.b32.xlu0 %v4832, 24
      %v4980 = vpop.permute.xlu0 %4979
      %4981 = vrot.lane.b32.xlu0 %v4841, 24
      %v4982 = vpop.permute.xlu0 %4981
      %4983 = vrot.lane.b32.xlu0 %v4850, 24
      %v4984 = vpop.permute.xlu0 %4983
      %4985 = vrot.lane.b32.xlu0 %v4859, 24
      %v4986 = vpop.permute.xlu0 %4985
      %4987 = vrot.lane.b32.xlu0 %v4868, 24
      %v4988 = vpop.permute.xlu0 %4987
      %4989 = vrot.lane.b32.xlu0 %v4877, 24
      %v4990 = vpop.permute.xlu0 %4989
      %4991 = vrot.lane.b32.xlu0 %v4886, 24
      %v4992 = vpop.permute.xlu0 %4991
      %4993 = vrot.lane.b32.xlu0 %v4895, 24
      %v4994 = vpop.permute.xlu0 %4993
      %4995 = vrot.lane.b32.xlu0 %v4904, 24
      %v4996 = vpop.permute.xlu0 %4995
      %4997 = vrot.lane.b32.xlu0 %v4913, 24
      %v4998 = vpop.permute.xlu0 %4997
      %4999 = vrot.lane.b32.xlu0 %v4922, 24
      %v5000 = vpop.permute.xlu0 %4999
      %5001 = vrot.lane.b32.xlu0 %v4931, 24
      %v5002 = vpop.permute.xlu0 %5001
      %5003 = vrot.lane.b32.xlu0 %v4940, 24
      %v5004 = vpop.permute.xlu0 %5003
      %vm5037 = vcmask 224448
      %5038 = vst.msk [vmem:[#allocation4] sm:$0xf] %vm5037, %v4942
      %5039 = vst.msk [vmem:[#allocation4 + $0x4] sm:$0xf] %vm5037, %v4944
      %5040 = vst.msk [vmem:[#allocation4 + $0x8] sm:$0xf] %vm5037, %v4946
      %5041 = vst.msk [vmem:[#allocation4 + $0xc] sm:$0xf] %vm5037, %v4948
      %5042 = vst.msk [vmem:[#allocation4 + $0x10] sm:$0xf] %vm5037, %v4950
      %5043 = vst.msk [vmem:[#allocation4 + $0x14] sm:$0xf] %vm5037, %v4952
      %5044 = vst.msk [vmem:[#allocation4 + $0x18] sm:$0xf] %vm5037, %v4954
      %5045 = vst.msk [vmem:[#allocation4 + $0x1c] sm:$0xf] %vm5037, %v4956
      %5046 = vst.msk [vmem:[#allocation4 + $0x20] sm:$0xf] %vm5037, %v4958
      %5047 = vst.msk [vmem:[#allocation4 + $0x24] sm:$0xf] %vm5037, %v4960
      %5048 = vst.msk [vmem:[#allocation4 + $0x28] sm:$0xf] %vm5037, %v4962
      %5049 = vst.msk [vmem:[#allocation4 + $0x2c] sm:$0xf] %vm5037, %v4964
      %5050 = vst.msk [vmem:[#allocation4 + $0x30] sm:$0xf] %vm5037, %v4966
      %5051 = vst.msk [vmem:[#allocation4 + $0x34] sm:$0xf] %vm5037, %v4968
      %5052 = vst.msk [vmem:[#allocation4 + $0x38] sm:$0xf] %vm5037, %v4970
      %5053 = vst.msk [vmem:[#allocation4 + $0x3c] sm:$0xf] %vm5037, %v4972
      %5054 = vst.msk [vmem:[#allocation4 + $0x40] sm:$0xf] %vm5037, %v4974
      %5055 = vst.msk [vmem:[#allocation4 + $0x44] sm:$0xf] %vm5037, %v4976
      %5056 = vst.msk [vmem:[#allocation4 + $0x48] sm:$0xf] %vm5037, %v4978
      %5057 = vst.msk [vmem:[#allocation4 + $0x4c] sm:$0xf] %vm5037, %v4980
      %5058 = vst.msk [vmem:[#allocation4 + $0x50] sm:$0xf] %vm5037, %v4982
      %5059 = vst.msk [vmem:[#allocation4 + $0x54] sm:$0xf] %vm5037, %v4984
      %5060 = vst.msk [vmem:[#allocation4 + $0x58] sm:$0xf] %vm5037, %v4986
      %5061 = vst.msk [vmem:[#allocation4 + $0x5c] sm:$0xf] %vm5037, %v4988
      %5062 = vst.msk [vmem:[#allocation4 + $0x60] sm:$0xf] %vm5037, %v4990
      %5063 = vst.msk [vmem:[#allocation4 + $0x64] sm:$0xf] %vm5037, %v4992
      %5064 = vst.msk [vmem:[#allocation4 + $0x68] sm:$0xf] %vm5037, %v4994
      %5065 = vst.msk [vmem:[#allocation4 + $0x6c] sm:$0xf] %vm5037, %v4996
      %5066 = vst.msk [vmem:[#allocation4 + $0x70] sm:$0xf] %vm5037, %v4998
      %5067 = vst.msk [vmem:[#allocation4 + $0x74] sm:$0xf] %vm5037, %v5000
      %5068 = vst.msk [vmem:[#allocation4 + $0x78] sm:$0xf] %vm5037, %v5002
      %5069 = vst.msk [vmem:[#allocation4 + $0x7c] sm:$0xf] %vm5037, %v5004
      %v5070 = vld [vmem:[#allocation2 + $0x18] sm:$0xf]
      %v5071 = vld [vmem:[#allocation2 + $0x1c] sm:$0xf]
      %v5072 = vld [vmem:[#allocation2 + $0x20] sm:$0xf]
      %v5073 = vld [vmem:[#allocation2 + $0x24] sm:$0xf]
      %v5074 = vld [vmem:[#allocation2 + $0x28] sm:$0xf]
      %v5075 = vld [vmem:[#allocation2 + $0x2c] sm:$0xf]
      %v5076 = vld [vmem:[#allocation2 + $0x30] sm:$0xf]
      %v5077 = vld [vmem:[#allocation2 + $0x34] sm:$0xf]
      %v5078 = vld [vmem:[#allocation2 + $0x38] sm:$0xf]
      %v5079 = vld [vmem:[#allocation2 + $0x3c] sm:$0xf]
      %v5080 = vld [vmem:[#allocation2 + $0x40] sm:$0xf]
      %v5081 = vld [vmem:[#allocation2 + $0x44] sm:$0xf]
      %v5082 = vld [vmem:[#allocation2 + $0x48] sm:$0xf]
      %v5083 = vld [vmem:[#allocation2 + $0x4c] sm:$0xf]
      %v5084 = vld [vmem:[#allocation2 + $0x50] sm:$0xf]
      %v5085 = vld [vmem:[#allocation2 + $0x54] sm:$0xf]
      %v5086 = vld [vmem:[#allocation2 + $0x58] sm:$0xf]
      %v5087 = vld [vmem:[#allocation2 + $0x5c] sm:$0xf]
      %v5088 = vld [vmem:[#allocation2 + $0x60] sm:$0xf]
      %v5089 = vld [vmem:[#allocation2 + $0x64] sm:$0xf]
      %v5090 = vld [vmem:[#allocation2 + $0x68] sm:$0xf]
      %v5091 = vld [vmem:[#allocation2 + $0x6c] sm:$0xf]
      %v5092 = vld [vmem:[#allocation2 + $0x70] sm:$0xf]
      %v5093 = vld [vmem:[#allocation2 + $0x74] sm:$0xf]
      %v5094 = vld [vmem:[#allocation2 + $0x78] sm:$0xf]
      %v5095 = vld [vmem:[#allocation2 + $0x7c] sm:$0xf]
      %v5096 = vld [vmem:[#allocation2 + $0x80] sm:$0xf]
      %v5097 = vld [vmem:[#allocation2 + $0x84] sm:$0xf]
      %v5098 = vld [vmem:[#allocation2 + $0x88] sm:$0xf]
      %v5099 = vld [vmem:[#allocation2 + $0x8c] sm:$0xf]
      %v5100 = vld [vmem:[#allocation2 + $0x90] sm:$0xf]
      %v5101 = vld [vmem:[#allocation2 + $0x94] sm:$0xf]
      %5134 = vrot.lane.b32.xlu0 %v5070, 28
      %v5135 = vpop.permute.xlu0 %5134
      %5136 = vrot.lane.b32.xlu0 %v5071, 28
      %v5137 = vpop.permute.xlu0 %5136
      %5138 = vrot.lane.b32.xlu0 %v5072, 28
      %v5139 = vpop.permute.xlu0 %5138
      %5140 = vrot.lane.b32.xlu0 %v5073, 28
      %v5141 = vpop.permute.xlu0 %5140
      %5142 = vrot.lane.b32.xlu0 %v5074, 28
      %v5143 = vpop.permute.xlu0 %5142
      %5144 = vrot.lane.b32.xlu0 %v5075, 28
      %v5145 = vpop.permute.xlu0 %5144
      %5146 = vrot.lane.b32.xlu0 %v5076, 28
      %v5147 = vpop.permute.xlu0 %5146
      %5148 = vrot.lane.b32.xlu0 %v5077, 28
      %v5149 = vpop.permute.xlu0 %5148
      %5150 = vrot.lane.b32.xlu0 %v5078, 28
      %v5151 = vpop.permute.xlu0 %5150
      %5152 = vrot.lane.b32.xlu0 %v5079, 28
      %v5153 = vpop.permute.xlu0 %5152
      %5154 = vrot.lane.b32.xlu0 %v5080, 28
      %v5155 = vpop.permute.xlu0 %5154
      %5156 = vrot.lane.b32.xlu0 %v5081, 28
      %v5157 = vpop.permute.xlu0 %5156
      %5158 = vrot.lane.b32.xlu0 %v5082, 28
      %v5159 = vpop.permute.xlu0 %5158
      %5160 = vrot.lane.b32.xlu0 %v5083, 28
      %v5161 = vpop.permute.xlu0 %5160
      %5162 = vrot.lane.b32.xlu0 %v5084, 28
      %v5163 = vpop.permute.xlu0 %5162
      %5164 = vrot.lane.b32.xlu0 %v5085, 28
      %v5165 = vpop.permute.xlu0 %5164
      %5166 = vrot.lane.b32.xlu0 %v5086, 28
      %v5167 = vpop.permute.xlu0 %5166
      %5168 = vrot.lane.b32.xlu0 %v5087, 28
      %v5169 = vpop.permute.xlu0 %5168
      %5170 = vrot.lane.b32.xlu0 %v5088, 28
      %v5171 = vpop.permute.xlu0 %5170
      %5172 = vrot.lane.b32.xlu0 %v5089, 28
      %v5173 = vpop.permute.xlu0 %5172
      %5174 = vrot.lane.b32.xlu0 %v5090, 28
      %v5175 = vpop.permute.xlu0 %5174
      %5176 = vrot.lane.b32.xlu0 %v5091, 28
      %v5177 = vpop.permute.xlu0 %5176
      %5178 = vrot.lane.b32.xlu0 %v5092, 28
      %v5179 = vpop.permute.xlu0 %5178
      %5180 = vrot.lane.b32.xlu0 %v5093, 28
      %v5181 = vpop.permute.xlu0 %5180
      %5182 = vrot.lane.b32.xlu0 %v5094, 28
      %v5183 = vpop.permute.xlu0 %5182
      %5184 = vrot.lane.b32.xlu0 %v5095, 28
      %v5185 = vpop.permute.xlu0 %5184
      %5186 = vrot.lane.b32.xlu0 %v5096, 28
      %v5187 = vpop.permute.xlu0 %5186
      %5188 = vrot.lane.b32.xlu0 %v5097, 28
      %v5189 = vpop.permute.xlu0 %5188
      %5190 = vrot.lane.b32.xlu0 %v5098, 28
      %v5191 = vpop.permute.xlu0 %5190
      %5192 = vrot.lane.b32.xlu0 %v5099, 28
      %v5193 = vpop.permute.xlu0 %5192
      %5194 = vrot.lane.b32.xlu0 %v5100, 28
      %v5195 = vpop.permute.xlu0 %5194
      %5196 = vrot.lane.b32.xlu0 %v5101, 28
      %v5197 = vpop.permute.xlu0 %5196
      %vm5230 = vcmask 257248
      %5231 = vst.msk [vmem:[#allocation4] sm:$0xf] %vm5230, %v5135
      %5232 = vst.msk [vmem:[#allocation4 + $0x4] sm:$0xf] %vm5230, %v5137
      %5233 = vst.msk [vmem:[#allocation4 + $0x8] sm:$0xf] %vm5230, %v5139
      %5234 = vst.msk [vmem:[#allocation4 + $0xc] sm:$0xf] %vm5230, %v5141
      %5235 = vst.msk [vmem:[#allocation4 + $0x10] sm:$0xf] %vm5230, %v5143
      %5236 = vst.msk [vmem:[#allocation4 + $0x14] sm:$0xf] %vm5230, %v5145
      %5237 = vst.msk [vmem:[#allocation4 + $0x18] sm:$0xf] %vm5230, %v5147
      %5238 = vst.msk [vmem:[#allocation4 + $0x1c] sm:$0xf] %vm5230, %v5149
      %5239 = vst.msk [vmem:[#allocation4 + $0x20] sm:$0xf] %vm5230, %v5151
      %5240 = vst.msk [vmem:[#allocation4 + $0x24] sm:$0xf] %vm5230, %v5153
      %5241 = vst.msk [vmem:[#allocation4 + $0x28] sm:$0xf] %vm5230, %v5155
      %5242 = vst.msk [vmem:[#allocation4 + $0x2c] sm:$0xf] %vm5230, %v5157
      %5243 = vst.msk [vmem:[#allocation4 + $0x30] sm:$0xf] %vm5230, %v5159
      %5244 = vst.msk [vmem:[#allocation4 + $0x34] sm:$0xf] %vm5230, %v5161
      %5245 = vst.msk [vmem:[#allocation4 + $0x38] sm:$0xf] %vm5230, %v5163
      %5246 = vst.msk [vmem:[#allocation4 + $0x3c] sm:$0xf] %vm5230, %v5165
      %5247 = vst.msk [vmem:[#allocation4 + $0x40] sm:$0xf] %vm5230, %v5167
      %5248 = vst.msk [vmem:[#allocation4 + $0x44] sm:$0xf] %vm5230, %v5169
      %5249 = vst.msk [vmem:[#allocation4 + $0x48] sm:$0xf] %vm5230, %v5171
      %5250 = vst.msk [vmem:[#allocation4 + $0x4c] sm:$0xf] %vm5230, %v5173
      %5251 = vst.msk [vmem:[#allocation4 + $0x50] sm:$0xf] %vm5230, %v5175
      %5252 = vst.msk [vmem:[#allocation4 + $0x54] sm:$0xf] %vm5230, %v5177
      %5253 = vst.msk [vmem:[#allocation4 + $0x58] sm:$0xf] %vm5230, %v5179
      %5254 = vst.msk [vmem:[#allocation4 + $0x5c] sm:$0xf] %vm5230, %v5181
      %5255 = vst.msk [vmem:[#allocation4 + $0x60] sm:$0xf] %vm5230, %v5183
      %5256 = vst.msk [vmem:[#allocation4 + $0x64] sm:$0xf] %vm5230, %v5185
      %5257 = vst.msk [vmem:[#allocation4 + $0x68] sm:$0xf] %vm5230, %v5187
      %5258 = vst.msk [vmem:[#allocation4 + $0x6c] sm:$0xf] %vm5230, %v5189
      %5259 = vst.msk [vmem:[#allocation4 + $0x70] sm:$0xf] %vm5230, %v5191
      %5260 = vst.msk [vmem:[#allocation4 + $0x74] sm:$0xf] %vm5230, %v5193
      %5261 = vst.msk [vmem:[#allocation4 + $0x78] sm:$0xf] %vm5230, %v5195
      %5262 = vst.msk [vmem:[#allocation4 + $0x7c] sm:$0xf] %vm5230, %v5197
      %v5263 = vld [vmem:[#allocation2 + $0x18] sm:$0xf]
      %v5264 = vld [vmem:[#allocation2 + $0x1c] sm:$0xf]
      %v5265 = vld [vmem:[#allocation2 + $0x20] sm:$0xf]
      %v5266 = vld [vmem:[#allocation2 + $0x24] sm:$0xf]
      %v5267 = vld [vmem:[#allocation2 + $0x28] sm:$0xf]
      %v5268 = vld [vmem:[#allocation2 + $0x2c] sm:$0xf]
      %v5269 = vld [vmem:[#allocation2 + $0x30] sm:$0xf]
      %v5270 = vld [vmem:[#allocation2 + $0x34] sm:$0xf]
      %v5271 = vld [vmem:[#allocation2 + $0x38] sm:$0xf]
      %v5272 = vld [vmem:[#allocation2 + $0x3c] sm:$0xf]
      %v5273 = vld [vmem:[#allocation2 + $0x40] sm:$0xf]
      %v5274 = vld [vmem:[#allocation2 + $0x44] sm:$0xf]
      %v5275 = vld [vmem:[#allocation2 + $0x48] sm:$0xf]
      %v5276 = vld [vmem:[#allocation2 + $0x4c] sm:$0xf]
      %v5277 = vld [vmem:[#allocation2 + $0x50] sm:$0xf]
      %v5278 = vld [vmem:[#allocation2 + $0x54] sm:$0xf]
      %v5279 = vld [vmem:[#allocation2 + $0x58] sm:$0xf]
      %v5280 = vld [vmem:[#allocation2 + $0x5c] sm:$0xf]
      %v5281 = vld [vmem:[#allocation2 + $0x60] sm:$0xf]
      %v5282 = vld [vmem:[#allocation2 + $0x64] sm:$0xf]
      %v5283 = vld [vmem:[#allocation2 + $0x68] sm:$0xf]
      %v5284 = vld [vmem:[#allocation2 + $0x6c] sm:$0xf]
      %v5285 = vld [vmem:[#allocation2 + $0x70] sm:$0xf]
      %v5286 = vld [vmem:[#allocation2 + $0x74] sm:$0xf]
      %v5287 = vld [vmem:[#allocation2 + $0x78] sm:$0xf]
      %v5288 = vld [vmem:[#allocation2 + $0x7c] sm:$0xf]
      %v5289 = vld [vmem:[#allocation2 + $0x80] sm:$0xf]
      %v5290 = vld [vmem:[#allocation2 + $0x84] sm:$0xf]
      %v5291 = vld [vmem:[#allocation2 + $0x88] sm:$0xf]
      %v5292 = vld [vmem:[#allocation2 + $0x8c] sm:$0xf]
      %v5293 = vld [vmem:[#allocation2 + $0x90] sm:$0xf]
      %v5294 = vld [vmem:[#allocation2 + $0x94] sm:$0xf]
      %v5295 = vld [vmem:[#allocation2 + $0x98] sm:$0x1]
      %v5296 = vsel %vm2865, %v5263, 0
      %v5297 = vsel %vm2866, %v5264, 0
      %v5298 = vsel %vm2867, %v5265, 0
      %v5299 = vsel %vm2868, %v5266, 0
      %v5300 = vsel %vm2869, %v5267, 0
      %v5301 = vsel %vm2870, %v5268, 0
      %v5302 = vsel %vm2871, %v5269, 0
      %v5303 = vsel %vm2872, %v5270, 0
      %v5304 = vsel %vm2873, %v5271, 0
      %v5305 = vsel %vm2874, %v5272, 0
      %v5306 = vsel %vm2875, %v5273, 0
      %v5307 = vsel %vm2876, %v5274, 0
      %v5308 = vsel %vm2877, %v5275, 0
      %v5309 = vsel %vm2878, %v5276, 0
      %v5310 = vsel %vm2879, %v5277, 0
      %v5311 = vsel %vm2880, %v5278, 0
      %v5312 = vsel %vm2881, %v5279, 0
      %v5313 = vsel %vm2882, %v5280, 0
      %v5314 = vsel %vm2883, %v5281, 0
      %v5315 = vsel %vm2884, %v5282, 0
      %v5316 = vsel %vm2885, %v5283, 0
      %v5317 = vsel %vm2886, %v5284, 0
      %v5318 = vsel %vm2887, %v5285, 0
      %v5319 = vsel %vm2888, %v5286, 0
      %v5320 = vsel %vm2889, %v5287, 0
      %v5321 = vsel %vm2890, %v5288, 0
      %v5322 = vsel %vm2891, %v5289, 0
      %v5323 = vsel %vm2892, %v5290, 0
      %v5324 = vsel %vm2893, %v5291, 0
      %v5325 = vsel %vm2894, %v5292, 0
      %v5326 = vsel %vm2895, %v5293, 0
      %v5327 = vsel %vm2896, %v5294, 0
      %v5328 = vsel %vm2897, %v5295, 0
      %v5330 = vshrl.u32 %v5296, 16
      %v5332 = vrot.slane %v5330, 4
      %v5333 = vshll.u32 %v5296, 16
      %v5335 = vrot.slane %v5333, 5
      %v5336 = vor.u32 %v5332, %v5335
      %v5337 = vrot.slane %v5336, 4
      %v5339 = vshll.u32 %v5297, 16
      %v5341 = vrot.slane %v5339, 5
      %v5342 = vsel %vm1543, %v5337, %v5341
      %v5343 = vshrl.u32 %v5297, 16
      %v5345 = vrot.slane %v5343, 4
      %v5346 = vor.u32 %v5345, %v5341
      %v5347 = vrot.slane %v5346, 4
      %v5349 = vshll.u32 %v5298, 16
      %v5351 = vrot.slane %v5349, 5
      %v5352 = vsel %vm1543, %v5347, %v5351
      %v5353 = vshrl.u32 %v5298, 16
      %v5355 = vrot.slane %v5353, 4
      %v5356 = vor.u32 %v5355, %v5351
      %v5357 = vrot.slane %v5356, 4
      %v5359 = vshll.u32 %v5299, 16
      %v5361 = vrot.slane %v5359, 5
      %v5362 = vsel %vm1543, %v5357, %v5361
      %v5363 = vshrl.u32 %v5299, 16
      %v5365 = vrot.slane %v5363, 4
      %v5366 = vor.u32 %v5365, %v5361
      %v5367 = vrot.slane %v5366, 4
      %v5369 = vshll.u32 %v5300, 16
      %v5371 = vrot.slane %v5369, 5
      %v5372 = vsel %vm1543, %v5367, %v5371
      %v5373 = vshrl.u32 %v5300, 16
      %v5375 = vrot.slane %v5373, 4
      %v5376 = vor.u32 %v5375, %v5371
      %v5377 = vrot.slane %v5376, 4
      %v5379 = vshll.u32 %v5301, 16
      %v5381 = vrot.slane %v5379, 5
      %v5382 = vsel %vm1543, %v5377, %v5381
      %v5383 = vshrl.u32 %v5301, 16
      %v5385 = vrot.slane %v5383, 4
      %v5386 = vor.u32 %v5385, %v5381
      %v5387 = vrot.slane %v5386, 4
      %v5389 = vshll.u32 %v5302, 16
      %v5391 = vrot.slane %v5389, 5
      %v5392 = vsel %vm1543, %v5387, %v5391
      %v5393 = vshrl.u32 %v5302, 16
      %v5395 = vrot.slane %v5393, 4
      %v5396 = vor.u32 %v5395, %v5391
      %v5397 = vrot.slane %v5396, 4
      %v5399 = vshll.u32 %v5303, 16
      %v5401 = vrot.slane %v5399, 5
      %v5402 = vsel %vm1543, %v5397, %v5401
      %v5403 = vshrl.u32 %v5303, 16
      %v5405 = vrot.slane %v5403, 4
      %v5406 = vor.u32 %v5405, %v5401
      %v5407 = vrot.slane %v5406, 4
      %v5409 = vshll.u32 %v5304, 16
      %v5411 = vrot.slane %v5409, 5
      %v5412 = vsel %vm1543, %v5407, %v5411
      %v5413 = vshrl.u32 %v5304, 16
      %v5415 = vrot.slane %v5413, 4
      %v5416 = vor.u32 %v5415, %v5411
      %v5417 = vrot.slane %v5416, 4
      %v5419 = vshll.u32 %v5305, 16
      %v5421 = vrot.slane %v5419, 5
      %v5422 = vsel %vm1543, %v5417, %v5421
      %v5423 = vshrl.u32 %v5305, 16
      %v5425 = vrot.slane %v5423, 4
      %v5426 = vor.u32 %v5425, %v5421
      %v5427 = vrot.slane %v5426, 4
      %v5429 = vshll.u32 %v5306, 16
      %v5431 = vrot.slane %v5429, 5
      %v5432 = vsel %vm1543, %v5427, %v5431
      %v5433 = vshrl.u32 %v5306, 16
      %v5435 = vrot.slane %v5433, 4
      %v5436 = vor.u32 %v5435, %v5431
      %v5437 = vrot.slane %v5436, 4
      %v5439 = vshll.u32 %v5307, 16
      %v5441 = vrot.slane %v5439, 5
      %v5442 = vsel %vm1543, %v5437, %v5441
      %v5443 = vshrl.u32 %v5307, 16
      %v5445 = vrot.slane %v5443, 4
      %v5446 = vor.u32 %v5445, %v5441
      %v5447 = vrot.slane %v5446, 4
      %v5449 = vshll.u32 %v5308, 16
      %v5451 = vrot.slane %v5449, 5
      %v5452 = vsel %vm1543, %v5447, %v5451
      %v5453 = vshrl.u32 %v5308, 16
      %v5455 = vrot.slane %v5453, 4
      %v5456 = vor.u32 %v5455, %v5451
      %v5457 = vrot.slane %v5456, 4
      %v5459 = vshll.u32 %v5309, 16
      %v5461 = vrot.slane %v5459, 5
      %v5462 = vsel %vm1543, %v5457, %v5461
      %v5463 = vshrl.u32 %v5309, 16
      %v5465 = vrot.slane %v5463, 4
      %v5466 = vor.u32 %v5465, %v5461
      %v5467 = vrot.slane %v5466, 4
      %v5469 = vshll.u32 %v5310, 16
      %v5471 = vrot.slane %v5469, 5
      %v5472 = vsel %vm1543, %v5467, %v5471
      %v5473 = vshrl.u32 %v5310, 16
      %v5475 = vrot.slane %v5473, 4
      %v5476 = vor.u32 %v5475, %v5471
      %v5477 = vrot.slane %v5476, 4
      %v5479 = vshll.u32 %v5311, 16
      %v5481 = vrot.slane %v5479, 5
      %v5482 = vsel %vm1543, %v5477, %v5481
      %v5483 = vshrl.u32 %v5311, 16
      %v5485 = vrot.slane %v5483, 4
      %v5486 = vor.u32 %v5485, %v5481
      %v5487 = vrot.slane %v5486, 4
      %v5489 = vshll.u32 %v5312, 16
      %v5491 = vrot.slane %v5489, 5
      %v5492 = vsel %vm1543, %v5487, %v5491
      %v5493 = vshrl.u32 %v5312, 16
      %v5495 = vrot.slane %v5493, 4
      %v5496 = vor.u32 %v5495, %v5491
      %v5497 = vrot.slane %v5496, 4
      %v5499 = vshll.u32 %v5313, 16
      %v5501 = vrot.slane %v5499, 5
      %v5502 = vsel %vm1543, %v5497, %v5501
      %v5503 = vshrl.u32 %v5313, 16
      %v5505 = vrot.slane %v5503, 4
      %v5506 = vor.u32 %v5505, %v5501
      %v5507 = vrot.slane %v5506, 4
      %v5509 = vshll.u32 %v5314, 16
      %v5511 = vrot.slane %v5509, 5
      %v5512 = vsel %vm1543, %v5507, %v5511
      %v5513 = vshrl.u32 %v5314, 16
      %v5515 = vrot.slane %v5513, 4
      %v5516 = vor.u32 %v5515, %v5511
      %v5517 = vrot.slane %v5516, 4
      %v5519 = vshll.u32 %v5315, 16
      %v5521 = vrot.slane %v5519, 5
      %v5522 = vsel %vm1543, %v5517, %v5521
      %v5523 = vshrl.u32 %v5315, 16
      %v5525 = vrot.slane %v5523, 4
      %v5526 = vor.u32 %v5525, %v5521
      %v5527 = vrot.slane %v5526, 4
      %v5529 = vshll.u32 %v5316, 16
      %v5531 = vrot.slane %v5529, 5
      %v5532 = vsel %vm1543, %v5527, %v5531
      %v5533 = vshrl.u32 %v5316, 16
      %v5535 = vrot.slane %v5533, 4
      %v5536 = vor.u32 %v5535, %v5531
      %v5537 = vrot.slane %v5536, 4
      %v5539 = vshll.u32 %v5317, 16
      %v5541 = vrot.slane %v5539, 5
      %v5542 = vsel %vm1543, %v5537, %v5541
      %v5543 = vshrl.u32 %v5317, 16
      %v5545 = vrot.slane %v5543, 4
      %v5546 = vor.u32 %v5545, %v5541
      %v5547 = vrot.slane %v5546, 4
      %v5549 = vshll.u32 %v5318, 16
      %v5551 = vrot.slane %v5549, 5
      %v5552 = vsel %vm1543, %v5547, %v5551
      %v5553 = vshrl.u32 %v5318, 16
      %v5555 = vrot.slane %v5553, 4
      %v5556 = vor.u32 %v5555, %v5551
      %v5557 = vrot.slane %v5556, 4
      %v5559 = vshll.u32 %v5319, 16
      %v5561 = vrot.slane %v5559, 5
      %v5562 = vsel %vm1543, %v5557, %v5561
      %v5563 = vshrl.u32 %v5319, 16
      %v5565 = vrot.slane %v5563, 4
      %v5566 = vor.u32 %v5565, %v5561
      %v5567 = vrot.slane %v5566, 4
      %v5569 = vshll.u32 %v5320, 16
      %v5571 = vrot.slane %v5569, 5
      %v5572 = vsel %vm1543, %v5567, %v5571
      %v5573 = vshrl.u32 %v5320, 16
      %v5575 = vrot.slane %v5573, 4
      %v5576 = vor.u32 %v5575, %v5571
      %v5577 = vrot.slane %v5576, 4
      %v5579 = vshll.u32 %v5321, 16
      %v5581 = vrot.slane %v5579, 5
      %v5582 = vsel %vm1543, %v5577, %v5581
      %v5583 = vshrl.u32 %v5321, 16
      %v5585 = vrot.slane %v5583, 4
      %v5586 = vor.u32 %v5585, %v5581
      %v5587 = vrot.slane %v5586, 4
      %v5589 = vshll.u32 %v5322, 16
      %v5591 = vrot.slane %v5589, 5
      %v5592 = vsel %vm1543, %v5587, %v5591
      %v5593 = vshrl.u32 %v5322, 16
      %v5595 = vrot.slane %v5593, 4
      %v5596 = vor.u32 %v5595, %v5591
      %v5597 = vrot.slane %v5596, 4
      %v5599 = vshll.u32 %v5323, 16
      %v5601 = vrot.slane %v5599, 5
      %v5602 = vsel %vm1543, %v5597, %v5601
      %v5603 = vshrl.u32 %v5323, 16
      %v5605 = vrot.slane %v5603, 4
      %v5606 = vor.u32 %v5605, %v5601
      %v5607 = vrot.slane %v5606, 4
      %v5609 = vshll.u32 %v5324, 16
      %v5611 = vrot.slane %v5609, 5
      %v5612 = vsel %vm1543, %v5607, %v5611
      %v5613 = vshrl.u32 %v5324, 16
      %v5615 = vrot.slane %v5613, 4
      %v5616 = vor.u32 %v5615, %v5611
      %v5617 = vrot.slane %v5616, 4
      %v5619 = vshll.u32 %v5325, 16
      %v5621 = vrot.slane %v5619, 5
      %v5622 = vsel %vm1543, %v5617, %v5621
      %v5623 = vshrl.u32 %v5325, 16
      %v5625 = vrot.slane %v5623, 4
      %v5626 = vor.u32 %v5625, %v5621
      %v5627 = vrot.slane %v5626, 4
      %v5629 = vshll.u32 %v5326, 16
      %v5631 = vrot.slane %v5629, 5
      %v5632 = vsel %vm1543, %v5627, %v5631
      %v5633 = vshrl.u32 %v5326, 16
      %v5635 = vrot.slane %v5633, 4
      %v5636 = vor.u32 %v5635, %v5631
      %v5637 = vrot.slane %v5636, 4
      %v5639 = vshll.u32 %v5327, 16
      %v5641 = vrot.slane %v5639, 5
      %v5642 = vsel %vm1543, %v5637, %v5641
      %v5643 = vshrl.u32 %v5327, 16
      %v5645 = vrot.slane %v5643, 4
      %v5646 = vor.u32 %v5645, %v5641
      %v5647 = vrot.slane %v5646, 4
      %v5649 = vshll.u32 %v5328, 16
      %v5651 = vrot.slane %v5649, 5
      %v5652 = vsel %vm1543, %v5647, %v5651
      %5653 = vrot.lane.b32.xlu0 %v5342, 32
      %v5654 = vpop.permute.xlu0 %5653
      %5655 = vrot.lane.b32.xlu0 %v5352, 32
      %v5656 = vpop.permute.xlu0 %5655
      %5657 = vrot.lane.b32.xlu0 %v5362, 32
      %v5658 = vpop.permute.xlu0 %5657
      %5659 = vrot.lane.b32.xlu0 %v5372, 32
      %v5660 = vpop.permute.xlu0 %5659
      %5661 = vrot.lane.b32.xlu0 %v5382, 32
      %v5662 = vpop.permute.xlu0 %5661
      %5663 = vrot.lane.b32.xlu0 %v5392, 32
      %v5664 = vpop.permute.xlu0 %5663
      %5665 = vrot.lane.b32.xlu0 %v5402, 32
      %v5666 = vpop.permute.xlu0 %5665
      %5667 = vrot.lane.b32.xlu0 %v5412, 32
      %v5668 = vpop.permute.xlu0 %5667
      %5669 = vrot.lane.b32.xlu0 %v5422, 32
      %v5670 = vpop.permute.xlu0 %5669
      %5671 = vrot.lane.b32.xlu0 %v5432, 32
      %v5672 = vpop.permute.xlu0 %5671
      %5673 = vrot.lane.b32.xlu0 %v5442, 32
      %v5674 = vpop.permute.xlu0 %5673
      %5675 = vrot.lane.b32.xlu0 %v5452, 32
      %v5676 = vpop.permute.xlu0 %5675
      %5677 = vrot.lane.b32.xlu0 %v5462, 32
      %v5678 = vpop.permute.xlu0 %5677
      %5679 = vrot.lane.b32.xlu0 %v5472, 32
      %v5680 = vpop.permute.xlu0 %5679
      %5681 = vrot.lane.b32.xlu0 %v5482, 32
      %v5682 = vpop.permute.xlu0 %5681
      %5683 = vrot.lane.b32.xlu0 %v5492, 32
      %v5684 = vpop.permute.xlu0 %5683
      %5685 = vrot.lane.b32.xlu0 %v5502, 32
      %v5686 = vpop.permute.xlu0 %5685
      %5687 = vrot.lane.b32.xlu0 %v5512, 32
      %v5688 = vpop.permute.xlu0 %5687
      %5689 = vrot.lane.b32.xlu0 %v5522, 32
      %v5690 = vpop.permute.xlu0 %5689
      %5691 = vrot.lane.b32.xlu0 %v5532, 32
      %v5692 = vpop.permute.xlu0 %5691
      %5693 = vrot.lane.b32.xlu0 %v5542, 32
      %v5694 = vpop.permute.xlu0 %5693
      %5695 = vrot.lane.b32.xlu0 %v5552, 32
      %v5696 = vpop.permute.xlu0 %5695
      %5697 = vrot.lane.b32.xlu0 %v5562, 32
      %v5698 = vpop.permute.xlu0 %5697
      %5699 = vrot.lane.b32.xlu0 %v5572, 32
      %v5700 = vpop.permute.xlu0 %5699
      %5701 = vrot.lane.b32.xlu0 %v5582, 32
      %v5702 = vpop.permute.xlu0 %5701
      %5703 = vrot.lane.b32.xlu0 %v5592, 32
      %v5704 = vpop.permute.xlu0 %5703
      %5705 = vrot.lane.b32.xlu0 %v5602, 32
      %v5706 = vpop.permute.xlu0 %5705
      %5707 = vrot.lane.b32.xlu0 %v5612, 32
      %v5708 = vpop.permute.xlu0 %5707
      %5709 = vrot.lane.b32.xlu0 %v5622, 32
      %v5710 = vpop.permute.xlu0 %5709
      %5711 = vrot.lane.b32.xlu0 %v5632, 32
      %v5712 = vpop.permute.xlu0 %5711
      %5713 = vrot.lane.b32.xlu0 %v5642, 32
      %v5714 = vpop.permute.xlu0 %5713
      %5715 = vrot.lane.b32.xlu0 %v5652, 32
      %v5716 = vpop.permute.xlu0 %5715
      %vm5749 = vcmask 290048
      %5750 = vst.msk [vmem:[#allocation4] sm:$0xf] %vm5749, %v5654
      %5751 = vst.msk [vmem:[#allocation4 + $0x4] sm:$0xf] %vm5749, %v5656
      %5752 = vst.msk [vmem:[#allocation4 + $0x8] sm:$0xf] %vm5749, %v5658
      %5753 = vst.msk [vmem:[#allocation4 + $0xc] sm:$0xf] %vm5749, %v5660
      %5754 = vst.msk [vmem:[#allocation4 + $0x10] sm:$0xf] %vm5749, %v5662
      %5755 = vst.msk [vmem:[#allocation4 + $0x14] sm:$0xf] %vm5749, %v5664
      %5756 = vst.msk [vmem:[#allocation4 + $0x18] sm:$0xf] %vm5749, %v5666
      %5757 = vst.msk [vmem:[#allocation4 + $0x1c] sm:$0xf] %vm5749, %v5668
      %5758 = vst.msk [vmem:[#allocation4 + $0x20] sm:$0xf] %vm5749, %v5670
      %5759 = vst.msk [vmem:[#allocation4 + $0x24] sm:$0xf] %vm5749, %v5672
      %5760 = vst.msk [vmem:[#allocation4 + $0x28] sm:$0xf] %vm5749, %v5674
      %5761 = vst.msk [vmem:[#allocation4 + $0x2c] sm:$0xf] %vm5749, %v5676
      %5762 = vst.msk [vmem:[#allocation4 + $0x30] sm:$0xf] %vm5749, %v5678
      %5763 = vst.msk [vmem:[#allocation4 + $0x34] sm:$0xf] %vm5749, %v5680
      %5764 = vst.msk [vmem:[#allocation4 + $0x38] sm:$0xf] %vm5749, %v5682
      %5765 = vst.msk [vmem:[#allocation4 + $0x3c] sm:$0xf] %vm5749, %v5684
      %5766 = vst.msk [vmem:[#allocation4 + $0x40] sm:$0xf] %vm5749, %v5686
      %5767 = vst.msk [vmem:[#allocation4 + $0x44] sm:$0xf] %vm5749, %v5688
      %5768 = vst.msk [vmem:[#allocation4 + $0x48] sm:$0xf] %vm5749, %v5690
      %5769 = vst.msk [vmem:[#allocation4 + $0x4c] sm:$0xf] %vm5749, %v5692
      %5770 = vst.msk [vmem:[#allocation4 + $0x50] sm:$0xf] %vm5749, %v5694
      %5771 = vst.msk [vmem:[#allocation4 + $0x54] sm:$0xf] %vm5749, %v5696
      %5772 = vst.msk [vmem:[#allocation4 + $0x58] sm:$0xf] %vm5749, %v5698
      %5773 = vst.msk [vmem:[#allocation4 + $0x5c] sm:$0xf] %vm5749, %v5700
      %5774 = vst.msk [vmem:[#allocation4 + $0x60] sm:$0xf] %vm5749, %v5702
      %5775 = vst.msk [vmem:[#allocation4 + $0x64] sm:$0xf] %vm5749, %v5704
      %5776 = vst.msk [vmem:[#allocation4 + $0x68] sm:$0xf] %vm5749, %v5706
      %5777 = vst.msk [vmem:[#allocation4 + $0x6c] sm:$0xf] %vm5749, %v5708
      %5778 = vst.msk [vmem:[#allocation4 + $0x70] sm:$0xf] %vm5749, %v5710
      %5779 = vst.msk [vmem:[#allocation4 + $0x74] sm:$0xf] %vm5749, %v5712
      %5780 = vst.msk [vmem:[#allocation4 + $0x78] sm:$0xf] %vm5749, %v5714
      %5781 = vst.msk [vmem:[#allocation4 + $0x7c] sm:$0xf] %vm5749, %v5716
      %v5782 = vld [vmem:[#allocation4] sm:$0xf]
      %v5783 = vld [vmem:[#allocation4 + $0x4] sm:$0xf]
      %v5784 = vld [vmem:[#allocation4 + $0x8] sm:$0xf]
      %v5785 = vld [vmem:[#allocation4 + $0xc] sm:$0xf]
      %v5786 = vld [vmem:[#allocation4 + $0x10] sm:$0xf]
      %v5787 = vld [vmem:[#allocation4 + $0x14] sm:$0xf]
      %v5788 = vld [vmem:[#allocation4 + $0x18] sm:$0xf]
      %v5789 = vld [vmem:[#allocation4 + $0x1c] sm:$0xf]
      %v5790 = vld [vmem:[#allocation4 + $0x20] sm:$0xf]
      %v5791 = vld [vmem:[#allocation4 + $0x24] sm:$0xf]
      %v5792 = vld [vmem:[#allocation4 + $0x28] sm:$0xf]
      %v5793 = vld [vmem:[#allocation4 + $0x2c] sm:$0xf]
      %v5794 = vld [vmem:[#allocation4 + $0x30] sm:$0xf]
      %v5795 = vld [vmem:[#allocation4 + $0x34] sm:$0xf]
      %v5796 = vld [vmem:[#allocation4 + $0x38] sm:$0xf]
      %v5797 = vld [vmem:[#allocation4 + $0x3c] sm:$0xf]
      %v5798 = vld [vmem:[#allocation4 + $0x40] sm:$0xf]
      %v5799 = vld [vmem:[#allocation4 + $0x44] sm:$0xf]
      %v5800 = vld [vmem:[#allocation4 + $0x48] sm:$0xf]
      %v5801 = vld [vmem:[#allocation4 + $0x4c] sm:$0xf]
      %v5802 = vld [vmem:[#allocation4 + $0x50] sm:$0xf]
      %v5803 = vld [vmem:[#allocation4 + $0x54] sm:$0xf]
      %v5804 = vld [vmem:[#allocation4 + $0x58] sm:$0xf]
      %v5805 = vld [vmem:[#allocation4 + $0x5c] sm:$0xf]
      %v5806 = vld [vmem:[#allocation4 + $0x60] sm:$0xf]
      %v5807 = vld [vmem:[#allocation4 + $0x64] sm:$0xf]
      %v5808 = vld [vmem:[#allocation4 + $0x68] sm:$0xf]
      %v5809 = vld [vmem:[#allocation4 + $0x6c] sm:$0xf]
      %v5810 = vld [vmem:[#allocation4 + $0x70] sm:$0xf]
      %v5811 = vld [vmem:[#allocation4 + $0x74] sm:$0xf]
      %v5812 = vld [vmem:[#allocation4 + $0x78] sm:$0xf]
      %v5813 = vld [vmem:[#allocation4 + $0x7c] sm:$0xf]
      %v5814 = vld [vmem:[%s3] sm:$0xf]
      %v5815 = vld [vmem:[%s3 + $0x4] sm:$0xf]
      %v5816 = vld [vmem:[%s3 + $0x8] sm:$0xf]
      %v5817 = vld [vmem:[%s3 + $0xc] sm:$0xf]
      %v5818 = vld [vmem:[%s3 + $0x10] sm:$0x3]
      %v5851 = vunpack.c.l.b16 %v5782
      %v5852 = vunpack.c.l.b16 %v5783
      %v5853 = vunpack.c.l.b16 %v5784
      %v5854 = vunpack.c.l.b16 %v5785
      %v5855 = vunpack.c.l.b16 %v5786
      %v5856 = vunpack.c.l.b16 %v5787
      %v5857 = vunpack.c.l.b16 %v5788
      %v5858 = vunpack.c.l.b16 %v5789
      %v5859 = vunpack.c.l.b16 %v5790
      %v5860 = vunpack.c.l.b16 %v5791
      %v5861 = vunpack.c.l.b16 %v5792
      %v5862 = vunpack.c.l.b16 %v5793
      %v5863 = vunpack.c.l.b16 %v5794
      %v5864 = vunpack.c.l.b16 %v5795
      %v5865 = vunpack.c.l.b16 %v5796
      %v5866 = vunpack.c.l.b16 %v5797
      %v5867 = vunpack.c.l.b16 %v5798
      %v5868 = vunpack.c.l.b16 %v5799
      %v5869 = vunpack.c.l.b16 %v5800
      %v5870 = vunpack.c.l.b16 %v5801
      %v5871 = vunpack.c.l.b16 %v5802
      %v5872 = vunpack.c.l.b16 %v5803
      %v5873 = vunpack.c.l.b16 %v5804
      %v5874 = vunpack.c.l.b16 %v5805
      %v5875 = vunpack.c.l.b16 %v5806
      %v5876 = vunpack.c.l.b16 %v5807
      %v5877 = vunpack.c.l.b16 %v5808
      %v5878 = vunpack.c.l.b16 %v5809
      %v5879 = vunpack.c.l.b16 %v5810
      %v5880 = vunpack.c.l.b16 %v5811
      %v5881 = vunpack.c.l.b16 %v5812
      %v5882 = vunpack.c.l.b16 %v5813
      %v5883 = vpack.c.b16 %v5852, %v5851
      %v5884 = vpack.c.b16 %v5854, %v5853
      %v5885 = vpack.c.b16 %v5856, %v5855
      %v5886 = vpack.c.b16 %v5858, %v5857
      %v5887 = vpack.c.b16 %v5860, %v5859
      %v5888 = vpack.c.b16 %v5862, %v5861
      %v5889 = vpack.c.b16 %v5864, %v5863
      %v5890 = vpack.c.b16 %v5866, %v5865
      %v5891 = vpack.c.b16 %v5868, %v5867
      %v5892 = vpack.c.b16 %v5870, %v5869
      %v5893 = vpack.c.b16 %v5872, %v5871
      %v5894 = vpack.c.b16 %v5874, %v5873
      %v5895 = vpack.c.b16 %v5876, %v5875
      %v5896 = vpack.c.b16 %v5878, %v5877
      %v5897 = vpack.c.b16 %v5880, %v5879
      %v5898 = vpack.c.b16 %v5882, %v5881
      %v5904 = vunpack.c.l.b16 %v5814
      %v5905 = vunpack.c.l.b16 %v5815
      %v5906 = vunpack.c.l.b16 %v5816
      %v5907 = vunpack.c.l.b16 %v5817
      %v5908 = vunpack.c.l.b16 %v5818
      %v5909 = vpack.c.b16 %v5905, %v5904
      %v5910 = vpack.c.b16 %v5907, %v5906
      %v5911 = vpack.c.b16 %v5908, %v5908
      %vm5914 = vcmask 293888
      %v5916 = vsel %vm5914, %v5883, 0
      %v5919 = vsel %vm5914, %v5884, 0
      %v5922 = vsel %vm5914, %v5885, 0
      %v5925 = vsel %vm5914, %v5886, 0
      %v5928 = vsel %vm5914, %v5887, 0
      %v5931 = vsel %vm5914, %v5888, 0
      %v5934 = vsel %vm5914, %v5889, 0
      %v5937 = vsel %vm5914, %v5890, 0
      %v5940 = vsel %vm5914, %v5891, 0
      %v5943 = vsel %vm5914, %v5892, 0
      %v5946 = vsel %vm5914, %v5893, 0
      %v5949 = vsel %vm5914, %v5894, 0
      %v5952 = vsel %vm5914, %v5895, 0
      %v5955 = vsel %vm5914, %v5896, 0
      %v5958 = vsel %vm5914, %v5897, 0
      %v5961 = vsel %vm5914, %v5898, 0
      %v5964 = vsel %vm998, %v5911, 0
      %5966 = vmatprep.subr.bf16.mxu0 0
      %5967 = vmatpush1.bf16.msra.mxu0 0
      %5968 = vmatprep.subr.bf16.mxu0 0
      %5969 = vmatpush1.bf16.msra.mxu0 0
      %5970 = vmatprep.subr.bf16.mxu0 0
      %5971 = vmatpush1.bf16.msra.mxu0 0
      %5972 = vmatprep.subr.bf16.mxu0 0
      %5973 = vmatpush1.bf16.msra.mxu0 0
      %5974 = vmatprep.subr.bf16.mxu0 0
      %5975 = vmatpush1.bf16.msra.mxu0 0
      %5976 = vmatprep.subr.bf16.mxu0 0
      %5977 = vmatpush1.bf16.msra.mxu0 %v5964
      %5978 = vmatprep.subr.bf16.mxu0 0
      %5979 = vmatpush1.bf16.msra.mxu0 %v5910
      %5980 = vmatprep.subr.bf16.mxu0 0
      %5981 = vmatpush1.bf16.msra.mxu0 %v5909
      %5982 = vmatprep.subr.bf16.mxu0 0
      %5983 = vmatpush2.bf16.msra.mxu0 0
      %5984 = vmatprep.subr.bf16.mxu0 0
      %5985 = vmatpush2.bf16.msra.mxu0 0
      %5986 = vmatprep.subr.bf16.mxu0 0
      %5987 = vmatpush2.bf16.msra.mxu0 0
      %5988 = vmatprep.subr.bf16.mxu0 0
      %5989 = vmatpush2.bf16.msra.mxu0 0
      %5990 = vmatprep.subr.bf16.mxu0 0
      %5991 = vmatpush2.bf16.msra.mxu0 0
      %5992 = vmatprep.subr.bf16.mxu0 0
      %5993 = vmatpush2.bf16.msra.mxu0 0
      %5994 = vmatprep.subr.bf16.mxu0 0
      %5995 = vmatpush2.bf16.msra.mxu0 0
      %5996 = vmatprep.subr.bf16.mxu0 0
      %5997 = vmatpush2.bf16.msra.mxu0 0
      %5998 = vmatprep.mubr.bf16.mxu0 0
      %5999 = vmatmul.mubr.bf16.gmra.mxu0 %v5916
      %v6000 = vpop.f32.mrf.mxu0
      %v6001 = vadd.f32 0.0, %v6000
      %v6002 = vpop.f32.mrf.mxu0
      %v6003 = vpop.f32.mrf.mxu0
      %v6004 = vadd.f32 0.0, %v6003
      %v6005 = vpop.f32.mrf.mxu0
      %6006 = vmatprep.mubr.bf16.mxu0 0
      %6007 = vmatmul.mubr.bf16.gmra.mxu0 %v5919
      %v6008 = vpop.f32.mrf.mxu0
      %v6009 = vadd.f32 0.0, %v6008
      %v6010 = vpop.f32.mrf.mxu0
      %v6011 = vpop.f32.mrf.mxu0
      %v6012 = vadd.f32 0.0, %v6011
      %v6013 = vpop.f32.mrf.mxu0
      %6014 = vmatprep.mubr.bf16.mxu0 0
      %6015 = vmatmul.mubr.bf16.gmra.mxu0 %v5922
      %v6016 = vpop.f32.mrf.mxu0
      %v6017 = vadd.f32 0.0, %v6016
      %v6018 = vpop.f32.mrf.mxu0
      %v6019 = vpop.f32.mrf.mxu0
      %v6020 = vadd.f32 0.0, %v6019
      %v6021 = vpop.f32.mrf.mxu0
      %6022 = vmatprep.mubr.bf16.mxu0 0
      %6023 = vmatmul.mubr.bf16.gmra.mxu0 %v5925
      %v6024 = vpop.f32.mrf.mxu0
      %v6025 = vadd.f32 0.0, %v6024
      %v6026 = vpop.f32.mrf.mxu0
      %v6027 = vpop.f32.mrf.mxu0
      %v6028 = vadd.f32 0.0, %v6027
      %v6029 = vpop.f32.mrf.mxu0
      %6030 = vmatprep.mubr.bf16.mxu0 0
      %6031 = vmatmul.mubr.bf16.gmra.mxu0 %v5928
      %v6032 = vpop.f32.mrf.mxu0
      %v6033 = vadd.f32 0.0, %v6032
      %v6034 = vpop.f32.mrf.mxu0
      %v6035 = vpop.f32.mrf.mxu0
      %v6036 = vadd.f32 0.0, %v6035
      %v6037 = vpop.f32.mrf.mxu0
      %6038 = vmatprep.mubr.bf16.mxu0 0
      %6039 = vmatmul.mubr.bf16.gmra.mxu0 %v5931
      %v6040 = vpop.f32.mrf.mxu0
      %v6041 = vadd.f32 0.0, %v6040
      %v6042 = vpop.f32.mrf.mxu0
      %v6043 = vpop.f32.mrf.mxu0
      %v6044 = vadd.f32 0.0, %v6043
      %v6045 = vpop.f32.mrf.mxu0
      %6046 = vmatprep.mubr.bf16.mxu0 0
      %6047 = vmatmul.mubr.bf16.gmra.mxu0 %v5934
      %v6048 = vpop.f32.mrf.mxu0
      %v6049 = vadd.f32 0.0, %v6048
      %v6050 = vpop.f32.mrf.mxu0
      %v6051 = vpop.f32.mrf.mxu0
      %v6052 = vadd.f32 0.0, %v6051
      %v6053 = vpop.f32.mrf.mxu0
      %6054 = vmatprep.mubr.bf16.mxu0 0
      %6055 = vmatmul.mubr.bf16.gmra.mxu0 %v5937
      %v6056 = vpop.f32.mrf.mxu0
      %v6057 = vadd.f32 0.0, %v6056
      %v6058 = vpop.f32.mrf.mxu0
      %v6059 = vpop.f32.mrf.mxu0
      %v6060 = vadd.f32 0.0, %v6059
      %v6061 = vpop.f32.mrf.mxu0
      %6062 = vmatprep.mubr.bf16.mxu0 0
      %6063 = vmatmul.mubr.bf16.gmra.mxu0 %v5940
      %v6064 = vpop.f32.mrf.mxu0
      %v6065 = vadd.f32 0.0, %v6064
      %v6066 = vpop.f32.mrf.mxu0
      %v6067 = vpop.f32.mrf.mxu0
      %v6068 = vadd.f32 0.0, %v6067
      %v6069 = vpop.f32.mrf.mxu0
      %6070 = vmatprep.mubr.bf16.mxu0 0
      %6071 = vmatmul.mubr.bf16.gmra.mxu0 %v5943
      %v6072 = vpop.f32.mrf.mxu0
      %v6073 = vadd.f32 0.0, %v6072
      %v6074 = vpop.f32.mrf.mxu0
      %v6075 = vpop.f32.mrf.mxu0
      %v6076 = vadd.f32 0.0, %v6075
      %v6077 = vpop.f32.mrf.mxu0
      %6078 = vmatprep.mubr.bf16.mxu0 0
      %6079 = vmatmul.mubr.bf16.gmra.mxu0 %v5946
      %v6080 = vpop.f32.mrf.mxu0
      %v6081 = vadd.f32 0.0, %v6080
      %v6082 = vpop.f32.mrf.mxu0
      %v6083 = vpop.f32.mrf.mxu0
      %v6084 = vadd.f32 0.0, %v6083
      %v6085 = vpop.f32.mrf.mxu0
      %6086 = vmatprep.mubr.bf16.mxu0 0
      %6087 = vmatmul.mubr.bf16.gmra.mxu0 %v5949
      %v6088 = vpop.f32.mrf.mxu0
      %v6089 = vadd.f32 0.0, %v6088
      %v6090 = vpop.f32.mrf.mxu0
      %v6091 = vpop.f32.mrf.mxu0
      %v6092 = vadd.f32 0.0, %v6091
      %v6093 = vpop.f32.mrf.mxu0
      %6094 = vmatprep.mubr.bf16.mxu0 0
      %6095 = vmatmul.mubr.bf16.gmra.mxu0 %v5952
      %v6096 = vpop.f32.mrf.mxu0
      %v6097 = vadd.f32 0.0, %v6096
      %v6098 = vpop.f32.mrf.mxu0
      %v6099 = vpop.f32.mrf.mxu0
      %v6100 = vadd.f32 0.0, %v6099
      %v6101 = vpop.f32.mrf.mxu0
      %6102 = vmatprep.mubr.bf16.mxu0 0
      %6103 = vmatmul.mubr.bf16.gmra.mxu0 %v5955
      %v6104 = vpop.f32.mrf.mxu0
      %v6105 = vadd.f32 0.0, %v6104
      %v6106 = vpop.f32.mrf.mxu0
      %v6107 = vpop.f32.mrf.mxu0
      %v6108 = vadd.f32 0.0, %v6107
      %v6109 = vpop.f32.mrf.mxu0
      %6110 = vmatprep.mubr.bf16.mxu0 0
      %6111 = vmatmul.mubr.bf16.gmra.mxu0 %v5958
      %v6112 = vpop.f32.mrf.mxu0
      %v6113 = vadd.f32 0.0, %v6112
      %v6114 = vpop.f32.mrf.mxu0
      %v6115 = vpop.f32.mrf.mxu0
      %v6116 = vadd.f32 0.0, %v6115
      %v6117 = vpop.f32.mrf.mxu0
      %6118 = vmatprep.mubr.bf16.mxu0 0
      %6119 = vmatmul.mubr.bf16.gmra.mxu0 %v5961
      %v6120 = vpop.f32.mrf.mxu0
      %v6121 = vadd.f32 0.0, %v6120
      %v6122 = vpop.f32.mrf.mxu0
      %v6123 = vpop.f32.mrf.mxu0
      %v6124 = vadd.f32 0.0, %v6123
      %v6125 = vpop.f32.mrf.mxu0
      %6126 = vdwg.mxu0
      %v6127 = vld [vmem:[%s4] sm:$0x1]
      %v6129 = vlaneseq
      %v6130 = vshrl.u32 %v6129, 7
      %v6131 = vsub.s32 0, %v6130
      %v6132 = vrot.slane %v6127, %v6131
      %v6134 = vmul.f32 %v6001, %v6132
      %v6135 = vmul.f32 %v6004, %v6132
      %v6136 = vmul.f32 %v6009, %v6132
      %v6137 = vmul.f32 %v6012, %v6132
      %v6138 = vmul.f32 %v6017, %v6132
      %v6139 = vmul.f32 %v6020, %v6132
      %v6140 = vmul.f32 %v6025, %v6132
      %v6141 = vmul.f32 %v6028, %v6132
      %v6142 = vmul.f32 %v6033, %v6132
      %v6143 = vmul.f32 %v6036, %v6132
      %v6144 = vmul.f32 %v6041, %v6132
      %v6145 = vmul.f32 %v6044, %v6132
      %v6146 = vmul.f32 %v6049, %v6132
      %v6147 = vmul.f32 %v6052, %v6132
      %v6148 = vmul.f32 %v6057, %v6132
      %v6149 = vmul.f32 %v6060, %v6132
      %v6150 = vmul.f32 %v6065, %v6132
      %v6151 = vmul.f32 %v6068, %v6132
      %v6152 = vmul.f32 %v6073, %v6132
      %v6153 = vmul.f32 %v6076, %v6132
      %v6154 = vmul.f32 %v6081, %v6132
      %v6155 = vmul.f32 %v6084, %v6132
      %v6156 = vmul.f32 %v6089, %v6132
      %v6157 = vmul.f32 %v6092, %v6132
      %v6158 = vmul.f32 %v6097, %v6132
      %v6159 = vmul.f32 %v6100, %v6132
      %v6160 = vmul.f32 %v6105, %v6132
      %v6161 = vmul.f32 %v6108, %v6132
      %v6162 = vmul.f32 %v6113, %v6132
      %v6163 = vmul.f32 %v6116, %v6132
      %v6164 = vmul.f32 %v6121, %v6132
      %v6165 = vmul.f32 %v6124, %v6132
      %v6166 = vld [vmem:[%s5] sm:$0x1]
      %v6168 = vlaneseq
      %v6169 = vshrl.u32 %v6168, 7
      %v6170 = vsub.s32 0, %v6169
      %v6171 = vrot.slane %v6166, %v6170
      %v6173 = vadd.f32 %v6134, %v6171
      %v6174 = vadd.f32 %v6135, %v6171
      %v6175 = vadd.f32 %v6136, %v6171
      %v6176 = vadd.f32 %v6137, %v6171
      %v6177 = vadd.f32 %v6138, %v6171
      %v6178 = vadd.f32 %v6139, %v6171
      %v6179 = vadd.f32 %v6140, %v6171
      %v6180 = vadd.f32 %v6141, %v6171
      %v6181 = vadd.f32 %v6142, %v6171
      %v6182 = vadd.f32 %v6143, %v6171
      %v6183 = vadd.f32 %v6144, %v6171
      %v6184 = vadd.f32 %v6145, %v6171
      %v6185 = vadd.f32 %v6146, %v6171
      %v6186 = vadd.f32 %v6147, %v6171
      %v6187 = vadd.f32 %v6148, %v6171
      %v6188 = vadd.f32 %v6149, %v6171
      %v6189 = vadd.f32 %v6150, %v6171
      %v6190 = vadd.f32 %v6151, %v6171
      %v6191 = vadd.f32 %v6152, %v6171
      %v6192 = vadd.f32 %v6153, %v6171
      %v6193 = vadd.f32 %v6154, %v6171
      %v6194 = vadd.f32 %v6155, %v6171
      %v6195 = vadd.f32 %v6156, %v6171
      %v6196 = vadd.f32 %v6157, %v6171
      %v6197 = vadd.f32 %v6158, %v6171
      %v6198 = vadd.f32 %v6159, %v6171
      %v6199 = vadd.f32 %v6160, %v6171
      %v6200 = vadd.f32 %v6161, %v6171
      %v6201 = vadd.f32 %v6162, %v6171
      %v6202 = vadd.f32 %v6163, %v6171
      %v6203 = vadd.f32 %v6164, %v6171
      %v6204 = vadd.f32 %v6165, %v6171
      %v6205 = vmax.f32 %v6173, 0.0
      %v6206 = vmax.f32 %v6174, 0.0
      %v6207 = vmax.f32 %v6175, 0.0
      %v6208 = vmax.f32 %v6176, 0.0
      %v6209 = vmax.f32 %v6177, 0.0
      %v6210 = vmax.f32 %v6178, 0.0
      %v6211 = vmax.f32 %v6179, 0.0
      %v6212 = vmax.f32 %v6180, 0.0
      %v6213 = vmax.f32 %v6181, 0.0
      %v6214 = vmax.f32 %v6182, 0.0
      %v6215 = vmax.f32 %v6183, 0.0
      %v6216 = vmax.f32 %v6184, 0.0
      %v6217 = vmax.f32 %v6185, 0.0
      %v6218 = vmax.f32 %v6186, 0.0
      %v6219 = vmax.f32 %v6187, 0.0
      %v6220 = vmax.f32 %v6188, 0.0
      %v6221 = vmax.f32 %v6189, 0.0
      %v6222 = vmax.f32 %v6190, 0.0
      %v6223 = vmax.f32 %v6191, 0.0
      %v6224 = vmax.f32 %v6192, 0.0
      %v6225 = vmax.f32 %v6193, 0.0
      %v6226 = vmax.f32 %v6194, 0.0
      %v6227 = vmax.f32 %v6195, 0.0
      %v6228 = vmax.f32 %v6196, 0.0
      %v6229 = vmax.f32 %v6197, 0.0
      %v6230 = vmax.f32 %v6198, 0.0
      %v6231 = vmax.f32 %v6199, 0.0
      %v6232 = vmax.f32 %v6200, 0.0
      %v6233 = vmax.f32 %v6201, 0.0
      %v6234 = vmax.f32 %v6202, 0.0
      %v6235 = vmax.f32 %v6203, 0.0
      %v6236 = vmax.f32 %v6204, 0.0
      %v6237 = vpack.c.bf16 %v6206, %v6205
      %v6238 = vpack.c.bf16 %v6208, %v6207
      %v6239 = vpack.c.bf16 %v6210, %v6209
      %v6240 = vpack.c.bf16 %v6212, %v6211
      %v6241 = vpack.c.bf16 %v6214, %v6213
      %v6242 = vpack.c.bf16 %v6216, %v6215
      %v6243 = vpack.c.bf16 %v6218, %v6217
      %v6244 = vpack.c.bf16 %v6220, %v6219
      %v6245 = vpack.c.bf16 %v6222, %v6221
      %v6246 = vpack.c.bf16 %v6224, %v6223
      %v6247 = vpack.c.bf16 %v6226, %v6225
      %v6248 = vpack.c.bf16 %v6228, %v6227
      %v6249 = vpack.c.bf16 %v6230, %v6229
      %v6250 = vpack.c.bf16 %v6232, %v6231
      %v6251 = vpack.c.bf16 %v6234, %v6233
      %v6252 = vpack.c.bf16 %v6236, %v6235
      %vm6253 = vcmask 60416
      %6254 = vst.msk [vmem:[#allocation3] sm:$0xf] %vm6253, 0
      %6255 = vst.msk [vmem:[#allocation3 + $0x4] sm:$0xf] %vm6253, 0
      %6256 = vst.msk [vmem:[#allocation3 + $0x8] sm:$0xf] %vm6253, 0
      %6257 = vst.msk [vmem:[#allocation3 + $0xc] sm:$0xf] %vm6253, 0
      %6258 = vst.msk [vmem:[#allocation3 + $0x90] sm:$0xf] %vm6253, 0
      %6259 = vst.msk [vmem:[#allocation3 + $0x94] sm:$0xf] %vm6253, 0
      %6260 = vst.msk [vmem:[#allocation3 + $0x98] sm:$0xf] %vm6253, 0
      %6261 = vst.msk [vmem:[#allocation3 + $0x9c] sm:$0xf] %vm6253, 0
      %v6278 = vunpack.c.l.b16 %v6237
      %v6279 = vunpack.c.h.b16 %v6237
      %v6280 = vunpack.c.l.b16 %v6238
      %v6281 = vunpack.c.h.b16 %v6238
      %v6282 = vunpack.c.l.b16 %v6239
      %v6283 = vunpack.c.h.b16 %v6239
      %v6284 = vunpack.c.l.b16 %v6240
      %v6285 = vunpack.c.h.b16 %v6240
      %v6286 = vunpack.c.l.b16 %v6241
      %v6287 = vunpack.c.h.b16 %v6241
      %v6288 = vunpack.c.l.b16 %v6242
      %v6289 = vunpack.c.h.b16 %v6242
      %v6290 = vunpack.c.l.b16 %v6243
      %v6291 = vunpack.c.h.b16 %v6243
      %v6292 = vunpack.c.l.b16 %v6244
      %v6293 = vunpack.c.h.b16 %v6244
      %v6294 = vunpack.c.l.b16 %v6245
      %v6295 = vunpack.c.h.b16 %v6245
      %v6296 = vunpack.c.l.b16 %v6246
      %v6297 = vunpack.c.h.b16 %v6246
      %v6298 = vunpack.c.l.b16 %v6247
      %v6299 = vunpack.c.h.b16 %v6247
      %v6300 = vunpack.c.l.b16 %v6248
      %v6301 = vunpack.c.h.b16 %v6248
      %v6302 = vunpack.c.l.b16 %v6249
      %v6303 = vunpack.c.h.b16 %v6249
      %v6304 = vunpack.c.l.b16 %v6250
      %v6305 = vunpack.c.h.b16 %v6250
      %v6306 = vunpack.c.l.b16 %v6251
      %v6307 = vunpack.c.h.b16 %v6251
      %v6308 = vunpack.c.l.b16 %v6252
      %v6309 = vunpack.c.h.b16 %v6252
      %v6310 = vpack.c.b16 %v6278, %v6278
      %v6311 = vpack.c.b16 %v6279, %v6279
      %v6312 = vpack.c.b16 %v6280, %v6280
      %v6313 = vpack.c.b16 %v6281, %v6281
      %v6314 = vpack.c.b16 %v6282, %v6282
      %v6315 = vpack.c.b16 %v6283, %v6283
      %v6316 = vpack.c.b16 %v6284, %v6284
      %v6317 = vpack.c.b16 %v6285, %v6285
      %v6318 = vpack.c.b16 %v6286, %v6286
      %v6319 = vpack.c.b16 %v6287, %v6287
      %v6320 = vpack.c.b16 %v6288, %v6288
      %v6321 = vpack.c.b16 %v6289, %v6289
      %v6322 = vpack.c.b16 %v6290, %v6290
      %v6323 = vpack.c.b16 %v6291, %v6291
      %v6324 = vpack.c.b16 %v6292, %v6292
      %v6325 = vpack.c.b16 %v6293, %v6293
      %v6326 = vpack.c.b16 %v6294, %v6294
      %v6327 = vpack.c.b16 %v6295, %v6295
      %v6328 = vpack.c.b16 %v6296, %v6296
      %v6329 = vpack.c.b16 %v6297, %v6297
      %v6330 = vpack.c.b16 %v6298, %v6298
      %v6331 = vpack.c.b16 %v6299, %v6299
      %v6332 = vpack.c.b16 %v6300, %v6300
      %v6333 = vpack.c.b16 %v6301, %v6301
      %v6334 = vpack.c.b16 %v6302, %v6302
      %v6335 = vpack.c.b16 %v6303, %v6303
      %v6336 = vpack.c.b16 %v6304, %v6304
      %v6337 = vpack.c.b16 %v6305, %v6305
      %v6338 = vpack.c.b16 %v6306, %v6306
      %v6339 = vpack.c.b16 %v6307, %v6307
      %v6340 = vpack.c.b16 %v6308, %v6308
      %v6341 = vpack.c.b16 %v6309, %v6309
      %6374 = vst.msk [vmem:[#allocation3 + $0x10] sm:$0xf] %vm6253, %v6310
      %6375 = vst.msk [vmem:[#allocation3 + $0x14] sm:$0xf] %vm6253, %v6311
      %6376 = vst.msk [vmem:[#allocation3 + $0x18] sm:$0xf] %vm6253, %v6312
      %6377 = vst.msk [vmem:[#allocation3 + $0x1c] sm:$0xf] %vm6253, %v6313
      %6378 = vst.msk [vmem:[#allocation3 + $0x20] sm:$0xf] %vm6253, %v6314
      %6379 = vst.msk [vmem:[#allocation3 + $0x24] sm:$0xf] %vm6253, %v6315
      %6380 = vst.msk [vmem:[#allocation3 + $0x28] sm:$0xf] %vm6253, %v6316
      %6381 = vst.msk [vmem:[#allocation3 + $0x2c] sm:$0xf] %vm6253, %v6317
      %6382 = vst.msk [vmem:[#allocation3 + $0x30] sm:$0xf] %vm6253, %v6318
      %6383 = vst.msk [vmem:[#allocation3 + $0x34] sm:$0xf] %vm6253, %v6319
      %6384 = vst.msk [vmem:[#allocation3 + $0x38] sm:$0xf] %vm6253, %v6320
      %6385 = vst.msk [vmem:[#allocation3 + $0x3c] sm:$0xf] %vm6253, %v6321
      %6386 = vst.msk [vmem:[#allocation3 + $0x40] sm:$0xf] %vm6253, %v6322
      %6387 = vst.msk [vmem:[#allocation3 + $0x44] sm:$0xf] %vm6253, %v6323
      %6388 = vst.msk [vmem:[#allocation3 + $0x48] sm:$0xf] %vm6253, %v6324
      %6389 = vst.msk [vmem:[#allocation3 + $0x4c] sm:$0xf] %vm6253, %v6325
      %6390 = vst.msk [vmem:[#allocation3 + $0x50] sm:$0xf] %vm6253, %v6326
      %6391 = vst.msk [vmem:[#allocation3 + $0x54] sm:$0xf] %vm6253, %v6327
      %6392 = vst.msk [vmem:[#allocation3 + $0x58] sm:$0xf] %vm6253, %v6328
      %6393 = vst.msk [vmem:[#allocation3 + $0x5c] sm:$0xf] %vm6253, %v6329
      %6394 = vst.msk [vmem:[#allocation3 + $0x60] sm:$0xf] %vm6253, %v6330
      %6395 = vst.msk [vmem:[#allocation3 + $0x64] sm:$0xf] %vm6253, %v6331
      %6396 = vst.msk [vmem:[#allocation3 + $0x68] sm:$0xf] %vm6253, %v6332
      %6397 = vst.msk [vmem:[#allocation3 + $0x6c] sm:$0xf] %vm6253, %v6333
      %6398 = vst.msk [vmem:[#allocation3 + $0x70] sm:$0xf] %vm6253, %v6334
      %6399 = vst.msk [vmem:[#allocation3 + $0x74] sm:$0xf] %vm6253, %v6335
      %6400 = vst.msk [vmem:[#allocation3 + $0x78] sm:$0xf] %vm6253, %v6336
      %6401 = vst.msk [vmem:[#allocation3 + $0x7c] sm:$0xf] %vm6253, %v6337
      %6402 = vst.msk [vmem:[#allocation3 + $0x80] sm:$0xf] %vm6253, %v6338
      %6403 = vst.msk [vmem:[#allocation3 + $0x84] sm:$0xf] %vm6253, %v6339
      %6404 = vst.msk [vmem:[#allocation3 + $0x88] sm:$0xf] %vm6253, %v6340
      %6405 = vst.msk [vmem:[#allocation3 + $0x8c] sm:$0xf] %vm6253, %v6341
      %v6406 = vld [vmem:[#allocation3 + $0x4] sm:$0x8]
      %v6407 = vld [vmem:[#allocation3 + $0x8] sm:$0xf]
      %v6408 = vld [vmem:[#allocation3 + $0xc] sm:$0xf]
      %v6409 = vld [vmem:[#allocation3 + $0x10] sm:$0xf]
      %v6410 = vld [vmem:[#allocation3 + $0x14] sm:$0xf]
      %v6411 = vld [vmem:[#allocation3 + $0x18] sm:$0xf]
      %v6412 = vld [vmem:[#allocation3 + $0x1c] sm:$0xf]
      %v6413 = vld [vmem:[#allocation3 + $0x20] sm:$0xf]
      %v6414 = vld [vmem:[#allocation3 + $0x24] sm:$0xf]
      %v6415 = vld [vmem:[#allocation3 + $0x28] sm:$0xf]
      %v6416 = vld [vmem:[#allocation3 + $0x2c] sm:$0xf]
      %v6417 = vld [vmem:[#allocation3 + $0x30] sm:$0xf]
      %v6418 = vld [vmem:[#allocation3 + $0x34] sm:$0xf]
      %v6419 = vld [vmem:[#allocation3 + $0x38] sm:$0xf]
      %v6420 = vld [vmem:[#allocation3 + $0x3c] sm:$0xf]
      %v6421 = vld [vmem:[#allocation3 + $0x40] sm:$0xf]
      %v6422 = vld [vmem:[#allocation3 + $0x44] sm:$0xf]
      %v6423 = vld [vmem:[#allocation3 + $0x48] sm:$0xf]
      %v6424 = vld [vmem:[#allocation3 + $0x4c] sm:$0xf]
      %v6425 = vld [vmem:[#allocation3 + $0x50] sm:$0xf]
      %v6426 = vld [vmem:[#allocation3 + $0x54] sm:$0xf]
      %v6427 = vld [vmem:[#allocation3 + $0x58] sm:$0xf]
      %v6428 = vld [vmem:[#allocation3 + $0x5c] sm:$0xf]
      %v6429 = vld [vmem:[#allocation3 + $0x60] sm:$0xf]
      %v6430 = vld [vmem:[#allocation3 + $0x64] sm:$0xf]
      %v6431 = vld [vmem:[#allocation3 + $0x68] sm:$0xf]
      %v6432 = vld [vmem:[#allocation3 + $0x6c] sm:$0xf]
      %v6433 = vld [vmem:[#allocation3 + $0x70] sm:$0xf]
      %v6434 = vld [vmem:[#allocation3 + $0x74] sm:$0xf]
      %v6435 = vld [vmem:[#allocation3 + $0x78] sm:$0xf]
      %v6436 = vld [vmem:[#allocation3 + $0x7c] sm:$0xf]
      %v6437 = vld [vmem:[#allocation3 + $0x80] sm:$0xf]
      %v6438 = vld [vmem:[#allocation3 + $0x84] sm:$0xf]
      %v6439 = vsel %vm1863, %v6406, 0
      %v6440 = vsel %vm1864, %v6407, 0
      %v6441 = vsel %vm1865, %v6408, 0
      %v6442 = vsel %vm1866, %v6409, 0
      %v6443 = vsel %vm1867, %v6410, 0
      %v6444 = vsel %vm1868, %v6411, 0
      %v6445 = vsel %vm1869, %v6412, 0
      %v6446 = vsel %vm1870, %v6413, 0
      %v6447 = vsel %vm1871, %v6414, 0
      %v6448 = vsel %vm1872, %v6415, 0
      %v6449 = vsel %vm1873, %v6416, 0
      %v6450 = vsel %vm1874, %v6417, 0
      %v6451 = vsel %vm1875, %v6418, 0
      %v6452 = vsel %vm1876, %v6419, 0
      %v6453 = vsel %vm1877, %v6420, 0
      %v6454 = vsel %vm1878, %v6421, 0
      %v6455 = vsel %vm1879, %v6422, 0
      %v6456 = vsel %vm1880, %v6423, 0
      %v6457 = vsel %vm1881, %v6424, 0
      %v6458 = vsel %vm1882, %v6425, 0
      %v6459 = vsel %vm1883, %v6426, 0
      %v6460 = vsel %vm1884, %v6427, 0
      %v6461 = vsel %vm1885, %v6428, 0
      %v6462 = vsel %vm1886, %v6429, 0
      %v6463 = vsel %vm1887, %v6430, 0
      %v6464 = vsel %vm1888, %v6431, 0
      %v6465 = vsel %vm1889, %v6432, 0
      %v6466 = vsel %vm1890, %v6433, 0
      %v6467 = vsel %vm1891, %v6434, 0
      %v6468 = vsel %vm1892, %v6435, 0
      %v6469 = vsel %vm1893, %v6436, 0
      %v6470 = vsel %vm1894, %v6437, 0
      %v6471 = vsel %vm1895, %v6438, 0
      %v6473 = vshrl.u32 %v6439, 16
      %v6475 = vrot.slane %v6473, 7
      %v6476 = vrot.slane %v6475, 4
      %v6478 = vshrl.u32 %v6440, 16
      %v6480 = vrot.slane %v6478, 7
      %v6481 = vshll.u32 %v6440, 16
      %v6483 = vor.u32 %v6480, %v6481
      %v6484 = vsel %vm1931, %v6476, %v6483
      %v6485 = vrot.slane %v6480, 4
      %v6487 = vshrl.u32 %v6441, 16
      %v6489 = vrot.slane %v6487, 7
      %v6490 = vshll.u32 %v6441, 16
      %v6492 = vor.u32 %v6489, %v6490
      %v6493 = vsel %vm1931, %v6485, %v6492
      %v6494 = vrot.slane %v6489, 4
      %v6496 = vshrl.u32 %v6442, 16
      %v6498 = vrot.slane %v6496, 7
      %v6499 = vshll.u32 %v6442, 16
      %v6501 = vor.u32 %v6498, %v6499
      %v6502 = vsel %vm1931, %v6494, %v6501
      %v6503 = vrot.slane %v6498, 4
      %v6505 = vshrl.u32 %v6443, 16
      %v6507 = vrot.slane %v6505, 7
      %v6508 = vshll.u32 %v6443, 16
      %v6510 = vor.u32 %v6507, %v6508
      %v6511 = vsel %vm1931, %v6503, %v6510
      %v6512 = vrot.slane %v6507, 4
      %v6514 = vshrl.u32 %v6444, 16
      %v6516 = vrot.slane %v6514, 7
      %v6517 = vshll.u32 %v6444, 16
      %v6519 = vor.u32 %v6516, %v6517
      %v6520 = vsel %vm1931, %v6512, %v6519
      %v6521 = vrot.slane %v6516, 4
      %v6523 = vshrl.u32 %v6445, 16
      %v6525 = vrot.slane %v6523, 7
      %v6526 = vshll.u32 %v6445, 16
      %v6528 = vor.u32 %v6525, %v6526
      %v6529 = vsel %vm1931, %v6521, %v6528
      %v6530 = vrot.slane %v6525, 4
      %v6532 = vshrl.u32 %v6446, 16
      %v6534 = vrot.slane %v6532, 7
      %v6535 = vshll.u32 %v6446, 16
      %v6537 = vor.u32 %v6534, %v6535
      %v6538 = vsel %vm1931, %v6530, %v6537
      %v6539 = vrot.slane %v6534, 4
      %v6541 = vshrl.u32 %v6447, 16
      %v6543 = vrot.slane %v6541, 7
      %v6544 = vshll.u32 %v6447, 16
      %v6546 = vor.u32 %v6543, %v6544
      %v6547 = vsel %vm1931, %v6539, %v6546
      %v6548 = vrot.slane %v6543, 4
      %v6550 = vshrl.u32 %v6448, 16
      %v6552 = vrot.slane %v6550, 7
      %v6553 = vshll.u32 %v6448, 16
      %v6555 = vor.u32 %v6552, %v6553
      %v6556 = vsel %vm1931, %v6548, %v6555
      %v6557 = vrot.slane %v6552, 4
      %v6559 = vshrl.u32 %v6449, 16
      %v6561 = vrot.slane %v6559, 7
      %v6562 = vshll.u32 %v6449, 16
      %v6564 = vor.u32 %v6561, %v6562
      %v6565 = vsel %vm1931, %v6557, %v6564
      %v6566 = vrot.slane %v6561, 4
      %v6568 = vshrl.u32 %v6450, 16
      %v6570 = vrot.slane %v6568, 7
      %v6571 = vshll.u32 %v6450, 16
      %v6573 = vor.u32 %v6570, %v6571
      %v6574 = vsel %vm1931, %v6566, %v6573
      %v6575 = vrot.slane %v6570, 4
      %v6577 = vshrl.u32 %v6451, 16
      %v6579 = vrot.slane %v6577, 7
      %v6580 = vshll.u32 %v6451, 16
      %v6582 = vor.u32 %v6579, %v6580
      %v6583 = vsel %vm1931, %v6575, %v6582
      %v6584 = vrot.slane %v6579, 4
      %v6586 = vshrl.u32 %v6452, 16
      %v6588 = vrot.slane %v6586, 7
      %v6589 = vshll.u32 %v6452, 16
      %v6591 = vor.u32 %v6588, %v6589
      %v6592 = vsel %vm1931, %v6584, %v6591
      %v6593 = vrot.slane %v6588, 4
      %v6595 = vshrl.u32 %v6453, 16
      %v6597 = vrot.slane %v6595, 7
      %v6598 = vshll.u32 %v6453, 16
      %v6600 = vor.u32 %v6597, %v6598
      %v6601 = vsel %vm1931, %v6593, %v6600
      %v6602 = vrot.slane %v6597, 4
      %v6604 = vshrl.u32 %v6454, 16
      %v6606 = vrot.slane %v6604, 7
      %v6607 = vshll.u32 %v6454, 16
      %v6609 = vor.u32 %v6606, %v6607
      %v6610 = vsel %vm1931, %v6602, %v6609
      %v6611 = vrot.slane %v6606, 4
      %v6613 = vshrl.u32 %v6455, 16
      %v6615 = vrot.slane %v6613, 7
      %v6616 = vshll.u32 %v6455, 16
      %v6618 = vor.u32 %v6615, %v6616
      %v6619 = vsel %vm1931, %v6611, %v6618
      %v6620 = vrot.slane %v6615, 4
      %v6622 = vshrl.u32 %v6456, 16
      %v6624 = vrot.slane %v6622, 7
      %v6625 = vshll.u32 %v6456, 16
      %v6627 = vor.u32 %v6624, %v6625
      %v6628 = vsel %vm1931, %v6620, %v6627
      %v6629 = vrot.slane %v6624, 4
      %v6631 = vshrl.u32 %v6457, 16
      %v6633 = vrot.slane %v6631, 7
      %v6634 = vshll.u32 %v6457, 16
      %v6636 = vor.u32 %v6633, %v6634
      %v6637 = vsel %vm1931, %v6629, %v6636
      %v6638 = vrot.slane %v6633, 4
      %v6640 = vshrl.u32 %v6458, 16
      %v6642 = vrot.slane %v6640, 7
      %v6643 = vshll.u32 %v6458, 16
      %v6645 = vor.u32 %v6642, %v6643
      %v6646 = vsel %vm1931, %v6638, %v6645
      %v6647 = vrot.slane %v6642, 4
      %v6649 = vshrl.u32 %v6459, 16
      %v6651 = vrot.slane %v6649, 7
      %v6652 = vshll.u32 %v6459, 16
      %v6654 = vor.u32 %v6651, %v6652
      %v6655 = vsel %vm1931, %v6647, %v6654
      %v6656 = vrot.slane %v6651, 4
      %v6658 = vshrl.u32 %v6460, 16
      %v6660 = vrot.slane %v6658, 7
      %v6661 = vshll.u32 %v6460, 16
      %v6663 = vor.u32 %v6660, %v6661
      %v6664 = vsel %vm1931, %v6656, %v6663
      %v6665 = vrot.slane %v6660, 4
      %v6667 = vshrl.u32 %v6461, 16
      %v6669 = vrot.slane %v6667, 7
      %v6670 = vshll.u32 %v6461, 16
      %v6672 = vor.u32 %v6669, %v6670
      %v6673 = vsel %vm1931, %v6665, %v6672
      %v6674 = vrot.slane %v6669, 4
      %v6676 = vshrl.u32 %v6462, 16
      %v6678 = vrot.slane %v6676, 7
      %v6679 = vshll.u32 %v6462, 16
      %v6681 = vor.u32 %v6678, %v6679
      %v6682 = vsel %vm1931, %v6674, %v6681
      %v6683 = vrot.slane %v6678, 4
      %v6685 = vshrl.u32 %v6463, 16
      %v6687 = vrot.slane %v6685, 7
      %v6688 = vshll.u32 %v6463, 16
      %v6690 = vor.u32 %v6687, %v6688
      %v6691 = vsel %vm1931, %v6683, %v6690
      %v6692 = vrot.slane %v6687, 4
      %v6694 = vshrl.u32 %v6464, 16
      %v6696 = vrot.slane %v6694, 7
      %v6697 = vshll.u32 %v6464, 16
      %v6699 = vor.u32 %v6696, %v6697
      %v6700 = vsel %vm1931, %v6692, %v6699
      %v6701 = vrot.slane %v6696, 4
      %v6703 = vshrl.u32 %v6465, 16
      %v6705 = vrot.slane %v6703, 7
      %v6706 = vshll.u32 %v6465, 16
      %v6708 = vor.u32 %v6705, %v6706
      %v6709 = vsel %vm1931, %v6701, %v6708
      %v6710 = vrot.slane %v6705, 4
      %v6712 = vshrl.u32 %v6466, 16
      %v6714 = vrot.slane %v6712, 7
      %v6715 = vshll.u32 %v6466, 16
      %v6717 = vor.u32 %v6714, %v6715
      %v6718 = vsel %vm1931, %v6710, %v6717
      %v6719 = vrot.slane %v6714, 4
      %v6721 = vshrl.u32 %v6467, 16
      %v6723 = vrot.slane %v6721, 7
      %v6724 = vshll.u32 %v6467, 16
      %v6726 = vor.u32 %v6723, %v6724
      %v6727 = vsel %vm1931, %v6719, %v6726
      %v6728 = vrot.slane %v6723, 4
      %v6730 = vshrl.u32 %v6468, 16
      %v6732 = vrot.slane %v6730, 7
      %v6733 = vshll.u32 %v6468, 16
      %v6735 = vor.u32 %v6732, %v6733
      %v6736 = vsel %vm1931, %v6728, %v6735
      %v6737 = vrot.slane %v6732, 4
      %v6739 = vshrl.u32 %v6469, 16
      %v6741 = vrot.slane %v6739, 7
      %v6742 = vshll.u32 %v6469, 16
      %v6744 = vor.u32 %v6741, %v6742
      %v6745 = vsel %vm1931, %v6737, %v6744
      %v6746 = vrot.slane %v6741, 4
      %v6748 = vshrl.u32 %v6470, 16
      %v6750 = vrot.slane %v6748, 7
      %v6751 = vshll.u32 %v6470, 16
      %v6753 = vor.u32 %v6750, %v6751
      %v6754 = vsel %vm1931, %v6746, %v6753
      %v6755 = vrot.slane %v6750, 4
      %v6757 = vshrl.u32 %v6471, 16
      %v6759 = vrot.slane %v6757, 7
      %v6760 = vshll.u32 %v6471, 16
      %v6762 = vor.u32 %v6759, %v6760
      %v6763 = vsel %vm1931, %v6755, %v6762
      %6796 = vst.msk [vmem:[#allocation5] sm:$0xf] %vm6253, %v6484
      %6797 = vst.msk [vmem:[#allocation5 + $0x4] sm:$0xf] %vm6253, %v6493
      %6798 = vst.msk [vmem:[#allocation5 + $0x8] sm:$0xf] %vm6253, %v6502
      %6799 = vst.msk [vmem:[#allocation5 + $0xc] sm:$0xf] %vm6253, %v6511
      %6800 = vst.msk [vmem:[#allocation5 + $0x10] sm:$0xf] %vm6253, %v6520
      %6801 = vst.msk [vmem:[#allocation5 + $0x14] sm:$0xf] %vm6253, %v6529
      %6802 = vst.msk [vmem:[#allocation5 + $0x18] sm:$0xf] %vm6253, %v6538
      %6803 = vst.msk [vmem:[#allocation5 + $0x1c] sm:$0xf] %vm6253, %v6547
      %6804 = vst.msk [vmem:[#allocation5 + $0x20] sm:$0xf] %vm6253, %v6556
      %6805 = vst.msk [vmem:[#allocation5 + $0x24] sm:$0xf] %vm6253, %v6565
      %6806 = vst.msk [vmem:[#allocation5 + $0x28] sm:$0xf] %vm6253, %v6574
      %6807 = vst.msk [vmem:[#allocation5 + $0x2c] sm:$0xf] %vm6253, %v6583
      %6808 = vst.msk [vmem:[#allocation5 + $0x30] sm:$0xf] %vm6253, %v6592
      %6809 = vst.msk [vmem:[#allocation5 + $0x34] sm:$0xf] %vm6253, %v6601
      %6810 = vst.msk [vmem:[#allocation5 + $0x38] sm:$0xf] %vm6253, %v6610
      %6811 = vst.msk [vmem:[#allocation5 + $0x3c] sm:$0xf] %vm6253, %v6619
      %6812 = vst.msk [vmem:[#allocation5 + $0x40] sm:$0xf] %vm6253, %v6628
      %6813 = vst.msk [vmem:[#allocation5 + $0x44] sm:$0xf] %vm6253, %v6637
      %6814 = vst.msk [vmem:[#allocation5 + $0x48] sm:$0xf] %vm6253, %v6646
      %6815 = vst.msk [vmem:[#allocation5 + $0x4c] sm:$0xf] %vm6253, %v6655
      %6816 = vst.msk [vmem:[#allocation5 + $0x50] sm:$0xf] %vm6253, %v6664
      %6817 = vst.msk [vmem:[#allocation5 + $0x54] sm:$0xf] %vm6253, %v6673
      %6818 = vst.msk [vmem:[#allocation5 + $0x58] sm:$0xf] %vm6253, %v6682
      %6819 = vst.msk [vmem:[#allocation5 + $0x5c] sm:$0xf] %vm6253, %v6691
      %6820 = vst.msk [vmem:[#allocation5 + $0x60] sm:$0xf] %vm6253, %v6700
      %6821 = vst.msk [vmem:[#allocation5 + $0x64] sm:$0xf] %vm6253, %v6709
      %6822 = vst.msk [vmem:[#allocation5 + $0x68] sm:$0xf] %vm6253, %v6718
      %6823 = vst.msk [vmem:[#allocation5 + $0x6c] sm:$0xf] %vm6253, %v6727
      %6824 = vst.msk [vmem:[#allocation5 + $0x70] sm:$0xf] %vm6253, %v6736
      %6825 = vst.msk [vmem:[#allocation5 + $0x74] sm:$0xf] %vm6253, %v6745
      %6826 = vst.msk [vmem:[#allocation5 + $0x78] sm:$0xf] %vm6253, %v6754
      %6827 = vst.msk [vmem:[#allocation5 + $0x7c] sm:$0xf] %vm6253, %v6763
      %v6828 = vld [vmem:[#allocation3 + $0x8] sm:$0xf]
      %v6829 = vld [vmem:[#allocation3 + $0xc] sm:$0xf]
      %v6830 = vld [vmem:[#allocation3 + $0x10] sm:$0xf]
      %v6831 = vld [vmem:[#allocation3 + $0x14] sm:$0xf]
      %v6832 = vld [vmem:[#allocation3 + $0x18] sm:$0xf]
      %v6833 = vld [vmem:[#allocation3 + $0x1c] sm:$0xf]
      %v6834 = vld [vmem:[#allocation3 + $0x20] sm:$0xf]
      %v6835 = vld [vmem:[#allocation3 + $0x24] sm:$0xf]
      %v6836 = vld [vmem:[#allocation3 + $0x28] sm:$0xf]
      %v6837 = vld [vmem:[#allocation3 + $0x2c] sm:$0xf]
      %v6838 = vld [vmem:[#allocation3 + $0x30] sm:$0xf]
      %v6839 = vld [vmem:[#allocation3 + $0x34] sm:$0xf]
      %v6840 = vld [vmem:[#allocation3 + $0x38] sm:$0xf]
      %v6841 = vld [vmem:[#allocation3 + $0x3c] sm:$0xf]
      %v6842 = vld [vmem:[#allocation3 + $0x40] sm:$0xf]
      %v6843 = vld [vmem:[#allocation3 + $0x44] sm:$0xf]
      %v6844 = vld [vmem:[#allocation3 + $0x48] sm:$0xf]
      %v6845 = vld [vmem:[#allocation3 + $0x4c] sm:$0xf]
      %v6846 = vld [vmem:[#allocation3 + $0x50] sm:$0xf]
      %v6847 = vld [vmem:[#allocation3 + $0x54] sm:$0xf]
      %v6848 = vld [vmem:[#allocation3 + $0x58] sm:$0xf]
      %v6849 = vld [vmem:[#allocation3 + $0x5c] sm:$0xf]
      %v6850 = vld [vmem:[#allocation3 + $0x60] sm:$0xf]
      %v6851 = vld [vmem:[#allocation3 + $0x64] sm:$0xf]
      %v6852 = vld [vmem:[#allocation3 + $0x68] sm:$0xf]
      %v6853 = vld [vmem:[#allocation3 + $0x6c] sm:$0xf]
      %v6854 = vld [vmem:[#allocation3 + $0x70] sm:$0xf]
      %v6855 = vld [vmem:[#allocation3 + $0x74] sm:$0xf]
      %v6856 = vld [vmem:[#allocation3 + $0x78] sm:$0xf]
      %v6857 = vld [vmem:[#allocation3 + $0x7c] sm:$0xf]
      %v6858 = vld [vmem:[#allocation3 + $0x80] sm:$0xf]
      %v6859 = vld [vmem:[#allocation3 + $0x84] sm:$0xf]
      %6892 = vrot.lane.b32.xlu0 %v6828, 8
      %v6893 = vpop.permute.xlu0 %6892
      %6894 = vrot.lane.b32.xlu0 %v6829, 8
      %v6895 = vpop.permute.xlu0 %6894
      %6896 = vrot.lane.b32.xlu0 %v6830, 8
      %v6897 = vpop.permute.xlu0 %6896
      %6898 = vrot.lane.b32.xlu0 %v6831, 8
      %v6899 = vpop.permute.xlu0 %6898
      %6900 = vrot.lane.b32.xlu0 %v6832, 8
      %v6901 = vpop.permute.xlu0 %6900
      %6902 = vrot.lane.b32.xlu0 %v6833, 8
      %v6903 = vpop.permute.xlu0 %6902
      %6904 = vrot.lane.b32.xlu0 %v6834, 8
      %v6905 = vpop.permute.xlu0 %6904
      %6906 = vrot.lane.b32.xlu0 %v6835, 8
      %v6907 = vpop.permute.xlu0 %6906
      %6908 = vrot.lane.b32.xlu0 %v6836, 8
      %v6909 = vpop.permute.xlu0 %6908
      %6910 = vrot.lane.b32.xlu0 %v6837, 8
      %v6911 = vpop.permute.xlu0 %6910
      %6912 = vrot.lane.b32.xlu0 %v6838, 8
      %v6913 = vpop.permute.xlu0 %6912
      %6914 = vrot.lane.b32.xlu0 %v6839, 8
      %v6915 = vpop.permute.xlu0 %6914
      %6916 = vrot.lane.b32.xlu0 %v6840, 8
      %v6917 = vpop.permute.xlu0 %6916
      %6918 = vrot.lane.b32.xlu0 %v6841, 8
      %v6919 = vpop.permute.xlu0 %6918
      %6920 = vrot.lane.b32.xlu0 %v6842, 8
      %v6921 = vpop.permute.xlu0 %6920
      %6922 = vrot.lane.b32.xlu0 %v6843, 8
      %v6923 = vpop.permute.xlu0 %6922
      %6924 = vrot.lane.b32.xlu0 %v6844, 8
      %v6925 = vpop.permute.xlu0 %6924
      %6926 = vrot.lane.b32.xlu0 %v6845, 8
      %v6927 = vpop.permute.xlu0 %6926
      %6928 = vrot.lane.b32.xlu0 %v6846, 8
      %v6929 = vpop.permute.xlu0 %6928
      %6930 = vrot.lane.b32.xlu0 %v6847, 8
      %v6931 = vpop.permute.xlu0 %6930
      %6932 = vrot.lane.b32.xlu0 %v6848, 8
      %v6933 = vpop.permute.xlu0 %6932
      %6934 = vrot.lane.b32.xlu0 %v6849, 8
      %v6935 = vpop.permute.xlu0 %6934
      %6936 = vrot.lane.b32.xlu0 %v6850, 8
      %v6937 = vpop.permute.xlu0 %6936
      %6938 = vrot.lane.b32.xlu0 %v6851, 8
      %v6939 = vpop.permute.xlu0 %6938
      %6940 = vrot.lane.b32.xlu0 %v6852, 8
      %v6941 = vpop.permute.xlu0 %6940
      %6942 = vrot.lane.b32.xlu0 %v6853, 8
      %v6943 = vpop.permute.xlu0 %6942
      %6944 = vrot.lane.b32.xlu0 %v6854, 8
      %v6945 = vpop.permute.xlu0 %6944
      %6946 = vrot.lane.b32.xlu0 %v6855, 8
      %v6947 = vpop.permute.xlu0 %6946
      %6948 = vrot.lane.b32.xlu0 %v6856, 8
      %v6949 = vpop.permute.xlu0 %6948
      %6950 = vrot.lane.b32.xlu0 %v6857, 8
      %v6951 = vpop.permute.xlu0 %6950
      %6952 = vrot.lane.b32.xlu0 %v6858, 8
      %v6953 = vpop.permute.xlu0 %6952
      %6954 = vrot.lane.b32.xlu0 %v6859, 8
      %v6955 = vpop.permute.xlu0 %6954
      %vm6988 = vcmask 126016
      %6989 = vst.msk [vmem:[#allocation5] sm:$0xf] %vm6988, %v6893
      %6990 = vst.msk [vmem:[#allocation5 + $0x4] sm:$0xf] %vm6988, %v6895
      %6991 = vst.msk [vmem:[#allocation5 + $0x8] sm:$0xf] %vm6988, %v6897
      %6992 = vst.msk [vmem:[#allocation5 + $0xc] sm:$0xf] %vm6988, %v6899
      %6993 = vst.msk [vmem:[#allocation5 + $0x10] sm:$0xf] %vm6988, %v6901
      %6994 = vst.msk [vmem:[#allocation5 + $0x14] sm:$0xf] %vm6988, %v6903
      %6995 = vst.msk [vmem:[#allocation5 + $0x18] sm:$0xf] %vm6988, %v6905
      %6996 = vst.msk [vmem:[#allocation5 + $0x1c] sm:$0xf] %vm6988, %v6907
      %6997 = vst.msk [vmem:[#allocation5 + $0x20] sm:$0xf] %vm6988, %v6909
      %6998 = vst.msk [vmem:[#allocation5 + $0x24] sm:$0xf] %vm6988, %v6911
      %6999 = vst.msk [vmem:[#allocation5 + $0x28] sm:$0xf] %vm6988, %v6913
      %7000 = vst.msk [vmem:[#allocation5 + $0x2c] sm:$0xf] %vm6988, %v6915
      %7001 = vst.msk [vmem:[#allocation5 + $0x30] sm:$0xf] %vm6988, %v6917
      %7002 = vst.msk [vmem:[#allocation5 + $0x34] sm:$0xf] %vm6988, %v6919
      %7003 = vst.msk [vmem:[#allocation5 + $0x38] sm:$0xf] %vm6988, %v6921
      %7004 = vst.msk [vmem:[#allocation5 + $0x3c] sm:$0xf] %vm6988, %v6923
      %7005 = vst.msk [vmem:[#allocation5 + $0x40] sm:$0xf] %vm6988, %v6925
      %7006 = vst.msk [vmem:[#allocation5 + $0x44] sm:$0xf] %vm6988, %v6927
      %7007 = vst.msk [vmem:[#allocation5 + $0x48] sm:$0xf] %vm6988, %v6929
      %7008 = vst.msk [vmem:[#allocation5 + $0x4c] sm:$0xf] %vm6988, %v6931
      %7009 = vst.msk [vmem:[#allocation5 + $0x50] sm:$0xf] %vm6988, %v6933
      %7010 = vst.msk [vmem:[#allocation5 + $0x54] sm:$0xf] %vm6988, %v6935
      %7011 = vst.msk [vmem:[#allocation5 + $0x58] sm:$0xf] %vm6988, %v6937
      %7012 = vst.msk [vmem:[#allocation5 + $0x5c] sm:$0xf] %vm6988, %v6939
      %7013 = vst.msk [vmem:[#allocation5 + $0x60] sm:$0xf] %vm6988, %v6941
      %7014 = vst.msk [vmem:[#allocation5 + $0x64] sm:$0xf] %vm6988, %v6943
      %7015 = vst.msk [vmem:[#allocation5 + $0x68] sm:$0xf] %vm6988, %v6945
      %7016 = vst.msk [vmem:[#allocation5 + $0x6c] sm:$0xf] %vm6988, %v6947
      %7017 = vst.msk [vmem:[#allocation5 + $0x70] sm:$0xf] %vm6988, %v6949
      %7018 = vst.msk [vmem:[#allocation5 + $0x74] sm:$0xf] %vm6988, %v6951
      %7019 = vst.msk [vmem:[#allocation5 + $0x78] sm:$0xf] %vm6988, %v6953
      %7020 = vst.msk [vmem:[#allocation5 + $0x7c] sm:$0xf] %vm6988, %v6955
      %v7021 = vld [vmem:[#allocation3 + $0x8] sm:$0xf]
      %v7022 = vld [vmem:[#allocation3 + $0xc] sm:$0xf]
      %v7023 = vld [vmem:[#allocation3 + $0x10] sm:$0xf]
      %v7024 = vld [vmem:[#allocation3 + $0x14] sm:$0xf]
      %v7025 = vld [vmem:[#allocation3 + $0x18] sm:$0xf]
      %v7026 = vld [vmem:[#allocation3 + $0x1c] sm:$0xf]
      %v7027 = vld [vmem:[#allocation3 + $0x20] sm:$0xf]
      %v7028 = vld [vmem:[#allocation3 + $0x24] sm:$0xf]
      %v7029 = vld [vmem:[#allocation3 + $0x28] sm:$0xf]
      %v7030 = vld [vmem:[#allocation3 + $0x2c] sm:$0xf]
      %v7031 = vld [vmem:[#allocation3 + $0x30] sm:$0xf]
      %v7032 = vld [vmem:[#allocation3 + $0x34] sm:$0xf]
      %v7033 = vld [vmem:[#allocation3 + $0x38] sm:$0xf]
      %v7034 = vld [vmem:[#allocation3 + $0x3c] sm:$0xf]
      %v7035 = vld [vmem:[#allocation3 + $0x40] sm:$0xf]
      %v7036 = vld [vmem:[#allocation3 + $0x44] sm:$0xf]
      %v7037 = vld [vmem:[#allocation3 + $0x48] sm:$0xf]
      %v7038 = vld [vmem:[#allocation3 + $0x4c] sm:$0xf]
      %v7039 = vld [vmem:[#allocation3 + $0x50] sm:$0xf]
      %v7040 = vld [vmem:[#allocation3 + $0x54] sm:$0xf]
      %v7041 = vld [vmem:[#allocation3 + $0x58] sm:$0xf]
      %v7042 = vld [vmem:[#allocation3 + $0x5c] sm:$0xf]
      %v7043 = vld [vmem:[#allocation3 + $0x60] sm:$0xf]
      %v7044 = vld [vmem:[#allocation3 + $0x64] sm:$0xf]
      %v7045 = vld [vmem:[#allocation3 + $0x68] sm:$0xf]
      %v7046 = vld [vmem:[#allocation3 + $0x6c] sm:$0xf]
      %v7047 = vld [vmem:[#allocation3 + $0x70] sm:$0xf]
      %v7048 = vld [vmem:[#allocation3 + $0x74] sm:$0xf]
      %v7049 = vld [vmem:[#allocation3 + $0x78] sm:$0xf]
      %v7050 = vld [vmem:[#allocation3 + $0x7c] sm:$0xf]
      %v7051 = vld [vmem:[#allocation3 + $0x80] sm:$0xf]
      %v7052 = vld [vmem:[#allocation3 + $0x84] sm:$0xf]
      %v7053 = vld [vmem:[#allocation3 + $0x88] sm:$0x1]
      %v7054 = vsel %vm2865, %v7021, 0
      %v7055 = vsel %vm2866, %v7022, 0
      %v7056 = vsel %vm2867, %v7023, 0
      %v7057 = vsel %vm2868, %v7024, 0
      %v7058 = vsel %vm2869, %v7025, 0
      %v7059 = vsel %vm2870, %v7026, 0
      %v7060 = vsel %vm2871, %v7027, 0
      %v7061 = vsel %vm2872, %v7028, 0
      %v7062 = vsel %vm2873, %v7029, 0
      %v7063 = vsel %vm2874, %v7030, 0
      %v7064 = vsel %vm2875, %v7031, 0
      %v7065 = vsel %vm2876, %v7032, 0
      %v7066 = vsel %vm2877, %v7033, 0
      %v7067 = vsel %vm2878, %v7034, 0
      %v7068 = vsel %vm2879, %v7035, 0
      %v7069 = vsel %vm2880, %v7036, 0
      %v7070 = vsel %vm2881, %v7037, 0
      %v7071 = vsel %vm2882, %v7038, 0
      %v7072 = vsel %vm2883, %v7039, 0
      %v7073 = vsel %vm2884, %v7040, 0
      %v7074 = vsel %vm2885, %v7041, 0
      %v7075 = vsel %vm2886, %v7042, 0
      %v7076 = vsel %vm2887, %v7043, 0
      %v7077 = vsel %vm2888, %v7044, 0
      %v7078 = vsel %vm2889, %v7045, 0
      %v7079 = vsel %vm2890, %v7046, 0
      %v7080 = vsel %vm2891, %v7047, 0
      %v7081 = vsel %vm2892, %v7048, 0
      %v7082 = vsel %vm2893, %v7049, 0
      %v7083 = vsel %vm2894, %v7050, 0
      %v7084 = vsel %vm2895, %v7051, 0
      %v7085 = vsel %vm2896, %v7052, 0
      %v7086 = vsel %vm2897, %v7053, 0
      %v7088 = vshrl.u32 %v7054, 16
      %v7090 = vrot.slane %v7088, 4
      %v7091 = vshll.u32 %v7054, 16
      %v7093 = vrot.slane %v7091, 5
      %v7094 = vor.u32 %v7090, %v7093
      %v7095 = vrot.slane %v7094, 4
      %v7097 = vshll.u32 %v7055, 16
      %v7099 = vrot.slane %v7097, 5
      %v7100 = vsel %vm1543, %v7095, %v7099
      %v7101 = vshrl.u32 %v7055, 16
      %v7103 = vrot.slane %v7101, 4
      %v7104 = vor.u32 %v7103, %v7099
      %v7105 = vrot.slane %v7104, 4
      %v7107 = vshll.u32 %v7056, 16
      %v7109 = vrot.slane %v7107, 5
      %v7110 = vsel %vm1543, %v7105, %v7109
      %v7111 = vshrl.u32 %v7056, 16
      %v7113 = vrot.slane %v7111, 4
      %v7114 = vor.u32 %v7113, %v7109
      %v7115 = vrot.slane %v7114, 4
      %v7117 = vshll.u32 %v7057, 16
      %v7119 = vrot.slane %v7117, 5
      %v7120 = vsel %vm1543, %v7115, %v7119
      %v7121 = vshrl.u32 %v7057, 16
      %v7123 = vrot.slane %v7121, 4
      %v7124 = vor.u32 %v7123, %v7119
      %v7125 = vrot.slane %v7124, 4
      %v7127 = vshll.u32 %v7058, 16
      %v7129 = vrot.slane %v7127, 5
      %v7130 = vsel %vm1543, %v7125, %v7129
      %v7131 = vshrl.u32 %v7058, 16
      %v7133 = vrot.slane %v7131, 4
      %v7134 = vor.u32 %v7133, %v7129
      %v7135 = vrot.slane %v7134, 4
      %v7137 = vshll.u32 %v7059, 16
      %v7139 = vrot.slane %v7137, 5
      %v7140 = vsel %vm1543, %v7135, %v7139
      %v7141 = vshrl.u32 %v7059, 16
      %v7143 = vrot.slane %v7141, 4
      %v7144 = vor.u32 %v7143, %v7139
      %v7145 = vrot.slane %v7144, 4
      %v7147 = vshll.u32 %v7060, 16
      %v7149 = vrot.slane %v7147, 5
      %v7150 = vsel %vm1543, %v7145, %v7149
      %v7151 = vshrl.u32 %v7060, 16
      %v7153 = vrot.slane %v7151, 4
      %v7154 = vor.u32 %v7153, %v7149
      %v7155 = vrot.slane %v7154, 4
      %v7157 = vshll.u32 %v7061, 16
      %v7159 = vrot.slane %v7157, 5
      %v7160 = vsel %vm1543, %v7155, %v7159
      %v7161 = vshrl.u32 %v7061, 16
      %v7163 = vrot.slane %v7161, 4
      %v7164 = vor.u32 %v7163, %v7159
      %v7165 = vrot.slane %v7164, 4
      %v7167 = vshll.u32 %v7062, 16
      %v7169 = vrot.slane %v7167, 5
      %v7170 = vsel %vm1543, %v7165, %v7169
      %v7171 = vshrl.u32 %v7062, 16
      %v7173 = vrot.slane %v7171, 4
      %v7174 = vor.u32 %v7173, %v7169
      %v7175 = vrot.slane %v7174, 4
      %v7177 = vshll.u32 %v7063, 16
      %v7179 = vrot.slane %v7177, 5
      %v7180 = vsel %vm1543, %v7175, %v7179
      %v7181 = vshrl.u32 %v7063, 16
      %v7183 = vrot.slane %v7181, 4
      %v7184 = vor.u32 %v7183, %v7179
      %v7185 = vrot.slane %v7184, 4
      %v7187 = vshll.u32 %v7064, 16
      %v7189 = vrot.slane %v7187, 5
      %v7190 = vsel %vm1543, %v7185, %v7189
      %v7191 = vshrl.u32 %v7064, 16
      %v7193 = vrot.slane %v7191, 4
      %v7194 = vor.u32 %v7193, %v7189
      %v7195 = vrot.slane %v7194, 4
      %v7197 = vshll.u32 %v7065, 16
      %v7199 = vrot.slane %v7197, 5
      %v7200 = vsel %vm1543, %v7195, %v7199
      %v7201 = vshrl.u32 %v7065, 16
      %v7203 = vrot.slane %v7201, 4
      %v7204 = vor.u32 %v7203, %v7199
      %v7205 = vrot.slane %v7204, 4
      %v7207 = vshll.u32 %v7066, 16
      %v7209 = vrot.slane %v7207, 5
      %v7210 = vsel %vm1543, %v7205, %v7209
      %v7211 = vshrl.u32 %v7066, 16
      %v7213 = vrot.slane %v7211, 4
      %v7214 = vor.u32 %v7213, %v7209
      %v7215 = vrot.slane %v7214, 4
      %v7217 = vshll.u32 %v7067, 16
      %v7219 = vrot.slane %v7217, 5
      %v7220 = vsel %vm1543, %v7215, %v7219
      %v7221 = vshrl.u32 %v7067, 16
      %v7223 = vrot.slane %v7221, 4
      %v7224 = vor.u32 %v7223, %v7219
      %v7225 = vrot.slane %v7224, 4
      %v7227 = vshll.u32 %v7068, 16
      %v7229 = vrot.slane %v7227, 5
      %v7230 = vsel %vm1543, %v7225, %v7229
      %v7231 = vshrl.u32 %v7068, 16
      %v7233 = vrot.slane %v7231, 4
      %v7234 = vor.u32 %v7233, %v7229
      %v7235 = vrot.slane %v7234, 4
      %v7237 = vshll.u32 %v7069, 16
      %v7239 = vrot.slane %v7237, 5
      %v7240 = vsel %vm1543, %v7235, %v7239
      %v7241 = vshrl.u32 %v7069, 16
      %v7243 = vrot.slane %v7241, 4
      %v7244 = vor.u32 %v7243, %v7239
      %v7245 = vrot.slane %v7244, 4
      %v7247 = vshll.u32 %v7070, 16
      %v7249 = vrot.slane %v7247, 5
      %v7250 = vsel %vm1543, %v7245, %v7249
      %v7251 = vshrl.u32 %v7070, 16
      %v7253 = vrot.slane %v7251, 4
      %v7254 = vor.u32 %v7253, %v7249
      %v7255 = vrot.slane %v7254, 4
      %v7257 = vshll.u32 %v7071, 16
      %v7259 = vrot.slane %v7257, 5
      %v7260 = vsel %vm1543, %v7255, %v7259
      %v7261 = vshrl.u32 %v7071, 16
      %v7263 = vrot.slane %v7261, 4
      %v7264 = vor.u32 %v7263, %v7259
      %v7265 = vrot.slane %v7264, 4
      %v7267 = vshll.u32 %v7072, 16
      %v7269 = vrot.slane %v7267, 5
      %v7270 = vsel %vm1543, %v7265, %v7269
      %v7271 = vshrl.u32 %v7072, 16
      %v7273 = vrot.slane %v7271, 4
      %v7274 = vor.u32 %v7273, %v7269
      %v7275 = vrot.slane %v7274, 4
      %v7277 = vshll.u32 %v7073, 16
      %v7279 = vrot.slane %v7277, 5
      %v7280 = vsel %vm1543, %v7275, %v7279
      %v7281 = vshrl.u32 %v7073, 16
      %v7283 = vrot.slane %v7281, 4
      %v7284 = vor.u32 %v7283, %v7279
      %v7285 = vrot.slane %v7284, 4
      %v7287 = vshll.u32 %v7074, 16
      %v7289 = vrot.slane %v7287, 5
      %v7290 = vsel %vm1543, %v7285, %v7289
      %v7291 = vshrl.u32 %v7074, 16
      %v7293 = vrot.slane %v7291, 4
      %v7294 = vor.u32 %v7293, %v7289
      %v7295 = vrot.slane %v7294, 4
      %v7297 = vshll.u32 %v7075, 16
      %v7299 = vrot.slane %v7297, 5
      %v7300 = vsel %vm1543, %v7295, %v7299
      %v7301 = vshrl.u32 %v7075, 16
      %v7303 = vrot.slane %v7301, 4
      %v7304 = vor.u32 %v7303, %v7299
      %v7305 = vrot.slane %v7304, 4
      %v7307 = vshll.u32 %v7076, 16
      %v7309 = vrot.slane %v7307, 5
      %v7310 = vsel %vm1543, %v7305, %v7309
      %v7311 = vshrl.u32 %v7076, 16
      %v7313 = vrot.slane %v7311, 4
      %v7314 = vor.u32 %v7313, %v7309
      %v7315 = vrot.slane %v7314, 4
      %v7317 = vshll.u32 %v7077, 16
      %v7319 = vrot.slane %v7317, 5
      %v7320 = vsel %vm1543, %v7315, %v7319
      %v7321 = vshrl.u32 %v7077, 16
      %v7323 = vrot.slane %v7321, 4
      %v7324 = vor.u32 %v7323, %v7319
      %v7325 = vrot.slane %v7324, 4
      %v7327 = vshll.u32 %v7078, 16
      %v7329 = vrot.slane %v7327, 5
      %v7330 = vsel %vm1543, %v7325, %v7329
      %v7331 = vshrl.u32 %v7078, 16
      %v7333 = vrot.slane %v7331, 4
      %v7334 = vor.u32 %v7333, %v7329
      %v7335 = vrot.slane %v7334, 4
      %v7337 = vshll.u32 %v7079, 16
      %v7339 = vrot.slane %v7337, 5
      %v7340 = vsel %vm1543, %v7335, %v7339
      %v7341 = vshrl.u32 %v7079, 16
      %v7343 = vrot.slane %v7341, 4
      %v7344 = vor.u32 %v7343, %v7339
      %v7345 = vrot.slane %v7344, 4
      %v7347 = vshll.u32 %v7080, 16
      %v7349 = vrot.slane %v7347, 5
      %v7350 = vsel %vm1543, %v7345, %v7349
      %v7351 = vshrl.u32 %v7080, 16
      %v7353 = vrot.slane %v7351, 4
      %v7354 = vor.u32 %v7353, %v7349
      %v7355 = vrot.slane %v7354, 4
      %v7357 = vshll.u32 %v7081, 16
      %v7359 = vrot.slane %v7357, 5
      %v7360 = vsel %vm1543, %v7355, %v7359
      %v7361 = vshrl.u32 %v7081, 16
      %v7363 = vrot.slane %v7361, 4
      %v7364 = vor.u32 %v7363, %v7359
      %v7365 = vrot.slane %v7364, 4
      %v7367 = vshll.u32 %v7082, 16
      %v7369 = vrot.slane %v7367, 5
      %v7370 = vsel %vm1543, %v7365, %v7369
      %v7371 = vshrl.u32 %v7082, 16
      %v7373 = vrot.slane %v7371, 4
      %v7374 = vor.u32 %v7373, %v7369
      %v7375 = vrot.slane %v7374, 4
      %v7377 = vshll.u32 %v7083, 16
      %v7379 = vrot.slane %v7377, 5
      %v7380 = vsel %vm1543, %v7375, %v7379
      %v7381 = vshrl.u32 %v7083, 16
      %v7383 = vrot.slane %v7381, 4
      %v7384 = vor.u32 %v7383, %v7379
      %v7385 = vrot.slane %v7384, 4
      %v7387 = vshll.u32 %v7084, 16
      %v7389 = vrot.slane %v7387, 5
      %v7390 = vsel %vm1543, %v7385, %v7389
      %v7391 = vshrl.u32 %v7084, 16
      %v7393 = vrot.slane %v7391, 4
      %v7394 = vor.u32 %v7393, %v7389
      %v7395 = vrot.slane %v7394, 4
      %v7397 = vshll.u32 %v7085, 16
      %v7399 = vrot.slane %v7397, 5
      %v7400 = vsel %vm1543, %v7395, %v7399
      %v7401 = vshrl.u32 %v7085, 16
      %v7403 = vrot.slane %v7401, 4
      %v7404 = vor.u32 %v7403, %v7399
      %v7405 = vrot.slane %v7404, 4
      %v7407 = vshll.u32 %v7086, 16
      %v7409 = vrot.slane %v7407, 5
      %v7410 = vsel %vm1543, %v7405, %v7409
      %7411 = vrot.lane.b32.xlu0 %v7100, 16
      %v7412 = vpop.permute.xlu0 %7411
      %7413 = vrot.lane.b32.xlu0 %v7110, 16
      %v7414 = vpop.permute.xlu0 %7413
      %7415 = vrot.lane.b32.xlu0 %v7120, 16
      %v7416 = vpop.permute.xlu0 %7415
      %7417 = vrot.lane.b32.xlu0 %v7130, 16
      %v7418 = vpop.permute.xlu0 %7417
      %7419 = vrot.lane.b32.xlu0 %v7140, 16
      %v7420 = vpop.permute.xlu0 %7419
      %7421 = vrot.lane.b32.xlu0 %v7150, 16
      %v7422 = vpop.permute.xlu0 %7421
      %7423 = vrot.lane.b32.xlu0 %v7160, 16
      %v7424 = vpop.permute.xlu0 %7423
      %7425 = vrot.lane.b32.xlu0 %v7170, 16
      %v7426 = vpop.permute.xlu0 %7425
      %7427 = vrot.lane.b32.xlu0 %v7180, 16
      %v7428 = vpop.permute.xlu0 %7427
      %7429 = vrot.lane.b32.xlu0 %v7190, 16
      %v7430 = vpop.permute.xlu0 %7429
      %7431 = vrot.lane.b32.xlu0 %v7200, 16
      %v7432 = vpop.permute.xlu0 %7431
      %7433 = vrot.lane.b32.xlu0 %v7210, 16
      %v7434 = vpop.permute.xlu0 %7433
      %7435 = vrot.lane.b32.xlu0 %v7220, 16
      %v7436 = vpop.permute.xlu0 %7435
      %7437 = vrot.lane.b32.xlu0 %v7230, 16
      %v7438 = vpop.permute.xlu0 %7437
      %7439 = vrot.lane.b32.xlu0 %v7240, 16
      %v7440 = vpop.permute.xlu0 %7439
      %7441 = vrot.lane.b32.xlu0 %v7250, 16
      %v7442 = vpop.permute.xlu0 %7441
      %7443 = vrot.lane.b32.xlu0 %v7260, 16
      %v7444 = vpop.permute.xlu0 %7443
      %7445 = vrot.lane.b32.xlu0 %v7270, 16
      %v7446 = vpop.permute.xlu0 %7445
      %7447 = vrot.lane.b32.xlu0 %v7280, 16
      %v7448 = vpop.permute.xlu0 %7447
      %7449 = vrot.lane.b32.xlu0 %v7290, 16
      %v7450 = vpop.permute.xlu0 %7449
      %7451 = vrot.lane.b32.xlu0 %v7300, 16
      %v7452 = vpop.permute.xlu0 %7451
      %7453 = vrot.lane.b32.xlu0 %v7310, 16
      %v7454 = vpop.permute.xlu0 %7453
      %7455 = vrot.lane.b32.xlu0 %v7320, 16
      %v7456 = vpop.permute.xlu0 %7455
      %7457 = vrot.lane.b32.xlu0 %v7330, 16
      %v7458 = vpop.permute.xlu0 %7457
      %7459 = vrot.lane.b32.xlu0 %v7340, 16
      %v7460 = vpop.permute.xlu0 %7459
      %7461 = vrot.lane.b32.xlu0 %v7350, 16
      %v7462 = vpop.permute.xlu0 %7461
      %7463 = vrot.lane.b32.xlu0 %v7360, 16
      %v7464 = vpop.permute.xlu0 %7463
      %7465 = vrot.lane.b32.xlu0 %v7370, 16
      %v7466 = vpop.permute.xlu0 %7465
      %7467 = vrot.lane.b32.xlu0 %v7380, 16
      %v7468 = vpop.permute.xlu0 %7467
      %7469 = vrot.lane.b32.xlu0 %v7390, 16
      %v7470 = vpop.permute.xlu0 %7469
      %7471 = vrot.lane.b32.xlu0 %v7400, 16
      %v7472 = vpop.permute.xlu0 %7471
      %7473 = vrot.lane.b32.xlu0 %v7410, 16
      %v7474 = vpop.permute.xlu0 %7473
      %vm7507 = vcmask 191616
      %7508 = vst.msk [vmem:[#allocation5] sm:$0xf] %vm7507, %v7412
      %7509 = vst.msk [vmem:[#allocation5 + $0x4] sm:$0xf] %vm7507, %v7414
      %7510 = vst.msk [vmem:[#allocation5 + $0x8] sm:$0xf] %vm7507, %v7416
      %7511 = vst.msk [vmem:[#allocation5 + $0xc] sm:$0xf] %vm7507, %v7418
      %7512 = vst.msk [vmem:[#allocation5 + $0x10] sm:$0xf] %vm7507, %v7420
      %7513 = vst.msk [vmem:[#allocation5 + $0x14] sm:$0xf] %vm7507, %v7422
      %7514 = vst.msk [vmem:[#allocation5 + $0x18] sm:$0xf] %vm7507, %v7424
      %7515 = vst.msk [vmem:[#allocation5 + $0x1c] sm:$0xf] %vm7507, %v7426
      %7516 = vst.msk [vmem:[#allocation5 + $0x20] sm:$0xf] %vm7507, %v7428
      %7517 = vst.msk [vmem:[#allocation5 + $0x24] sm:$0xf] %vm7507, %v7430
      %7518 = vst.msk [vmem:[#allocation5 + $0x28] sm:$0xf] %vm7507, %v7432
      %7519 = vst.msk [vmem:[#allocation5 + $0x2c] sm:$0xf] %vm7507, %v7434
      %7520 = vst.msk [vmem:[#allocation5 + $0x30] sm:$0xf] %vm7507, %v7436
      %7521 = vst.msk [vmem:[#allocation5 + $0x34] sm:$0xf] %vm7507, %v7438
      %7522 = vst.msk [vmem:[#allocation5 + $0x38] sm:$0xf] %vm7507, %v7440
      %7523 = vst.msk [vmem:[#allocation5 + $0x3c] sm:$0xf] %vm7507, %v7442
      %7524 = vst.msk [vmem:[#allocation5 + $0x40] sm:$0xf] %vm7507, %v7444
      %7525 = vst.msk [vmem:[#allocation5 + $0x44] sm:$0xf] %vm7507, %v7446
      %7526 = vst.msk [vmem:[#allocation5 + $0x48] sm:$0xf] %vm7507, %v7448
      %7527 = vst.msk [vmem:[#allocation5 + $0x4c] sm:$0xf] %vm7507, %v7450
      %7528 = vst.msk [vmem:[#allocation5 + $0x50] sm:$0xf] %vm7507, %v7452
      %7529 = vst.msk [vmem:[#allocation5 + $0x54] sm:$0xf] %vm7507, %v7454
      %7530 = vst.msk [vmem:[#allocation5 + $0x58] sm:$0xf] %vm7507, %v7456
      %7531 = vst.msk [vmem:[#allocation5 + $0x5c] sm:$0xf] %vm7507, %v7458
      %7532 = vst.msk [vmem:[#allocation5 + $0x60] sm:$0xf] %vm7507, %v7460
      %7533 = vst.msk [vmem:[#allocation5 + $0x64] sm:$0xf] %vm7507, %v7462
      %7534 = vst.msk [vmem:[#allocation5 + $0x68] sm:$0xf] %vm7507, %v7464
      %7535 = vst.msk [vmem:[#allocation5 + $0x6c] sm:$0xf] %vm7507, %v7466
      %7536 = vst.msk [vmem:[#allocation5 + $0x70] sm:$0xf] %vm7507, %v7468
      %7537 = vst.msk [vmem:[#allocation5 + $0x74] sm:$0xf] %vm7507, %v7470
      %7538 = vst.msk [vmem:[#allocation5 + $0x78] sm:$0xf] %vm7507, %v7472
      %7539 = vst.msk [vmem:[#allocation5 + $0x7c] sm:$0xf] %vm7507, %v7474
      %v7540 = vld [vmem:[#allocation3 + $0xc] sm:$0x8]
      %v7541 = vld [vmem:[#allocation3 + $0x10] sm:$0xf]
      %v7542 = vld [vmem:[#allocation3 + $0x14] sm:$0xf]
      %v7543 = vld [vmem:[#allocation3 + $0x18] sm:$0xf]
      %v7544 = vld [vmem:[#allocation3 + $0x1c] sm:$0xf]
      %v7545 = vld [vmem:[#allocation3 + $0x20] sm:$0xf]
      %v7546 = vld [vmem:[#allocation3 + $0x24] sm:$0xf]
      %v7547 = vld [vmem:[#allocation3 + $0x28] sm:$0xf]
      %v7548 = vld [vmem:[#allocation3 + $0x2c] sm:$0xf]
      %v7549 = vld [vmem:[#allocation3 + $0x30] sm:$0xf]
      %v7550 = vld [vmem:[#allocation3 + $0x34] sm:$0xf]
      %v7551 = vld [vmem:[#allocation3 + $0x38] sm:$0xf]
      %v7552 = vld [vmem:[#allocation3 + $0x3c] sm:$0xf]
      %v7553 = vld [vmem:[#allocation3 + $0x40] sm:$0xf]
      %v7554 = vld [vmem:[#allocation3 + $0x44] sm:$0xf]
      %v7555 = vld [vmem:[#allocation3 + $0x48] sm:$0xf]
      %v7556 = vld [vmem:[#allocation3 + $0x4c] sm:$0xf]
      %v7557 = vld [vmem:[#allocation3 + $0x50] sm:$0xf]
      %v7558 = vld [vmem:[#allocation3 + $0x54] sm:$0xf]
      %v7559 = vld [vmem:[#allocation3 + $0x58] sm:$0xf]
      %v7560 = vld [vmem:[#allocation3 + $0x5c] sm:$0xf]
      %v7561 = vld [vmem:[#allocation3 + $0x60] sm:$0xf]
      %v7562 = vld [vmem:[#allocation3 + $0x64] sm:$0xf]
      %v7563 = vld [vmem:[#allocation3 + $0x68] sm:$0xf]
      %v7564 = vld [vmem:[#allocation3 + $0x6c] sm:$0xf]
      %v7565 = vld [vmem:[#allocation3 + $0x70] sm:$0xf]
      %v7566 = vld [vmem:[#allocation3 + $0x74] sm:$0xf]
      %v7567 = vld [vmem:[#allocation3 + $0x78] sm:$0xf]
      %v7568 = vld [vmem:[#allocation3 + $0x7c] sm:$0xf]
      %v7569 = vld [vmem:[#allocation3 + $0x80] sm:$0xf]
      %v7570 = vld [vmem:[#allocation3 + $0x84] sm:$0xf]
      %v7571 = vld [vmem:[#allocation3 + $0x88] sm:$0xf]
      %v7572 = vld [vmem:[#allocation3 + $0x8c] sm:$0xf]
      %v7573 = vsel %vm1863, %v7540, 0
      %v7574 = vsel %vm1864, %v7541, 0
      %v7575 = vsel %vm1865, %v7542, 0
      %v7576 = vsel %vm1866, %v7543, 0
      %v7577 = vsel %vm1867, %v7544, 0
      %v7578 = vsel %vm1868, %v7545, 0
      %v7579 = vsel %vm1869, %v7546, 0
      %v7580 = vsel %vm1870, %v7547, 0
      %v7581 = vsel %vm1871, %v7548, 0
      %v7582 = vsel %vm1872, %v7549, 0
      %v7583 = vsel %vm1873, %v7550, 0
      %v7584 = vsel %vm1874, %v7551, 0
      %v7585 = vsel %vm1875, %v7552, 0
      %v7586 = vsel %vm1876, %v7553, 0
      %v7587 = vsel %vm1877, %v7554, 0
      %v7588 = vsel %vm1878, %v7555, 0
      %v7589 = vsel %vm1879, %v7556, 0
      %v7590 = vsel %vm1880, %v7557, 0
      %v7591 = vsel %vm1881, %v7558, 0
      %v7592 = vsel %vm1882, %v7559, 0
      %v7593 = vsel %vm1883, %v7560, 0
      %v7594 = vsel %vm1884, %v7561, 0
      %v7595 = vsel %vm1885, %v7562, 0
      %v7596 = vsel %vm1886, %v7563, 0
      %v7597 = vsel %vm1887, %v7564, 0
      %v7598 = vsel %vm1888, %v7565, 0
      %v7599 = vsel %vm1889, %v7566, 0
      %v7600 = vsel %vm1890, %v7567, 0
      %v7601 = vsel %vm1891, %v7568, 0
      %v7602 = vsel %vm1892, %v7569, 0
      %v7603 = vsel %vm1893, %v7570, 0
      %v7604 = vsel %vm1894, %v7571, 0
      %v7605 = vsel %vm1895, %v7572, 0
      %v7607 = vshrl.u32 %v7573, 16
      %v7609 = vrot.slane %v7607, 7
      %v7610 = vrot.slane %v7609, 4
      %v7612 = vshrl.u32 %v7574, 16
      %v7614 = vrot.slane %v7612, 7
      %v7615 = vshll.u32 %v7574, 16
      %v7617 = vor.u32 %v7614, %v7615
      %v7618 = vsel %vm1931, %v7610, %v7617
      %v7619 = vrot.slane %v7614, 4
      %v7621 = vshrl.u32 %v7575, 16
      %v7623 = vrot.slane %v7621, 7
      %v7624 = vshll.u32 %v7575, 16
      %v7626 = vor.u32 %v7623, %v7624
      %v7627 = vsel %vm1931, %v7619, %v7626
      %v7628 = vrot.slane %v7623, 4
      %v7630 = vshrl.u32 %v7576, 16
      %v7632 = vrot.slane %v7630, 7
      %v7633 = vshll.u32 %v7576, 16
      %v7635 = vor.u32 %v7632, %v7633
      %v7636 = vsel %vm1931, %v7628, %v7635
      %v7637 = vrot.slane %v7632, 4
      %v7639 = vshrl.u32 %v7577, 16
      %v7641 = vrot.slane %v7639, 7
      %v7642 = vshll.u32 %v7577, 16
      %v7644 = vor.u32 %v7641, %v7642
      %v7645 = vsel %vm1931, %v7637, %v7644
      %v7646 = vrot.slane %v7641, 4
      %v7648 = vshrl.u32 %v7578, 16
      %v7650 = vrot.slane %v7648, 7
      %v7651 = vshll.u32 %v7578, 16
      %v7653 = vor.u32 %v7650, %v7651
      %v7654 = vsel %vm1931, %v7646, %v7653
      %v7655 = vrot.slane %v7650, 4
      %v7657 = vshrl.u32 %v7579, 16
      %v7659 = vrot.slane %v7657, 7
      %v7660 = vshll.u32 %v7579, 16
      %v7662 = vor.u32 %v7659, %v7660
      %v7663 = vsel %vm1931, %v7655, %v7662
      %v7664 = vrot.slane %v7659, 4
      %v7666 = vshrl.u32 %v7580, 16
      %v7668 = vrot.slane %v7666, 7
      %v7669 = vshll.u32 %v7580, 16
      %v7671 = vor.u32 %v7668, %v7669
      %v7672 = vsel %vm1931, %v7664, %v7671
      %v7673 = vrot.slane %v7668, 4
      %v7675 = vshrl.u32 %v7581, 16
      %v7677 = vrot.slane %v7675, 7
      %v7678 = vshll.u32 %v7581, 16
      %v7680 = vor.u32 %v7677, %v7678
      %v7681 = vsel %vm1931, %v7673, %v7680
      %v7682 = vrot.slane %v7677, 4
      %v7684 = vshrl.u32 %v7582, 16
      %v7686 = vrot.slane %v7684, 7
      %v7687 = vshll.u32 %v7582, 16
      %v7689 = vor.u32 %v7686, %v7687
      %v7690 = vsel %vm1931, %v7682, %v7689
      %v7691 = vrot.slane %v7686, 4
      %v7693 = vshrl.u32 %v7583, 16
      %v7695 = vrot.slane %v7693, 7
      %v7696 = vshll.u32 %v7583, 16
      %v7698 = vor.u32 %v7695, %v7696
      %v7699 = vsel %vm1931, %v7691, %v7698
      %v7700 = vrot.slane %v7695, 4
      %v7702 = vshrl.u32 %v7584, 16
      %v7704 = vrot.slane %v7702, 7
      %v7705 = vshll.u32 %v7584, 16
      %v7707 = vor.u32 %v7704, %v7705
      %v7708 = vsel %vm1931, %v7700, %v7707
      %v7709 = vrot.slane %v7704, 4
      %v7711 = vshrl.u32 %v7585, 16
      %v7713 = vrot.slane %v7711, 7
      %v7714 = vshll.u32 %v7585, 16
      %v7716 = vor.u32 %v7713, %v7714
      %v7717 = vsel %vm1931, %v7709, %v7716
      %v7718 = vrot.slane %v7713, 4
      %v7720 = vshrl.u32 %v7586, 16
      %v7722 = vrot.slane %v7720, 7
      %v7723 = vshll.u32 %v7586, 16
      %v7725 = vor.u32 %v7722, %v7723
      %v7726 = vsel %vm1931, %v7718, %v7725
      %v7727 = vrot.slane %v7722, 4
      %v7729 = vshrl.u32 %v7587, 16
      %v7731 = vrot.slane %v7729, 7
      %v7732 = vshll.u32 %v7587, 16
      %v7734 = vor.u32 %v7731, %v7732
      %v7735 = vsel %vm1931, %v7727, %v7734
      %v7736 = vrot.slane %v7731, 4
      %v7738 = vshrl.u32 %v7588, 16
      %v7740 = vrot.slane %v7738, 7
      %v7741 = vshll.u32 %v7588, 16
      %v7743 = vor.u32 %v7740, %v7741
      %v7744 = vsel %vm1931, %v7736, %v7743
      %v7745 = vrot.slane %v7740, 4
      %v7747 = vshrl.u32 %v7589, 16
      %v7749 = vrot.slane %v7747, 7
      %v7750 = vshll.u32 %v7589, 16
      %v7752 = vor.u32 %v7749, %v7750
      %v7753 = vsel %vm1931, %v7745, %v7752
      %v7754 = vrot.slane %v7749, 4
      %v7756 = vshrl.u32 %v7590, 16
      %v7758 = vrot.slane %v7756, 7
      %v7759 = vshll.u32 %v7590, 16
      %v7761 = vor.u32 %v7758, %v7759
      %v7762 = vsel %vm1931, %v7754, %v7761
      %v7763 = vrot.slane %v7758, 4
      %v7765 = vshrl.u32 %v7591, 16
      %v7767 = vrot.slane %v7765, 7
      %v7768 = vshll.u32 %v7591, 16
      %v7770 = vor.u32 %v7767, %v7768
      %v7771 = vsel %vm1931, %v7763, %v7770
      %v7772 = vrot.slane %v7767, 4
      %v7774 = vshrl.u32 %v7592, 16
      %v7776 = vrot.slane %v7774, 7
      %v7777 = vshll.u32 %v7592, 16
      %v7779 = vor.u32 %v7776, %v7777
      %v7780 = vsel %vm1931, %v7772, %v7779
      %v7781 = vrot.slane %v7776, 4
      %v7783 = vshrl.u32 %v7593, 16
      %v7785 = vrot.slane %v7783, 7
      %v7786 = vshll.u32 %v7593, 16
      %v7788 = vor.u32 %v7785, %v7786
      %v7789 = vsel %vm1931, %v7781, %v7788
      %v7790 = vrot.slane %v7785, 4
      %v7792 = vshrl.u32 %v7594, 16
      %v7794 = vrot.slane %v7792, 7
      %v7795 = vshll.u32 %v7594, 16
      %v7797 = vor.u32 %v7794, %v7795
      %v7798 = vsel %vm1931, %v7790, %v7797
      %v7799 = vrot.slane %v7794, 4
      %v7801 = vshrl.u32 %v7595, 16
      %v7803 = vrot.slane %v7801, 7
      %v7804 = vshll.u32 %v7595, 16
      %v7806 = vor.u32 %v7803, %v7804
      %v7807 = vsel %vm1931, %v7799, %v7806
      %v7808 = vrot.slane %v7803, 4
      %v7810 = vshrl.u32 %v7596, 16
      %v7812 = vrot.slane %v7810, 7
      %v7813 = vshll.u32 %v7596, 16
      %v7815 = vor.u32 %v7812, %v7813
      %v7816 = vsel %vm1931, %v7808, %v7815
      %v7817 = vrot.slane %v7812, 4
      %v7819 = vshrl.u32 %v7597, 16
      %v7821 = vrot.slane %v7819, 7
      %v7822 = vshll.u32 %v7597, 16
      %v7824 = vor.u32 %v7821, %v7822
      %v7825 = vsel %vm1931, %v7817, %v7824
      %v7826 = vrot.slane %v7821, 4
      %v7828 = vshrl.u32 %v7598, 16
      %v7830 = vrot.slane %v7828, 7
      %v7831 = vshll.u32 %v7598, 16
      %v7833 = vor.u32 %v7830, %v7831
      %v7834 = vsel %vm1931, %v7826, %v7833
      %v7835 = vrot.slane %v7830, 4
      %v7837 = vshrl.u32 %v7599, 16
      %v7839 = vrot.slane %v7837, 7
      %v7840 = vshll.u32 %v7599, 16
      %v7842 = vor.u32 %v7839, %v7840
      %v7843 = vsel %vm1931, %v7835, %v7842
      %v7844 = vrot.slane %v7839, 4
      %v7846 = vshrl.u32 %v7600, 16
      %v7848 = vrot.slane %v7846, 7
      %v7849 = vshll.u32 %v7600, 16
      %v7851 = vor.u32 %v7848, %v7849
      %v7852 = vsel %vm1931, %v7844, %v7851
      %v7853 = vrot.slane %v7848, 4
      %v7855 = vshrl.u32 %v7601, 16
      %v7857 = vrot.slane %v7855, 7
      %v7858 = vshll.u32 %v7601, 16
      %v7860 = vor.u32 %v7857, %v7858
      %v7861 = vsel %vm1931, %v7853, %v7860
      %v7862 = vrot.slane %v7857, 4
      %v7864 = vshrl.u32 %v7602, 16
      %v7866 = vrot.slane %v7864, 7
      %v7867 = vshll.u32 %v7602, 16
      %v7869 = vor.u32 %v7866, %v7867
      %v7870 = vsel %vm1931, %v7862, %v7869
      %v7871 = vrot.slane %v7866, 4
      %v7873 = vshrl.u32 %v7603, 16
      %v7875 = vrot.slane %v7873, 7
      %v7876 = vshll.u32 %v7603, 16
      %v7878 = vor.u32 %v7875, %v7876
      %v7879 = vsel %vm1931, %v7871, %v7878
      %v7880 = vrot.slane %v7875, 4
      %v7882 = vshrl.u32 %v7604, 16
      %v7884 = vrot.slane %v7882, 7
      %v7885 = vshll.u32 %v7604, 16
      %v7887 = vor.u32 %v7884, %v7885
      %v7888 = vsel %vm1931, %v7880, %v7887
      %v7889 = vrot.slane %v7884, 4
      %v7891 = vshrl.u32 %v7605, 16
      %v7893 = vrot.slane %v7891, 7
      %v7894 = vshll.u32 %v7605, 16
      %v7896 = vor.u32 %v7893, %v7894
      %v7897 = vsel %vm1931, %v7889, %v7896
      %7898 = vrot.lane.b32.xlu0 %v7618, 24
      %v7899 = vpop.permute.xlu0 %7898
      %7900 = vrot.lane.b32.xlu0 %v7627, 24
      %v7901 = vpop.permute.xlu0 %7900
      %7902 = vrot.lane.b32.xlu0 %v7636, 24
      %v7903 = vpop.permute.xlu0 %7902
      %7904 = vrot.lane.b32.xlu0 %v7645, 24
      %v7905 = vpop.permute.xlu0 %7904
      %7906 = vrot.lane.b32.xlu0 %v7654, 24
      %v7907 = vpop.permute.xlu0 %7906
      %7908 = vrot.lane.b32.xlu0 %v7663, 24
      %v7909 = vpop.permute.xlu0 %7908
      %7910 = vrot.lane.b32.xlu0 %v7672, 24
      %v7911 = vpop.permute.xlu0 %7910
      %7912 = vrot.lane.b32.xlu0 %v7681, 24
      %v7913 = vpop.permute.xlu0 %7912
      %7914 = vrot.lane.b32.xlu0 %v7690, 24
      %v7915 = vpop.permute.xlu0 %7914
      %7916 = vrot.lane.b32.xlu0 %v7699, 24
      %v7917 = vpop.permute.xlu0 %7916
      %7918 = vrot.lane.b32.xlu0 %v7708, 24
      %v7919 = vpop.permute.xlu0 %7918
      %7920 = vrot.lane.b32.xlu0 %v7717, 24
      %v7921 = vpop.permute.xlu0 %7920
      %7922 = vrot.lane.b32.xlu0 %v7726, 24
      %v7923 = vpop.permute.xlu0 %7922
      %7924 = vrot.lane.b32.xlu0 %v7735, 24
      %v7925 = vpop.permute.xlu0 %7924
      %7926 = vrot.lane.b32.xlu0 %v7744, 24
      %v7927 = vpop.permute.xlu0 %7926
      %7928 = vrot.lane.b32.xlu0 %v7753, 24
      %v7929 = vpop.permute.xlu0 %7928
      %7930 = vrot.lane.b32.xlu0 %v7762, 24
      %v7931 = vpop.permute.xlu0 %7930
      %7932 = vrot.lane.b32.xlu0 %v7771, 24
      %v7933 = vpop.permute.xlu0 %7932
      %7934 = vrot.lane.b32.xlu0 %v7780, 24
      %v7935 = vpop.permute.xlu0 %7934
      %7936 = vrot.lane.b32.xlu0 %v7789, 24
      %v7937 = vpop.permute.xlu0 %7936
      %7938 = vrot.lane.b32.xlu0 %v7798, 24
      %v7939 = vpop.permute.xlu0 %7938
      %7940 = vrot.lane.b32.xlu0 %v7807, 24
      %v7941 = vpop.permute.xlu0 %7940
      %7942 = vrot.lane.b32.xlu0 %v7816, 24
      %v7943 = vpop.permute.xlu0 %7942
      %7944 = vrot.lane.b32.xlu0 %v7825, 24
      %v7945 = vpop.permute.xlu0 %7944
      %7946 = vrot.lane.b32.xlu0 %v7834, 24
      %v7947 = vpop.permute.xlu0 %7946
      %7948 = vrot.lane.b32.xlu0 %v7843, 24
      %v7949 = vpop.permute.xlu0 %7948
      %7950 = vrot.lane.b32.xlu0 %v7852, 24
      %v7951 = vpop.permute.xlu0 %7950
      %7952 = vrot.lane.b32.xlu0 %v7861, 24
      %v7953 = vpop.permute.xlu0 %7952
      %7954 = vrot.lane.b32.xlu0 %v7870, 24
      %v7955 = vpop.permute.xlu0 %7954
      %7956 = vrot.lane.b32.xlu0 %v7879, 24
      %v7957 = vpop.permute.xlu0 %7956
      %7958 = vrot.lane.b32.xlu0 %v7888, 24
      %v7959 = vpop.permute.xlu0 %7958
      %7960 = vrot.lane.b32.xlu0 %v7897, 24
      %v7961 = vpop.permute.xlu0 %7960
      %vm7994 = vcmask 257216
      %7995 = vst.msk [vmem:[#allocation5] sm:$0xf] %vm7994, %v7899
      %7996 = vst.msk [vmem:[#allocation5 + $0x4] sm:$0xf] %vm7994, %v7901
      %7997 = vst.msk [vmem:[#allocation5 + $0x8] sm:$0xf] %vm7994, %v7903
      %7998 = vst.msk [vmem:[#allocation5 + $0xc] sm:$0xf] %vm7994, %v7905
      %7999 = vst.msk [vmem:[#allocation5 + $0x10] sm:$0xf] %vm7994, %v7907
      %8000 = vst.msk [vmem:[#allocation5 + $0x14] sm:$0xf] %vm7994, %v7909
      %8001 = vst.msk [vmem:[#allocation5 + $0x18] sm:$0xf] %vm7994, %v7911
      %8002 = vst.msk [vmem:[#allocation5 + $0x1c] sm:$0xf] %vm7994, %v7913
      %8003 = vst.msk [vmem:[#allocation5 + $0x20] sm:$0xf] %vm7994, %v7915
      %8004 = vst.msk [vmem:[#allocation5 + $0x24] sm:$0xf] %vm7994, %v7917
      %8005 = vst.msk [vmem:[#allocation5 + $0x28] sm:$0xf] %vm7994, %v7919
      %8006 = vst.msk [vmem:[#allocation5 + $0x2c] sm:$0xf] %vm7994, %v7921
      %8007 = vst.msk [vmem:[#allocation5 + $0x30] sm:$0xf] %vm7994, %v7923
      %8008 = vst.msk [vmem:[#allocation5 + $0x34] sm:$0xf] %vm7994, %v7925
      %8009 = vst.msk [vmem:[#allocation5 + $0x38] sm:$0xf] %vm7994, %v7927
      %8010 = vst.msk [vmem:[#allocation5 + $0x3c] sm:$0xf] %vm7994, %v7929
      %8011 = vst.msk [vmem:[#allocation5 + $0x40] sm:$0xf] %vm7994, %v7931
      %8012 = vst.msk [vmem:[#allocation5 + $0x44] sm:$0xf] %vm7994, %v7933
      %8013 = vst.msk [vmem:[#allocation5 + $0x48] sm:$0xf] %vm7994, %v7935
      %8014 = vst.msk [vmem:[#allocation5 + $0x4c] sm:$0xf] %vm7994, %v7937
      %8015 = vst.msk [vmem:[#allocation5 + $0x50] sm:$0xf] %vm7994, %v7939
      %8016 = vst.msk [vmem:[#allocation5 + $0x54] sm:$0xf] %vm7994, %v7941
      %8017 = vst.msk [vmem:[#allocation5 + $0x58] sm:$0xf] %vm7994, %v7943
      %8018 = vst.msk [vmem:[#allocation5 + $0x5c] sm:$0xf] %vm7994, %v7945
      %8019 = vst.msk [vmem:[#allocation5 + $0x60] sm:$0xf] %vm7994, %v7947
      %8020 = vst.msk [vmem:[#allocation5 + $0x64] sm:$0xf] %vm7994, %v7949
      %8021 = vst.msk [vmem:[#allocation5 + $0x68] sm:$0xf] %vm7994, %v7951
      %8022 = vst.msk [vmem:[#allocation5 + $0x6c] sm:$0xf] %vm7994, %v7953
      %8023 = vst.msk [vmem:[#allocation5 + $0x70] sm:$0xf] %vm7994, %v7955
      %8024 = vst.msk [vmem:[#allocation5 + $0x74] sm:$0xf] %vm7994, %v7957
      %8025 = vst.msk [vmem:[#allocation5 + $0x78] sm:$0xf] %vm7994, %v7959
      %8026 = vst.msk [vmem:[#allocation5 + $0x7c] sm:$0xf] %vm7994, %v7961
      %v8027 = vld [vmem:[#allocation3 + $0x10] sm:$0xf]
      %v8028 = vld [vmem:[#allocation3 + $0x14] sm:$0xf]
      %v8029 = vld [vmem:[#allocation3 + $0x18] sm:$0xf]
      %v8030 = vld [vmem:[#allocation3 + $0x1c] sm:$0xf]
      %v8031 = vld [vmem:[#allocation3 + $0x20] sm:$0xf]
      %v8032 = vld [vmem:[#allocation3 + $0x24] sm:$0xf]
      %v8033 = vld [vmem:[#allocation3 + $0x28] sm:$0xf]
      %v8034 = vld [vmem:[#allocation3 + $0x2c] sm:$0xf]
      %v8035 = vld [vmem:[#allocation3 + $0x30] sm:$0xf]
      %v8036 = vld [vmem:[#allocation3 + $0x34] sm:$0xf]
      %v8037 = vld [vmem:[#allocation3 + $0x38] sm:$0xf]
      %v8038 = vld [vmem:[#allocation3 + $0x3c] sm:$0xf]
      %v8039 = vld [vmem:[#allocation3 + $0x40] sm:$0xf]
      %v8040 = vld [vmem:[#allocation3 + $0x44] sm:$0xf]
      %v8041 = vld [vmem:[#allocation3 + $0x48] sm:$0xf]
      %v8042 = vld [vmem:[#allocation3 + $0x4c] sm:$0xf]
      %v8043 = vld [vmem:[#allocation3 + $0x50] sm:$0xf]
      %v8044 = vld [vmem:[#allocation3 + $0x54] sm:$0xf]
      %v8045 = vld [vmem:[#allocation3 + $0x58] sm:$0xf]
      %v8046 = vld [vmem:[#allocation3 + $0x5c] sm:$0xf]
      %v8047 = vld [vmem:[#allocation3 + $0x60] sm:$0xf]
      %v8048 = vld [vmem:[#allocation3 + $0x64] sm:$0xf]
      %v8049 = vld [vmem:[#allocation3 + $0x68] sm:$0xf]
      %v8050 = vld [vmem:[#allocation3 + $0x6c] sm:$0xf]
      %v8051 = vld [vmem:[#allocation3 + $0x70] sm:$0xf]
      %v8052 = vld [vmem:[#allocation3 + $0x74] sm:$0xf]
      %v8053 = vld [vmem:[#allocation3 + $0x78] sm:$0xf]
      %v8054 = vld [vmem:[#allocation3 + $0x7c] sm:$0xf]
      %v8055 = vld [vmem:[#allocation3 + $0x80] sm:$0xf]
      %v8056 = vld [vmem:[#allocation3 + $0x84] sm:$0xf]
      %v8057 = vld [vmem:[#allocation3 + $0x88] sm:$0xf]
      %v8058 = vld [vmem:[#allocation3 + $0x8c] sm:$0xf]
      %8091 = vrot.lane.b32.xlu0 %v8027, 32
      %v8092 = vpop.permute.xlu0 %8091
      %8093 = vrot.lane.b32.xlu0 %v8028, 32
      %v8094 = vpop.permute.xlu0 %8093
      %8095 = vrot.lane.b32.xlu0 %v8029, 32
      %v8096 = vpop.permute.xlu0 %8095
      %8097 = vrot.lane.b32.xlu0 %v8030, 32
      %v8098 = vpop.permute.xlu0 %8097
      %8099 = vrot.lane.b32.xlu0 %v8031, 32
      %v8100 = vpop.permute.xlu0 %8099
      %8101 = vrot.lane.b32.xlu0 %v8032, 32
      %v8102 = vpop.permute.xlu0 %8101
      %8103 = vrot.lane.b32.xlu0 %v8033, 32
      %v8104 = vpop.permute.xlu0 %8103
      %8105 = vrot.lane.b32.xlu0 %v8034, 32
      %v8106 = vpop.permute.xlu0 %8105
      %8107 = vrot.lane.b32.xlu0 %v8035, 32
      %v8108 = vpop.permute.xlu0 %8107
      %8109 = vrot.lane.b32.xlu0 %v8036, 32
      %v8110 = vpop.permute.xlu0 %8109
      %8111 = vrot.lane.b32.xlu0 %v8037, 32
      %v8112 = vpop.permute.xlu0 %8111
      %8113 = vrot.lane.b32.xlu0 %v8038, 32
      %v8114 = vpop.permute.xlu0 %8113
      %8115 = vrot.lane.b32.xlu0 %v8039, 32
      %v8116 = vpop.permute.xlu0 %8115
      %8117 = vrot.lane.b32.xlu0 %v8040, 32
      %v8118 = vpop.permute.xlu0 %8117
      %8119 = vrot.lane.b32.xlu0 %v8041, 32
      %v8120 = vpop.permute.xlu0 %8119
      %8121 = vrot.lane.b32.xlu0 %v8042, 32
      %v8122 = vpop.permute.xlu0 %8121
      %8123 = vrot.lane.b32.xlu0 %v8043, 32
      %v8124 = vpop.permute.xlu0 %8123
      %8125 = vrot.lane.b32.xlu0 %v8044, 32
      %v8126 = vpop.permute.xlu0 %8125
      %8127 = vrot.lane.b32.xlu0 %v8045, 32
      %v8128 = vpop.permute.xlu0 %8127
      %8129 = vrot.lane.b32.xlu0 %v8046, 32
      %v8130 = vpop.permute.xlu0 %8129
      %8131 = vrot.lane.b32.xlu0 %v8047, 32
      %v8132 = vpop.permute.xlu0 %8131
      %8133 = vrot.lane.b32.xlu0 %v8048, 32
      %v8134 = vpop.permute.xlu0 %8133
      %8135 = vrot.lane.b32.xlu0 %v8049, 32
      %v8136 = vpop.permute.xlu0 %8135
      %8137 = vrot.lane.b32.xlu0 %v8050, 32
      %v8138 = vpop.permute.xlu0 %8137
      %8139 = vrot.lane.b32.xlu0 %v8051, 32
      %v8140 = vpop.permute.xlu0 %8139
      %8141 = vrot.lane.b32.xlu0 %v8052, 32
      %v8142 = vpop.permute.xlu0 %8141
      %8143 = vrot.lane.b32.xlu0 %v8053, 32
      %v8144 = vpop.permute.xlu0 %8143
      %8145 = vrot.lane.b32.xlu0 %v8054, 32
      %v8146 = vpop.permute.xlu0 %8145
      %8147 = vrot.lane.b32.xlu0 %v8055, 32
      %v8148 = vpop.permute.xlu0 %8147
      %8149 = vrot.lane.b32.xlu0 %v8056, 32
      %v8150 = vpop.permute.xlu0 %8149
      %8151 = vrot.lane.b32.xlu0 %v8057, 32
      %v8152 = vpop.permute.xlu0 %8151
      %8153 = vrot.lane.b32.xlu0 %v8058, 32
      %v8154 = vpop.permute.xlu0 %8153
      %vm8187 = vcmask 322816
      %8188 = vst.msk [vmem:[#allocation5] sm:$0xf] %vm8187, %v8092
      %8189 = vst.msk [vmem:[#allocation5 + $0x4] sm:$0xf] %vm8187, %v8094
      %8190 = vst.msk [vmem:[#allocation5 + $0x8] sm:$0xf] %vm8187, %v8096
      %8191 = vst.msk [vmem:[#allocation5 + $0xc] sm:$0xf] %vm8187, %v8098
      %8192 = vst.msk [vmem:[#allocation5 + $0x10] sm:$0xf] %vm8187, %v8100
      %8193 = vst.msk [vmem:[#allocation5 + $0x14] sm:$0xf] %vm8187, %v8102
      %8194 = vst.msk [vmem:[#allocation5 + $0x18] sm:$0xf] %vm8187, %v8104
      %8195 = vst.msk [vmem:[#allocation5 + $0x1c] sm:$0xf] %vm8187, %v8106
      %8196 = vst.msk [vmem:[#allocation5 + $0x20] sm:$0xf] %vm8187, %v8108
      %8197 = vst.msk [vmem:[#allocation5 + $0x24] sm:$0xf] %vm8187, %v8110
      %8198 = vst.msk [vmem:[#allocation5 + $0x28] sm:$0xf] %vm8187, %v8112
      %8199 = vst.msk [vmem:[#allocation5 + $0x2c] sm:$0xf] %vm8187, %v8114
      %8200 = vst.msk [vmem:[#allocation5 + $0x30] sm:$0xf] %vm8187, %v8116
      %8201 = vst.msk [vmem:[#allocation5 + $0x34] sm:$0xf] %vm8187, %v8118
      %8202 = vst.msk [vmem:[#allocation5 + $0x38] sm:$0xf] %vm8187, %v8120
      %8203 = vst.msk [vmem:[#allocation5 + $0x3c] sm:$0xf] %vm8187, %v8122
      %8204 = vst.msk [vmem:[#allocation5 + $0x40] sm:$0xf] %vm8187, %v8124
      %8205 = vst.msk [vmem:[#allocation5 + $0x44] sm:$0xf] %vm8187, %v8126
      %8206 = vst.msk [vmem:[#allocation5 + $0x48] sm:$0xf] %vm8187, %v8128
      %8207 = vst.msk [vmem:[#allocation5 + $0x4c] sm:$0xf] %vm8187, %v8130
      %8208 = vst.msk [vmem:[#allocation5 + $0x50] sm:$0xf] %vm8187, %v8132
      %8209 = vst.msk [vmem:[#allocation5 + $0x54] sm:$0xf] %vm8187, %v8134
      %8210 = vst.msk [vmem:[#allocation5 + $0x58] sm:$0xf] %vm8187, %v8136
      %8211 = vst.msk [vmem:[#allocation5 + $0x5c] sm:$0xf] %vm8187, %v8138
      %8212 = vst.msk [vmem:[#allocation5 + $0x60] sm:$0xf] %vm8187, %v8140
      %8213 = vst.msk [vmem:[#allocation5 + $0x64] sm:$0xf] %vm8187, %v8142
      %8214 = vst.msk [vmem:[#allocation5 + $0x68] sm:$0xf] %vm8187, %v8144
      %8215 = vst.msk [vmem:[#allocation5 + $0x6c] sm:$0xf] %vm8187, %v8146
      %8216 = vst.msk [vmem:[#allocation5 + $0x70] sm:$0xf] %vm8187, %v8148
      %8217 = vst.msk [vmem:[#allocation5 + $0x74] sm:$0xf] %vm8187, %v8150
      %8218 = vst.msk [vmem:[#allocation5 + $0x78] sm:$0xf] %vm8187, %v8152
      %8219 = vst.msk [vmem:[#allocation5 + $0x7c] sm:$0xf] %vm8187, %v8154
      %v8220 = vld [vmem:[#allocation3 + $0x10] sm:$0xf]
      %v8221 = vld [vmem:[#allocation3 + $0x14] sm:$0xf]
      %v8222 = vld [vmem:[#allocation3 + $0x18] sm:$0xf]
      %v8223 = vld [vmem:[#allocation3 + $0x1c] sm:$0xf]
      %v8224 = vld [vmem:[#allocation3 + $0x20] sm:$0xf]
      %v8225 = vld [vmem:[#allocation3 + $0x24] sm:$0xf]
      %v8226 = vld [vmem:[#allocation3 + $0x28] sm:$0xf]
      %v8227 = vld [vmem:[#allocation3 + $0x2c] sm:$0xf]
      %v8228 = vld [vmem:[#allocation3 + $0x30] sm:$0xf]
      %v8229 = vld [vmem:[#allocation3 + $0x34] sm:$0xf]
      %v8230 = vld [vmem:[#allocation3 + $0x38] sm:$0xf]
      %v8231 = vld [vmem:[#allocation3 + $0x3c] sm:$0xf]
      %v8232 = vld [vmem:[#allocation3 + $0x40] sm:$0xf]
      %v8233 = vld [vmem:[#allocation3 + $0x44] sm:$0xf]
      %v8234 = vld [vmem:[#allocation3 + $0x48] sm:$0xf]
      %v8235 = vld [vmem:[#allocation3 + $0x4c] sm:$0xf]
      %v8236 = vld [vmem:[#allocation3 + $0x50] sm:$0xf]
      %v8237 = vld [vmem:[#allocation3 + $0x54] sm:$0xf]
      %v8238 = vld [vmem:[#allocation3 + $0x58] sm:$0xf]
      %v8239 = vld [vmem:[#allocation3 + $0x5c] sm:$0xf]
      %v8240 = vld [vmem:[#allocation3 + $0x60] sm:$0xf]
      %v8241 = vld [vmem:[#allocation3 + $0x64] sm:$0xf]
      %v8242 = vld [vmem:[#allocation3 + $0x68] sm:$0xf]
      %v8243 = vld [vmem:[#allocation3 + $0x6c] sm:$0xf]
      %v8244 = vld [vmem:[#allocation3 + $0x70] sm:$0xf]
      %v8245 = vld [vmem:[#allocation3 + $0x74] sm:$0xf]
      %v8246 = vld [vmem:[#allocation3 + $0x78] sm:$0xf]
      %v8247 = vld [vmem:[#allocation3 + $0x7c] sm:$0xf]
      %v8248 = vld [vmem:[#allocation3 + $0x80] sm:$0xf]
      %v8249 = vld [vmem:[#allocation3 + $0x84] sm:$0xf]
      %v8250 = vld [vmem:[#allocation3 + $0x88] sm:$0xf]
      %v8251 = vld [vmem:[#allocation3 + $0x8c] sm:$0xf]
      %v8252 = vld [vmem:[#allocation3 + $0x90] sm:$0x1]
      %v8253 = vsel %vm2865, %v8220, 0
      %v8254 = vsel %vm2866, %v8221, 0
      %v8255 = vsel %vm2867, %v8222, 0
      %v8256 = vsel %vm2868, %v8223, 0
      %v8257 = vsel %vm2869, %v8224, 0
      %v8258 = vsel %vm2870, %v8225, 0
      %v8259 = vsel %vm2871, %v8226, 0
      %v8260 = vsel %vm2872, %v8227, 0
      %v8261 = vsel %vm2873, %v8228, 0
      %v8262 = vsel %vm2874, %v8229, 0
      %v8263 = vsel %vm2875, %v8230, 0
      %v8264 = vsel %vm2876, %v8231, 0
      %v8265 = vsel %vm2877, %v8232, 0
      %v8266 = vsel %vm2878, %v8233, 0
      %v8267 = vsel %vm2879, %v8234, 0
      %v8268 = vsel %vm2880, %v8235, 0
      %v8269 = vsel %vm2881, %v8236, 0
      %v8270 = vsel %vm2882, %v8237, 0
      %v8271 = vsel %vm2883, %v8238, 0
      %v8272 = vsel %vm2884, %v8239, 0
      %v8273 = vsel %vm2885, %v8240, 0
      %v8274 = vsel %vm2886, %v8241, 0
      %v8275 = vsel %vm2887, %v8242, 0
      %v8276 = vsel %vm2888, %v8243, 0
      %v8277 = vsel %vm2889, %v8244, 0
      %v8278 = vsel %vm2890, %v8245, 0
      %v8279 = vsel %vm2891, %v8246, 0
      %v8280 = vsel %vm2892, %v8247, 0
      %v8281 = vsel %vm2893, %v8248, 0
      %v8282 = vsel %vm2894, %v8249, 0
      %v8283 = vsel %vm2895, %v8250, 0
      %v8284 = vsel %vm2896, %v8251, 0
      %v8285 = vsel %vm2897, %v8252, 0
      %v8287 = vshrl.u32 %v8253, 16
      %v8289 = vrot.slane %v8287, 4
      %v8290 = vshll.u32 %v8253, 16
      %v8292 = vrot.slane %v8290, 5
      %v8293 = vor.u32 %v8289, %v8292
      %v8294 = vrot.slane %v8293, 4
      %v8296 = vshll.u32 %v8254, 16
      %v8298 = vrot.slane %v8296, 5
      %v8299 = vsel %vm1543, %v8294, %v8298
      %v8300 = vshrl.u32 %v8254, 16
      %v8302 = vrot.slane %v8300, 4
      %v8303 = vor.u32 %v8302, %v8298
      %v8304 = vrot.slane %v8303, 4
      %v8306 = vshll.u32 %v8255, 16
      %v8308 = vrot.slane %v8306, 5
      %v8309 = vsel %vm1543, %v8304, %v8308
      %v8310 = vshrl.u32 %v8255, 16
      %v8312 = vrot.slane %v8310, 4
      %v8313 = vor.u32 %v8312, %v8308
      %v8314 = vrot.slane %v8313, 4
      %v8316 = vshll.u32 %v8256, 16
      %v8318 = vrot.slane %v8316, 5
      %v8319 = vsel %vm1543, %v8314, %v8318
      %v8320 = vshrl.u32 %v8256, 16
      %v8322 = vrot.slane %v8320, 4
      %v8323 = vor.u32 %v8322, %v8318
      %v8324 = vrot.slane %v8323, 4
      %v8326 = vshll.u32 %v8257, 16
      %v8328 = vrot.slane %v8326, 5
      %v8329 = vsel %vm1543, %v8324, %v8328
      %v8330 = vshrl.u32 %v8257, 16
      %v8332 = vrot.slane %v8330, 4
      %v8333 = vor.u32 %v8332, %v8328
      %v8334 = vrot.slane %v8333, 4
      %v8336 = vshll.u32 %v8258, 16
      %v8338 = vrot.slane %v8336, 5
      %v8339 = vsel %vm1543, %v8334, %v8338
      %v8340 = vshrl.u32 %v8258, 16
      %v8342 = vrot.slane %v8340, 4
      %v8343 = vor.u32 %v8342, %v8338
      %v8344 = vrot.slane %v8343, 4
      %v8346 = vshll.u32 %v8259, 16
      %v8348 = vrot.slane %v8346, 5
      %v8349 = vsel %vm1543, %v8344, %v8348
      %v8350 = vshrl.u32 %v8259, 16
      %v8352 = vrot.slane %v8350, 4
      %v8353 = vor.u32 %v8352, %v8348
      %v8354 = vrot.slane %v8353, 4
      %v8356 = vshll.u32 %v8260, 16
      %v8358 = vrot.slane %v8356, 5
      %v8359 = vsel %vm1543, %v8354, %v8358
      %v8360 = vshrl.u32 %v8260, 16
      %v8362 = vrot.slane %v8360, 4
      %v8363 = vor.u32 %v8362, %v8358
      %v8364 = vrot.slane %v8363, 4
      %v8366 = vshll.u32 %v8261, 16
      %v8368 = vrot.slane %v8366, 5
      %v8369 = vsel %vm1543, %v8364, %v8368
      %v8370 = vshrl.u32 %v8261, 16
      %v8372 = vrot.slane %v8370, 4
      %v8373 = vor.u32 %v8372, %v8368
      %v8374 = vrot.slane %v8373, 4
      %v8376 = vshll.u32 %v8262, 16
      %v8378 = vrot.slane %v8376, 5
      %v8379 = vsel %vm1543, %v8374, %v8378
      %v8380 = vshrl.u32 %v8262, 16
      %v8382 = vrot.slane %v8380, 4
      %v8383 = vor.u32 %v8382, %v8378
      %v8384 = vrot.slane %v8383, 4
      %v8386 = vshll.u32 %v8263, 16
      %v8388 = vrot.slane %v8386, 5
      %v8389 = vsel %vm1543, %v8384, %v8388
      %v8390 = vshrl.u32 %v8263, 16
      %v8392 = vrot.slane %v8390, 4
      %v8393 = vor.u32 %v8392, %v8388
      %v8394 = vrot.slane %v8393, 4
      %v8396 = vshll.u32 %v8264, 16
      %v8398 = vrot.slane %v8396, 5
      %v8399 = vsel %vm1543, %v8394, %v8398
      %v8400 = vshrl.u32 %v8264, 16
      %v8402 = vrot.slane %v8400, 4
      %v8403 = vor.u32 %v8402, %v8398
      %v8404 = vrot.slane %v8403, 4
      %v8406 = vshll.u32 %v8265, 16
      %v8408 = vrot.slane %v8406, 5
      %v8409 = vsel %vm1543, %v8404, %v8408
      %v8410 = vshrl.u32 %v8265, 16
      %v8412 = vrot.slane %v8410, 4
      %v8413 = vor.u32 %v8412, %v8408
      %v8414 = vrot.slane %v8413, 4
      %v8416 = vshll.u32 %v8266, 16
      %v8418 = vrot.slane %v8416, 5
      %v8419 = vsel %vm1543, %v8414, %v8418
      %v8420 = vshrl.u32 %v8266, 16
      %v8422 = vrot.slane %v8420, 4
      %v8423 = vor.u32 %v8422, %v8418
      %v8424 = vrot.slane %v8423, 4
      %v8426 = vshll.u32 %v8267, 16
      %v8428 = vrot.slane %v8426, 5
      %v8429 = vsel %vm1543, %v8424, %v8428
      %v8430 = vshrl.u32 %v8267, 16
      %v8432 = vrot.slane %v8430, 4
      %v8433 = vor.u32 %v8432, %v8428
      %v8434 = vrot.slane %v8433, 4
      %v8436 = vshll.u32 %v8268, 16
      %v8438 = vrot.slane %v8436, 5
      %v8439 = vsel %vm1543, %v8434, %v8438
      %v8440 = vshrl.u32 %v8268, 16
      %v8442 = vrot.slane %v8440, 4
      %v8443 = vor.u32 %v8442, %v8438
      %v8444 = vrot.slane %v8443, 4
      %v8446 = vshll.u32 %v8269, 16
      %v8448 = vrot.slane %v8446, 5
      %v8449 = vsel %vm1543, %v8444, %v8448
      %v8450 = vshrl.u32 %v8269, 16
      %v8452 = vrot.slane %v8450, 4
      %v8453 = vor.u32 %v8452, %v8448
      %v8454 = vrot.slane %v8453, 4
      %v8456 = vshll.u32 %v8270, 16
      %v8458 = vrot.slane %v8456, 5
      %v8459 = vsel %vm1543, %v8454, %v8458
      %v8460 = vshrl.u32 %v8270, 16
      %v8462 = vrot.slane %v8460, 4
      %v8463 = vor.u32 %v8462, %v8458
      %v8464 = vrot.slane %v8463, 4
      %v8466 = vshll.u32 %v8271, 16
      %v8468 = vrot.slane %v8466, 5
      %v8469 = vsel %vm1543, %v8464, %v8468
      %v8470 = vshrl.u32 %v8271, 16
      %v8472 = vrot.slane %v8470, 4
      %v8473 = vor.u32 %v8472, %v8468
      %v8474 = vrot.slane %v8473, 4
      %v8476 = vshll.u32 %v8272, 16
      %v8478 = vrot.slane %v8476, 5
      %v8479 = vsel %vm1543, %v8474, %v8478
      %v8480 = vshrl.u32 %v8272, 16
      %v8482 = vrot.slane %v8480, 4
      %v8483 = vor.u32 %v8482, %v8478
      %v8484 = vrot.slane %v8483, 4
      %v8486 = vshll.u32 %v8273, 16
      %v8488 = vrot.slane %v8486, 5
      %v8489 = vsel %vm1543, %v8484, %v8488
      %v8490 = vshrl.u32 %v8273, 16
      %v8492 = vrot.slane %v8490, 4
      %v8493 = vor.u32 %v8492, %v8488
      %v8494 = vrot.slane %v8493, 4
      %v8496 = vshll.u32 %v8274, 16
      %v8498 = vrot.slane %v8496, 5
      %v8499 = vsel %vm1543, %v8494, %v8498
      %v8500 = vshrl.u32 %v8274, 16
      %v8502 = vrot.slane %v8500, 4
      %v8503 = vor.u32 %v8502, %v8498
      %v8504 = vrot.slane %v8503, 4
      %v8506 = vshll.u32 %v8275, 16
      %v8508 = vrot.slane %v8506, 5
      %v8509 = vsel %vm1543, %v8504, %v8508
      %v8510 = vshrl.u32 %v8275, 16
      %v8512 = vrot.slane %v8510, 4
      %v8513 = vor.u32 %v8512, %v8508
      %v8514 = vrot.slane %v8513, 4
      %v8516 = vshll.u32 %v8276, 16
      %v8518 = vrot.slane %v8516, 5
      %v8519 = vsel %vm1543, %v8514, %v8518
      %v8520 = vshrl.u32 %v8276, 16
      %v8522 = vrot.slane %v8520, 4
      %v8523 = vor.u32 %v8522, %v8518
      %v8524 = vrot.slane %v8523, 4
      %v8526 = vshll.u32 %v8277, 16
      %v8528 = vrot.slane %v8526, 5
      %v8529 = vsel %vm1543, %v8524, %v8528
      %v8530 = vshrl.u32 %v8277, 16
      %v8532 = vrot.slane %v8530, 4
      %v8533 = vor.u32 %v8532, %v8528
      %v8534 = vrot.slane %v8533, 4
      %v8536 = vshll.u32 %v8278, 16
      %v8538 = vrot.slane %v8536, 5
      %v8539 = vsel %vm1543, %v8534, %v8538
      %v8540 = vshrl.u32 %v8278, 16
      %v8542 = vrot.slane %v8540, 4
      %v8543 = vor.u32 %v8542, %v8538
      %v8544 = vrot.slane %v8543, 4
      %v8546 = vshll.u32 %v8279, 16
      %v8548 = vrot.slane %v8546, 5
      %v8549 = vsel %vm1543, %v8544, %v8548
      %v8550 = vshrl.u32 %v8279, 16
      %v8552 = vrot.slane %v8550, 4
      %v8553 = vor.u32 %v8552, %v8548
      %v8554 = vrot.slane %v8553, 4
      %v8556 = vshll.u32 %v8280, 16
      %v8558 = vrot.slane %v8556, 5
      %v8559 = vsel %vm1543, %v8554, %v8558
      %v8560 = vshrl.u32 %v8280, 16
      %v8562 = vrot.slane %v8560, 4
      %v8563 = vor.u32 %v8562, %v8558
      %v8564 = vrot.slane %v8563, 4
      %v8566 = vshll.u32 %v8281, 16
      %v8568 = vrot.slane %v8566, 5
      %v8569 = vsel %vm1543, %v8564, %v8568
      %v8570 = vshrl.u32 %v8281, 16
      %v8572 = vrot.slane %v8570, 4
      %v8573 = vor.u32 %v8572, %v8568
      %v8574 = vrot.slane %v8573, 4
      %v8576 = vshll.u32 %v8282, 16
      %v8578 = vrot.slane %v8576, 5
      %v8579 = vsel %vm1543, %v8574, %v8578
      %v8580 = vshrl.u32 %v8282, 16
      %v8582 = vrot.slane %v8580, 4
      %v8583 = vor.u32 %v8582, %v8578
      %v8584 = vrot.slane %v8583, 4
      %v8586 = vshll.u32 %v8283, 16
      %v8588 = vrot.slane %v8586, 5
      %v8589 = vsel %vm1543, %v8584, %v8588
      %v8590 = vshrl.u32 %v8283, 16
      %v8592 = vrot.slane %v8590, 4
      %v8593 = vor.u32 %v8592, %v8588
      %v8594 = vrot.slane %v8593, 4
      %v8596 = vshll.u32 %v8284, 16
      %v8598 = vrot.slane %v8596, 5
      %v8599 = vsel %vm1543, %v8594, %v8598
      %v8600 = vshrl.u32 %v8284, 16
      %v8602 = vrot.slane %v8600, 4
      %v8603 = vor.u32 %v8602, %v8598
      %v8604 = vrot.slane %v8603, 4
      %v8606 = vshll.u32 %v8285, 16
      %v8608 = vrot.slane %v8606, 5
      %v8609 = vsel %vm1543, %v8604, %v8608
      %8610 = vrot.lane.b32.xlu0 %v8299, 40
      %v8611 = vpop.permute.xlu0 %8610
      %8612 = vrot.lane.b32.xlu0 %v8309, 40
      %v8613 = vpop.permute.xlu0 %8612
      %8614 = vrot.lane.b32.xlu0 %v8319, 40
      %v8615 = vpop.permute.xlu0 %8614
      %8616 = vrot.lane.b32.xlu0 %v8329, 40
      %v8617 = vpop.permute.xlu0 %8616
      %8618 = vrot.lane.b32.xlu0 %v8339, 40
      %v8619 = vpop.permute.xlu0 %8618
      %8620 = vrot.lane.b32.xlu0 %v8349, 40
      %v8621 = vpop.permute.xlu0 %8620
      %8622 = vrot.lane.b32.xlu0 %v8359, 40
      %v8623 = vpop.permute.xlu0 %8622
      %8624 = vrot.lane.b32.xlu0 %v8369, 40
      %v8625 = vpop.permute.xlu0 %8624
      %8626 = vrot.lane.b32.xlu0 %v8379, 40
      %v8627 = vpop.permute.xlu0 %8626
      %8628 = vrot.lane.b32.xlu0 %v8389, 40
      %v8629 = vpop.permute.xlu0 %8628
      %8630 = vrot.lane.b32.xlu0 %v8399, 40
      %v8631 = vpop.permute.xlu0 %8630
      %8632 = vrot.lane.b32.xlu0 %v8409, 40
      %v8633 = vpop.permute.xlu0 %8632
      %8634 = vrot.lane.b32.xlu0 %v8419, 40
      %v8635 = vpop.permute.xlu0 %8634
      %8636 = vrot.lane.b32.xlu0 %v8429, 40
      %v8637 = vpop.permute.xlu0 %8636
      %8638 = vrot.lane.b32.xlu0 %v8439, 40
      %v8639 = vpop.permute.xlu0 %8638
      %8640 = vrot.lane.b32.xlu0 %v8449, 40
      %v8641 = vpop.permute.xlu0 %8640
      %8642 = vrot.lane.b32.xlu0 %v8459, 40
      %v8643 = vpop.permute.xlu0 %8642
      %8644 = vrot.lane.b32.xlu0 %v8469, 40
      %v8645 = vpop.permute.xlu0 %8644
      %8646 = vrot.lane.b32.xlu0 %v8479, 40
      %v8647 = vpop.permute.xlu0 %8646
      %8648 = vrot.lane.b32.xlu0 %v8489, 40
      %v8649 = vpop.permute.xlu0 %8648
      %8650 = vrot.lane.b32.xlu0 %v8499, 40
      %v8651 = vpop.permute.xlu0 %8650
      %8652 = vrot.lane.b32.xlu0 %v8509, 40
      %v8653 = vpop.permute.xlu0 %8652
      %8654 = vrot.lane.b32.xlu0 %v8519, 40
      %v8655 = vpop.permute.xlu0 %8654
      %8656 = vrot.lane.b32.xlu0 %v8529, 40
      %v8657 = vpop.permute.xlu0 %8656
      %8658 = vrot.lane.b32.xlu0 %v8539, 40
      %v8659 = vpop.permute.xlu0 %8658
      %8660 = vrot.lane.b32.xlu0 %v8549, 40
      %v8661 = vpop.permute.xlu0 %8660
      %8662 = vrot.lane.b32.xlu0 %v8559, 40
      %v8663 = vpop.permute.xlu0 %8662
      %8664 = vrot.lane.b32.xlu0 %v8569, 40
      %v8665 = vpop.permute.xlu0 %8664
      %8666 = vrot.lane.b32.xlu0 %v8579, 40
      %v8667 = vpop.permute.xlu0 %8666
      %8668 = vrot.lane.b32.xlu0 %v8589, 40
      %v8669 = vpop.permute.xlu0 %8668
      %8670 = vrot.lane.b32.xlu0 %v8599, 40
      %v8671 = vpop.permute.xlu0 %8670
      %8672 = vrot.lane.b32.xlu0 %v8609, 40
      %v8673 = vpop.permute.xlu0 %8672
      %vm8706 = vcmask 388416
      %8707 = vst.msk [vmem:[#allocation5] sm:$0xf] %vm8706, %v8611
      %8708 = vst.msk [vmem:[#allocation5 + $0x4] sm:$0xf] %vm8706, %v8613
      %8709 = vst.msk [vmem:[#allocation5 + $0x8] sm:$0xf] %vm8706, %v8615
      %8710 = vst.msk [vmem:[#allocation5 + $0xc] sm:$0xf] %vm8706, %v8617
      %8711 = vst.msk [vmem:[#allocation5 + $0x10] sm:$0xf] %vm8706, %v8619
      %8712 = vst.msk [vmem:[#allocation5 + $0x14] sm:$0xf] %vm8706, %v8621
      %8713 = vst.msk [vmem:[#allocation5 + $0x18] sm:$0xf] %vm8706, %v8623
      %8714 = vst.msk [vmem:[#allocation5 + $0x1c] sm:$0xf] %vm8706, %v8625
      %8715 = vst.msk [vmem:[#allocation5 + $0x20] sm:$0xf] %vm8706, %v8627
      %8716 = vst.msk [vmem:[#allocation5 + $0x24] sm:$0xf] %vm8706, %v8629
      %8717 = vst.msk [vmem:[#allocation5 + $0x28] sm:$0xf] %vm8706, %v8631
      %8718 = vst.msk [vmem:[#allocation5 + $0x2c] sm:$0xf] %vm8706, %v8633
      %8719 = vst.msk [vmem:[#allocation5 + $0x30] sm:$0xf] %vm8706, %v8635
      %8720 = vst.msk [vmem:[#allocation5 + $0x34] sm:$0xf] %vm8706, %v8637
      %8721 = vst.msk [vmem:[#allocation5 + $0x38] sm:$0xf] %vm8706, %v8639
      %8722 = vst.msk [vmem:[#allocation5 + $0x3c] sm:$0xf] %vm8706, %v8641
      %8723 = vst.msk [vmem:[#allocation5 + $0x40] sm:$0xf] %vm8706, %v8643
      %8724 = vst.msk [vmem:[#allocation5 + $0x44] sm:$0xf] %vm8706, %v8645
      %8725 = vst.msk [vmem:[#allocation5 + $0x48] sm:$0xf] %vm8706, %v8647
      %8726 = vst.msk [vmem:[#allocation5 + $0x4c] sm:$0xf] %vm8706, %v8649
      %8727 = vst.msk [vmem:[#allocation5 + $0x50] sm:$0xf] %vm8706, %v8651
      %8728 = vst.msk [vmem:[#allocation5 + $0x54] sm:$0xf] %vm8706, %v8653
      %8729 = vst.msk [vmem:[#allocation5 + $0x58] sm:$0xf] %vm8706, %v8655
      %8730 = vst.msk [vmem:[#allocation5 + $0x5c] sm:$0xf] %vm8706, %v8657
      %8731 = vst.msk [vmem:[#allocation5 + $0x60] sm:$0xf] %vm8706, %v8659
      %8732 = vst.msk [vmem:[#allocation5 + $0x64] sm:$0xf] %vm8706, %v8661
      %8733 = vst.msk [vmem:[#allocation5 + $0x68] sm:$0xf] %vm8706, %v8663
      %8734 = vst.msk [vmem:[#allocation5 + $0x6c] sm:$0xf] %vm8706, %v8665
      %8735 = vst.msk [vmem:[#allocation5 + $0x70] sm:$0xf] %vm8706, %v8667
      %8736 = vst.msk [vmem:[#allocation5 + $0x74] sm:$0xf] %vm8706, %v8669
      %8737 = vst.msk [vmem:[#allocation5 + $0x78] sm:$0xf] %vm8706, %v8671
      %8738 = vst.msk [vmem:[#allocation5 + $0x7c] sm:$0xf] %vm8706, %v8673
      %v8739 = vld [vmem:[#allocation3 + $0x14] sm:$0x8]
      %v8740 = vld [vmem:[#allocation3 + $0x18] sm:$0xf]
      %v8741 = vld [vmem:[#allocation3 + $0x1c] sm:$0xf]
      %v8742 = vld [vmem:[#allocation3 + $0x20] sm:$0xf]
      %v8743 = vld [vmem:[#allocation3 + $0x24] sm:$0xf]
      %v8744 = vld [vmem:[#allocation3 + $0x28] sm:$0xf]
      %v8745 = vld [vmem:[#allocation3 + $0x2c] sm:$0xf]
      %v8746 = vld [vmem:[#allocation3 + $0x30] sm:$0xf]
      %v8747 = vld [vmem:[#allocation3 + $0x34] sm:$0xf]
      %v8748 = vld [vmem:[#allocation3 + $0x38] sm:$0xf]
      %v8749 = vld [vmem:[#allocation3 + $0x3c] sm:$0xf]
      %v8750 = vld [vmem:[#allocation3 + $0x40] sm:$0xf]
      %v8751 = vld [vmem:[#allocation3 + $0x44] sm:$0xf]
      %v8752 = vld [vmem:[#allocation3 + $0x48] sm:$0xf]
      %v8753 = vld [vmem:[#allocation3 + $0x4c] sm:$0xf]
      %v8754 = vld [vmem:[#allocation3 + $0x50] sm:$0xf]
      %v8755 = vld [vmem:[#allocation3 + $0x54] sm:$0xf]
      %v8756 = vld [vmem:[#allocation3 + $0x58] sm:$0xf]
      %v8757 = vld [vmem:[#allocation3 + $0x5c] sm:$0xf]
      %v8758 = vld [vmem:[#allocation3 + $0x60] sm:$0xf]
      %v8759 = vld [vmem:[#allocation3 + $0x64] sm:$0xf]
      %v8760 = vld [vmem:[#allocation3 + $0x68] sm:$0xf]
      %v8761 = vld [vmem:[#allocation3 + $0x6c] sm:$0xf]
      %v8762 = vld [vmem:[#allocation3 + $0x70] sm:$0xf]
      %v8763 = vld [vmem:[#allocation3 + $0x74] sm:$0xf]
      %v8764 = vld [vmem:[#allocation3 + $0x78] sm:$0xf]
      %v8765 = vld [vmem:[#allocation3 + $0x7c] sm:$0xf]
      %v8766 = vld [vmem:[#allocation3 + $0x80] sm:$0xf]
      %v8767 = vld [vmem:[#allocation3 + $0x84] sm:$0xf]
      %v8768 = vld [vmem:[#allocation3 + $0x88] sm:$0xf]
      %v8769 = vld [vmem:[#allocation3 + $0x8c] sm:$0xf]
      %v8770 = vld [vmem:[#allocation3 + $0x90] sm:$0xf]
      %v8771 = vld [vmem:[#allocation3 + $0x94] sm:$0xf]
      %v8772 = vsel %vm1863, %v8739, 0
      %v8773 = vsel %vm1864, %v8740, 0
      %v8774 = vsel %vm1865, %v8741, 0
      %v8775 = vsel %vm1866, %v8742, 0
      %v8776 = vsel %vm1867, %v8743, 0
      %v8777 = vsel %vm1868, %v8744, 0
      %v8778 = vsel %vm1869, %v8745, 0
      %v8779 = vsel %vm1870, %v8746, 0
      %v8780 = vsel %vm1871, %v8747, 0
      %v8781 = vsel %vm1872, %v8748, 0
      %v8782 = vsel %vm1873, %v8749, 0
      %v8783 = vsel %vm1874, %v8750, 0
      %v8784 = vsel %vm1875, %v8751, 0
      %v8785 = vsel %vm1876, %v8752, 0
      %v8786 = vsel %vm1877, %v8753, 0
      %v8787 = vsel %vm1878, %v8754, 0
      %v8788 = vsel %vm1879, %v8755, 0
      %v8789 = vsel %vm1880, %v8756, 0
      %v8790 = vsel %vm1881, %v8757, 0
      %v8791 = vsel %vm1882, %v8758, 0
      %v8792 = vsel %vm1883, %v8759, 0
      %v8793 = vsel %vm1884, %v8760, 0
      %v8794 = vsel %vm1885, %v8761, 0
      %v8795 = vsel %vm1886, %v8762, 0
      %v8796 = vsel %vm1887, %v8763, 0
      %v8797 = vsel %vm1888, %v8764, 0
      %v8798 = vsel %vm1889, %v8765, 0
      %v8799 = vsel %vm1890, %v8766, 0
      %v8800 = vsel %vm1891, %v8767, 0
      %v8801 = vsel %vm1892, %v8768, 0
      %v8802 = vsel %vm1893, %v8769, 0
      %v8803 = vsel %vm1894, %v8770, 0
      %v8804 = vsel %vm1895, %v8771, 0
      %v8806 = vshrl.u32 %v8772, 16
      %v8808 = vrot.slane %v8806, 7
      %v8809 = vrot.slane %v8808, 4
      %v8811 = vshrl.u32 %v8773, 16
      %v8813 = vrot.slane %v8811, 7
      %v8814 = vshll.u32 %v8773, 16
      %v8816 = vor.u32 %v8813, %v8814
      %v8817 = vsel %vm1931, %v8809, %v8816
      %v8818 = vrot.slane %v8813, 4
      %v8820 = vshrl.u32 %v8774, 16
      %v8822 = vrot.slane %v8820, 7
      %v8823 = vshll.u32 %v8774, 16
      %v8825 = vor.u32 %v8822, %v8823
      %v8826 = vsel %vm1931, %v8818, %v8825
      %v8827 = vrot.slane %v8822, 4
      %v8829 = vshrl.u32 %v8775, 16
      %v8831 = vrot.slane %v8829, 7
      %v8832 = vshll.u32 %v8775, 16
      %v8834 = vor.u32 %v8831, %v8832
      %v8835 = vsel %vm1931, %v8827, %v8834
      %v8836 = vrot.slane %v8831, 4
      %v8838 = vshrl.u32 %v8776, 16
      %v8840 = vrot.slane %v8838, 7
      %v8841 = vshll.u32 %v8776, 16
      %v8843 = vor.u32 %v8840, %v8841
      %v8844 = vsel %vm1931, %v8836, %v8843
      %v8845 = vrot.slane %v8840, 4
      %v8847 = vshrl.u32 %v8777, 16
      %v8849 = vrot.slane %v8847, 7
      %v8850 = vshll.u32 %v8777, 16
      %v8852 = vor.u32 %v8849, %v8850
      %v8853 = vsel %vm1931, %v8845, %v8852
      %v8854 = vrot.slane %v8849, 4
      %v8856 = vshrl.u32 %v8778, 16
      %v8858 = vrot.slane %v8856, 7
      %v8859 = vshll.u32 %v8778, 16
      %v8861 = vor.u32 %v8858, %v8859
      %v8862 = vsel %vm1931, %v8854, %v8861
      %v8863 = vrot.slane %v8858, 4
      %v8865 = vshrl.u32 %v8779, 16
      %v8867 = vrot.slane %v8865, 7
      %v8868 = vshll.u32 %v8779, 16
      %v8870 = vor.u32 %v8867, %v8868
      %v8871 = vsel %vm1931, %v8863, %v8870
      %v8872 = vrot.slane %v8867, 4
      %v8874 = vshrl.u32 %v8780, 16
      %v8876 = vrot.slane %v8874, 7
      %v8877 = vshll.u32 %v8780, 16
      %v8879 = vor.u32 %v8876, %v8877
      %v8880 = vsel %vm1931, %v8872, %v8879
      %v8881 = vrot.slane %v8876, 4
      %v8883 = vshrl.u32 %v8781, 16
      %v8885 = vrot.slane %v8883, 7
      %v8886 = vshll.u32 %v8781, 16
      %v8888 = vor.u32 %v8885, %v8886
      %v8889 = vsel %vm1931, %v8881, %v8888
      %v8890 = vrot.slane %v8885, 4
      %v8892 = vshrl.u32 %v8782, 16
      %v8894 = vrot.slane %v8892, 7
      %v8895 = vshll.u32 %v8782, 16
      %v8897 = vor.u32 %v8894, %v8895
      %v8898 = vsel %vm1931, %v8890, %v8897
      %v8899 = vrot.slane %v8894, 4
      %v8901 = vshrl.u32 %v8783, 16
      %v8903 = vrot.slane %v8901, 7
      %v8904 = vshll.u32 %v8783, 16
      %v8906 = vor.u32 %v8903, %v8904
      %v8907 = vsel %vm1931, %v8899, %v8906
      %v8908 = vrot.slane %v8903, 4
      %v8910 = vshrl.u32 %v8784, 16
      %v8912 = vrot.slane %v8910, 7
      %v8913 = vshll.u32 %v8784, 16
      %v8915 = vor.u32 %v8912, %v8913
      %v8916 = vsel %vm1931, %v8908, %v8915
      %v8917 = vrot.slane %v8912, 4
      %v8919 = vshrl.u32 %v8785, 16
      %v8921 = vrot.slane %v8919, 7
      %v8922 = vshll.u32 %v8785, 16
      %v8924 = vor.u32 %v8921, %v8922
      %v8925 = vsel %vm1931, %v8917, %v8924
      %v8926 = vrot.slane %v8921, 4
      %v8928 = vshrl.u32 %v8786, 16
      %v8930 = vrot.slane %v8928, 7
      %v8931 = vshll.u32 %v8786, 16
      %v8933 = vor.u32 %v8930, %v8931
      %v8934 = vsel %vm1931, %v8926, %v8933
      %v8935 = vrot.slane %v8930, 4
      %v8937 = vshrl.u32 %v8787, 16
      %v8939 = vrot.slane %v8937, 7
      %v8940 = vshll.u32 %v8787, 16
      %v8942 = vor.u32 %v8939, %v8940
      %v8943 = vsel %vm1931, %v8935, %v8942
      %v8944 = vrot.slane %v8939, 4
      %v8946 = vshrl.u32 %v8788, 16
      %v8948 = vrot.slane %v8946, 7
      %v8949 = vshll.u32 %v8788, 16
      %v8951 = vor.u32 %v8948, %v8949
      %v8952 = vsel %vm1931, %v8944, %v8951
      %v8953 = vrot.slane %v8948, 4
      %v8955 = vshrl.u32 %v8789, 16
      %v8957 = vrot.slane %v8955, 7
      %v8958 = vshll.u32 %v8789, 16
      %v8960 = vor.u32 %v8957, %v8958
      %v8961 = vsel %vm1931, %v8953, %v8960
      %v8962 = vrot.slane %v8957, 4
      %v8964 = vshrl.u32 %v8790, 16
      %v8966 = vrot.slane %v8964, 7
      %v8967 = vshll.u32 %v8790, 16
      %v8969 = vor.u32 %v8966, %v8967
      %v8970 = vsel %vm1931, %v8962, %v8969
      %v8971 = vrot.slane %v8966, 4
      %v8973 = vshrl.u32 %v8791, 16
      %v8975 = vrot.slane %v8973, 7
      %v8976 = vshll.u32 %v8791, 16
      %v8978 = vor.u32 %v8975, %v8976
      %v8979 = vsel %vm1931, %v8971, %v8978
      %v8980 = vrot.slane %v8975, 4
      %v8982 = vshrl.u32 %v8792, 16
      %v8984 = vrot.slane %v8982, 7
      %v8985 = vshll.u32 %v8792, 16
      %v8987 = vor.u32 %v8984, %v8985
      %v8988 = vsel %vm1931, %v8980, %v8987
      %v8989 = vrot.slane %v8984, 4
      %v8991 = vshrl.u32 %v8793, 16
      %v8993 = vrot.slane %v8991, 7
      %v8994 = vshll.u32 %v8793, 16
      %v8996 = vor.u32 %v8993, %v8994
      %v8997 = vsel %vm1931, %v8989, %v8996
      %v8998 = vrot.slane %v8993, 4
      %v9000 = vshrl.u32 %v8794, 16
      %v9002 = vrot.slane %v9000, 7
      %v9003 = vshll.u32 %v8794, 16
      %v9005 = vor.u32 %v9002, %v9003
      %v9006 = vsel %vm1931, %v8998, %v9005
      %v9007 = vrot.slane %v9002, 4
      %v9009 = vshrl.u32 %v8795, 16
      %v9011 = vrot.slane %v9009, 7
      %v9012 = vshll.u32 %v8795, 16
      %v9014 = vor.u32 %v9011, %v9012
      %v9015 = vsel %vm1931, %v9007, %v9014
      %v9016 = vrot.slane %v9011, 4
      %v9018 = vshrl.u32 %v8796, 16
      %v9020 = vrot.slane %v9018, 7
      %v9021 = vshll.u32 %v8796, 16
      %v9023 = vor.u32 %v9020, %v9021
      %v9024 = vsel %vm1931, %v9016, %v9023
      %v9025 = vrot.slane %v9020, 4
      %v9027 = vshrl.u32 %v8797, 16
      %v9029 = vrot.slane %v9027, 7
      %v9030 = vshll.u32 %v8797, 16
      %v9032 = vor.u32 %v9029, %v9030
      %v9033 = vsel %vm1931, %v9025, %v9032
      %v9034 = vrot.slane %v9029, 4
      %v9036 = vshrl.u32 %v8798, 16
      %v9038 = vrot.slane %v9036, 7
      %v9039 = vshll.u32 %v8798, 16
      %v9041 = vor.u32 %v9038, %v9039
      %v9042 = vsel %vm1931, %v9034, %v9041
      %v9043 = vrot.slane %v9038, 4
      %v9045 = vshrl.u32 %v8799, 16
      %v9047 = vrot.slane %v9045, 7
      %v9048 = vshll.u32 %v8799, 16
      %v9050 = vor.u32 %v9047, %v9048
      %v9051 = vsel %vm1931, %v9043, %v9050
      %v9052 = vrot.slane %v9047, 4
      %v9054 = vshrl.u32 %v8800, 16
      %v9056 = vrot.slane %v9054, 7
      %v9057 = vshll.u32 %v8800, 16
      %v9059 = vor.u32 %v9056, %v9057
      %v9060 = vsel %vm1931, %v9052, %v9059
      %v9061 = vrot.slane %v9056, 4
      %v9063 = vshrl.u32 %v8801, 16
      %v9065 = vrot.slane %v9063, 7
      %v9066 = vshll.u32 %v8801, 16
      %v9068 = vor.u32 %v9065, %v9066
      %v9069 = vsel %vm1931, %v9061, %v9068
      %v9070 = vrot.slane %v9065, 4
      %v9072 = vshrl.u32 %v8802, 16
      %v9074 = vrot.slane %v9072, 7
      %v9075 = vshll.u32 %v8802, 16
      %v9077 = vor.u32 %v9074, %v9075
      %v9078 = vsel %vm1931, %v9070, %v9077
      %v9079 = vrot.slane %v9074, 4
      %v9081 = vshrl.u32 %v8803, 16
      %v9083 = vrot.slane %v9081, 7
      %v9084 = vshll.u32 %v8803, 16
      %v9086 = vor.u32 %v9083, %v9084
      %v9087 = vsel %vm1931, %v9079, %v9086
      %v9088 = vrot.slane %v9083, 4
      %v9090 = vshrl.u32 %v8804, 16
      %v9092 = vrot.slane %v9090, 7
      %v9093 = vshll.u32 %v8804, 16
      %v9095 = vor.u32 %v9092, %v9093
      %v9096 = vsel %vm1931, %v9088, %v9095
      %9097 = vrot.lane.b32.xlu0 %v8817, 48
      %v9098 = vpop.permute.xlu0 %9097
      %9099 = vrot.lane.b32.xlu0 %v8826, 48
      %v9100 = vpop.permute.xlu0 %9099
      %9101 = vrot.lane.b32.xlu0 %v8835, 48
      %v9102 = vpop.permute.xlu0 %9101
      %9103 = vrot.lane.b32.xlu0 %v8844, 48
      %v9104 = vpop.permute.xlu0 %9103
      %9105 = vrot.lane.b32.xlu0 %v8853, 48
      %v9106 = vpop.permute.xlu0 %9105
      %9107 = vrot.lane.b32.xlu0 %v8862, 48
      %v9108 = vpop.permute.xlu0 %9107
      %9109 = vrot.lane.b32.xlu0 %v8871, 48
      %v9110 = vpop.permute.xlu0 %9109
      %9111 = vrot.lane.b32.xlu0 %v8880, 48
      %v9112 = vpop.permute.xlu0 %9111
      %9113 = vrot.lane.b32.xlu0 %v8889, 48
      %v9114 = vpop.permute.xlu0 %9113
      %9115 = vrot.lane.b32.xlu0 %v8898, 48
      %v9116 = vpop.permute.xlu0 %9115
      %9117 = vrot.lane.b32.xlu0 %v8907, 48
      %v9118 = vpop.permute.xlu0 %9117
      %9119 = vrot.lane.b32.xlu0 %v8916, 48
      %v9120 = vpop.permute.xlu0 %9119
      %9121 = vrot.lane.b32.xlu0 %v8925, 48
      %v9122 = vpop.permute.xlu0 %9121
      %9123 = vrot.lane.b32.xlu0 %v8934, 48
      %v9124 = vpop.permute.xlu0 %9123
      %9125 = vrot.lane.b32.xlu0 %v8943, 48
      %v9126 = vpop.permute.xlu0 %9125
      %9127 = vrot.lane.b32.xlu0 %v8952, 48
      %v9128 = vpop.permute.xlu0 %9127
      %9129 = vrot.lane.b32.xlu0 %v8961, 48
      %v9130 = vpop.permute.xlu0 %9129
      %9131 = vrot.lane.b32.xlu0 %v8970, 48
      %v9132 = vpop.permute.xlu0 %9131
      %9133 = vrot.lane.b32.xlu0 %v8979, 48
      %v9134 = vpop.permute.xlu0 %9133
      %9135 = vrot.lane.b32.xlu0 %v8988, 48
      %v9136 = vpop.permute.xlu0 %9135
      %9137 = vrot.lane.b32.xlu0 %v8997, 48
      %v9138 = vpop.permute.xlu0 %9137
      %9139 = vrot.lane.b32.xlu0 %v9006, 48
      %v9140 = vpop.permute.xlu0 %9139
      %9141 = vrot.lane.b32.xlu0 %v9015, 48
      %v9142 = vpop.permute.xlu0 %9141
      %9143 = vrot.lane.b32.xlu0 %v9024, 48
      %v9144 = vpop.permute.xlu0 %9143
      %9145 = vrot.lane.b32.xlu0 %v9033, 48
      %v9146 = vpop.permute.xlu0 %9145
      %9147 = vrot.lane.b32.xlu0 %v9042, 48
      %v9148 = vpop.permute.xlu0 %9147
      %9149 = vrot.lane.b32.xlu0 %v9051, 48
      %v9150 = vpop.permute.xlu0 %9149
      %9151 = vrot.lane.b32.xlu0 %v9060, 48
      %v9152 = vpop.permute.xlu0 %9151
      %9153 = vrot.lane.b32.xlu0 %v9069, 48
      %v9154 = vpop.permute.xlu0 %9153
      %9155 = vrot.lane.b32.xlu0 %v9078, 48
      %v9156 = vpop.permute.xlu0 %9155
      %9157 = vrot.lane.b32.xlu0 %v9087, 48
      %v9158 = vpop.permute.xlu0 %9157
      %9159 = vrot.lane.b32.xlu0 %v9096, 48
      %v9160 = vpop.permute.xlu0 %9159
      %vm9193 = vcmask 454016
      %9194 = vst.msk [vmem:[#allocation5] sm:$0xf] %vm9193, %v9098
      %9195 = vst.msk [vmem:[#allocation5 + $0x4] sm:$0xf] %vm9193, %v9100
      %9196 = vst.msk [vmem:[#allocation5 + $0x8] sm:$0xf] %vm9193, %v9102
      %9197 = vst.msk [vmem:[#allocation5 + $0xc] sm:$0xf] %vm9193, %v9104
      %9198 = vst.msk [vmem:[#allocation5 + $0x10] sm:$0xf] %vm9193, %v9106
      %9199 = vst.msk [vmem:[#allocation5 + $0x14] sm:$0xf] %vm9193, %v9108
      %9200 = vst.msk [vmem:[#allocation5 + $0x18] sm:$0xf] %vm9193, %v9110
      %9201 = vst.msk [vmem:[#allocation5 + $0x1c] sm:$0xf] %vm9193, %v9112
      %9202 = vst.msk [vmem:[#allocation5 + $0x20] sm:$0xf] %vm9193, %v9114
      %9203 = vst.msk [vmem:[#allocation5 + $0x24] sm:$0xf] %vm9193, %v9116
      %9204 = vst.msk [vmem:[#allocation5 + $0x28] sm:$0xf] %vm9193, %v9118
      %9205 = vst.msk [vmem:[#allocation5 + $0x2c] sm:$0xf] %vm9193, %v9120
      %9206 = vst.msk [vmem:[#allocation5 + $0x30] sm:$0xf] %vm9193, %v9122
      %9207 = vst.msk [vmem:[#allocation5 + $0x34] sm:$0xf] %vm9193, %v9124
      %9208 = vst.msk [vmem:[#allocation5 + $0x38] sm:$0xf] %vm9193, %v9126
      %9209 = vst.msk [vmem:[#allocation5 + $0x3c] sm:$0xf] %vm9193, %v9128
      %9210 = vst.msk [vmem:[#allocation5 + $0x40] sm:$0xf] %vm9193, %v9130
      %9211 = vst.msk [vmem:[#allocation5 + $0x44] sm:$0xf] %vm9193, %v9132
      %9212 = vst.msk [vmem:[#allocation5 + $0x48] sm:$0xf] %vm9193, %v9134
      %9213 = vst.msk [vmem:[#allocation5 + $0x4c] sm:$0xf] %vm9193, %v9136
      %9214 = vst.msk [vmem:[#allocation5 + $0x50] sm:$0xf] %vm9193, %v9138
      %9215 = vst.msk [vmem:[#allocation5 + $0x54] sm:$0xf] %vm9193, %v9140
      %9216 = vst.msk [vmem:[#allocation5 + $0x58] sm:$0xf] %vm9193, %v9142
      %9217 = vst.msk [vmem:[#allocation5 + $0x5c] sm:$0xf] %vm9193, %v9144
      %9218 = vst.msk [vmem:[#allocation5 + $0x60] sm:$0xf] %vm9193, %v9146
      %9219 = vst.msk [vmem:[#allocation5 + $0x64] sm:$0xf] %vm9193, %v9148
      %9220 = vst.msk [vmem:[#allocation5 + $0x68] sm:$0xf] %vm9193, %v9150
      %9221 = vst.msk [vmem:[#allocation5 + $0x6c] sm:$0xf] %vm9193, %v9152
      %9222 = vst.msk [vmem:[#allocation5 + $0x70] sm:$0xf] %vm9193, %v9154
      %9223 = vst.msk [vmem:[#allocation5 + $0x74] sm:$0xf] %vm9193, %v9156
      %9224 = vst.msk [vmem:[#allocation5 + $0x78] sm:$0xf] %vm9193, %v9158
      %9225 = vst.msk [vmem:[#allocation5 + $0x7c] sm:$0xf] %vm9193, %v9160
      %v9226 = vld [vmem:[#allocation3 + $0x18] sm:$0xf]
      %v9227 = vld [vmem:[#allocation3 + $0x1c] sm:$0xf]
      %v9228 = vld [vmem:[#allocation3 + $0x20] sm:$0xf]
      %v9229 = vld [vmem:[#allocation3 + $0x24] sm:$0xf]
      %v9230 = vld [vmem:[#allocation3 + $0x28] sm:$0xf]
      %v9231 = vld [vmem:[#allocation3 + $0x2c] sm:$0xf]
      %v9232 = vld [vmem:[#allocation3 + $0x30] sm:$0xf]
      %v9233 = vld [vmem:[#allocation3 + $0x34] sm:$0xf]
      %v9234 = vld [vmem:[#allocation3 + $0x38] sm:$0xf]
      %v9235 = vld [vmem:[#allocation3 + $0x3c] sm:$0xf]
      %v9236 = vld [vmem:[#allocation3 + $0x40] sm:$0xf]
      %v9237 = vld [vmem:[#allocation3 + $0x44] sm:$0xf]
      %v9238 = vld [vmem:[#allocation3 + $0x48] sm:$0xf]
      %v9239 = vld [vmem:[#allocation3 + $0x4c] sm:$0xf]
      %v9240 = vld [vmem:[#allocation3 + $0x50] sm:$0xf]
      %v9241 = vld [vmem:[#allocation3 + $0x54] sm:$0xf]
      %v9242 = vld [vmem:[#allocation3 + $0x58] sm:$0xf]
      %v9243 = vld [vmem:[#allocation3 + $0x5c] sm:$0xf]
      %v9244 = vld [vmem:[#allocation3 + $0x60] sm:$0xf]
      %v9245 = vld [vmem:[#allocation3 + $0x64] sm:$0xf]
      %v9246 = vld [vmem:[#allocation3 + $0x68] sm:$0xf]
      %v9247 = vld [vmem:[#allocation3 + $0x6c] sm:$0xf]
      %v9248 = vld [vmem:[#allocation3 + $0x70] sm:$0xf]
      %v9249 = vld [vmem:[#allocation3 + $0x74] sm:$0xf]
      %v9250 = vld [vmem:[#allocation3 + $0x78] sm:$0xf]
      %v9251 = vld [vmem:[#allocation3 + $0x7c] sm:$0xf]
      %v9252 = vld [vmem:[#allocation3 + $0x80] sm:$0xf]
      %v9253 = vld [vmem:[#allocation3 + $0x84] sm:$0xf]
      %v9254 = vld [vmem:[#allocation3 + $0x88] sm:$0xf]
      %v9255 = vld [vmem:[#allocation3 + $0x8c] sm:$0xf]
      %v9256 = vld [vmem:[#allocation3 + $0x90] sm:$0xf]
      %v9257 = vld [vmem:[#allocation3 + $0x94] sm:$0xf]
      %9290 = vrot.lane.b32.xlu0 %v9226, 56
      %v9291 = vpop.permute.xlu0 %9290
      %9292 = vrot.lane.b32.xlu0 %v9227, 56
      %v9293 = vpop.permute.xlu0 %9292
      %9294 = vrot.lane.b32.xlu0 %v9228, 56
      %v9295 = vpop.permute.xlu0 %9294
      %9296 = vrot.lane.b32.xlu0 %v9229, 56
      %v9297 = vpop.permute.xlu0 %9296
      %9298 = vrot.lane.b32.xlu0 %v9230, 56
      %v9299 = vpop.permute.xlu0 %9298
      %9300 = vrot.lane.b32.xlu0 %v9231, 56
      %v9301 = vpop.permute.xlu0 %9300
      %9302 = vrot.lane.b32.xlu0 %v9232, 56
      %v9303 = vpop.permute.xlu0 %9302
      %9304 = vrot.lane.b32.xlu0 %v9233, 56
      %v9305 = vpop.permute.xlu0 %9304
      %9306 = vrot.lane.b32.xlu0 %v9234, 56
      %v9307 = vpop.permute.xlu0 %9306
      %9308 = vrot.lane.b32.xlu0 %v9235, 56
      %v9309 = vpop.permute.xlu0 %9308
      %9310 = vrot.lane.b32.xlu0 %v9236, 56
      %v9311 = vpop.permute.xlu0 %9310
      %9312 = vrot.lane.b32.xlu0 %v9237, 56
      %v9313 = vpop.permute.xlu0 %9312
      %9314 = vrot.lane.b32.xlu0 %v9238, 56
      %v9315 = vpop.permute.xlu0 %9314
      %9316 = vrot.lane.b32.xlu0 %v9239, 56
      %v9317 = vpop.permute.xlu0 %9316
      %9318 = vrot.lane.b32.xlu0 %v9240, 56
      %v9319 = vpop.permute.xlu0 %9318
      %9320 = vrot.lane.b32.xlu0 %v9241, 56
      %v9321 = vpop.permute.xlu0 %9320
      %9322 = vrot.lane.b32.xlu0 %v9242, 56
      %v9323 = vpop.permute.xlu0 %9322
      %9324 = vrot.lane.b32.xlu0 %v9243, 56
      %v9325 = vpop.permute.xlu0 %9324
      %9326 = vrot.lane.b32.xlu0 %v9244, 56
      %v9327 = vpop.permute.xlu0 %9326
      %9328 = vrot.lane.b32.xlu0 %v9245, 56
      %v9329 = vpop.permute.xlu0 %9328
      %9330 = vrot.lane.b32.xlu0 %v9246, 56
      %v9331 = vpop.permute.xlu0 %9330
      %9332 = vrot.lane.b32.xlu0 %v9247, 56
      %v9333 = vpop.permute.xlu0 %9332
      %9334 = vrot.lane.b32.xlu0 %v9248, 56
      %v9335 = vpop.permute.xlu0 %9334
      %9336 = vrot.lane.b32.xlu0 %v9249, 56
      %v9337 = vpop.permute.xlu0 %9336
      %9338 = vrot.lane.b32.xlu0 %v9250, 56
      %v9339 = vpop.permute.xlu0 %9338
      %9340 = vrot.lane.b32.xlu0 %v9251, 56
      %v9341 = vpop.permute.xlu0 %9340
      %9342 = vrot.lane.b32.xlu0 %v9252, 56
      %v9343 = vpop.permute.xlu0 %9342
      %9344 = vrot.lane.b32.xlu0 %v9253, 56
      %v9345 = vpop.permute.xlu0 %9344
      %9346 = vrot.lane.b32.xlu0 %v9254, 56
      %v9347 = vpop.permute.xlu0 %9346
      %9348 = vrot.lane.b32.xlu0 %v9255, 56
      %v9349 = vpop.permute.xlu0 %9348
      %9350 = vrot.lane.b32.xlu0 %v9256, 56
      %v9351 = vpop.permute.xlu0 %9350
      %9352 = vrot.lane.b32.xlu0 %v9257, 56
      %v9353 = vpop.permute.xlu0 %9352
      %vm9386 = vcmask 519616
      %9387 = vst.msk [vmem:[#allocation5] sm:$0xf] %vm9386, %v9291
      %9388 = vst.msk [vmem:[#allocation5 + $0x4] sm:$0xf] %vm9386, %v9293
      %9389 = vst.msk [vmem:[#allocation5 + $0x8] sm:$0xf] %vm9386, %v9295
      %9390 = vst.msk [vmem:[#allocation5 + $0xc] sm:$0xf] %vm9386, %v9297
      %9391 = vst.msk [vmem:[#allocation5 + $0x10] sm:$0xf] %vm9386, %v9299
      %9392 = vst.msk [vmem:[#allocation5 + $0x14] sm:$0xf] %vm9386, %v9301
      %9393 = vst.msk [vmem:[#allocation5 + $0x18] sm:$0xf] %vm9386, %v9303
      %9394 = vst.msk [vmem:[#allocation5 + $0x1c] sm:$0xf] %vm9386, %v9305
      %9395 = vst.msk [vmem:[#allocation5 + $0x20] sm:$0xf] %vm9386, %v9307
      %9396 = vst.msk [vmem:[#allocation5 + $0x24] sm:$0xf] %vm9386, %v9309
      %9397 = vst.msk [vmem:[#allocation5 + $0x28] sm:$0xf] %vm9386, %v9311
      %9398 = vst.msk [vmem:[#allocation5 + $0x2c] sm:$0xf] %vm9386, %v9313
      %9399 = vst.msk [vmem:[#allocation5 + $0x30] sm:$0xf] %vm9386, %v9315
      %9400 = vst.msk [vmem:[#allocation5 + $0x34] sm:$0xf] %vm9386, %v9317
      %9401 = vst.msk [vmem:[#allocation5 + $0x38] sm:$0xf] %vm9386, %v9319
      %9402 = vst.msk [vmem:[#allocation5 + $0x3c] sm:$0xf] %vm9386, %v9321
      %9403 = vst.msk [vmem:[#allocation5 + $0x40] sm:$0xf] %vm9386, %v9323
      %9404 = vst.msk [vmem:[#allocation5 + $0x44] sm:$0xf] %vm9386, %v9325
      %9405 = vst.msk [vmem:[#allocation5 + $0x48] sm:$0xf] %vm9386, %v9327
      %9406 = vst.msk [vmem:[#allocation5 + $0x4c] sm:$0xf] %vm9386, %v9329
      %9407 = vst.msk [vmem:[#allocation5 + $0x50] sm:$0xf] %vm9386, %v9331
      %9408 = vst.msk [vmem:[#allocation5 + $0x54] sm:$0xf] %vm9386, %v9333
      %9409 = vst.msk [vmem:[#allocation5 + $0x58] sm:$0xf] %vm9386, %v9335
      %9410 = vst.msk [vmem:[#allocation5 + $0x5c] sm:$0xf] %vm9386, %v9337
      %9411 = vst.msk [vmem:[#allocation5 + $0x60] sm:$0xf] %vm9386, %v9339
      %9412 = vst.msk [vmem:[#allocation5 + $0x64] sm:$0xf] %vm9386, %v9341
      %9413 = vst.msk [vmem:[#allocation5 + $0x68] sm:$0xf] %vm9386, %v9343
      %9414 = vst.msk [vmem:[#allocation5 + $0x6c] sm:$0xf] %vm9386, %v9345
      %9415 = vst.msk [vmem:[#allocation5 + $0x70] sm:$0xf] %vm9386, %v9347
      %9416 = vst.msk [vmem:[#allocation5 + $0x74] sm:$0xf] %vm9386, %v9349
      %9417 = vst.msk [vmem:[#allocation5 + $0x78] sm:$0xf] %vm9386, %v9351
      %9418 = vst.msk [vmem:[#allocation5 + $0x7c] sm:$0xf] %vm9386, %v9353
      %v9419 = vld [vmem:[#allocation3 + $0x18] sm:$0xf]
      %v9420 = vld [vmem:[#allocation3 + $0x1c] sm:$0xf]
      %v9421 = vld [vmem:[#allocation3 + $0x20] sm:$0xf]
      %v9422 = vld [vmem:[#allocation3 + $0x24] sm:$0xf]
      %v9423 = vld [vmem:[#allocation3 + $0x28] sm:$0xf]
      %v9424 = vld [vmem:[#allocation3 + $0x2c] sm:$0xf]
      %v9425 = vld [vmem:[#allocation3 + $0x30] sm:$0xf]
      %v9426 = vld [vmem:[#allocation3 + $0x34] sm:$0xf]
      %v9427 = vld [vmem:[#allocation3 + $0x38] sm:$0xf]
      %v9428 = vld [vmem:[#allocation3 + $0x3c] sm:$0xf]
      %v9429 = vld [vmem:[#allocation3 + $0x40] sm:$0xf]
      %v9430 = vld [vmem:[#allocation3 + $0x44] sm:$0xf]
      %v9431 = vld [vmem:[#allocation3 + $0x48] sm:$0xf]
      %v9432 = vld [vmem:[#allocation3 + $0x4c] sm:$0xf]
      %v9433 = vld [vmem:[#allocation3 + $0x50] sm:$0xf]
      %v9434 = vld [vmem:[#allocation3 + $0x54] sm:$0xf]
      %v9435 = vld [vmem:[#allocation3 + $0x58] sm:$0xf]
      %v9436 = vld [vmem:[#allocation3 + $0x5c] sm:$0xf]
      %v9437 = vld [vmem:[#allocation3 + $0x60] sm:$0xf]
      %v9438 = vld [vmem:[#allocation3 + $0x64] sm:$0xf]
      %v9439 = vld [vmem:[#allocation3 + $0x68] sm:$0xf]
      %v9440 = vld [vmem:[#allocation3 + $0x6c] sm:$0xf]
      %v9441 = vld [vmem:[#allocation3 + $0x70] sm:$0xf]
      %v9442 = vld [vmem:[#allocation3 + $0x74] sm:$0xf]
      %v9443 = vld [vmem:[#allocation3 + $0x78] sm:$0xf]
      %v9444 = vld [vmem:[#allocation3 + $0x7c] sm:$0xf]
      %v9445 = vld [vmem:[#allocation3 + $0x80] sm:$0xf]
      %v9446 = vld [vmem:[#allocation3 + $0x84] sm:$0xf]
      %v9447 = vld [vmem:[#allocation3 + $0x88] sm:$0xf]
      %v9448 = vld [vmem:[#allocation3 + $0x8c] sm:$0xf]
      %v9449 = vld [vmem:[#allocation3 + $0x90] sm:$0xf]
      %v9450 = vld [vmem:[#allocation3 + $0x94] sm:$0xf]
      %v9451 = vld [vmem:[#allocation3 + $0x98] sm:$0x1]
      %v9452 = vsel %vm2865, %v9419, 0
      %v9453 = vsel %vm2866, %v9420, 0
      %v9454 = vsel %vm2867, %v9421, 0
      %v9455 = vsel %vm2868, %v9422, 0
      %v9456 = vsel %vm2869, %v9423, 0
      %v9457 = vsel %vm2870, %v9424, 0
      %v9458 = vsel %vm2871, %v9425, 0
      %v9459 = vsel %vm2872, %v9426, 0
      %v9460 = vsel %vm2873, %v9427, 0
      %v9461 = vsel %vm2874, %v9428, 0
      %v9462 = vsel %vm2875, %v9429, 0
      %v9463 = vsel %vm2876, %v9430, 0
      %v9464 = vsel %vm2877, %v9431, 0
      %v9465 = vsel %vm2878, %v9432, 0
      %v9466 = vsel %vm2879, %v9433, 0
      %v9467 = vsel %vm2880, %v9434, 0
      %v9468 = vsel %vm2881, %v9435, 0
      %v9469 = vsel %vm2882, %v9436, 0
      %v9470 = vsel %vm2883, %v9437, 0
      %v9471 = vsel %vm2884, %v9438, 0
      %v9472 = vsel %vm2885, %v9439, 0
      %v9473 = vsel %vm2886, %v9440, 0
      %v9474 = vsel %vm2887, %v9441, 0
      %v9475 = vsel %vm2888, %v9442, 0
      %v9476 = vsel %vm2889, %v9443, 0
      %v9477 = vsel %vm2890, %v9444, 0
      %v9478 = vsel %vm2891, %v9445, 0
      %v9479 = vsel %vm2892, %v9446, 0
      %v9480 = vsel %vm2893, %v9447, 0
      %v9481 = vsel %vm2894, %v9448, 0
      %v9482 = vsel %vm2895, %v9449, 0
      %v9483 = vsel %vm2896, %v9450, 0
      %v9484 = vsel %vm2897, %v9451, 0
      %v9486 = vshrl.u32 %v9452, 16
      %v9488 = vrot.slane %v9486, 4
      %v9489 = vshll.u32 %v9452, 16
      %v9491 = vrot.slane %v9489, 5
      %v9492 = vor.u32 %v9488, %v9491
      %v9493 = vrot.slane %v9492, 4
      %v9495 = vshll.u32 %v9453, 16
      %v9497 = vrot.slane %v9495, 5
      %v9498 = vsel %vm1543, %v9493, %v9497
      %v9499 = vshrl.u32 %v9453, 16
      %v9501 = vrot.slane %v9499, 4
      %v9502 = vor.u32 %v9501, %v9497
      %v9503 = vrot.slane %v9502, 4
      %v9505 = vshll.u32 %v9454, 16
      %v9507 = vrot.slane %v9505, 5
      %v9508 = vsel %vm1543, %v9503, %v9507
      %v9509 = vshrl.u32 %v9454, 16
      %v9511 = vrot.slane %v9509, 4
      %v9512 = vor.u32 %v9511, %v9507
      %v9513 = vrot.slane %v9512, 4
      %v9515 = vshll.u32 %v9455, 16
      %v9517 = vrot.slane %v9515, 5
      %v9518 = vsel %vm1543, %v9513, %v9517
      %v9519 = vshrl.u32 %v9455, 16
      %v9521 = vrot.slane %v9519, 4
      %v9522 = vor.u32 %v9521, %v9517
      %v9523 = vrot.slane %v9522, 4
      %v9525 = vshll.u32 %v9456, 16
      %v9527 = vrot.slane %v9525, 5
      %v9528 = vsel %vm1543, %v9523, %v9527
      %v9529 = vshrl.u32 %v9456, 16
      %v9531 = vrot.slane %v9529, 4
      %v9532 = vor.u32 %v9531, %v9527
      %v9533 = vrot.slane %v9532, 4
      %v9535 = vshll.u32 %v9457, 16
      %v9537 = vrot.slane %v9535, 5
      %v9538 = vsel %vm1543, %v9533, %v9537
      %v9539 = vshrl.u32 %v9457, 16
      %v9541 = vrot.slane %v9539, 4
      %v9542 = vor.u32 %v9541, %v9537
      %v9543 = vrot.slane %v9542, 4
      %v9545 = vshll.u32 %v9458, 16
      %v9547 = vrot.slane %v9545, 5
      %v9548 = vsel %vm1543, %v9543, %v9547
      %v9549 = vshrl.u32 %v9458, 16
      %v9551 = vrot.slane %v9549, 4
      %v9552 = vor.u32 %v9551, %v9547
      %v9553 = vrot.slane %v9552, 4
      %v9555 = vshll.u32 %v9459, 16
      %v9557 = vrot.slane %v9555, 5
      %v9558 = vsel %vm1543, %v9553, %v9557
      %v9559 = vshrl.u32 %v9459, 16
      %v9561 = vrot.slane %v9559, 4
      %v9562 = vor.u32 %v9561, %v9557
      %v9563 = vrot.slane %v9562, 4
      %v9565 = vshll.u32 %v9460, 16
      %v9567 = vrot.slane %v9565, 5
      %v9568 = vsel %vm1543, %v9563, %v9567
      %v9569 = vshrl.u32 %v9460, 16
      %v9571 = vrot.slane %v9569, 4
      %v9572 = vor.u32 %v9571, %v9567
      %v9573 = vrot.slane %v9572, 4
      %v9575 = vshll.u32 %v9461, 16
      %v9577 = vrot.slane %v9575, 5
      %v9578 = vsel %vm1543, %v9573, %v9577
      %v9579 = vshrl.u32 %v9461, 16
      %v9581 = vrot.slane %v9579, 4
      %v9582 = vor.u32 %v9581, %v9577
      %v9583 = vrot.slane %v9582, 4
      %v9585 = vshll.u32 %v9462, 16
      %v9587 = vrot.slane %v9585, 5
      %v9588 = vsel %vm1543, %v9583, %v9587
      %v9589 = vshrl.u32 %v9462, 16
      %v9591 = vrot.slane %v9589, 4
      %v9592 = vor.u32 %v9591, %v9587
      %v9593 = vrot.slane %v9592, 4
      %v9595 = vshll.u32 %v9463, 16
      %v9597 = vrot.slane %v9595, 5
      %v9598 = vsel %vm1543, %v9593, %v9597
      %v9599 = vshrl.u32 %v9463, 16
      %v9601 = vrot.slane %v9599, 4
      %v9602 = vor.u32 %v9601, %v9597
      %v9603 = vrot.slane %v9602, 4
      %v9605 = vshll.u32 %v9464, 16
      %v9607 = vrot.slane %v9605, 5
      %v9608 = vsel %vm1543, %v9603, %v9607
      %v9609 = vshrl.u32 %v9464, 16
      %v9611 = vrot.slane %v9609, 4
      %v9612 = vor.u32 %v9611, %v9607
      %v9613 = vrot.slane %v9612, 4
      %v9615 = vshll.u32 %v9465, 16
      %v9617 = vrot.slane %v9615, 5
      %v9618 = vsel %vm1543, %v9613, %v9617
      %v9619 = vshrl.u32 %v9465, 16
      %v9621 = vrot.slane %v9619, 4
      %v9622 = vor.u32 %v9621, %v9617
      %v9623 = vrot.slane %v9622, 4
      %v9625 = vshll.u32 %v9466, 16
      %v9627 = vrot.slane %v9625, 5
      %v9628 = vsel %vm1543, %v9623, %v9627
      %v9629 = vshrl.u32 %v9466, 16
      %v9631 = vrot.slane %v9629, 4
      %v9632 = vor.u32 %v9631, %v9627
      %v9633 = vrot.slane %v9632, 4
      %v9635 = vshll.u32 %v9467, 16
      %v9637 = vrot.slane %v9635, 5
      %v9638 = vsel %vm1543, %v9633, %v9637
      %v9639 = vshrl.u32 %v9467, 16
      %v9641 = vrot.slane %v9639, 4
      %v9642 = vor.u32 %v9641, %v9637
      %v9643 = vrot.slane %v9642, 4
      %v9645 = vshll.u32 %v9468, 16
      %v9647 = vrot.slane %v9645, 5
      %v9648 = vsel %vm1543, %v9643, %v9647
      %v9649 = vshrl.u32 %v9468, 16
      %v9651 = vrot.slane %v9649, 4
      %v9652 = vor.u32 %v9651, %v9647
      %v9653 = vrot.slane %v9652, 4
      %v9655 = vshll.u32 %v9469, 16
      %v9657 = vrot.slane %v9655, 5
      %v9658 = vsel %vm1543, %v9653, %v9657
      %v9659 = vshrl.u32 %v9469, 16
      %v9661 = vrot.slane %v9659, 4
      %v9662 = vor.u32 %v9661, %v9657
      %v9663 = vrot.slane %v9662, 4
      %v9665 = vshll.u32 %v9470, 16
      %v9667 = vrot.slane %v9665, 5
      %v9668 = vsel %vm1543, %v9663, %v9667
      %v9669 = vshrl.u32 %v9470, 16
      %v9671 = vrot.slane %v9669, 4
      %v9672 = vor.u32 %v9671, %v9667
      %v9673 = vrot.slane %v9672, 4
      %v9675 = vshll.u32 %v9471, 16
      %v9677 = vrot.slane %v9675, 5
      %v9678 = vsel %vm1543, %v9673, %v9677
      %v9679 = vshrl.u32 %v9471, 16
      %v9681 = vrot.slane %v9679, 4
      %v9682 = vor.u32 %v9681, %v9677
      %v9683 = vrot.slane %v9682, 4
      %v9685 = vshll.u32 %v9472, 16
      %v9687 = vrot.slane %v9685, 5
      %v9688 = vsel %vm1543, %v9683, %v9687
      %v9689 = vshrl.u32 %v9472, 16
      %v9691 = vrot.slane %v9689, 4
      %v9692 = vor.u32 %v9691, %v9687
      %v9693 = vrot.slane %v9692, 4
      %v9695 = vshll.u32 %v9473, 16
      %v9697 = vrot.slane %v9695, 5
      %v9698 = vsel %vm1543, %v9693, %v9697
      %v9699 = vshrl.u32 %v9473, 16
      %v9701 = vrot.slane %v9699, 4
      %v9702 = vor.u32 %v9701, %v9697
      %v9703 = vrot.slane %v9702, 4
      %v9705 = vshll.u32 %v9474, 16
      %v9707 = vrot.slane %v9705, 5
      %v9708 = vsel %vm1543, %v9703, %v9707
      %v9709 = vshrl.u32 %v9474, 16
      %v9711 = vrot.slane %v9709, 4
      %v9712 = vor.u32 %v9711, %v9707
      %v9713 = vrot.slane %v9712, 4
      %v9715 = vshll.u32 %v9475, 16
      %v9717 = vrot.slane %v9715, 5
      %v9718 = vsel %vm1543, %v9713, %v9717
      %v9719 = vshrl.u32 %v9475, 16
      %v9721 = vrot.slane %v9719, 4
      %v9722 = vor.u32 %v9721, %v9717
      %v9723 = vrot.slane %v9722, 4
      %v9725 = vshll.u32 %v9476, 16
      %v9727 = vrot.slane %v9725, 5
      %v9728 = vsel %vm1543, %v9723, %v9727
      %v9729 = vshrl.u32 %v9476, 16
      %v9731 = vrot.slane %v9729, 4
      %v9732 = vor.u32 %v9731, %v9727
      %v9733 = vrot.slane %v9732, 4
      %v9735 = vshll.u32 %v9477, 16
      %v9737 = vrot.slane %v9735, 5
      %v9738 = vsel %vm1543, %v9733, %v9737
      %v9739 = vshrl.u32 %v9477, 16
      %v9741 = vrot.slane %v9739, 4
      %v9742 = vor.u32 %v9741, %v9737
      %v9743 = vrot.slane %v9742, 4
      %v9745 = vshll.u32 %v9478, 16
      %v9747 = vrot.slane %v9745, 5
      %v9748 = vsel %vm1543, %v9743, %v9747
      %v9749 = vshrl.u32 %v9478, 16
      %v9751 = vrot.slane %v9749, 4
      %v9752 = vor.u32 %v9751, %v9747
      %v9753 = vrot.slane %v9752, 4
      %v9755 = vshll.u32 %v9479, 16
      %v9757 = vrot.slane %v9755, 5
      %v9758 = vsel %vm1543, %v9753, %v9757
      %v9759 = vshrl.u32 %v9479, 16
      %v9761 = vrot.slane %v9759, 4
      %v9762 = vor.u32 %v9761, %v9757
      %v9763 = vrot.slane %v9762, 4
      %v9765 = vshll.u32 %v9480, 16
      %v9767 = vrot.slane %v9765, 5
      %v9768 = vsel %vm1543, %v9763, %v9767
      %v9769 = vshrl.u32 %v9480, 16
      %v9771 = vrot.slane %v9769, 4
      %v9772 = vor.u32 %v9771, %v9767
      %v9773 = vrot.slane %v9772, 4
      %v9775 = vshll.u32 %v9481, 16
      %v9777 = vrot.slane %v9775, 5
      %v9778 = vsel %vm1543, %v9773, %v9777
      %v9779 = vshrl.u32 %v9481, 16
      %v9781 = vrot.slane %v9779, 4
      %v9782 = vor.u32 %v9781, %v9777
      %v9783 = vrot.slane %v9782, 4
      %v9785 = vshll.u32 %v9482, 16
      %v9787 = vrot.slane %v9785, 5
      %v9788 = vsel %vm1543, %v9783, %v9787
      %v9789 = vshrl.u32 %v9482, 16
      %v9791 = vrot.slane %v9789, 4
      %v9792 = vor.u32 %v9791, %v9787
      %v9793 = vrot.slane %v9792, 4
      %v9795 = vshll.u32 %v9483, 16
      %v9797 = vrot.slane %v9795, 5
      %v9798 = vsel %vm1543, %v9793, %v9797
      %v9799 = vshrl.u32 %v9483, 16
      %v9801 = vrot.slane %v9799, 4
      %v9802 = vor.u32 %v9801, %v9797
      %v9803 = vrot.slane %v9802, 4
      %v9805 = vshll.u32 %v9484, 16
      %v9807 = vrot.slane %v9805, 5
      %v9808 = vsel %vm1543, %v9803, %v9807
      %9809 = vrot.lane.b32.xlu0 %v9498, 64
      %v9810 = vpop.permute.xlu0 %9809
      %9811 = vrot.lane.b32.xlu0 %v9508, 64
      %v9812 = vpop.permute.xlu0 %9811
      %9813 = vrot.lane.b32.xlu0 %v9518, 64
      %v9814 = vpop.permute.xlu0 %9813
      %9815 = vrot.lane.b32.xlu0 %v9528, 64
      %v9816 = vpop.permute.xlu0 %9815
      %9817 = vrot.lane.b32.xlu0 %v9538, 64
      %v9818 = vpop.permute.xlu0 %9817
      %9819 = vrot.lane.b32.xlu0 %v9548, 64
      %v9820 = vpop.permute.xlu0 %9819
      %9821 = vrot.lane.b32.xlu0 %v9558, 64
      %v9822 = vpop.permute.xlu0 %9821
      %9823 = vrot.lane.b32.xlu0 %v9568, 64
      %v9824 = vpop.permute.xlu0 %9823
      %9825 = vrot.lane.b32.xlu0 %v9578, 64
      %v9826 = vpop.permute.xlu0 %9825
      %9827 = vrot.lane.b32.xlu0 %v9588, 64
      %v9828 = vpop.permute.xlu0 %9827
      %9829 = vrot.lane.b32.xlu0 %v9598, 64
      %v9830 = vpop.permute.xlu0 %9829
      %9831 = vrot.lane.b32.xlu0 %v9608, 64
      %v9832 = vpop.permute.xlu0 %9831
      %9833 = vrot.lane.b32.xlu0 %v9618, 64
      %v9834 = vpop.permute.xlu0 %9833
      %9835 = vrot.lane.b32.xlu0 %v9628, 64
      %v9836 = vpop.permute.xlu0 %9835
      %9837 = vrot.lane.b32.xlu0 %v9638, 64
      %v9838 = vpop.permute.xlu0 %9837
      %9839 = vrot.lane.b32.xlu0 %v9648, 64
      %v9840 = vpop.permute.xlu0 %9839
      %9841 = vrot.lane.b32.xlu0 %v9658, 64
      %v9842 = vpop.permute.xlu0 %9841
      %9843 = vrot.lane.b32.xlu0 %v9668, 64
      %v9844 = vpop.permute.xlu0 %9843
      %9845 = vrot.lane.b32.xlu0 %v9678, 64
      %v9846 = vpop.permute.xlu0 %9845
      %9847 = vrot.lane.b32.xlu0 %v9688, 64
      %v9848 = vpop.permute.xlu0 %9847
      %9849 = vrot.lane.b32.xlu0 %v9698, 64
      %v9850 = vpop.permute.xlu0 %9849
      %9851 = vrot.lane.b32.xlu0 %v9708, 64
      %v9852 = vpop.permute.xlu0 %9851
      %9853 = vrot.lane.b32.xlu0 %v9718, 64
      %v9854 = vpop.permute.xlu0 %9853
      %9855 = vrot.lane.b32.xlu0 %v9728, 64
      %v9856 = vpop.permute.xlu0 %9855
      %9857 = vrot.lane.b32.xlu0 %v9738, 64
      %v9858 = vpop.permute.xlu0 %9857
      %9859 = vrot.lane.b32.xlu0 %v9748, 64
      %v9860 = vpop.permute.xlu0 %9859
      %9861 = vrot.lane.b32.xlu0 %v9758, 64
      %v9862 = vpop.permute.xlu0 %9861
      %9863 = vrot.lane.b32.xlu0 %v9768, 64
      %v9864 = vpop.permute.xlu0 %9863
      %9865 = vrot.lane.b32.xlu0 %v9778, 64
      %v9866 = vpop.permute.xlu0 %9865
      %9867 = vrot.lane.b32.xlu0 %v9788, 64
      %v9868 = vpop.permute.xlu0 %9867
      %9869 = vrot.lane.b32.xlu0 %v9798, 64
      %v9870 = vpop.permute.xlu0 %9869
      %9871 = vrot.lane.b32.xlu0 %v9808, 64
      %v9872 = vpop.permute.xlu0 %9871
      %vm9905 = vcmask 585216
      %9906 = vst.msk [vmem:[#allocation5] sm:$0xf] %vm9905, %v9810
      %9907 = vst.msk [vmem:[#allocation5 + $0x4] sm:$0xf] %vm9905, %v9812
      %9908 = vst.msk [vmem:[#allocation5 + $0x8] sm:$0xf] %vm9905, %v9814
      %9909 = vst.msk [vmem:[#allocation5 + $0xc] sm:$0xf] %vm9905, %v9816
      %9910 = vst.msk [vmem:[#allocation5 + $0x10] sm:$0xf] %vm9905, %v9818
      %9911 = vst.msk [vmem:[#allocation5 + $0x14] sm:$0xf] %vm9905, %v9820
      %9912 = vst.msk [vmem:[#allocation5 + $0x18] sm:$0xf] %vm9905, %v9822
      %9913 = vst.msk [vmem:[#allocation5 + $0x1c] sm:$0xf] %vm9905, %v9824
      %9914 = vst.msk [vmem:[#allocation5 + $0x20] sm:$0xf] %vm9905, %v9826
      %9915 = vst.msk [vmem:[#allocation5 + $0x24] sm:$0xf] %vm9905, %v9828
      %9916 = vst.msk [vmem:[#allocation5 + $0x28] sm:$0xf] %vm9905, %v9830
      %9917 = vst.msk [vmem:[#allocation5 + $0x2c] sm:$0xf] %vm9905, %v9832
      %9918 = vst.msk [vmem:[#allocation5 + $0x30] sm:$0xf] %vm9905, %v9834
      %9919 = vst.msk [vmem:[#allocation5 + $0x34] sm:$0xf] %vm9905, %v9836
      %9920 = vst.msk [vmem:[#allocation5 + $0x38] sm:$0xf] %vm9905, %v9838
      %9921 = vst.msk [vmem:[#allocation5 + $0x3c] sm:$0xf] %vm9905, %v9840
      %9922 = vst.msk [vmem:[#allocation5 + $0x40] sm:$0xf] %vm9905, %v9842
      %9923 = vst.msk [vmem:[#allocation5 + $0x44] sm:$0xf] %vm9905, %v9844
      %9924 = vst.msk [vmem:[#allocation5 + $0x48] sm:$0xf] %vm9905, %v9846
      %9925 = vst.msk [vmem:[#allocation5 + $0x4c] sm:$0xf] %vm9905, %v9848
      %9926 = vst.msk [vmem:[#allocation5 + $0x50] sm:$0xf] %vm9905, %v9850
      %9927 = vst.msk [vmem:[#allocation5 + $0x54] sm:$0xf] %vm9905, %v9852
      %9928 = vst.msk [vmem:[#allocation5 + $0x58] sm:$0xf] %vm9905, %v9854
      %9929 = vst.msk [vmem:[#allocation5 + $0x5c] sm:$0xf] %vm9905, %v9856
      %9930 = vst.msk [vmem:[#allocation5 + $0x60] sm:$0xf] %vm9905, %v9858
      %9931 = vst.msk [vmem:[#allocation5 + $0x64] sm:$0xf] %vm9905, %v9860
      %9932 = vst.msk [vmem:[#allocation5 + $0x68] sm:$0xf] %vm9905, %v9862
      %9933 = vst.msk [vmem:[#allocation5 + $0x6c] sm:$0xf] %vm9905, %v9864
      %9934 = vst.msk [vmem:[#allocation5 + $0x70] sm:$0xf] %vm9905, %v9866
      %9935 = vst.msk [vmem:[#allocation5 + $0x74] sm:$0xf] %vm9905, %v9868
      %9936 = vst.msk [vmem:[#allocation5 + $0x78] sm:$0xf] %vm9905, %v9870
      %9937 = vst.msk [vmem:[#allocation5 + $0x7c] sm:$0xf] %vm9905, %v9872
      %v9938 = vld [vmem:[#allocation5] sm:$0xf]
      %v9939 = vld [vmem:[#allocation5 + $0x4] sm:$0xf]
      %v9940 = vld [vmem:[#allocation5 + $0x8] sm:$0xf]
      %v9941 = vld [vmem:[#allocation5 + $0xc] sm:$0xf]
      %v9942 = vld [vmem:[#allocation5 + $0x10] sm:$0xf]
      %v9943 = vld [vmem:[#allocation5 + $0x14] sm:$0xf]
      %v9944 = vld [vmem:[#allocation5 + $0x18] sm:$0xf]
      %v9945 = vld [vmem:[#allocation5 + $0x1c] sm:$0xf]
      %v9946 = vld [vmem:[#allocation5 + $0x20] sm:$0xf]
      %v9947 = vld [vmem:[#allocation5 + $0x24] sm:$0xf]
      %v9948 = vld [vmem:[#allocation5 + $0x28] sm:$0xf]
      %v9949 = vld [vmem:[#allocation5 + $0x2c] sm:$0xf]
      %v9950 = vld [vmem:[#allocation5 + $0x30] sm:$0xf]
      %v9951 = vld [vmem:[#allocation5 + $0x34] sm:$0xf]
      %v9952 = vld [vmem:[#allocation5 + $0x38] sm:$0xf]
      %v9953 = vld [vmem:[#allocation5 + $0x3c] sm:$0xf]
      %v9954 = vld [vmem:[#allocation5 + $0x40] sm:$0xf]
      %v9955 = vld [vmem:[#allocation5 + $0x44] sm:$0xf]
      %v9956 = vld [vmem:[#allocation5 + $0x48] sm:$0xf]
      %v9957 = vld [vmem:[#allocation5 + $0x4c] sm:$0xf]
      %v9958 = vld [vmem:[#allocation5 + $0x50] sm:$0xf]
      %v9959 = vld [vmem:[#allocation5 + $0x54] sm:$0xf]
      %v9960 = vld [vmem:[#allocation5 + $0x58] sm:$0xf]
      %v9961 = vld [vmem:[#allocation5 + $0x5c] sm:$0xf]
      %v9962 = vld [vmem:[#allocation5 + $0x60] sm:$0xf]
      %v9963 = vld [vmem:[#allocation5 + $0x64] sm:$0xf]
      %v9964 = vld [vmem:[#allocation5 + $0x68] sm:$0xf]
      %v9965 = vld [vmem:[#allocation5 + $0x6c] sm:$0xf]
      %v9966 = vld [vmem:[#allocation5 + $0x70] sm:$0xf]
      %v9967 = vld [vmem:[#allocation5 + $0x74] sm:$0xf]
      %v9968 = vld [vmem:[#allocation5 + $0x78] sm:$0xf]
      %v9969 = vld [vmem:[#allocation5 + $0x7c] sm:$0xf]
      %v9970 = vld [vmem:[%s6] sm:$0xf]
      %v9971 = vld [vmem:[%s6 + $0x4] sm:$0xf]
      %v9972 = vld [vmem:[%s6 + $0x8] sm:$0xf]
      %v9973 = vld [vmem:[%s6 + $0xc] sm:$0xf]
      %v9974 = vld [vmem:[%s6 + $0x10] sm:$0xf]
      %v9975 = vld [vmem:[%s6 + $0x14] sm:$0xf]
      %v9976 = vld [vmem:[%s6 + $0x18] sm:$0xf]
      %v9977 = vld [vmem:[%s6 + $0x1c] sm:$0xf]
      %v9978 = vld [vmem:[%s6 + $0x20] sm:$0xf]
      %v10011 = vunpack.c.l.b16 %v9938
      %v10012 = vunpack.c.l.b16 %v9939
      %v10013 = vunpack.c.l.b16 %v9940
      %v10014 = vunpack.c.l.b16 %v9941
      %v10015 = vunpack.c.l.b16 %v9942
      %v10016 = vunpack.c.l.b16 %v9943
      %v10017 = vunpack.c.l.b16 %v9944
      %v10018 = vunpack.c.l.b16 %v9945
      %v10019 = vunpack.c.l.b16 %v9946
      %v10020 = vunpack.c.l.b16 %v9947
      %v10021 = vunpack.c.l.b16 %v9948
      %v10022 = vunpack.c.l.b16 %v9949
      %v10023 = vunpack.c.l.b16 %v9950
      %v10024 = vunpack.c.l.b16 %v9951
      %v10025 = vunpack.c.l.b16 %v9952
      %v10026 = vunpack.c.l.b16 %v9953
      %v10027 = vunpack.c.l.b16 %v9954
      %v10028 = vunpack.c.l.b16 %v9955
      %v10029 = vunpack.c.l.b16 %v9956
      %v10030 = vunpack.c.l.b16 %v9957
      %v10031 = vunpack.c.l.b16 %v9958
      %v10032 = vunpack.c.l.b16 %v9959
      %v10033 = vunpack.c.l.b16 %v9960
      %v10034 = vunpack.c.l.b16 %v9961
      %v10035 = vunpack.c.l.b16 %v9962
      %v10036 = vunpack.c.l.b16 %v9963
      %v10037 = vunpack.c.l.b16 %v9964
      %v10038 = vunpack.c.l.b16 %v9965
      %v10039 = vunpack.c.l.b16 %v9966
      %v10040 = vunpack.c.l.b16 %v9967
      %v10041 = vunpack.c.l.b16 %v9968
      %v10042 = vunpack.c.l.b16 %v9969
      %v10043 = vpack.c.b16 %v10012, %v10011
      %v10044 = vpack.c.b16 %v10014, %v10013
      %v10045 = vpack.c.b16 %v10016, %v10015
      %v10046 = vpack.c.b16 %v10018, %v10017
      %v10047 = vpack.c.b16 %v10020, %v10019
      %v10048 = vpack.c.b16 %v10022, %v10021
      %v10049 = vpack.c.b16 %v10024, %v10023
      %v10050 = vpack.c.b16 %v10026, %v10025
      %v10051 = vpack.c.b16 %v10028, %v10027
      %v10052 = vpack.c.b16 %v10030, %v10029
      %v10053 = vpack.c.b16 %v10032, %v10031
      %v10054 = vpack.c.b16 %v10034, %v10033
      %v10055 = vpack.c.b16 %v10036, %v10035
      %v10056 = vpack.c.b16 %v10038, %v10037
      %v10057 = vpack.c.b16 %v10040, %v10039
      %v10058 = vpack.c.b16 %v10042, %v10041
      %v10068 = vunpack.c.l.b16 %v9970
      %v10069 = vunpack.c.l.b16 %v9971
      %v10070 = vunpack.c.l.b16 %v9972
      %v10071 = vunpack.c.l.b16 %v9973
      %v10072 = vunpack.c.l.b16 %v9974
      %v10073 = vunpack.c.l.b16 %v9975
      %v10074 = vunpack.c.l.b16 %v9976
      %v10075 = vunpack.c.l.b16 %v9977
      %v10076 = vunpack.c.l.b16 %v9978
      %v10077 = vpack.c.b16 %v10069, %v10068
      %v10078 = vpack.c.b16 %v10071, %v10070
      %v10079 = vpack.c.b16 %v10073, %v10072
      %v10080 = vpack.c.b16 %v10075, %v10074
      %v10081 = vpack.c.b16 %v10076, %v10076
      %vm10086 = vcmask 588800
      %v10088 = vsel %vm10086, %v10043, 0
      %v10091 = vsel %vm10086, %v10044, 0
      %v10094 = vsel %vm10086, %v10045, 0
      %v10097 = vsel %vm10086, %v10046, 0
      %v10100 = vsel %vm10086, %v10047, 0
      %v10103 = vsel %vm10086, %v10048, 0
      %v10106 = vsel %vm10086, %v10049, 0
      %v10109 = vsel %vm10086, %v10050, 0
      %v10112 = vsel %vm10086, %v10051, 0
      %v10115 = vsel %vm10086, %v10052, 0
      %v10118 = vsel %vm10086, %v10053, 0
      %v10121 = vsel %vm10086, %v10054, 0
      %v10124 = vsel %vm10086, %v10055, 0
      %v10127 = vsel %vm10086, %v10056, 0
      %v10130 = vsel %vm10086, %v10057, 0
      %v10133 = vsel %vm10086, %v10058, 0
      %vm10135 = vcmask 1043456
      %v10137 = vsel %vm10135, %v10081, 0
      %10139 = vmatprep.subr.bf16.mxu0 0
      %10140 = vmatpush1.bf16.msra.mxu0 0
      %10141 = vmatprep.subr.bf16.mxu0 0
      %10142 = vmatpush1.bf16.msra.mxu0 0
      %10143 = vmatprep.subr.bf16.mxu0 0
      %10144 = vmatpush1.bf16.msra.mxu0 0
      %10145 = vmatprep.subr.bf16.mxu0 0
      %10146 = vmatpush1.bf16.msra.mxu0 %v10137
      %10147 = vmatprep.subr.bf16.mxu0 0
      %10148 = vmatpush1.bf16.msra.mxu0 %v10080
      %10149 = vmatprep.subr.bf16.mxu0 0
      %10150 = vmatpush1.bf16.msra.mxu0 %v10079
      %10151 = vmatprep.subr.bf16.mxu0 0
      %10152 = vmatpush1.bf16.msra.mxu0 %v10078
      %10153 = vmatprep.subr.bf16.mxu0 0
      %10154 = vmatpush1.bf16.msra.mxu0 %v10077
      %10155 = vmatprep.subr.bf16.mxu0 0
      %10156 = vmatpush2.bf16.msra.mxu0 0
      %10157 = vmatprep.subr.bf16.mxu0 0
      %10158 = vmatpush2.bf16.msra.mxu0 0
      %10159 = vmatprep.subr.bf16.mxu0 0
      %10160 = vmatpush2.bf16.msra.mxu0 0
      %10161 = vmatprep.subr.bf16.mxu0 0
      %10162 = vmatpush2.bf16.msra.mxu0 0
      %10163 = vmatprep.subr.bf16.mxu0 0
      %10164 = vmatpush2.bf16.msra.mxu0 0
      %10165 = vmatprep.subr.bf16.mxu0 0
      %10166 = vmatpush2.bf16.msra.mxu0 0
      %10167 = vmatprep.subr.bf16.mxu0 0
      %10168 = vmatpush2.bf16.msra.mxu0 0
      %10169 = vmatprep.subr.bf16.mxu0 0
      %10170 = vmatpush2.bf16.msra.mxu0 0
      %10171 = vmatprep.mubr.bf16.mxu0 0
      %10172 = vmatmul.mubr.bf16.gmra.mxu0 %v10088
      %v10173 = vpop.f32.mrf.mxu0
      %v10174 = vadd.f32 %v1037, %v10173
      %v10175 = vpop.f32.mrf.mxu0
      %v10176 = vpop.f32.mrf.mxu0
      %v10177 = vadd.f32 %v1040, %v10176
      %v10178 = vpop.f32.mrf.mxu0
      %10179 = vmatprep.mubr.bf16.mxu0 0
      %10180 = vmatmul.mubr.bf16.gmra.mxu0 %v10091
      %v10181 = vpop.f32.mrf.mxu0
      %v10182 = vadd.f32 %v1045, %v10181
      %v10183 = vpop.f32.mrf.mxu0
      %v10184 = vpop.f32.mrf.mxu0
      %v10185 = vadd.f32 %v1048, %v10184
      %v10186 = vpop.f32.mrf.mxu0
      %10187 = vmatprep.mubr.bf16.mxu0 0
      %10188 = vmatmul.mubr.bf16.gmra.mxu0 %v10094
      %v10189 = vpop.f32.mrf.mxu0
      %v10190 = vadd.f32 %v1053, %v10189
      %v10191 = vpop.f32.mrf.mxu0
      %v10192 = vpop.f32.mrf.mxu0
      %v10193 = vadd.f32 %v1056, %v10192
      %v10194 = vpop.f32.mrf.mxu0
      %10195 = vmatprep.mubr.bf16.mxu0 0
      %10196 = vmatmul.mubr.bf16.gmra.mxu0 %v10097
      %v10197 = vpop.f32.mrf.mxu0
      %v10198 = vadd.f32 %v1061, %v10197
      %v10199 = vpop.f32.mrf.mxu0
      %v10200 = vpop.f32.mrf.mxu0
      %v10201 = vadd.f32 %v1064, %v10200
      %v10202 = vpop.f32.mrf.mxu0
      %10203 = vmatprep.mubr.bf16.mxu0 0
      %10204 = vmatmul.mubr.bf16.gmra.mxu0 %v10100
      %v10205 = vpop.f32.mrf.mxu0
      %v10206 = vadd.f32 %v1069, %v10205
      %v10207 = vpop.f32.mrf.mxu0
      %v10208 = vpop.f32.mrf.mxu0
      %v10209 = vadd.f32 %v1072, %v10208
      %v10210 = vpop.f32.mrf.mxu0
      %10211 = vmatprep.mubr.bf16.mxu0 0
      %10212 = vmatmul.mubr.bf16.gmra.mxu0 %v10103
      %v10213 = vpop.f32.mrf.mxu0
      %v10214 = vadd.f32 %v1077, %v10213
      %v10215 = vpop.f32.mrf.mxu0
      %v10216 = vpop.f32.mrf.mxu0
      %v10217 = vadd.f32 %v1080, %v10216
      %v10218 = vpop.f32.mrf.mxu0
      %10219 = vmatprep.mubr.bf16.mxu0 0
      %10220 = vmatmul.mubr.bf16.gmra.mxu0 %v10106
      %v10221 = vpop.f32.mrf.mxu0
      %v10222 = vadd.f32 %v1085, %v10221
      %v10223 = vpop.f32.mrf.mxu0
      %v10224 = vpop.f32.mrf.mxu0
      %v10225 = vadd.f32 %v1088, %v10224
      %v10226 = vpop.f32.mrf.mxu0
      %10227 = vmatprep.mubr.bf16.mxu0 0
      %10228 = vmatmul.mubr.bf16.gmra.mxu0 %v10109
      %v10229 = vpop.f32.mrf.mxu0
      %v10230 = vadd.f32 %v1093, %v10229
      %v10231 = vpop.f32.mrf.mxu0
      %v10232 = vpop.f32.mrf.mxu0
      %v10233 = vadd.f32 %v1096, %v10232
      %v10234 = vpop.f32.mrf.mxu0
      %10235 = vmatprep.mubr.bf16.mxu0 0
      %10236 = vmatmul.mubr.bf16.gmra.mxu0 %v10112
      %v10237 = vpop.f32.mrf.mxu0
      %v10238 = vadd.f32 %v1101, %v10237
      %v10239 = vpop.f32.mrf.mxu0
      %v10240 = vpop.f32.mrf.mxu0
      %v10241 = vadd.f32 %v1104, %v10240
      %v10242 = vpop.f32.mrf.mxu0
      %10243 = vmatprep.mubr.bf16.mxu0 0
      %10244 = vmatmul.mubr.bf16.gmra.mxu0 %v10115
      %v10245 = vpop.f32.mrf.mxu0
      %v10246 = vadd.f32 %v1109, %v10245
      %v10247 = vpop.f32.mrf.mxu0
      %v10248 = vpop.f32.mrf.mxu0
      %v10249 = vadd.f32 %v1112, %v10248
      %v10250 = vpop.f32.mrf.mxu0
      %10251 = vmatprep.mubr.bf16.mxu0 0
      %10252 = vmatmul.mubr.bf16.gmra.mxu0 %v10118
      %v10253 = vpop.f32.mrf.mxu0
      %v10254 = vadd.f32 %v1117, %v10253
      %v10255 = vpop.f32.mrf.mxu0
      %v10256 = vpop.f32.mrf.mxu0
      %v10257 = vadd.f32 %v1120, %v10256
      %v10258 = vpop.f32.mrf.mxu0
      %10259 = vmatprep.mubr.bf16.mxu0 0
      %10260 = vmatmul.mubr.bf16.gmra.mxu0 %v10121
      %v10261 = vpop.f32.mrf.mxu0
      %v10262 = vadd.f32 %v1125, %v10261
      %v10263 = vpop.f32.mrf.mxu0
      %v10264 = vpop.f32.mrf.mxu0
      %v10265 = vadd.f32 %v1128, %v10264
      %v10266 = vpop.f32.mrf.mxu0
      %10267 = vmatprep.mubr.bf16.mxu0 0
      %10268 = vmatmul.mubr.bf16.gmra.mxu0 %v10124
      %v10269 = vpop.f32.mrf.mxu0
      %v10270 = vadd.f32 %v1133, %v10269
      %v10271 = vpop.f32.mrf.mxu0
      %v10272 = vpop.f32.mrf.mxu0
      %v10273 = vadd.f32 %v1136, %v10272
      %v10274 = vpop.f32.mrf.mxu0
      %10275 = vmatprep.mubr.bf16.mxu0 0
      %10276 = vmatmul.mubr.bf16.gmra.mxu0 %v10127
      %v10277 = vpop.f32.mrf.mxu0
      %v10278 = vadd.f32 %v1141, %v10277
      %v10279 = vpop.f32.mrf.mxu0
      %v10280 = vpop.f32.mrf.mxu0
      %v10281 = vadd.f32 %v1144, %v10280
      %v10282 = vpop.f32.mrf.mxu0
      %10283 = vmatprep.mubr.bf16.mxu0 0
      %10284 = vmatmul.mubr.bf16.gmra.mxu0 %v10130
      %v10285 = vpop.f32.mrf.mxu0
      %v10286 = vadd.f32 %v1149, %v10285
      %v10287 = vpop.f32.mrf.mxu0
      %v10288 = vpop.f32.mrf.mxu0
      %v10289 = vadd.f32 %v1152, %v10288
      %v10290 = vpop.f32.mrf.mxu0
      %10291 = vmatprep.mubr.bf16.mxu0 0
      %10292 = vmatmul.mubr.bf16.gmra.mxu0 %v10133
      %v10293 = vpop.f32.mrf.mxu0
      %v10294 = vadd.f32 %v1157, %v10293
      %v10295 = vpop.f32.mrf.mxu0
      %v10296 = vpop.f32.mrf.mxu0
      %v10297 = vadd.f32 %v1160, %v10296
      %v10298 = vpop.f32.mrf.mxu0
      %10299 = vdwg.mxu0
      %vm10300 = vcmask 64512
      %10301 = vst.msk [vmem:[%s305] sm:$0xff] %vm10300, %v10174
      %10302 = vst.msk [vmem:[%s305 + $0x8] sm:$0xff] %vm10300, %v10177
      %10303 = vst.msk [vmem:[%s305 + $0x10] sm:$0xff] %vm10300, %v10182
      %10304 = vst.msk [vmem:[%s305 + $0x18] sm:$0xff] %vm10300, %v10185
      %10305 = vst.msk [vmem:[%s305 + $0x20] sm:$0xff] %vm10300, %v10190
      %10306 = vst.msk [vmem:[%s305 + $0x28] sm:$0xff] %vm10300, %v10193
      %10307 = vst.msk [vmem:[%s305 + $0x30] sm:$0xff] %vm10300, %v10198
      %10308 = vst.msk [vmem:[%s305 + $0x38] sm:$0xff] %vm10300, %v10201
      %10309 = vst.msk [vmem:[%s305 + $0x40] sm:$0xff] %vm10300, %v10206
      %10310 = vst.msk [vmem:[%s305 + $0x48] sm:$0xff] %vm10300, %v10209
      %10311 = vst.msk [vmem:[%s305 + $0x50] sm:$0xff] %vm10300, %v10214
      %10312 = vst.msk [vmem:[%s305 + $0x58] sm:$0xff] %vm10300, %v10217
      %10313 = vst.msk [vmem:[%s305 + $0x60] sm:$0xff] %vm10300, %v10222
      %10314 = vst.msk [vmem:[%s305 + $0x68] sm:$0xff] %vm10300, %v10225
      %10315 = vst.msk [vmem:[%s305 + $0x70] sm:$0xff] %vm10300, %v10230
      %10316 = vst.msk [vmem:[%s305 + $0x78] sm:$0xff] %vm10300, %v10233
      %10317 = vst.msk [vmem:[%s305 + $0x80] sm:$0xff] %vm10300, %v10238
      %10318 = vst.msk [vmem:[%s305 + $0x88] sm:$0xff] %vm10300, %v10241
      %10319 = vst.msk [vmem:[%s305 + $0x90] sm:$0xff] %vm10300, %v10246
      %10320 = vst.msk [vmem:[%s305 + $0x98] sm:$0xff] %vm10300, %v10249
      %10321 = vst.msk [vmem:[%s305 + $0xa0] sm:$0xff] %vm10300, %v10254
      %10322 = vst.msk [vmem:[%s305 + $0xa8] sm:$0xff] %vm10300, %v10257
      %10323 = vst.msk [vmem:[%s305 + $0xb0] sm:$0xff] %vm10300, %v10262
      %10324 = vst.msk [vmem:[%s305 + $0xb8] sm:$0xff] %vm10300, %v10265
      %10325 = vst.msk [vmem:[%s305 + $0xc0] sm:$0xff] %vm10300, %v10270
      %10326 = vst.msk [vmem:[%s305 + $0xc8] sm:$0xff] %vm10300, %v10273
      %10327 = vst.msk [vmem:[%s305 + $0xd0] sm:$0xff] %vm10300, %v10278
      %10328 = vst.msk [vmem:[%s305 + $0xd8] sm:$0xff] %vm10300, %v10281
      %10329 = vst.msk [vmem:[%s305 + $0xe0] sm:$0xff] %vm10300, %v10286
      %10330 = vst.msk [vmem:[%s305 + $0xe8] sm:$0xff] %vm10300, %v10289
      %10331 = vst.msk [vmem:[%s305 + $0xf0] sm:$0xff] %vm10300, %v10294
      %10332 = vst.msk [vmem:[%s305 + $0xf8] sm:$0xff] %vm10300, %v10297
      %p10333 = scmp.lt.s32.totalorder %s19, 1
      %s10334 = scalar_select %p10333, %s19, 1
      %s10335 = smul.addr %s10334, 32
      %s10336 = smul.addr %s10335, 8
      %s10337 = scalar_lea.vmem %s8, %s10336
      // Predicated region
      $region53: #{tpu_custom_call.1} parent=51 // pred_check
        %p10338 = pneg %p210
      $region54: #{tpu_custom_call.1} parent=51 // pred_check_branch
        %10340 = sbr.rel (%p10338) target = $region56
      $region55: #{tpu_custom_call.1} parent=51 // pred_region
        _
      $region56: #{tpu_custom_call.1} parent=51 // pred_fallthru
        _
    $region52: #{tpu_custom_call.1} parent=5 // pred_fallthru
      _
    %p10341 = scmp.le.s32.totalorder 2, %s14
    // Predicated region
    $region57: #{tpu_custom_call.1} parent=5 // pred_check
      %p10342 = pneg %p10341
    $region58: #{tpu_custom_call.1} parent=5 // pred_check_branch
      %10344 = sbr.rel (%p10342) target = $region60
    $region59: #{tpu_custom_call.1} parent=5 // pred_region
      %s10345 = ssub.s32 %s14, 2
      // Predicated region
      $region61: #{tpu_custom_call.1} parent=59 // pred_check
        %p10346 = pneg %p216
      $region62: #{tpu_custom_call.1} parent=59 // pred_check_branch
        %10348 = sbr.rel (%p10346) target = $region64
      $region63: #{tpu_custom_call.1} parent=59 // pred_region
        %p10349 = scmp.lt.s32.totalorder %s20, 1
        %s10350 = scalar_select %p10349, %s20, 1
        %s10351 = smul.addr %s10350, 32
        %s10352 = smul.addr %s10351, 8
        %s10353 = scalar_lea.vmem %s8, %s10352
      $region64: #{tpu_custom_call.1} parent=59 // pred_fallthru
        _
    $region60: #{tpu_custom_call.1} parent=5 // pred_fallthru
      _
  $region6: #{tpu_custom_call.1} parent=0 // loop_footer
    %s18 = sadd.s32 1, %s14
  $region7: #{tpu_custom_call.1} parent=0 // loop_footer_branch
    %13 = sbr.rel target = $region3
  $region8: #{tpu_custom_call.1} parent=0 // loop_exit
    _

</llo_original>
